<compile_context>
chip_gen: v6e
topology: v6e:2x2x1
jax: 0.10.0
libtpu: 0.0.40
codegen_flags: <defaults>
</compile_context>

<pallas_src>
import numpy as np
import jax
import jax.numpy as jnp
from jax.experimental import pallas as pl
from jax.experimental.pallas import tpu as pltpu

LANES = 128
SUBLANES = 8


def _round_up(x, m):
    return (x + m - 1) // m * m


# ----------------------------------------------------------------------------
# Host-side, one-time parameter / constant preparation
# ----------------------------------------------------------------------------
def _im2col_index(H, W, kh, kw, stride):
    """Gather index so that x_hwc[:, idx, :] yields conv patches (p-major)."""
    oh = (H - kh) // stride + 1
    ow = (W - kw) // stride + 1
    idx = np.zeros((oh * ow, kh * kw), np.int32)
    for r in range(oh):
        for c in range(ow):
            for i in range(kh):
                for j in range(kw):
                    idx[r * ow + c, i * kw + j] = (i + stride * r) * W + (j + stride * c)
    return jnp.asarray(idx), oh, ow


def _conv_selection_bd(H, W, kh, kw, stride, rin_blk, batch):
    """Block-diagonal (over batch) 0/1 matrices S[p] with
    (S[p] @ a_stack) == patch-p rows of im2col, for a_stack = per-sample
    (rin_blk, C) activations stacked along rows."""
    oh = (H - kh) // stride + 1
    ow = (W - kw) // stride + 1
    rout_blk = _round_up(oh * ow, SUBLANES)
    S = np.zeros((kh * kw, batch * rout_blk, batch * rin_blk), np.float32)
    for i in range(kh):
        for j in range(kw):
            p = i * kw + j
            for b in range(batch):
                for r in range(oh):
                    for c in range(ow):
                        S[p, b * rout_blk + r * ow + c,
                          b * rin_blk + (i + stride * r) * W + (j + stride * c)] = 1.0
    return jnp.asarray(S), oh, ow, rout_blk


def prepare_kernel_params(params, *, H, W, n_actions, batch):
    """Reorder / pad / fold the PyTorch-layout parameters for the fused kernel.

    NOTE: the selection matrices are specialized to `batch` (one-time cost).
    """
    f32 = jnp.float32

    def conv_w_patches(w):  # OIHW -> (kh*kw, Cin, Cout); patch order p = i*kw + j
        O, Ci, kh, kw = w.shape
        return jnp.transpose(w, (2, 3, 1, 0)).reshape(kh * kw, Ci, O).astype(f32)

    # conv1 (k4, s2): wrapper-side im2col -> single (kh*kw*Cin, Cout) matmul.
    # The x/255 prescale is folded into the weights.
    O1, Ci1, kh1, kw1 = params["w1"].shape
    w1f = jnp.transpose(params["w1"] / 255.0, (2, 3, 1, 0)) \
             .reshape(kh1 * kw1 * Ci1, O1).astype(f32)
    idx1, oh1, ow1 = _im2col_index(H, W, kh1, kw1, 2)          # 16 -> 7
    r1 = _round_up(oh1 * ow1, SUBLANES)                         # 56

    w2 = conv_w_patches(params["w2"])
    w3 = conv_w_patches(params["w3"])
    b1 = params["b1"].reshape(1, -1).astype(f32)
    b2 = params["b2"].reshape(1, -1).astype(f32)
    b3 = params["b3"].reshape(1, -1).astype(f32)

    S2, oh2, ow2, r2 = _conv_selection_bd(oh1, ow1, 3, 3, 1, r1, batch)  # 7 -> 5
    S3, oh3, ow3, r3 = _conv_selection_bd(oh2, ow2, 3, 3, 1, r2, batch)  # 5 -> 3

    # fc == a 9-position "conv" that collapses the spatial extent; its
    # block-diag selector drops sample b's row straight into output row b.
    n_pos = oh3 * ow3                        # 9
    c3 = int(w3.shape[2])                    # 64
    hidden = int(params["fc_w"].shape[1])    # 512
    b_pad = _round_up(batch, SUBLANES)
    Sf = np.zeros((n_pos, b_pad, batch * r3), np.float32)
    for p in range(n_pos):
        for b in range(batch):
            Sf[p, b, b * r3 + p] = 1.0
    Sf = jnp.asarray(Sf)

    # PyTorch flattens NCHW -> fc rows ordered (c, h, w); reorder to (h, w, c)
    # so the kernel's channels-last activations need no in-kernel transpose.
    fc_w = params["fc_w"].reshape(c3, oh3, ow3, hidden)
    fc_w = jnp.transpose(fc_w, (1, 2, 0, 3)).reshape(n_pos, c3, hidden).astype(f32)
    fc_b = params["fc_b"].reshape(1, hidden).astype(f32)

    # Actor padded to 128 lanes -> the final HBM store is full-width/unmasked.
    n_pad = _round_up(n_actions, LANES)
    aw = jnp.zeros((hidden, n_pad), f32).at[:, :n_actions].set(
        params["actor_w"].astype(f32))
    ab = jnp.zeros((1, n_pad), f32).at[:, :n_actions].set(
        params["actor_b"].reshape(1, -1).astype(f32))

    return dict(idx1=idx1, w1=w1f, b1=b1, S2=S2, w2=w2, b2=b2, S3=S3, w3=w3,
                b3=b3, Sf=Sf, fw=fc_w, fb=fc_b, aw=aw, ab=ab)


# ----------------------------------------------------------------------------
# Single fused Pallas kernel: conv1 -> conv2 -> conv3 -> fc -> actor
# ----------------------------------------------------------------------------
def _bc_forward_kernel(xp_ref, w1_ref, b1_ref,
                       s2_ref, w2_ref, b2_ref,
                       s3_ref, w3_ref, b3_ref,
                       sf_ref, fw_ref, fb_ref,
                       aw_ref, ab_ref,
                       o_ref):
    f32 = jnp.float32

    def patched_conv_relu(a, s_ref, w_ref, b_ref):
        # relu( sum_p S[p] @ a + b ) with S block-diagonal over the batch ->
        # every op is a plain 2-D MXU matmul / VPU add, whole batch at once.
        acc = jnp.zeros((s_ref.shape[1], w_ref.shape[2]), f32)
        for p in range(s_ref.shape[0]):                    # 9 iters, trace-unrolled
            g = jnp.dot(s_ref[p], a, preferred_element_type=f32)
            acc = acc + jnp.dot(g, w_ref[p], preferred_element_type=f32)
        return jnp.maximum(acc + b_ref[...], 0.0)

    # conv1: im2col already done in the wrapper -> one matmul for all samples.
    a1 = jnp.maximum(
        jnp.dot(xp_ref[...], w1_ref[...], preferred_element_type=f32) + b1_ref[...],
        0.0)                                               # (B*56, 32)
    a2 = patched_conv_relu(a1, s2_ref, w2_ref, b2_ref)     # (B*32, 64) (25 valid/blk)
    a3 = patched_conv_relu(a2, s3_ref, w3_ref, b3_ref)     # (B*16, 64) ( 9 valid/blk)
    h = patched_conv_relu(a3, sf_ref, fw_ref, fb_ref)      # (8, 512); row b = sample b
    # actor + single full-width (8,128) unmasked store
    o_ref[...] = jnp.dot(h, aw_ref[...], preferred_element_type=f32) + ab_ref[...]


def _behavior_cloning_forward(kparams, x, *, n_actions):
    B, C, H, W = x.shape

    # Wrapper-side layout plumbing for conv1: NCHW -> channels-last -> im2col
    # patches, padded to 8-row blocks per sample and stacked along rows.
    idx1 = kparams["idx1"]
    ohow, kk = idx1.shape                                   # 49, 16 (static)
    r1 = _round_up(ohow, SUBLANES)                          # 56
    x_hwc = jnp.transpose(x, (0, 2, 3, 1)).reshape(B, H * W, C).astype(jnp.float32)
    patches = jnp.take(x_hwc, idx1, axis=1)                 # (B, 49, 16, C)
    patches = patches.reshape(B, ohow, kk * C)              # (B, 49, 64)
    patches = jnp.pad(patches, ((0, 0), (0, r1 - ohow), (0, 0)))
    patches = patches.reshape(B * r1, kk * C)               # (B*56, 64)

    order = ("w1", "b1", "S2", "w2", "b2", "S3", "w3", "b3",
             "Sf", "fw", "fb", "aw", "ab")
    operands = (patches,) + tuple(kparams[k] for k in order)

    def full_spec(arr):
        zeros = (0,) * arr.ndim
        return pl.BlockSpec(arr.shape, lambda i, _z=zeros: _z)

    b_pad = kparams["Sf"].shape[1]
    n_pad = kparams["aw"].shape[1]

    # NOTE: grid=(1,) -- the whole problem (~2 MB of operands) fits in VMEM.
    # For large batches, add a batch grid axis marked "parallel" so multi-core
    # chips (v7x) can shard it across TensorCores.
    out = pl.pallas_call(
        _bc_forward_kernel,
        out_shape=jax.ShapeDtypeStruct((b_pad, n_pad), jnp.float32),
        grid=(1,),
        in_specs=[full_spec(a) for a in operands],
        out_specs=pl.BlockSpec((b_pad, n_pad), lambda i: (0, 0)),
        compiler_params=pltpu.CompilerParams(
            dimension_semantics=("arbitrary",)),
    )(*operands)
    return out[:B, :n_actions]


behavior_cloning_forward = jax.jit(_behavior_cloning_forward,
                                   static_argnames="n_actions")


# ----------------------------------------------------------------------------
# Pure-JAX reference (for correctness check) -- matches the PyTorch module
# ----------------------------------------------------------------------------
def _conv_relu_ref(x, w, b, stride):
    y = jax.lax.conv_general_dilated(
        x, w, window_strides=(stride, stride), padding="VALID",
        dimension_numbers=("NCHW", "OIHW", "NCHW"))
    return jnp.maximum(y + b.reshape(1, -1, 1, 1), 0.0)


def reference_forward(params, x):
    h = x / 255.0
    h = _conv_relu_ref(h, params["w1"], params["b1"], 2)
    h = _conv_relu_ref(h, params["w2"], params["b2"], 1)
    h = _conv_relu_ref(h, params["w3"], params["b3"], 1)
    h = h.reshape(h.shape[0], -1)                      # NCHW (c, h, w) flatten
    h = jnp.maximum(h @ params["fc_w"] + params["fc_b"], 0.0)
    return h @ params["actor_w"] + params["actor_b"]


# ----------------------------------------------------------------------------
# Deterministic parameter init (PyTorch layouts: OIHW convs, (in,out) dense)
# ----------------------------------------------------------------------------
def init_params(key, n_actions=6):
    ks = jax.random.split(key, 10)

    def dense(kw_, kb_, fan_in, fan_out):
        w = jax.random.normal(kw_, (fan_in, fan_out), jnp.float32) / jnp.sqrt(fan_in)
        b = 0.01 * jax.random.normal(kb_, (1, fan_out), jnp.float32)
        return w, b

    def conv(kw_, kb_, o, i, k):
        fan_in = i * k * k
        w = jax.random.normal(kw_, (o, i, k, k), jnp.float32) / jnp.sqrt(fan_in)
        b = 0.01 * jax.random.normal(kb_, (o,), jnp.float32)
        return w, b

    w1, b1 = conv(ks[0], ks[1], 32, 4, 4)
    w2, b2 = conv(ks[2], ks[3], 64, 32, 3)
    w3, b3 = conv(ks[4], ks[5], 64, 64, 3)
    # spatial: 16 -> 7 (k4 s2) -> 5 (k3 s1) -> 3 (k3 s1); flatten = 64*3*3 = 576
    fc_w, fc_b = dense(ks[6], ks[7], 64 * 3 * 3, 512)
    actor_w, actor_b = dense(ks[8], ks[9], 512, n_actions)
    return dict(w1=w1, b1=b1, w2=w2, b2=b2, w3=w3, b3=b3,
                fc_w=fc_w, fc_b=fc_b, actor_w=actor_w, actor_b=actor_b)


if __name__ == "__main__":
    key = jax.random.PRNGKey(0)
    k_params, k_x = jax.random.split(key)

    n_actions = 6
    batch = 2
    params = init_params(k_params, n_actions=n_actions)
    kparams = prepare_kernel_params(params, H=16, W=16, n_actions=n_actions,
                                    batch=batch)

    # Synthetic "frame stack" input: (B=2, C=4, H=16, W=16), uint8-range values.
    x = jax.random.randint(k_x, (batch, 4, 16, 16), 0, 256).astype(jnp.float32)

    logits = behavior_cloning_forward(kparams, x, n_actions=n_actions)
    logits = jax.block_until_ready(logits)

    logits_ref = jax.block_until_ready(reference_forward(params, x))
    np.testing.assert_allclose(np.asarray(logits), np.asarray(logits_ref),
                               rtol=2e-2, atol=2e-2)

    assert logits.shape == (batch, n_actions) and logits.dtype == jnp.float32
    print("KERNEL_OK")
</pallas_src>

<mosaic_0001>
module attributes {stable_mosaic.version = 11 : i64} {
  func.func @_bc_forward_kernel(%arg0: i32, %arg1: memref<112x64xf32, #tpu.memory_space<vmem>>, %arg2: memref<64x32xf32, #tpu.memory_space<vmem>>, %arg3: memref<1x32xf32, #tpu.memory_space<vmem>>, %arg4: memref<9x64x112xf32, #tpu.memory_space<vmem>>, %arg5: memref<9x32x64xf32, #tpu.memory_space<vmem>>, %arg6: memref<1x64xf32, #tpu.memory_space<vmem>>, %arg7: memref<9x32x64xf32, #tpu.memory_space<vmem>>, %arg8: memref<9x64x64xf32, #tpu.memory_space<vmem>>, %arg9: memref<1x64xf32, #tpu.memory_space<vmem>>, %arg10: memref<9x8x32xf32, #tpu.memory_space<vmem>>, %arg11: memref<9x64x512xf32, #tpu.memory_space<vmem>>, %arg12: memref<1x512xf32, #tpu.memory_space<vmem>>, %arg13: memref<512x128xf32, #tpu.memory_space<vmem>>, %arg14: memref<1x128xf32, #tpu.memory_space<vmem>>, %arg15: memref<8x128xf32, #tpu.memory_space<vmem>>) attributes {dimension_semantics = [#tpu.dimension_semantics<arbitrary>], iteration_bounds = array<i64: 1>, scalar_prefetch = 0 : i64, scratch_operands = 0 : i64, tpu.core_type = #tpu.core_type<tc>, window_params = [{pipeline_mode = #tpu.pipeline_mode<synchronous>, transform_indices = @transform_0, window_bounds = array<i64: 112, 64>}, {pipeline_mode = #tpu.pipeline_mode<synchronous>, transform_indices = @transform_1, window_bounds = array<i64: 64, 32>}, {pipeline_mode = #tpu.pipeline_mode<synchronous>, transform_indices = @transform_2, window_bounds = array<i64: 1, 32>}, {pipeline_mode = #tpu.pipeline_mode<synchronous>, transform_indices = @transform_3, window_bounds = array<i64: 9, 64, 112>}, {pipeline_mode = #tpu.pipeline_mode<synchronous>, transform_indices = @transform_4, window_bounds = array<i64: 9, 32, 64>}, {pipeline_mode = #tpu.pipeline_mode<synchronous>, transform_indices = @transform_5, window_bounds = array<i64: 1, 64>}, {pipeline_mode = #tpu.pipeline_mode<synchronous>, transform_indices = @transform_6, window_bounds = array<i64: 9, 32, 64>}, {pipeline_mode = #tpu.pipeline_mode<synchronous>, transform_indices = @transform_7, window_bounds = array<i64: 9, 64, 64>}, {pipeline_mode = #tpu.pipeline_mode<synchronous>, transform_indices = @transform_8, window_bounds = array<i64: 1, 64>}, {pipeline_mode = #tpu.pipeline_mode<synchronous>, transform_indices = @transform_9, window_bounds = array<i64: 9, 8, 32>}, {pipeline_mode = #tpu.pipeline_mode<synchronous>, transform_indices = @transform_10, window_bounds = array<i64: 9, 64, 512>}, {pipeline_mode = #tpu.pipeline_mode<synchronous>, transform_indices = @transform_11, window_bounds = array<i64: 1, 512>}, {pipeline_mode = #tpu.pipeline_mode<synchronous>, transform_indices = @transform_12, window_bounds = array<i64: 512, 128>}, {pipeline_mode = #tpu.pipeline_mode<synchronous>, transform_indices = @transform_13, window_bounds = array<i64: 1, 128>}, {pipeline_mode = #tpu.pipeline_mode<synchronous>, transform_indices = @transform_14, window_bounds = array<i64: 8, 128>}]} {
    %c0 = arith.constant 0 : index
    %c0_0 = arith.constant 0 : index
    %0 = vector.load %arg1[%c0, %c0_0] : memref<112x64xf32, #tpu.memory_space<vmem>>, vector<112x64xf32>
    %c0_1 = arith.constant 0 : index
    %c0_2 = arith.constant 0 : index
    %1 = vector.load %arg2[%c0_1, %c0_2] : memref<64x32xf32, #tpu.memory_space<vmem>>, vector<64x32xf32>
    %cst = arith.constant dense<0.000000e+00> : vector<112x32xf32>
    %2 = tpu.matmul %0, %1, %cst {dimension_numbers = #tpu.dot_dimension_numbers<[1], [0], [0], [1], [0, 0, 1, 1], [], []>} : vector<112x64xf32>, vector<64x32xf32>, vector<112x32xf32> -> vector<112x32xf32>
    %c0_3 = arith.constant 0 : index
    %c0_4 = arith.constant 0 : index
    %3 = vector.load %arg3[%c0_3, %c0_4] : memref<1x32xf32, #tpu.memory_space<vmem>>, vector<1x32xf32>
    %4 = vector.broadcast %3 : vector<1x32xf32> to vector<112x32xf32>
    %5 = arith.addf %2, %4 : vector<112x32xf32>
    %cst_5 = arith.constant 0.000000e+00 : f32
    %6 = vector.broadcast %cst_5 : f32 to vector<112x32xf32>
    %7 = arith.maximumf %5, %6 : vector<112x32xf32>
    %cst_6 = arith.constant 0.000000e+00 : f32
    %8 = vector.broadcast %cst_6 : f32 to vector<64x64xf32>
    %c0_7 = arith.constant 0 : index
    %c0_8 = arith.constant 0 : index
    %c0_9 = arith.constant 0 : index
    %9 = vector.load %arg4[%c0_7, %c0_8, %c0_9] : memref<9x64x112xf32, #tpu.memory_space<vmem>>, vector<1x64x112xf32>
    %10 = vector.shape_cast %9 : vector<1x64x112xf32> to vector<64x112xf32>
    %cst_10 = arith.constant dense<0.000000e+00> : vector<64x32xf32>
    %11 = tpu.matmul %10, %7, %cst_10 {dimension_numbers = #tpu.dot_dimension_numbers<[1], [0], [0], [1], [0, 0, 1, 1], [], []>} : vector<64x112xf32>, vector<112x32xf32>, vector<64x32xf32> -> vector<64x32xf32>
    %c0_11 = arith.constant 0 : index
    %c0_12 = arith.constant 0 : index
    %c0_13 = arith.constant 0 : index
    %12 = vector.load %arg5[%c0_11, %c0_12, %c0_13] : memref<9x32x64xf32, #tpu.memory_space<vmem>>, vector<1x32x64xf32>
    %13 = vector.shape_cast %12 : vector<1x32x64xf32> to vector<32x64xf32>
    %cst_14 = arith.constant dense<0.000000e+00> : vector<64x64xf32>
    %14 = tpu.matmul %11, %13, %cst_14 {dimension_numbers = #tpu.dot_dimension_numbers<[1], [0], [0], [1], [0, 0, 1, 1], [], []>} : vector<64x32xf32>, vector<32x64xf32>, vector<64x64xf32> -> vector<64x64xf32>
    %15 = arith.addf %8, %14 : vector<64x64xf32>
    %c1 = arith.constant 1 : index
    %c0_15 = arith.constant 0 : index
    %c0_16 = arith.constant 0 : index
    %16 = vector.load %arg4[%c1, %c0_15, %c0_16] : memref<9x64x112xf32, #tpu.memory_space<vmem>>, vector<1x64x112xf32>
    %17 = vector.shape_cast %16 : vector<1x64x112xf32> to vector<64x112xf32>
    %cst_17 = arith.constant dense<0.000000e+00> : vector<64x32xf32>
    %18 = tpu.matmul %17, %7, %cst_17 {dimension_numbers = #tpu.dot_dimension_numbers<[1], [0], [0], [1], [0, 0, 1, 1], [], []>} : vector<64x112xf32>, vector<112x32xf32>, vector<64x32xf32> -> vector<64x32xf32>
    %c1_18 = arith.constant 1 : index
    %c0_19 = arith.constant 0 : index
    %c0_20 = arith.constant 0 : index
    %19 = vector.load %arg5[%c1_18, %c0_19, %c0_20] : memref<9x32x64xf32, #tpu.memory_space<vmem>>, vector<1x32x64xf32>
    %20 = vector.shape_cast %19 : vector<1x32x64xf32> to vector<32x64xf32>
    %cst_21 = arith.constant dense<0.000000e+00> : vector<64x64xf32>
    %21 = tpu.matmul %18, %20, %cst_21 {dimension_numbers = #tpu.dot_dimension_numbers<[1], [0], [0], [1], [0, 0, 1, 1], [], []>} : vector<64x32xf32>, vector<32x64xf32>, vector<64x64xf32> -> vector<64x64xf32>
    %22 = arith.addf %15, %21 : vector<64x64xf32>
    %c2 = arith.constant 2 : index
    %c0_22 = arith.constant 0 : index
    %c0_23 = arith.constant 0 : index
    %23 = vector.load %arg4[%c2, %c0_22, %c0_23] : memref<9x64x112xf32, #tpu.memory_space<vmem>>, vector<1x64x112xf32>
    %24 = vector.shape_cast %23 : vector<1x64x112xf32> to vector<64x112xf32>
    %cst_24 = arith.constant dense<0.000000e+00> : vector<64x32xf32>
    %25 = tpu.matmul %24, %7, %cst_24 {dimension_numbers = #tpu.dot_dimension_numbers<[1], [0], [0], [1], [0, 0, 1, 1], [], []>} : vector<64x112xf32>, vector<112x32xf32>, vector<64x32xf32> -> vector<64x32xf32>
    %c2_25 = arith.constant 2 : index
    %c0_26 = arith.constant 0 : index
    %c0_27 = arith.constant 0 : index
    %26 = vector.load %arg5[%c2_25, %c0_26, %c0_27] : memref<9x32x64xf32, #tpu.memory_space<vmem>>, vector<1x32x64xf32>
    %27 = vector.shape_cast %26 : vector<1x32x64xf32> to vector<32x64xf32>
    %cst_28 = arith.constant dense<0.000000e+00> : vector<64x64xf32>
    %28 = tpu.matmul %25, %27, %cst_28 {dimension_numbers = #tpu.dot_dimension_numbers<[1], [0], [0], [1], [0, 0, 1, 1], [], []>} : vector<64x32xf32>, vector<32x64xf32>, vector<64x64xf32> -> vector<64x64xf32>
    %29 = arith.addf %22, %28 : vector<64x64xf32>
    %c3 = arith.constant 3 : index
    %c0_29 = arith.constant 0 : index
    %c0_30 = arith.constant 0 : index
    %30 = vector.load %arg4[%c3, %c0_29, %c0_30] : memref<9x64x112xf32, #tpu.memory_space<vmem>>, vector<1x64x112xf32>
    %31 = vector.shape_cast %30 : vector<1x64x112xf32> to vector<64x112xf32>
    %cst_31 = arith.constant dense<0.000000e+00> : vector<64x32xf32>
    %32 = tpu.matmul %31, %7, %cst_31 {dimension_numbers = #tpu.dot_dimension_numbers<[1], [0], [0], [1], [0, 0, 1, 1], [], []>} : vector<64x112xf32>, vector<112x32xf32>, vector<64x32xf32> -> vector<64x32xf32>
    %c3_32 = arith.constant 3 : index
    %c0_33 = arith.constant 0 : index
    %c0_34 = arith.constant 0 : index
    %33 = vector.load %arg5[%c3_32, %c0_33, %c0_34] : memref<9x32x64xf32, #tpu.memory_space<vmem>>, vector<1x32x64xf32>
    %34 = vector.shape_cast %33 : vector<1x32x64xf32> to vector<32x64xf32>
    %cst_35 = arith.constant dense<0.000000e+00> : vector<64x64xf32>
    %35 = tpu.matmul %32, %34, %cst_35 {dimension_numbers = #tpu.dot_dimension_numbers<[1], [0], [0], [1], [0, 0, 1, 1], [], []>} : vector<64x32xf32>, vector<32x64xf32>, vector<64x64xf32> -> vector<64x64xf32>
    %36 = arith.addf %29, %35 : vector<64x64xf32>
    %c4 = arith.constant 4 : index
    %c0_36 = arith.constant 0 : index
    %c0_37 = arith.constant 0 : index
    %37 = vector.load %arg4[%c4, %c0_36, %c0_37] : memref<9x64x112xf32, #tpu.memory_space<vmem>>, vector<1x64x112xf32>
    %38 = vector.shape_cast %37 : vector<1x64x112xf32> to vector<64x112xf32>
    %cst_38 = arith.constant dense<0.000000e+00> : vector<64x32xf32>
    %39 = tpu.matmul %38, %7, %cst_38 {dimension_numbers = #tpu.dot_dimension_numbers<[1], [0], [0], [1], [0, 0, 1, 1], [], []>} : vector<64x112xf32>, vector<112x32xf32>, vector<64x32xf32> -> vector<64x32xf32>
    %c4_39 = arith.constant 4 : index
    %c0_40 = arith.constant 0 : index
    %c0_41 = arith.constant 0 : index
    %40 = vector.load %arg5[%c4_39, %c0_40, %c0_41] : memref<9x32x64xf32, #tpu.memory_space<vmem>>, vector<1x32x64xf32>
    %41 = vector.shape_cast %40 : vector<1x32x64xf32> to vector<32x64xf32>
    %cst_42 = arith.constant dense<0.000000e+00> : vector<64x64xf32>
    %42 = tpu.matmul %39, %41, %cst_42 {dimension_numbers = #tpu.dot_dimension_numbers<[1], [0], [0], [1], [0, 0, 1, 1], [], []>} : vector<64x32xf32>, vector<32x64xf32>, vector<64x64xf32> -> vector<64x64xf32>
    %43 = arith.addf %36, %42 : vector<64x64xf32>
    %c5 = arith.constant 5 : index
    %c0_43 = arith.constant 0 : index
    %c0_44 = arith.constant 0 : index
    %44 = vector.load %arg4[%c5, %c0_43, %c0_44] : memref<9x64x112xf32, #tpu.memory_space<vmem>>, vector<1x64x112xf32>
    %45 = vector.shape_cast %44 : vector<1x64x112xf32> to vector<64x112xf32>
    %cst_45 = arith.constant dense<0.000000e+00> : vector<64x32xf32>
    %46 = tpu.matmul %45, %7, %cst_45 {dimension_numbers = #tpu.dot_dimension_numbers<[1], [0], [0], [1], [0, 0, 1, 1], [], []>} : vector<64x112xf32>, vector<112x32xf32>, vector<64x32xf32> -> vector<64x32xf32>
    %c5_46 = arith.constant 5 : index
    %c0_47 = arith.constant 0 : index
    %c0_48 = arith.constant 0 : index
    %47 = vector.load %arg5[%c5_46, %c0_47, %c0_48] : memref<9x32x64xf32, #tpu.memory_space<vmem>>, vector<1x32x64xf32>
    %48 = vector.shape_cast %47 : vector<1x32x64xf32> to vector<32x64xf32>
    %cst_49 = arith.constant dense<0.000000e+00> : vector<64x64xf32>
    %49 = tpu.matmul %46, %48, %cst_49 {dimension_numbers = #tpu.dot_dimension_numbers<[1], [0], [0], [1], [0, 0, 1, 1], [], []>} : vector<64x32xf32>, vector<32x64xf32>, vector<64x64xf32> -> vector<64x64xf32>
    %50 = arith.addf %43, %49 : vector<64x64xf32>
    %c6 = arith.constant 6 : index
    %c0_50 = arith.constant 0 : index
    %c0_51 = arith.constant 0 : index
    %51 = vector.load %arg4[%c6, %c0_50, %c0_51] : memref<9x64x112xf32, #tpu.memory_space<vmem>>, vector<1x64x112xf32>
    %52 = vector.shape_cast %51 : vector<1x64x112xf32> to vector<64x112xf32>
    %cst_52 = arith.constant dense<0.000000e+00> : vector<64x32xf32>
    %53 = tpu.matmul %52, %7, %cst_52 {dimension_numbers = #tpu.dot_dimension_numbers<[1], [0], [0], [1], [0, 0, 1, 1], [], []>} : vector<64x112xf32>, vector<112x32xf32>, vector<64x32xf32> -> vector<64x32xf32>
    %c6_53 = arith.constant 6 : index
    %c0_54 = arith.constant 0 : index
    %c0_55 = arith.constant 0 : index
    %54 = vector.load %arg5[%c6_53, %c0_54, %c0_55] : memref<9x32x64xf32, #tpu.memory_space<vmem>>, vector<1x32x64xf32>
    %55 = vector.shape_cast %54 : vector<1x32x64xf32> to vector<32x64xf32>
    %cst_56 = arith.constant dense<0.000000e+00> : vector<64x64xf32>
    %56 = tpu.matmul %53, %55, %cst_56 {dimension_numbers = #tpu.dot_dimension_numbers<[1], [0], [0], [1], [0, 0, 1, 1], [], []>} : vector<64x32xf32>, vector<32x64xf32>, vector<64x64xf32> -> vector<64x64xf32>
    %57 = arith.addf %50, %56 : vector<64x64xf32>
    %c7 = arith.constant 7 : index
    %c0_57 = arith.constant 0 : index
    %c0_58 = arith.constant 0 : index
    %58 = vector.load %arg4[%c7, %c0_57, %c0_58] : memref<9x64x112xf32, #tpu.memory_space<vmem>>, vector<1x64x112xf32>
    %59 = vector.shape_cast %58 : vector<1x64x112xf32> to vector<64x112xf32>
    %cst_59 = arith.constant dense<0.000000e+00> : vector<64x32xf32>
    %60 = tpu.matmul %59, %7, %cst_59 {dimension_numbers = #tpu.dot_dimension_numbers<[1], [0], [0], [1], [0, 0, 1, 1], [], []>} : vector<64x112xf32>, vector<112x32xf32>, vector<64x32xf32> -> vector<64x32xf32>
    %c7_60 = arith.constant 7 : index
    %c0_61 = arith.constant 0 : index
    %c0_62 = arith.constant 0 : index
    %61 = vector.load %arg5[%c7_60, %c0_61, %c0_62] : memref<9x32x64xf32, #tpu.memory_space<vmem>>, vector<1x32x64xf32>
    %62 = vector.shape_cast %61 : vector<1x32x64xf32> to vector<32x64xf32>
    %cst_63 = arith.constant dense<0.000000e+00> : vector<64x64xf32>
    %63 = tpu.matmul %60, %62, %cst_63 {dimension_numbers = #tpu.dot_dimension_numbers<[1], [0], [0], [1], [0, 0, 1, 1], [], []>} : vector<64x32xf32>, vector<32x64xf32>, vector<64x64xf32> -> vector<64x64xf32>
    %64 = arith.addf %57, %63 : vector<64x64xf32>
    %c8 = arith.constant 8 : index
    %c0_64 = arith.constant 0 : index
    %c0_65 = arith.constant 0 : index
    %65 = vector.load %arg4[%c8, %c0_64, %c0_65] : memref<9x64x112xf32, #tpu.memory_space<vmem>>, vector<1x64x112xf32>
    %66 = vector.shape_cast %65 : vector<1x64x112xf32> to vector<64x112xf32>
    %cst_66 = arith.constant dense<0.000000e+00> : vector<64x32xf32>
    %67 = tpu.matmul %66, %7, %cst_66 {dimension_numbers = #tpu.dot_dimension_numbers<[1], [0], [0], [1], [0, 0, 1, 1], [], []>} : vector<64x112xf32>, vector<112x32xf32>, vector<64x32xf32> -> vector<64x32xf32>
    %c8_67 = arith.constant 8 : index
    %c0_68 = arith.constant 0 : index
    %c0_69 = arith.constant 0 : index
    %68 = vector.load %arg5[%c8_67, %c0_68, %c0_69] : memref<9x32x64xf32, #tpu.memory_space<vmem>>, vector<1x32x64xf32>
    %69 = vector.shape_cast %68 : vector<1x32x64xf32> to vector<32x64xf32>
    %cst_70 = arith.constant dense<0.000000e+00> : vector<64x64xf32>
    %70 = tpu.matmul %67, %69, %cst_70 {dimension_numbers = #tpu.dot_dimension_numbers<[1], [0], [0], [1], [0, 0, 1, 1], [], []>} : vector<64x32xf32>, vector<32x64xf32>, vector<64x64xf32> -> vector<64x64xf32>
    %71 = arith.addf %64, %70 : vector<64x64xf32>
    %c0_71 = arith.constant 0 : index
    %c0_72 = arith.constant 0 : index
    %72 = vector.load %arg6[%c0_71, %c0_72] : memref<1x64xf32, #tpu.memory_space<vmem>>, vector<1x64xf32>
    %73 = vector.broadcast %72 : vector<1x64xf32> to vector<64x64xf32>
    %74 = arith.addf %71, %73 : vector<64x64xf32>
    %cst_73 = arith.constant 0.000000e+00 : f32
    %75 = vector.broadcast %cst_73 : f32 to vector<64x64xf32>
    %76 = arith.maximumf %74, %75 : vector<64x64xf32>
    %cst_74 = arith.constant 0.000000e+00 : f32
    %77 = vector.broadcast %cst_74 : f32 to vector<32x64xf32>
    %c0_75 = arith.constant 0 : index
    %c0_76 = arith.constant 0 : index
    %c0_77 = arith.constant 0 : index
    %78 = vector.load %arg7[%c0_75, %c0_76, %c0_77] : memref<9x32x64xf32, #tpu.memory_space<vmem>>, vector<1x32x64xf32>
    %79 = vector.shape_cast %78 : vector<1x32x64xf32> to vector<32x64xf32>
    %cst_78 = arith.constant dense<0.000000e+00> : vector<32x64xf32>
    %80 = tpu.matmul %79, %76, %cst_78 {dimension_numbers = #tpu.dot_dimension_numbers<[1], [0], [0], [1], [0, 0, 1, 1], [], []>} : vector<32x64xf32>, vector<64x64xf32>, vector<32x64xf32> -> vector<32x64xf32>
    %c0_79 = arith.constant 0 : index
    %c0_80 = arith.constant 0 : index
    %c0_81 = arith.constant 0 : index
    %81 = vector.load %arg8[%c0_79, %c0_80, %c0_81] : memref<9x64x64xf32, #tpu.memory_space<vmem>>, vector<1x64x64xf32>
    %82 = vector.shape_cast %81 : vector<1x64x64xf32> to vector<64x64xf32>
    %cst_82 = arith.constant dense<0.000000e+00> : vector<32x64xf32>
    %83 = tpu.matmul %80, %82, %cst_82 {dimension_numbers = #tpu.dot_dimension_numbers<[1], [0], [0], [1], [0, 0, 1, 1], [], []>} : vector<32x64xf32>, vector<64x64xf32>, vector<32x64xf32> -> vector<32x64xf32>
    %84 = arith.addf %77, %83 : vector<32x64xf32>
    %c1_83 = arith.constant 1 : index
    %c0_84 = arith.constant 0 : index
    %c0_85 = arith.constant 0 : index
    %85 = vector.load %arg7[%c1_83, %c0_84, %c0_85] : memref<9x32x64xf32, #tpu.memory_space<vmem>>, vector<1x32x64xf32>
    %86 = vector.shape_cast %85 : vector<1x32x64xf32> to vector<32x64xf32>
    %cst_86 = arith.constant dense<0.000000e+00> : vector<32x64xf32>
    %87 = tpu.matmul %86, %76, %cst_86 {dimension_numbers = #tpu.dot_dimension_numbers<[1], [0], [0], [1], [0, 0, 1, 1], [], []>} : vector<32x64xf32>, vector<64x64xf32>, vector<32x64xf32> -> vector<32x64xf32>
    %c1_87 = arith.constant 1 : index
    %c0_88 = arith.constant 0 : index
    %c0_89 = arith.constant 0 : index
    %88 = vector.load %arg8[%c1_87, %c0_88, %c0_89] : memref<9x64x64xf32, #tpu.memory_space<vmem>>, vector<1x64x64xf32>
    %89 = vector.shape_cast %88 : vector<1x64x64xf32> to vector<64x64xf32>
    %cst_90 = arith.constant dense<0.000000e+00> : vector<32x64xf32>
    %90 = tpu.matmul %87, %89, %cst_90 {dimension_numbers = #tpu.dot_dimension_numbers<[1], [0], [0], [1], [0, 0, 1, 1], [], []>} : vector<32x64xf32>, vector<64x64xf32>, vector<32x64xf32> -> vector<32x64xf32>
    %91 = arith.addf %84, %90 : vector<32x64xf32>
    %c2_91 = arith.constant 2 : index
    %c0_92 = arith.constant 0 : index
    %c0_93 = arith.constant 0 : index
    %92 = vector.load %arg7[%c2_91, %c0_92, %c0_93] : memref<9x32x64xf32, #tpu.memory_space<vmem>>, vector<1x32x64xf32>
    %93 = vector.shape_cast %92 : vector<1x32x64xf32> to vector<32x64xf32>
    %cst_94 = arith.constant dense<0.000000e+00> : vector<32x64xf32>
    %94 = tpu.matmul %93, %76, %cst_94 {dimension_numbers = #tpu.dot_dimension_numbers<[1], [0], [0], [1], [0, 0, 1, 1], [], []>} : vector<32x64xf32>, vector<64x64xf32>, vector<32x64xf32> -> vector<32x64xf32>
    %c2_95 = arith.constant 2 : index
    %c0_96 = arith.constant 0 : index
    %c0_97 = arith.constant 0 : index
    %95 = vector.load %arg8[%c2_95, %c0_96, %c0_97] : memref<9x64x64xf32, #tpu.memory_space<vmem>>, vector<1x64x64xf32>
    %96 = vector.shape_cast %95 : vector<1x64x64xf32> to vector<64x64xf32>
    %cst_98 = arith.constant dense<0.000000e+00> : vector<32x64xf32>
    %97 = tpu.matmul %94, %96, %cst_98 {dimension_numbers = #tpu.dot_dimension_numbers<[1], [0], [0], [1], [0, 0, 1, 1], [], []>} : vector<32x64xf32>, vector<64x64xf32>, vector<32x64xf32> -> vector<32x64xf32>
    %98 = arith.addf %91, %97 : vector<32x64xf32>
    %c3_99 = arith.constant 3 : index
    %c0_100 = arith.constant 0 : index
    %c0_101 = arith.constant 0 : index
    %99 = vector.load %arg7[%c3_99, %c0_100, %c0_101] : memref<9x32x64xf32, #tpu.memory_space<vmem>>, vector<1x32x64xf32>
    %100 = vector.shape_cast %99 : vector<1x32x64xf32> to vector<32x64xf32>
    %cst_102 = arith.constant dense<0.000000e+00> : vector<32x64xf32>
    %101 = tpu.matmul %100, %76, %cst_102 {dimension_numbers = #tpu.dot_dimension_numbers<[1], [0], [0], [1], [0, 0, 1, 1], [], []>} : vector<32x64xf32>, vector<64x64xf32>, vector<32x64xf32> -> vector<32x64xf32>
    %c3_103 = arith.constant 3 : index
    %c0_104 = arith.constant 0 : index
    %c0_105 = arith.constant 0 : index
    %102 = vector.load %arg8[%c3_103, %c0_104, %c0_105] : memref<9x64x64xf32, #tpu.memory_space<vmem>>, vector<1x64x64xf32>
    %103 = vector.shape_cast %102 : vector<1x64x64xf32> to vector<64x64xf32>
    %cst_106 = arith.constant dense<0.000000e+00> : vector<32x64xf32>
    %104 = tpu.matmul %101, %103, %cst_106 {dimension_numbers = #tpu.dot_dimension_numbers<[1], [0], [0], [1], [0, 0, 1, 1], [], []>} : vector<32x64xf32>, vector<64x64xf32>, vector<32x64xf32> -> vector<32x64xf32>
    %105 = arith.addf %98, %104 : vector<32x64xf32>
    %c4_107 = arith.constant 4 : index
    %c0_108 = arith.constant 0 : index
    %c0_109 = arith.constant 0 : index
    %106 = vector.load %arg7[%c4_107, %c0_108, %c0_109] : memref<9x32x64xf32, #tpu.memory_space<vmem>>, vector<1x32x64xf32>
    %107 = vector.shape_cast %106 : vector<1x32x64xf32> to vector<32x64xf32>
    %cst_110 = arith.constant dense<0.000000e+00> : vector<32x64xf32>
    %108 = tpu.matmul %107, %76, %cst_110 {dimension_numbers = #tpu.dot_dimension_numbers<[1], [0], [0], [1], [0, 0, 1, 1], [], []>} : vector<32x64xf32>, vector<64x64xf32>, vector<32x64xf32> -> vector<32x64xf32>
    %c4_111 = arith.constant 4 : index
    %c0_112 = arith.constant 0 : index
    %c0_113 = arith.constant 0 : index
    %109 = vector.load %arg8[%c4_111, %c0_112, %c0_113] : memref<9x64x64xf32, #tpu.memory_space<vmem>>, vector<1x64x64xf32>
    %110 = vector.shape_cast %109 : vector<1x64x64xf32> to vector<64x64xf32>
    %cst_114 = arith.constant dense<0.000000e+00> : vector<32x64xf32>
    %111 = tpu.matmul %108, %110, %cst_114 {dimension_numbers = #tpu.dot_dimension_numbers<[1], [0], [0], [1], [0, 0, 1, 1], [], []>} : vector<32x64xf32>, vector<64x64xf32>, vector<32x64xf32> -> vector<32x64xf32>
    %112 = arith.addf %105, %111 : vector<32x64xf32>
    %c5_115 = arith.constant 5 : index
    %c0_116 = arith.constant 0 : index
    %c0_117 = arith.constant 0 : index
    %113 = vector.load %arg7[%c5_115, %c0_116, %c0_117] : memref<9x32x64xf32, #tpu.memory_space<vmem>>, vector<1x32x64xf32>
    %114 = vector.shape_cast %113 : vector<1x32x64xf32> to vector<32x64xf32>
    %cst_118 = arith.constant dense<0.000000e+00> : vector<32x64xf32>
    %115 = tpu.matmul %114, %76, %cst_118 {dimension_numbers = #tpu.dot_dimension_numbers<[1], [0], [0], [1], [0, 0, 1, 1], [], []>} : vector<32x64xf32>, vector<64x64xf32>, vector<32x64xf32> -> vector<32x64xf32>
    %c5_119 = arith.constant 5 : index
    %c0_120 = arith.constant 0 : index
    %c0_121 = arith.constant 0 : index
    %116 = vector.load %arg8[%c5_119, %c0_120, %c0_121] : memref<9x64x64xf32, #tpu.memory_space<vmem>>, vector<1x64x64xf32>
    %117 = vector.shape_cast %116 : vector<1x64x64xf32> to vector<64x64xf32>
    %cst_122 = arith.constant dense<0.000000e+00> : vector<32x64xf32>
    %118 = tpu.matmul %115, %117, %cst_122 {dimension_numbers = #tpu.dot_dimension_numbers<[1], [0], [0], [1], [0, 0, 1, 1], [], []>} : vector<32x64xf32>, vector<64x64xf32>, vector<32x64xf32> -> vector<32x64xf32>
    %119 = arith.addf %112, %118 : vector<32x64xf32>
    %c6_123 = arith.constant 6 : index
    %c0_124 = arith.constant 0 : index
    %c0_125 = arith.constant 0 : index
    %120 = vector.load %arg7[%c6_123, %c0_124, %c0_125] : memref<9x32x64xf32, #tpu.memory_space<vmem>>, vector<1x32x64xf32>
    %121 = vector.shape_cast %120 : vector<1x32x64xf32> to vector<32x64xf32>
    %cst_126 = arith.constant dense<0.000000e+00> : vector<32x64xf32>
    %122 = tpu.matmul %121, %76, %cst_126 {dimension_numbers = #tpu.dot_dimension_numbers<[1], [0], [0], [1], [0, 0, 1, 1], [], []>} : vector<32x64xf32>, vector<64x64xf32>, vector<32x64xf32> -> vector<32x64xf32>
    %c6_127 = arith.constant 6 : index
    %c0_128 = arith.constant 0 : index
    %c0_129 = arith.constant 0 : index
    %123 = vector.load %arg8[%c6_127, %c0_128, %c0_129] : memref<9x64x64xf32, #tpu.memory_space<vmem>>, vector<1x64x64xf32>
    %124 = vector.shape_cast %123 : vector<1x64x64xf32> to vector<64x64xf32>
    %cst_130 = arith.constant dense<0.000000e+00> : vector<32x64xf32>
    %125 = tpu.matmul %122, %124, %cst_130 {dimension_numbers = #tpu.dot_dimension_numbers<[1], [0], [0], [1], [0, 0, 1, 1], [], []>} : vector<32x64xf32>, vector<64x64xf32>, vector<32x64xf32> -> vector<32x64xf32>
    %126 = arith.addf %119, %125 : vector<32x64xf32>
    %c7_131 = arith.constant 7 : index
    %c0_132 = arith.constant 0 : index
    %c0_133 = arith.constant 0 : index
    %127 = vector.load %arg7[%c7_131, %c0_132, %c0_133] : memref<9x32x64xf32, #tpu.memory_space<vmem>>, vector<1x32x64xf32>
    %128 = vector.shape_cast %127 : vector<1x32x64xf32> to vector<32x64xf32>
    %cst_134 = arith.constant dense<0.000000e+00> : vector<32x64xf32>
    %129 = tpu.matmul %128, %76, %cst_134 {dimension_numbers = #tpu.dot_dimension_numbers<[1], [0], [0], [1], [0, 0, 1, 1], [], []>} : vector<32x64xf32>, vector<64x64xf32>, vector<32x64xf32> -> vector<32x64xf32>
    %c7_135 = arith.constant 7 : index
    %c0_136 = arith.constant 0 : index
    %c0_137 = arith.constant 0 : index
    %130 = vector.load %arg8[%c7_135, %c0_136, %c0_137] : memref<9x64x64xf32, #tpu.memory_space<vmem>>, vector<1x64x64xf32>
    %131 = vector.shape_cast %130 : vector<1x64x64xf32> to vector<64x64xf32>
    %cst_138 = arith.constant dense<0.000000e+00> : vector<32x64xf32>
    %132 = tpu.matmul %129, %131, %cst_138 {dimension_numbers = #tpu.dot_dimension_numbers<[1], [0], [0], [1], [0, 0, 1, 1], [], []>} : vector<32x64xf32>, vector<64x64xf32>, vector<32x64xf32> -> vector<32x64xf32>
    %133 = arith.addf %126, %132 : vector<32x64xf32>
    %c8_139 = arith.constant 8 : index
    %c0_140 = arith.constant 0 : index
    %c0_141 = arith.constant 0 : index
    %134 = vector.load %arg7[%c8_139, %c0_140, %c0_141] : memref<9x32x64xf32, #tpu.memory_space<vmem>>, vector<1x32x64xf32>
    %135 = vector.shape_cast %134 : vector<1x32x64xf32> to vector<32x64xf32>
    %cst_142 = arith.constant dense<0.000000e+00> : vector<32x64xf32>
    %136 = tpu.matmul %135, %76, %cst_142 {dimension_numbers = #tpu.dot_dimension_numbers<[1], [0], [0], [1], [0, 0, 1, 1], [], []>} : vector<32x64xf32>, vector<64x64xf32>, vector<32x64xf32> -> vector<32x64xf32>
    %c8_143 = arith.constant 8 : index
    %c0_144 = arith.constant 0 : index
    %c0_145 = arith.constant 0 : index
    %137 = vector.load %arg8[%c8_143, %c0_144, %c0_145] : memref<9x64x64xf32, #tpu.memory_space<vmem>>, vector<1x64x64xf32>
    %138 = vector.shape_cast %137 : vector<1x64x64xf32> to vector<64x64xf32>
    %cst_146 = arith.constant dense<0.000000e+00> : vector<32x64xf32>
    %139 = tpu.matmul %136, %138, %cst_146 {dimension_numbers = #tpu.dot_dimension_numbers<[1], [0], [0], [1], [0, 0, 1, 1], [], []>} : vector<32x64xf32>, vector<64x64xf32>, vector<32x64xf32> -> vector<32x64xf32>
    %140 = arith.addf %133, %139 : vector<32x64xf32>
    %c0_147 = arith.constant 0 : index
    %c0_148 = arith.constant 0 : index
    %141 = vector.load %arg9[%c0_147, %c0_148] : memref<1x64xf32, #tpu.memory_space<vmem>>, vector<1x64xf32>
    %142 = vector.broadcast %141 : vector<1x64xf32> to vector<32x64xf32>
    %143 = arith.addf %140, %142 : vector<32x64xf32>
    %cst_149 = arith.constant 0.000000e+00 : f32
    %144 = vector.broadcast %cst_149 : f32 to vector<32x64xf32>
    %145 = arith.maximumf %143, %144 : vector<32x64xf32>
    %cst_150 = arith.constant 0.000000e+00 : f32
    %146 = vector.broadcast %cst_150 : f32 to vector<8x512xf32>
    %c0_151 = arith.constant 0 : index
    %c0_152 = arith.constant 0 : index
    %c0_153 = arith.constant 0 : index
    %147 = vector.load %arg10[%c0_151, %c0_152, %c0_153] : memref<9x8x32xf32, #tpu.memory_space<vmem>>, vector<1x8x32xf32>
    %148 = vector.shape_cast %147 : vector<1x8x32xf32> to vector<8x32xf32>
    %cst_154 = arith.constant dense<0.000000e+00> : vector<8x64xf32>
    %149 = tpu.matmul %148, %145, %cst_154 {dimension_numbers = #tpu.dot_dimension_numbers<[1], [0], [0], [1], [0, 0, 1, 1], [], []>} : vector<8x32xf32>, vector<32x64xf32>, vector<8x64xf32> -> vector<8x64xf32>
    %c0_155 = arith.constant 0 : index
    %c0_156 = arith.constant 0 : index
    %c0_157 = arith.constant 0 : index
    %150 = vector.load %arg11[%c0_155, %c0_156, %c0_157] : memref<9x64x512xf32, #tpu.memory_space<vmem>>, vector<1x64x512xf32>
    %151 = vector.shape_cast %150 : vector<1x64x512xf32> to vector<64x512xf32>
    %cst_158 = arith.constant dense<0.000000e+00> : vector<8x512xf32>
    %152 = tpu.matmul %149, %151, %cst_158 {dimension_numbers = #tpu.dot_dimension_numbers<[1], [0], [0], [1], [0, 0, 1, 1], [], []>} : vector<8x64xf32>, vector<64x512xf32>, vector<8x512xf32> -> vector<8x512xf32>
    %153 = arith.addf %146, %152 : vector<8x512xf32>
    %c1_159 = arith.constant 1 : index
    %c0_160 = arith.constant 0 : index
    %c0_161 = arith.constant 0 : index
    %154 = vector.load %arg10[%c1_159, %c0_160, %c0_161] : memref<9x8x32xf32, #tpu.memory_space<vmem>>, vector<1x8x32xf32>
    %155 = vector.shape_cast %154 : vector<1x8x32xf32> to vector<8x32xf32>
    %cst_162 = arith.constant dense<0.000000e+00> : vector<8x64xf32>
    %156 = tpu.matmul %155, %145, %cst_162 {dimension_numbers = #tpu.dot_dimension_numbers<[1], [0], [0], [1], [0, 0, 1, 1], [], []>} : vector<8x32xf32>, vector<32x64xf32>, vector<8x64xf32> -> vector<8x64xf32>
    %c1_163 = arith.constant 1 : index
    %c0_164 = arith.constant 0 : index
    %c0_165 = arith.constant 0 : index
    %157 = vector.load %arg11[%c1_163, %c0_164, %c0_165] : memref<9x64x512xf32, #tpu.memory_space<vmem>>, vector<1x64x512xf32>
    %158 = vector.shape_cast %157 : vector<1x64x512xf32> to vector<64x512xf32>
    %cst_166 = arith.constant dense<0.000000e+00> : vector<8x512xf32>
    %159 = tpu.matmul %156, %158, %cst_166 {dimension_numbers = #tpu.dot_dimension_numbers<[1], [0], [0], [1], [0, 0, 1, 1], [], []>} : vector<8x64xf32>, vector<64x512xf32>, vector<8x512xf32> -> vector<8x512xf32>
    %160 = arith.addf %153, %159 : vector<8x512xf32>
    %c2_167 = arith.constant 2 : index
    %c0_168 = arith.constant 0 : index
    %c0_169 = arith.constant 0 : index
    %161 = vector.load %arg10[%c2_167, %c0_168, %c0_169] : memref<9x8x32xf32, #tpu.memory_space<vmem>>, vector<1x8x32xf32>
    %162 = vector.shape_cast %161 : vector<1x8x32xf32> to vector<8x32xf32>
    %cst_170 = arith.constant dense<0.000000e+00> : vector<8x64xf32>
    %163 = tpu.matmul %162, %145, %cst_170 {dimension_numbers = #tpu.dot_dimension_numbers<[1], [0], [0], [1], [0, 0, 1, 1], [], []>} : vector<8x32xf32>, vector<32x64xf32>, vector<8x64xf32> -> vector<8x64xf32>
    %c2_171 = arith.constant 2 : index
    %c0_172 = arith.constant 0 : index
    %c0_173 = arith.constant 0 : index
    %164 = vector.load %arg11[%c2_171, %c0_172, %c0_173] : memref<9x64x512xf32, #tpu.memory_space<vmem>>, vector<1x64x512xf32>
    %165 = vector.shape_cast %164 : vector<1x64x512xf32> to vector<64x512xf32>
    %cst_174 = arith.constant dense<0.000000e+00> : vector<8x512xf32>
    %166 = tpu.matmul %163, %165, %cst_174 {dimension_numbers = #tpu.dot_dimension_numbers<[1], [0], [0], [1], [0, 0, 1, 1], [], []>} : vector<8x64xf32>, vector<64x512xf32>, vector<8x512xf32> -> vector<8x512xf32>
    %167 = arith.addf %160, %166 : vector<8x512xf32>
    %c3_175 = arith.constant 3 : index
    %c0_176 = arith.constant 0 : index
    %c0_177 = arith.constant 0 : index
    %168 = vector.load %arg10[%c3_175, %c0_176, %c0_177] : memref<9x8x32xf32, #tpu.memory_space<vmem>>, vector<1x8x32xf32>
    %169 = vector.shape_cast %168 : vector<1x8x32xf32> to vector<8x32xf32>
    %cst_178 = arith.constant dense<0.000000e+00> : vector<8x64xf32>
    %170 = tpu.matmul %169, %145, %cst_178 {dimension_numbers = #tpu.dot_dimension_numbers<[1], [0], [0], [1], [0, 0, 1, 1], [], []>} : vector<8x32xf32>, vector<32x64xf32>, vector<8x64xf32> -> vector<8x64xf32>
    %c3_179 = arith.constant 3 : index
    %c0_180 = arith.constant 0 : index
    %c0_181 = arith.constant 0 : index
    %171 = vector.load %arg11[%c3_179, %c0_180, %c0_181] : memref<9x64x512xf32, #tpu.memory_space<vmem>>, vector<1x64x512xf32>
    %172 = vector.shape_cast %171 : vector<1x64x512xf32> to vector<64x512xf32>
    %cst_182 = arith.constant dense<0.000000e+00> : vector<8x512xf32>
    %173 = tpu.matmul %170, %172, %cst_182 {dimension_numbers = #tpu.dot_dimension_numbers<[1], [0], [0], [1], [0, 0, 1, 1], [], []>} : vector<8x64xf32>, vector<64x512xf32>, vector<8x512xf32> -> vector<8x512xf32>
    %174 = arith.addf %167, %173 : vector<8x512xf32>
    %c4_183 = arith.constant 4 : index
    %c0_184 = arith.constant 0 : index
    %c0_185 = arith.constant 0 : index
    %175 = vector.load %arg10[%c4_183, %c0_184, %c0_185] : memref<9x8x32xf32, #tpu.memory_space<vmem>>, vector<1x8x32xf32>
    %176 = vector.shape_cast %175 : vector<1x8x32xf32> to vector<8x32xf32>
    %cst_186 = arith.constant dense<0.000000e+00> : vector<8x64xf32>
    %177 = tpu.matmul %176, %145, %cst_186 {dimension_numbers = #tpu.dot_dimension_numbers<[1], [0], [0], [1], [0, 0, 1, 1], [], []>} : vector<8x32xf32>, vector<32x64xf32>, vector<8x64xf32> -> vector<8x64xf32>
    %c4_187 = arith.constant 4 : index
    %c0_188 = arith.constant 0 : index
    %c0_189 = arith.constant 0 : index
    %178 = vector.load %arg11[%c4_187, %c0_188, %c0_189] : memref<9x64x512xf32, #tpu.memory_space<vmem>>, vector<1x64x512xf32>
    %179 = vector.shape_cast %178 : vector<1x64x512xf32> to vector<64x512xf32>
    %cst_190 = arith.constant dense<0.000000e+00> : vector<8x512xf32>
    %180 = tpu.matmul %177, %179, %cst_190 {dimension_numbers = #tpu.dot_dimension_numbers<[1], [0], [0], [1], [0, 0, 1, 1], [], []>} : vector<8x64xf32>, vector<64x512xf32>, vector<8x512xf32> -> vector<8x512xf32>
    %181 = arith.addf %174, %180 : vector<8x512xf32>
    %c5_191 = arith.constant 5 : index
    %c0_192 = arith.constant 0 : index
    %c0_193 = arith.constant 0 : index
    %182 = vector.load %arg10[%c5_191, %c0_192, %c0_193] : memref<9x8x32xf32, #tpu.memory_space<vmem>>, vector<1x8x32xf32>
    %183 = vector.shape_cast %182 : vector<1x8x32xf32> to vector<8x32xf32>
    %cst_194 = arith.constant dense<0.000000e+00> : vector<8x64xf32>
    %184 = tpu.matmul %183, %145, %cst_194 {dimension_numbers = #tpu.dot_dimension_numbers<[1], [0], [0], [1], [0, 0, 1, 1], [], []>} : vector<8x32xf32>, vector<32x64xf32>, vector<8x64xf32> -> vector<8x64xf32>
    %c5_195 = arith.constant 5 : index
    %c0_196 = arith.constant 0 : index
    %c0_197 = arith.constant 0 : index
    %185 = vector.load %arg11[%c5_195, %c0_196, %c0_197] : memref<9x64x512xf32, #tpu.memory_space<vmem>>, vector<1x64x512xf32>
    %186 = vector.shape_cast %185 : vector<1x64x512xf32> to vector<64x512xf32>
    %cst_198 = arith.constant dense<0.000000e+00> : vector<8x512xf32>
    %187 = tpu.matmul %184, %186, %cst_198 {dimension_numbers = #tpu.dot_dimension_numbers<[1], [0], [0], [1], [0, 0, 1, 1], [], []>} : vector<8x64xf32>, vector<64x512xf32>, vector<8x512xf32> -> vector<8x512xf32>
    %188 = arith.addf %181, %187 : vector<8x512xf32>
    %c6_199 = arith.constant 6 : index
    %c0_200 = arith.constant 0 : index
    %c0_201 = arith.constant 0 : index
    %189 = vector.load %arg10[%c6_199, %c0_200, %c0_201] : memref<9x8x32xf32, #tpu.memory_space<vmem>>, vector<1x8x32xf32>
    %190 = vector.shape_cast %189 : vector<1x8x32xf32> to vector<8x32xf32>
    %cst_202 = arith.constant dense<0.000000e+00> : vector<8x64xf32>
    %191 = tpu.matmul %190, %145, %cst_202 {dimension_numbers = #tpu.dot_dimension_numbers<[1], [0], [0], [1], [0, 0, 1, 1], [], []>} : vector<8x32xf32>, vector<32x64xf32>, vector<8x64xf32> -> vector<8x64xf32>
    %c6_203 = arith.constant 6 : index
    %c0_204 = arith.constant 0 : index
    %c0_205 = arith.constant 0 : index
    %192 = vector.load %arg11[%c6_203, %c0_204, %c0_205] : memref<9x64x512xf32, #tpu.memory_space<vmem>>, vector<1x64x512xf32>
    %193 = vector.shape_cast %192 : vector<1x64x512xf32> to vector<64x512xf32>
    %cst_206 = arith.constant dense<0.000000e+00> : vector<8x512xf32>
    %194 = tpu.matmul %191, %193, %cst_206 {dimension_numbers = #tpu.dot_dimension_numbers<[1], [0], [0], [1], [0, 0, 1, 1], [], []>} : vector<8x64xf32>, vector<64x512xf32>, vector<8x512xf32> -> vector<8x512xf32>
    %195 = arith.addf %188, %194 : vector<8x512xf32>
    %c7_207 = arith.constant 7 : index
    %c0_208 = arith.constant 0 : index
    %c0_209 = arith.constant 0 : index
    %196 = vector.load %arg10[%c7_207, %c0_208, %c0_209] : memref<9x8x32xf32, #tpu.memory_space<vmem>>, vector<1x8x32xf32>
    %197 = vector.shape_cast %196 : vector<1x8x32xf32> to vector<8x32xf32>
    %cst_210 = arith.constant dense<0.000000e+00> : vector<8x64xf32>
    %198 = tpu.matmul %197, %145, %cst_210 {dimension_numbers = #tpu.dot_dimension_numbers<[1], [0], [0], [1], [0, 0, 1, 1], [], []>} : vector<8x32xf32>, vector<32x64xf32>, vector<8x64xf32> -> vector<8x64xf32>
    %c7_211 = arith.constant 7 : index
    %c0_212 = arith.constant 0 : index
    %c0_213 = arith.constant 0 : index
    %199 = vector.load %arg11[%c7_211, %c0_212, %c0_213] : memref<9x64x512xf32, #tpu.memory_space<vmem>>, vector<1x64x512xf32>
    %200 = vector.shape_cast %199 : vector<1x64x512xf32> to vector<64x512xf32>
    %cst_214 = arith.constant dense<0.000000e+00> : vector<8x512xf32>
    %201 = tpu.matmul %198, %200, %cst_214 {dimension_numbers = #tpu.dot_dimension_numbers<[1], [0], [0], [1], [0, 0, 1, 1], [], []>} : vector<8x64xf32>, vector<64x512xf32>, vector<8x512xf32> -> vector<8x512xf32>
    %202 = arith.addf %195, %201 : vector<8x512xf32>
    %c8_215 = arith.constant 8 : index
    %c0_216 = arith.constant 0 : index
    %c0_217 = arith.constant 0 : index
    %203 = vector.load %arg10[%c8_215, %c0_216, %c0_217] : memref<9x8x32xf32, #tpu.memory_space<vmem>>, vector<1x8x32xf32>
    %204 = vector.shape_cast %203 : vector<1x8x32xf32> to vector<8x32xf32>
    %cst_218 = arith.constant dense<0.000000e+00> : vector<8x64xf32>
    %205 = tpu.matmul %204, %145, %cst_218 {dimension_numbers = #tpu.dot_dimension_numbers<[1], [0], [0], [1], [0, 0, 1, 1], [], []>} : vector<8x32xf32>, vector<32x64xf32>, vector<8x64xf32> -> vector<8x64xf32>
    %c8_219 = arith.constant 8 : index
    %c0_220 = arith.constant 0 : index
    %c0_221 = arith.constant 0 : index
    %206 = vector.load %arg11[%c8_219, %c0_220, %c0_221] : memref<9x64x512xf32, #tpu.memory_space<vmem>>, vector<1x64x512xf32>
    %207 = vector.shape_cast %206 : vector<1x64x512xf32> to vector<64x512xf32>
    %cst_222 = arith.constant dense<0.000000e+00> : vector<8x512xf32>
    %208 = tpu.matmul %205, %207, %cst_222 {dimension_numbers = #tpu.dot_dimension_numbers<[1], [0], [0], [1], [0, 0, 1, 1], [], []>} : vector<8x64xf32>, vector<64x512xf32>, vector<8x512xf32> -> vector<8x512xf32>
    %209 = arith.addf %202, %208 : vector<8x512xf32>
    %c0_223 = arith.constant 0 : index
    %c0_224 = arith.constant 0 : index
    %210 = vector.load %arg12[%c0_223, %c0_224] : memref<1x512xf32, #tpu.memory_space<vmem>>, vector<1x512xf32>
    %211 = vector.broadcast %210 : vector<1x512xf32> to vector<8x512xf32>
    %212 = arith.addf %209, %211 : vector<8x512xf32>
    %cst_225 = arith.constant 0.000000e+00 : f32
    %213 = vector.broadcast %cst_225 : f32 to vector<8x512xf32>
    %214 = arith.maximumf %212, %213 : vector<8x512xf32>
    %c0_226 = arith.constant 0 : index
    %c0_227 = arith.constant 0 : index
    %215 = vector.load %arg13[%c0_226, %c0_227] : memref<512x128xf32, #tpu.memory_space<vmem>>, vector<512x128xf32>
    %cst_228 = arith.constant dense<0.000000e+00> : vector<8x128xf32>
    %216 = tpu.matmul %214, %215, %cst_228 {dimension_numbers = #tpu.dot_dimension_numbers<[1], [0], [0], [1], [0, 0, 1, 1], [], []>} : vector<8x512xf32>, vector<512x128xf32>, vector<8x128xf32> -> vector<8x128xf32>
    %c0_229 = arith.constant 0 : index
    %c0_230 = arith.constant 0 : index
    %217 = vector.load %arg14[%c0_229, %c0_230] : memref<1x128xf32, #tpu.memory_space<vmem>>, vector<1x128xf32>
    %218 = vector.broadcast %217 : vector<1x128xf32> to vector<8x128xf32>
    %219 = arith.addf %216, %218 : vector<8x128xf32>
    %c0_231 = arith.constant 0 : index
    %c0_232 = arith.constant 0 : index
    %220 = vector.load %arg15[%c0_231, %c0_232] : memref<8x128xf32, #tpu.memory_space<vmem>>, vector<8x128xf32>
    tpu.vector_store %arg15[%c0_231, %c0_232], %219 {strides = array<i32>} : memref<8x128xf32, #tpu.memory_space<vmem>>, vector<8x128xf32>,
    return
  }
  func.func @transform_0(%arg0: i32) -> (i32, i32) {
    %c0_i32 = arith.constant 0 : i32
    %c0_i32_0 = arith.constant 0 : i32
    %c0_i32_1 = arith.constant 0 : i32
    return %c0_i32, %c0_i32_0 : i32, i32
  }
  func.func @transform_1(%arg0: i32) -> (i32, i32) {
    %c0_i32 = arith.constant 0 : i32
    %c0_i32_0 = arith.constant 0 : i32
    %c0_i32_1 = arith.constant 0 : i32
    return %c0_i32, %c0_i32_0 : i32, i32
  }
  func.func @transform_2(%arg0: i32) -> (i32, i32) {
    %c0_i32 = arith.constant 0 : i32
    %c0_i32_0 = arith.constant 0 : i32
    %c0_i32_1 = arith.constant 0 : i32
    return %c0_i32, %c0_i32_0 : i32, i32
  }
  func.func @transform_3(%arg0: i32) -> (i32, i32, i32) {
    %c0_i32 = arith.constant 0 : i32
    %c0_i32_0 = arith.constant 0 : i32
    %c0_i32_1 = arith.constant 0 : i32
    %c0_i32_2 = arith.constant 0 : i32
    return %c0_i32, %c0_i32_0, %c0_i32_1 : i32, i32, i32
  }
  func.func @transform_4(%arg0: i32) -> (i32, i32, i32) {
    %c0_i32 = arith.constant 0 : i32
    %c0_i32_0 = arith.constant 0 : i32
    %c0_i32_1 = arith.constant 0 : i32
    %c0_i32_2 = arith.constant 0 : i32
    return %c0_i32, %c0_i32_0, %c0_i32_1 : i32, i32, i32
  }
  func.func @transform_5(%arg0: i32) -> (i32, i32) {
    %c0_i32 = arith.constant 0 : i32
    %c0_i32_0 = arith.constant 0 : i32
    %c0_i32_1 = arith.constant 0 : i32
    return %c0_i32, %c0_i32_0 : i32, i32
  }
  func.func @transform_6(%arg0: i32) -> (i32, i32, i32) {
    %c0_i32 = arith.constant 0 : i32
    %c0_i32_0 = arith.constant 0 : i32
    %c0_i32_1 = arith.constant 0 : i32
    %c0_i32_2 = arith.constant 0 : i32
    return %c0_i32, %c0_i32_0, %c0_i32_1 : i32, i32, i32
  }
  func.func @transform_7(%arg0: i32) -> (i32, i32, i32) {
    %c0_i32 = arith.constant 0 : i32
    %c0_i32_0 = arith.constant 0 : i32
    %c0_i32_1 = arith.constant 0 : i32
    %c0_i32_2 = arith.constant 0 : i32
    return %c0_i32, %c0_i32_0, %c0_i32_1 : i32, i32, i32
  }
  func.func @transform_8(%arg0: i32) -> (i32, i32) {
    %c0_i32 = arith.constant 0 : i32
    %c0_i32_0 = arith.constant 0 : i32
    %c0_i32_1 = arith.constant 0 : i32
    return %c0_i32, %c0_i32_0 : i32, i32
  }
  func.func @transform_9(%arg0: i32) -> (i32, i32, i32) {
    %c0_i32 = arith.constant 0 : i32
    %c0_i32_0 = arith.constant 0 : i32
    %c0_i32_1 = arith.constant 0 : i32
    %c0_i32_2 = arith.constant 0 : i32
    return %c0_i32, %c0_i32_0, %c0_i32_1 : i32, i32, i32
  }
  func.func @transform_10(%arg0: i32) -> (i32, i32, i32) {
    %c0_i32 = arith.constant 0 : i32
    %c0_i32_0 = arith.constant 0 : i32
    %c0_i32_1 = arith.constant 0 : i32
    %c0_i32_2 = arith.constant 0 : i32
    return %c0_i32, %c0_i32_0, %c0_i32_1 : i32, i32, i32
  }
  func.func @transform_11(%arg0: i32) -> (i32, i32) {
    %c0_i32 = arith.constant 0 : i32
    %c0_i32_0 = arith.constant 0 : i32
    %c0_i32_1 = arith.constant 0 : i32
    return %c0_i32, %c0_i32_0 : i32, i32
  }
  func.func @transform_12(%arg0: i32) -> (i32, i32) {
    %c0_i32 = arith.constant 0 : i32
    %c0_i32_0 = arith.constant 0 : i32
    %c0_i32_1 = arith.constant 0 : i32
    return %c0_i32, %c0_i32_0 : i32, i32
  }
  func.func @transform_13(%arg0: i32) -> (i32, i32) {
    %c0_i32 = arith.constant 0 : i32
    %c0_i32_0 = arith.constant 0 : i32
    %c0_i32_1 = arith.constant 0 : i32
    return %c0_i32, %c0_i32_0 : i32, i32
  }
  func.func @transform_14(%arg0: i32) -> (i32, i32) {
    %c0_i32 = arith.constant 0 : i32
    %c0_i32_0 = arith.constant 0 : i32
    %c0_i32_1 = arith.constant 0 : i32
    return %c0_i32, %c0_i32_0 : i32, i32
  }
}

</mosaic_0001>

<llo_original>
// kernel: _behavior_cloning_forward.1
$region0: #{_behavior_cloning_forward.1}
  #allocation0 [shape = 'u32[]', space=smem, size = 0x4, offset = 0x4, fixed_abs, tag = 'smem constant byte address 0x4 - core index']
  #allocation1 [shape = 'u32[144,128]{1,0:T(1,128)}', space=vmem, size = 0x12000, scoped, tag = 'internal scratch']
  %s0 = inlined_call_operand.vmem [shape: f32[112,64], index: 0, kind: input, shape index: {}]
  %s1 = inlined_call_operand.vmem [shape: f32[64,32], index: 1, kind: input, shape index: {}]
  %s2 = inlined_call_operand.vmem [shape: f32[1,32], index: 2, kind: input, shape index: {}]
  %s3 = inlined_call_operand.vmem [shape: f32[9,64,112], index: 3, kind: input, shape index: {}]
  %s4 = inlined_call_operand.vmem [shape: f32[9,32,64], index: 4, kind: input, shape index: {}]
  %s5 = inlined_call_operand.vmem [shape: f32[1,64], index: 5, kind: input, shape index: {}]
  %s6 = inlined_call_operand.vmem [shape: f32[9,32,64], index: 6, kind: input, shape index: {}]
  %s7 = inlined_call_operand.vmem [shape: f32[9,64,64], index: 7, kind: input, shape index: {}]
  %s8 = inlined_call_operand.vmem [shape: f32[1,64], index: 8, kind: input, shape index: {}]
  %s9 = inlined_call_operand.vmem [shape: f32[9,8,32], index: 9, kind: input, shape index: {}]
  %s10 = inlined_call_operand.vmem [shape: f32[9,64,512], index: 10, kind: input, shape index: {}]
  %s11 = inlined_call_operand.vmem [shape: f32[1,512], index: 11, kind: input, shape index: {}]
  %s12 = inlined_call_operand.vmem [shape: f32[512,128], index: 12, kind: input, shape index: {}]
  %s13 = inlined_call_operand.vmem [shape: f32[1,128], index: 13, kind: input, shape index: {}]
  %s14 = inlined_call_operand.vmem [shape: f32[8,128], index: 14, kind: output, shape index: {}]
  %s15 = sld [smem:[#allocation0]]
  $region66: #{_behavior_cloning_forward.1} parent=0
    _
  %s17 = ssub.s32 1, %s15
  %s18 = scalar_select 0, %s17, %s15
  // Predicated region
  $region2: #{_behavior_cloning_forward.1} parent=0 // pred_check
    _
  $region3: #{_behavior_cloning_forward.1} parent=0 // pred_check_branch
    %20 = sbr.rel (0) target = $region5
  $region4: #{_behavior_cloning_forward.1} parent=0 // pred_region
    _
  $region5: #{_behavior_cloning_forward.1} parent=0 // pred_fallthru
    _
  // Predicated region
  $region6: #{_behavior_cloning_forward.1} parent=0 // pred_check
    _
  $region7: #{_behavior_cloning_forward.1} parent=0 // pred_check_branch
    %22 = sbr.rel (0) target = $region9
  $region8: #{_behavior_cloning_forward.1} parent=0 // pred_region
    _
  $region9: #{_behavior_cloning_forward.1} parent=0 // pred_fallthru
    _
  // Predicated region
  $region10: #{_behavior_cloning_forward.1} parent=0 // pred_check
    _
  $region11: #{_behavior_cloning_forward.1} parent=0 // pred_check_branch
    %24 = sbr.rel (0) target = $region13
  $region12: #{_behavior_cloning_forward.1} parent=0 // pred_region
    _
  $region13: #{_behavior_cloning_forward.1} parent=0 // pred_fallthru
    _
  // Predicated region
  $region14: #{_behavior_cloning_forward.1} parent=0 // pred_check
    _
  $region15: #{_behavior_cloning_forward.1} parent=0 // pred_check_branch
    %26 = sbr.rel (0) target = $region17
  $region16: #{_behavior_cloning_forward.1} parent=0 // pred_region
    _
  $region17: #{_behavior_cloning_forward.1} parent=0 // pred_fallthru
    _
  // Predicated region
  $region18: #{_behavior_cloning_forward.1} parent=0 // pred_check
    _
  $region19: #{_behavior_cloning_forward.1} parent=0 // pred_check_branch
    %28 = sbr.rel (0) target = $region21
  $region20: #{_behavior_cloning_forward.1} parent=0 // pred_region
    _
  $region21: #{_behavior_cloning_forward.1} parent=0 // pred_fallthru
    _
  // Predicated region
  $region22: #{_behavior_cloning_forward.1} parent=0 // pred_check
    _
  $region23: #{_behavior_cloning_forward.1} parent=0 // pred_check_branch
    %30 = sbr.rel (0) target = $region25
  $region24: #{_behavior_cloning_forward.1} parent=0 // pred_region
    _
  $region25: #{_behavior_cloning_forward.1} parent=0 // pred_fallthru
    _
  // Predicated region
  $region26: #{_behavior_cloning_forward.1} parent=0 // pred_check
    _
  $region27: #{_behavior_cloning_forward.1} parent=0 // pred_check_branch
    %32 = sbr.rel (0) target = $region29
  $region28: #{_behavior_cloning_forward.1} parent=0 // pred_region
    _
  $region29: #{_behavior_cloning_forward.1} parent=0 // pred_fallthru
    _
  // Predicated region
  $region30: #{_behavior_cloning_forward.1} parent=0 // pred_check
    _
  $region31: #{_behavior_cloning_forward.1} parent=0 // pred_check_branch
    %34 = sbr.rel (0) target = $region33
  $region32: #{_behavior_cloning_forward.1} parent=0 // pred_region
    _
  $region33: #{_behavior_cloning_forward.1} parent=0 // pred_fallthru
    _
  // Predicated region
  $region34: #{_behavior_cloning_forward.1} parent=0 // pred_check
    _
  $region35: #{_behavior_cloning_forward.1} parent=0 // pred_check_branch
    %36 = sbr.rel (0) target = $region37
  $region36: #{_behavior_cloning_forward.1} parent=0 // pred_region
    _
  $region37: #{_behavior_cloning_forward.1} parent=0 // pred_fallthru
    _
  // Predicated region
  $region38: #{_behavior_cloning_forward.1} parent=0 // pred_check
    _
  $region39: #{_behavior_cloning_forward.1} parent=0 // pred_check_branch
    %38 = sbr.rel (0) target = $region41
  $region40: #{_behavior_cloning_forward.1} parent=0 // pred_region
    _
  $region41: #{_behavior_cloning_forward.1} parent=0 // pred_fallthru
    _
  // Predicated region
  $region42: #{_behavior_cloning_forward.1} parent=0 // pred_check
    _
  $region43: #{_behavior_cloning_forward.1} parent=0 // pred_check_branch
    %40 = sbr.rel (0) target = $region45
  $region44: #{_behavior_cloning_forward.1} parent=0 // pred_region
    _
  $region45: #{_behavior_cloning_forward.1} parent=0 // pred_fallthru
    _
  // Predicated region
  $region46: #{_behavior_cloning_forward.1} parent=0 // pred_check
    _
  $region47: #{_behavior_cloning_forward.1} parent=0 // pred_check_branch
    %42 = sbr.rel (0) target = $region49
  $region48: #{_behavior_cloning_forward.1} parent=0 // pred_region
    _
  $region49: #{_behavior_cloning_forward.1} parent=0 // pred_fallthru
    _
  // Predicated region
  $region50: #{_behavior_cloning_forward.1} parent=0 // pred_check
    _
  $region51: #{_behavior_cloning_forward.1} parent=0 // pred_check_branch
    %44 = sbr.rel (0) target = $region53
  $region52: #{_behavior_cloning_forward.1} parent=0 // pred_region
    _
  $region53: #{_behavior_cloning_forward.1} parent=0 // pred_fallthru
    _
  // Predicated region
  $region54: #{_behavior_cloning_forward.1} parent=0 // pred_check
    _
  $region55: #{_behavior_cloning_forward.1} parent=0 // pred_check_branch
    %46 = sbr.rel (0) target = $region57
  $region56: #{_behavior_cloning_forward.1} parent=0 // pred_region
    _
  $region57: #{_behavior_cloning_forward.1} parent=0 // pred_fallthru
    _
  %v47 = vld [vmem:[%s0] sm:$0xff]
  %v48 = vld [vmem:[%s0 + $0x8] sm:$0xff]
  %v49 = vld [vmem:[%s0 + $0x10] sm:$0xff]
  %v50 = vld [vmem:[%s0 + $0x18] sm:$0xff]
  %v51 = vld [vmem:[%s0 + $0x20] sm:$0xff]
  %v52 = vld [vmem:[%s0 + $0x28] sm:$0xff]
  %v53 = vld [vmem:[%s0 + $0x30] sm:$0xff]
  %v54 = vld [vmem:[%s0 + $0x38] sm:$0xff]
  %v55 = vld [vmem:[%s0 + $0x40] sm:$0xff]
  %v56 = vld [vmem:[%s0 + $0x48] sm:$0xff]
  %v57 = vld [vmem:[%s0 + $0x50] sm:$0xff]
  %v58 = vld [vmem:[%s0 + $0x58] sm:$0xff]
  %v59 = vld [vmem:[%s0 + $0x60] sm:$0xff]
  %v60 = vld [vmem:[%s0 + $0x68] sm:$0xff]
  %v61 = vld [vmem:[%s1] sm:$0xff]
  %v62 = vld [vmem:[%s1 + $0x8] sm:$0xff]
  %v63 = vld [vmem:[%s1 + $0x10] sm:$0xff]
  %v64 = vld [vmem:[%s1 + $0x18] sm:$0xff]
  %v65 = vld [vmem:[%s1 + $0x20] sm:$0xff]
  %v66 = vld [vmem:[%s1 + $0x28] sm:$0xff]
  %v67 = vld [vmem:[%s1 + $0x30] sm:$0xff]
  %v68 = vld [vmem:[%s1 + $0x38] sm:$0xff]
  %v69 = vld [vmem:[%s2] sm:$0x1]
  %v71 = vlaneseq
  %v72 = vshrl.u32 %v71, 7
  %v73 = vsub.s32 0, %v72
  %v74 = vrot.slane %v69, %v73
  %vm76 = vcmask 523264
  %v78 = vsel %vm76, %v47, 0
  %v81 = vsel %vm76, %v48, 0
  %v84 = vsel %vm76, %v49, 0
  %v87 = vsel %vm76, %v50, 0
  %v90 = vsel %vm76, %v51, 0
  %v93 = vsel %vm76, %v52, 0
  %v96 = vsel %vm76, %v53, 0
  %v99 = vsel %vm76, %v54, 0
  %v102 = vsel %vm76, %v55, 0
  %v105 = vsel %vm76, %v56, 0
  %v108 = vsel %vm76, %v57, 0
  %v111 = vsel %vm76, %v58, 0
  %v114 = vsel %vm76, %v59, 0
  %v117 = vsel %vm76, %v60, 0
  %119 = vmatprep.subr.mxu0 0.0
  %120 = vmatpush1.msra.mxu0 0.0
  %121 = vmatprep.subr.mxu0 0.0
  %122 = vmatpush1.msra.mxu0 0.0
  %123 = vmatprep.subr.mxu0 0.0
  %124 = vmatpush1.msra.mxu0 0.0
  %125 = vmatprep.subr.mxu0 0.0
  %126 = vmatpush1.msra.mxu0 0.0
  %127 = vmatprep.subr.mxu0 0.0
  %128 = vmatpush1.msra.mxu0 0.0
  %129 = vmatprep.subr.mxu0 0.0
  %130 = vmatpush1.msra.mxu0 0.0
  %131 = vmatprep.subr.mxu0 0.0
  %132 = vmatpush1.msra.mxu0 0.0
  %133 = vmatprep.subr.mxu0 0.0
  %134 = vmatpush1.msra.mxu0 0.0
  %135 = vmatprep.subr.mxu0 0.0
  %136 = vmatpush1.msra.mxu0 %v68
  %137 = vmatprep.subr.mxu0 0.0
  %138 = vmatpush1.msra.mxu0 %v67
  %139 = vmatprep.subr.mxu0 0.0
  %140 = vmatpush1.msra.mxu0 %v66
  %141 = vmatprep.subr.mxu0 0.0
  %142 = vmatpush1.msra.mxu0 %v65
  %143 = vmatprep.subr.mxu0 0.0
  %144 = vmatpush1.msra.mxu0 %v64
  %145 = vmatprep.subr.mxu0 0.0
  %146 = vmatpush1.msra.mxu0 %v63
  %147 = vmatprep.subr.mxu0 0.0
  %148 = vmatpush1.msra.mxu0 %v62
  %149 = vmatprep.subr.mxu0 0.0
  %150 = vmatpush1.msra.mxu0 %v61
  %151 = vmatprep.subr.mxu0 0.0
  %152 = vmatpush2.msra.mxu0 0.0
  %153 = vmatprep.subr.mxu0 0.0
  %154 = vmatpush2.msra.mxu0 0.0
  %155 = vmatprep.subr.mxu0 0.0
  %156 = vmatpush2.msra.mxu0 0.0
  %157 = vmatprep.subr.mxu0 0.0
  %158 = vmatpush2.msra.mxu0 0.0
  %159 = vmatprep.subr.mxu0 0.0
  %160 = vmatpush2.msra.mxu0 0.0
  %161 = vmatprep.subr.mxu0 0.0
  %162 = vmatpush2.msra.mxu0 0.0
  %163 = vmatprep.subr.mxu0 0.0
  %164 = vmatpush2.msra.mxu0 0.0
  %165 = vmatprep.subr.mxu0 0.0
  %166 = vmatpush2.msra.mxu0 0.0
  %167 = vmatprep.subr.mxu0 0.0
  %168 = vmatpush2.msra.mxu0 0.0
  %169 = vmatprep.subr.mxu0 0.0
  %170 = vmatpush2.msra.mxu0 0.0
  %171 = vmatprep.subr.mxu0 0.0
  %172 = vmatpush2.msra.mxu0 0.0
  %173 = vmatprep.subr.mxu0 0.0
  %174 = vmatpush2.msra.mxu0 0.0
  %175 = vmatprep.subr.mxu0 0.0
  %176 = vmatpush2.msra.mxu0 0.0
  %177 = vmatprep.subr.mxu0 0.0
  %178 = vmatpush2.msra.mxu0 0.0
  %179 = vmatprep.subr.mxu0 0.0
  %180 = vmatpush2.msra.mxu0 0.0
  %181 = vmatprep.subr.mxu0 0.0
  %182 = vmatpush2.msra.mxu0 0.0
  %183 = vmatprep.mubr.f32.mxu0 0.0
  %184 = vmatmul.mubr.f32.gmra.mxu0 %v78
  %v185 = vpop.f32.mrf.mxu0
  %v186 = vadd.f32 %v74, %v185
  %v187 = vpop.f32.mrf.mxu0
  %188 = vmatprep.mubr.f32.mxu0 0.0
  %189 = vmatmul.mubr.f32.gmra.mxu0 %v81
  %v190 = vpop.f32.mrf.mxu0
  %v191 = vadd.f32 %v74, %v190
  %v192 = vpop.f32.mrf.mxu0
  %193 = vmatprep.mubr.f32.mxu0 0.0
  %194 = vmatmul.mubr.f32.gmra.mxu0 %v84
  %v195 = vpop.f32.mrf.mxu0
  %v196 = vadd.f32 %v74, %v195
  %v197 = vpop.f32.mrf.mxu0
  %198 = vmatprep.mubr.f32.mxu0 0.0
  %199 = vmatmul.mubr.f32.gmra.mxu0 %v87
  %v200 = vpop.f32.mrf.mxu0
  %v201 = vadd.f32 %v74, %v200
  %v202 = vpop.f32.mrf.mxu0
  %203 = vmatprep.mubr.f32.mxu0 0.0
  %204 = vmatmul.mubr.f32.gmra.mxu0 %v90
  %v205 = vpop.f32.mrf.mxu0
  %v206 = vadd.f32 %v74, %v205
  %v207 = vpop.f32.mrf.mxu0
  %208 = vmatprep.mubr.f32.mxu0 0.0
  %209 = vmatmul.mubr.f32.gmra.mxu0 %v93
  %v210 = vpop.f32.mrf.mxu0
  %v211 = vadd.f32 %v74, %v210
  %v212 = vpop.f32.mrf.mxu0
  %213 = vmatprep.mubr.f32.mxu0 0.0
  %214 = vmatmul.mubr.f32.gmra.mxu0 %v96
  %v215 = vpop.f32.mrf.mxu0
  %v216 = vadd.f32 %v74, %v215
  %v217 = vpop.f32.mrf.mxu0
  %218 = vmatprep.mubr.f32.mxu0 0.0
  %219 = vmatmul.mubr.f32.gmra.mxu0 %v99
  %v220 = vpop.f32.mrf.mxu0
  %v221 = vadd.f32 %v74, %v220
  %v222 = vpop.f32.mrf.mxu0
  %223 = vmatprep.mubr.f32.mxu0 0.0
  %224 = vmatmul.mubr.f32.gmra.mxu0 %v102
  %v225 = vpop.f32.mrf.mxu0
  %v226 = vadd.f32 %v74, %v225
  %v227 = vpop.f32.mrf.mxu0
  %228 = vmatprep.mubr.f32.mxu0 0.0
  %229 = vmatmul.mubr.f32.gmra.mxu0 %v105
  %v230 = vpop.f32.mrf.mxu0
  %v231 = vadd.f32 %v74, %v230
  %v232 = vpop.f32.mrf.mxu0
  %233 = vmatprep.mubr.f32.mxu0 0.0
  %234 = vmatmul.mubr.f32.gmra.mxu0 %v108
  %v235 = vpop.f32.mrf.mxu0
  %v236 = vadd.f32 %v74, %v235
  %v237 = vpop.f32.mrf.mxu0
  %238 = vmatprep.mubr.f32.mxu0 0.0
  %239 = vmatmul.mubr.f32.gmra.mxu0 %v111
  %v240 = vpop.f32.mrf.mxu0
  %v241 = vadd.f32 %v74, %v240
  %v242 = vpop.f32.mrf.mxu0
  %243 = vmatprep.mubr.f32.mxu0 0.0
  %244 = vmatmul.mubr.f32.gmra.mxu0 %v114
  %v245 = vpop.f32.mrf.mxu0
  %v246 = vadd.f32 %v74, %v245
  %v247 = vpop.f32.mrf.mxu0
  %248 = vmatprep.mubr.f32.mxu0 0.0
  %249 = vmatmul.mubr.f32.gmra.mxu0 %v117
  %v250 = vpop.f32.mrf.mxu0
  %v251 = vadd.f32 %v74, %v250
  %v252 = vpop.f32.mrf.mxu0
  %253 = vdwg.mxu0
  %v254 = vmax.f32 %v186, 0.0
  %v255 = vmax.f32 %v191, 0.0
  %v256 = vmax.f32 %v196, 0.0
  %v257 = vmax.f32 %v201, 0.0
  %v258 = vmax.f32 %v206, 0.0
  %v259 = vmax.f32 %v211, 0.0
  %v260 = vmax.f32 %v216, 0.0
  %v261 = vmax.f32 %v221, 0.0
  %v262 = vmax.f32 %v226, 0.0
  %v263 = vmax.f32 %v231, 0.0
  %v264 = vmax.f32 %v236, 0.0
  %v265 = vmax.f32 %v241, 0.0
  %v266 = vmax.f32 %v246, 0.0
  %v267 = vmax.f32 %v251, 0.0
  %v268 = vld [vmem:[%s3] sm:$0xff]
  %v269 = vld [vmem:[%s3 + $0x8] sm:$0xff]
  %v270 = vld [vmem:[%s3 + $0x10] sm:$0xff]
  %v271 = vld [vmem:[%s3 + $0x18] sm:$0xff]
  %v272 = vld [vmem:[%s3 + $0x20] sm:$0xff]
  %v273 = vld [vmem:[%s3 + $0x28] sm:$0xff]
  %v274 = vld [vmem:[%s3 + $0x30] sm:$0xff]
  %v275 = vld [vmem:[%s3 + $0x38] sm:$0xff]
  %vm276 = vcmask 916480
  %v278 = vsel %vm276, %v268, 0
  %v281 = vsel %vm276, %v269, 0
  %v284 = vsel %vm276, %v270, 0
  %v287 = vsel %vm276, %v271, 0
  %v290 = vsel %vm276, %v272, 0
  %v293 = vsel %vm276, %v273, 0
  %v296 = vsel %vm276, %v274, 0
  %v299 = vsel %vm276, %v275, 0
  %301 = vmatprep.subr.mxu0 0.0
  %302 = vmatpush1.msra.mxu0 0.0
  %303 = vmatprep.subr.mxu0 0.0
  %304 = vmatpush1.msra.mxu0 0.0
  %305 = vmatprep.subr.mxu0 0.0
  %306 = vmatpush1.msra.mxu0 %v267
  %307 = vmatprep.subr.mxu0 0.0
  %308 = vmatpush1.msra.mxu0 %v266
  %309 = vmatprep.subr.mxu0 0.0
  %310 = vmatpush1.msra.mxu0 %v265
  %311 = vmatprep.subr.mxu0 0.0
  %312 = vmatpush1.msra.mxu0 %v264
  %313 = vmatprep.subr.mxu0 0.0
  %314 = vmatpush1.msra.mxu0 %v263
  %315 = vmatprep.subr.mxu0 0.0
  %316 = vmatpush1.msra.mxu0 %v262
  %317 = vmatprep.subr.mxu0 0.0
  %318 = vmatpush1.msra.mxu0 %v261
  %319 = vmatprep.subr.mxu0 0.0
  %320 = vmatpush1.msra.mxu0 %v260
  %321 = vmatprep.subr.mxu0 0.0
  %322 = vmatpush1.msra.mxu0 %v259
  %323 = vmatprep.subr.mxu0 0.0
  %324 = vmatpush1.msra.mxu0 %v258
  %325 = vmatprep.subr.mxu0 0.0
  %326 = vmatpush1.msra.mxu0 %v257
  %327 = vmatprep.subr.mxu0 0.0
  %328 = vmatpush1.msra.mxu0 %v256
  %329 = vmatprep.subr.mxu0 0.0
  %330 = vmatpush1.msra.mxu0 %v255
  %331 = vmatprep.subr.mxu0 0.0
  %332 = vmatpush1.msra.mxu0 %v254
  %333 = vmatprep.subr.mxu0 0.0
  %334 = vmatpush2.msra.mxu0 0.0
  %335 = vmatprep.subr.mxu0 0.0
  %336 = vmatpush2.msra.mxu0 0.0
  %337 = vmatprep.subr.mxu0 0.0
  %338 = vmatpush2.msra.mxu0 0.0
  %339 = vmatprep.subr.mxu0 0.0
  %340 = vmatpush2.msra.mxu0 0.0
  %341 = vmatprep.subr.mxu0 0.0
  %342 = vmatpush2.msra.mxu0 0.0
  %343 = vmatprep.subr.mxu0 0.0
  %344 = vmatpush2.msra.mxu0 0.0
  %345 = vmatprep.subr.mxu0 0.0
  %346 = vmatpush2.msra.mxu0 0.0
  %347 = vmatprep.subr.mxu0 0.0
  %348 = vmatpush2.msra.mxu0 0.0
  %349 = vmatprep.subr.mxu0 0.0
  %350 = vmatpush2.msra.mxu0 0.0
  %351 = vmatprep.subr.mxu0 0.0
  %352 = vmatpush2.msra.mxu0 0.0
  %353 = vmatprep.subr.mxu0 0.0
  %354 = vmatpush2.msra.mxu0 0.0
  %355 = vmatprep.subr.mxu0 0.0
  %356 = vmatpush2.msra.mxu0 0.0
  %357 = vmatprep.subr.mxu0 0.0
  %358 = vmatpush2.msra.mxu0 0.0
  %359 = vmatprep.subr.mxu0 0.0
  %360 = vmatpush2.msra.mxu0 0.0
  %361 = vmatprep.subr.mxu0 0.0
  %362 = vmatpush2.msra.mxu0 0.0
  %363 = vmatprep.subr.mxu0 0.0
  %364 = vmatpush2.msra.mxu0 0.0
  %365 = vmatprep.mubr.f32.mxu0 0.0
  %366 = vmatmul.mubr.f32.gmra.mxu0 %v278
  %v367 = vpop.f32.mrf.mxu0
  %v368 = vadd.f32 0.0, %v367
  %v369 = vpop.f32.mrf.mxu0
  %370 = vmatprep.mubr.f32.mxu0 0.0
  %371 = vmatmul.mubr.f32.gmra.mxu0 %v281
  %v372 = vpop.f32.mrf.mxu0
  %v373 = vadd.f32 0.0, %v372
  %v374 = vpop.f32.mrf.mxu0
  %375 = vmatprep.mubr.f32.mxu0 0.0
  %376 = vmatmul.mubr.f32.gmra.mxu0 %v284
  %v377 = vpop.f32.mrf.mxu0
  %v378 = vadd.f32 0.0, %v377
  %v379 = vpop.f32.mrf.mxu0
  %380 = vmatprep.mubr.f32.mxu0 0.0
  %381 = vmatmul.mubr.f32.gmra.mxu0 %v287
  %v382 = vpop.f32.mrf.mxu0
  %v383 = vadd.f32 0.0, %v382
  %v384 = vpop.f32.mrf.mxu0
  %385 = vmatprep.mubr.f32.mxu0 0.0
  %386 = vmatmul.mubr.f32.gmra.mxu0 %v290
  %v387 = vpop.f32.mrf.mxu0
  %v388 = vadd.f32 0.0, %v387
  %v389 = vpop.f32.mrf.mxu0
  %390 = vmatprep.mubr.f32.mxu0 0.0
  %391 = vmatmul.mubr.f32.gmra.mxu0 %v293
  %v392 = vpop.f32.mrf.mxu0
  %v393 = vadd.f32 0.0, %v392
  %v394 = vpop.f32.mrf.mxu0
  %395 = vmatprep.mubr.f32.mxu0 0.0
  %396 = vmatmul.mubr.f32.gmra.mxu0 %v296
  %v397 = vpop.f32.mrf.mxu0
  %v398 = vadd.f32 0.0, %v397
  %v399 = vpop.f32.mrf.mxu0
  %400 = vmatprep.mubr.f32.mxu0 0.0
  %401 = vmatmul.mubr.f32.gmra.mxu0 %v299
  %v402 = vpop.f32.mrf.mxu0
  %v403 = vadd.f32 0.0, %v402
  %v404 = vpop.f32.mrf.mxu0
  %405 = vdwg.mxu0
  %v406 = vld [vmem:[%s4] sm:$0xff]
  %v407 = vld [vmem:[%s4 + $0x8] sm:$0xff]
  %v408 = vld [vmem:[%s4 + $0x10] sm:$0xff]
  %v409 = vld [vmem:[%s4 + $0x18] sm:$0xff]
  %s410 = scalar_lea.vmem %s3, 64
  %v411 = vld [vmem:[%s410] sm:$0xff]
  %v412 = vld [vmem:[%s410 + $0x8] sm:$0xff]
  %v413 = vld [vmem:[%s410 + $0x10] sm:$0xff]
  %v414 = vld [vmem:[%s410 + $0x18] sm:$0xff]
  %v415 = vld [vmem:[%s410 + $0x20] sm:$0xff]
  %v416 = vld [vmem:[%s410 + $0x28] sm:$0xff]
  %v417 = vld [vmem:[%s410 + $0x30] sm:$0xff]
  %v418 = vld [vmem:[%s410 + $0x38] sm:$0xff]
  %v420 = vsel %vm276, %v411, 0
  %v423 = vsel %vm276, %v412, 0
  %v426 = vsel %vm276, %v413, 0
  %v429 = vsel %vm276, %v414, 0
  %v432 = vsel %vm276, %v415, 0
  %v435 = vsel %vm276, %v416, 0
  %v438 = vsel %vm276, %v417, 0
  %v441 = vsel %vm276, %v418, 0
  %443 = vmatprep.subr.mxu0 0.0
  %444 = vmatpush1.msra.mxu0 0.0
  %445 = vmatprep.subr.mxu0 0.0
  %446 = vmatpush1.msra.mxu0 0.0
  %447 = vmatprep.subr.mxu0 0.0
  %448 = vmatpush1.msra.mxu0 %v267
  %449 = vmatprep.subr.mxu0 0.0
  %450 = vmatpush1.msra.mxu0 %v266
  %451 = vmatprep.subr.mxu0 0.0
  %452 = vmatpush1.msra.mxu0 %v265
  %453 = vmatprep.subr.mxu0 0.0
  %454 = vmatpush1.msra.mxu0 %v264
  %455 = vmatprep.subr.mxu0 0.0
  %456 = vmatpush1.msra.mxu0 %v263
  %457 = vmatprep.subr.mxu0 0.0
  %458 = vmatpush1.msra.mxu0 %v262
  %459 = vmatprep.subr.mxu0 0.0
  %460 = vmatpush1.msra.mxu0 %v261
  %461 = vmatprep.subr.mxu0 0.0
  %462 = vmatpush1.msra.mxu0 %v260
  %463 = vmatprep.subr.mxu0 0.0
  %464 = vmatpush1.msra.mxu0 %v259
  %465 = vmatprep.subr.mxu0 0.0
  %466 = vmatpush1.msra.mxu0 %v258
  %467 = vmatprep.subr.mxu0 0.0
  %468 = vmatpush1.msra.mxu0 %v257
  %469 = vmatprep.subr.mxu0 0.0
  %470 = vmatpush1.msra.mxu0 %v256
  %471 = vmatprep.subr.mxu0 0.0
  %472 = vmatpush1.msra.mxu0 %v255
  %473 = vmatprep.subr.mxu0 0.0
  %474 = vmatpush1.msra.mxu0 %v254
  %475 = vmatprep.subr.mxu0 0.0
  %476 = vmatpush2.msra.mxu0 0.0
  %477 = vmatprep.subr.mxu0 0.0
  %478 = vmatpush2.msra.mxu0 0.0
  %479 = vmatprep.subr.mxu0 0.0
  %480 = vmatpush2.msra.mxu0 0.0
  %481 = vmatprep.subr.mxu0 0.0
  %482 = vmatpush2.msra.mxu0 0.0
  %483 = vmatprep.subr.mxu0 0.0
  %484 = vmatpush2.msra.mxu0 0.0
  %485 = vmatprep.subr.mxu0 0.0
  %486 = vmatpush2.msra.mxu0 0.0
  %487 = vmatprep.subr.mxu0 0.0
  %488 = vmatpush2.msra.mxu0 0.0
  %489 = vmatprep.subr.mxu0 0.0
  %490 = vmatpush2.msra.mxu0 0.0
  %491 = vmatprep.subr.mxu0 0.0
  %492 = vmatpush2.msra.mxu0 0.0
  %493 = vmatprep.subr.mxu0 0.0
  %494 = vmatpush2.msra.mxu0 0.0
  %495 = vmatprep.subr.mxu0 0.0
  %496 = vmatpush2.msra.mxu0 0.0
  %497 = vmatprep.subr.mxu0 0.0
  %498 = vmatpush2.msra.mxu0 0.0
  %499 = vmatprep.subr.mxu0 0.0
  %500 = vmatpush2.msra.mxu0 0.0
  %501 = vmatprep.subr.mxu0 0.0
  %502 = vmatpush2.msra.mxu0 0.0
  %503 = vmatprep.subr.mxu0 0.0
  %504 = vmatpush2.msra.mxu0 0.0
  %505 = vmatprep.subr.mxu0 0.0
  %506 = vmatpush2.msra.mxu0 0.0
  %507 = vmatprep.mubr.f32.mxu0 0.0
  %508 = vmatmul.mubr.f32.gmra.mxu0 %v420
  %v509 = vpop.f32.mrf.mxu0
  %v510 = vadd.f32 0.0, %v509
  %v511 = vpop.f32.mrf.mxu0
  %512 = vmatprep.mubr.f32.mxu0 0.0
  %513 = vmatmul.mubr.f32.gmra.mxu0 %v423
  %v514 = vpop.f32.mrf.mxu0
  %v515 = vadd.f32 0.0, %v514
  %v516 = vpop.f32.mrf.mxu0
  %517 = vmatprep.mubr.f32.mxu0 0.0
  %518 = vmatmul.mubr.f32.gmra.mxu0 %v426
  %v519 = vpop.f32.mrf.mxu0
  %v520 = vadd.f32 0.0, %v519
  %v521 = vpop.f32.mrf.mxu0
  %522 = vmatprep.mubr.f32.mxu0 0.0
  %523 = vmatmul.mubr.f32.gmra.mxu0 %v429
  %v524 = vpop.f32.mrf.mxu0
  %v525 = vadd.f32 0.0, %v524
  %v526 = vpop.f32.mrf.mxu0
  %527 = vmatprep.mubr.f32.mxu0 0.0
  %528 = vmatmul.mubr.f32.gmra.mxu0 %v432
  %v529 = vpop.f32.mrf.mxu0
  %v530 = vadd.f32 0.0, %v529
  %v531 = vpop.f32.mrf.mxu0
  %532 = vmatprep.mubr.f32.mxu0 0.0
  %533 = vmatmul.mubr.f32.gmra.mxu0 %v435
  %v534 = vpop.f32.mrf.mxu0
  %v535 = vadd.f32 0.0, %v534
  %v536 = vpop.f32.mrf.mxu0
  %537 = vmatprep.mubr.f32.mxu0 0.0
  %538 = vmatmul.mubr.f32.gmra.mxu0 %v438
  %v539 = vpop.f32.mrf.mxu0
  %v540 = vadd.f32 0.0, %v539
  %v541 = vpop.f32.mrf.mxu0
  %542 = vmatprep.mubr.f32.mxu0 0.0
  %543 = vmatmul.mubr.f32.gmra.mxu0 %v441
  %v544 = vpop.f32.mrf.mxu0
  %v545 = vadd.f32 0.0, %v544
  %v546 = vpop.f32.mrf.mxu0
  %547 = vdwg.mxu0
  %s548 = scalar_lea.vmem %s4, 32
  %v549 = vld [vmem:[%s548] sm:$0xff]
  %v550 = vld [vmem:[%s548 + $0x8] sm:$0xff]
  %v551 = vld [vmem:[%s548 + $0x10] sm:$0xff]
  %v552 = vld [vmem:[%s548 + $0x18] sm:$0xff]
  %vm553 = vcmask 261120
  %v555 = vsel %vm553, %v510, 0
  %v558 = vsel %vm553, %v515, 0
  %v561 = vsel %vm553, %v520, 0
  %v564 = vsel %vm553, %v525, 0
  %v567 = vsel %vm553, %v530, 0
  %v570 = vsel %vm553, %v535, 0
  %v573 = vsel %vm553, %v540, 0
  %v576 = vsel %vm553, %v545, 0
  %578 = vmatprep.subr.mxu0 0.0
  %579 = vmatpush1.msra.mxu0 0.0
  %580 = vmatprep.subr.mxu0 0.0
  %581 = vmatpush1.msra.mxu0 0.0
  %582 = vmatprep.subr.mxu0 0.0
  %583 = vmatpush1.msra.mxu0 0.0
  %584 = vmatprep.subr.mxu0 0.0
  %585 = vmatpush1.msra.mxu0 0.0
  %586 = vmatprep.subr.mxu0 0.0
  %587 = vmatpush1.msra.mxu0 0.0
  %588 = vmatprep.subr.mxu0 0.0
  %589 = vmatpush1.msra.mxu0 0.0
  %590 = vmatprep.subr.mxu0 0.0
  %591 = vmatpush1.msra.mxu0 0.0
  %592 = vmatprep.subr.mxu0 0.0
  %593 = vmatpush1.msra.mxu0 0.0
  %594 = vmatprep.subr.mxu0 0.0
  %595 = vmatpush1.msra.mxu0 0.0
  %596 = vmatprep.subr.mxu0 0.0
  %597 = vmatpush1.msra.mxu0 0.0
  %598 = vmatprep.subr.mxu0 0.0
  %599 = vmatpush1.msra.mxu0 0.0
  %600 = vmatprep.subr.mxu0 0.0
  %601 = vmatpush1.msra.mxu0 0.0
  %602 = vmatprep.subr.mxu0 0.0
  %603 = vmatpush1.msra.mxu0 %v552
  %604 = vmatprep.subr.mxu0 0.0
  %605 = vmatpush1.msra.mxu0 %v551
  %606 = vmatprep.subr.mxu0 0.0
  %607 = vmatpush1.msra.mxu0 %v550
  %608 = vmatprep.subr.mxu0 0.0
  %609 = vmatpush1.msra.mxu0 %v549
  %610 = vmatprep.subr.mxu0 0.0
  %611 = vmatpush2.msra.mxu0 0.0
  %612 = vmatprep.subr.mxu0 0.0
  %613 = vmatpush2.msra.mxu0 0.0
  %614 = vmatprep.subr.mxu0 0.0
  %615 = vmatpush2.msra.mxu0 0.0
  %616 = vmatprep.subr.mxu0 0.0
  %617 = vmatpush2.msra.mxu0 0.0
  %618 = vmatprep.subr.mxu0 0.0
  %619 = vmatpush2.msra.mxu0 0.0
  %620 = vmatprep.subr.mxu0 0.0
  %621 = vmatpush2.msra.mxu0 0.0
  %622 = vmatprep.subr.mxu0 0.0
  %623 = vmatpush2.msra.mxu0 0.0
  %624 = vmatprep.subr.mxu0 0.0
  %625 = vmatpush2.msra.mxu0 0.0
  %626 = vmatprep.subr.mxu0 0.0
  %627 = vmatpush2.msra.mxu0 0.0
  %628 = vmatprep.subr.mxu0 0.0
  %629 = vmatpush2.msra.mxu0 0.0
  %630 = vmatprep.subr.mxu0 0.0
  %631 = vmatpush2.msra.mxu0 0.0
  %632 = vmatprep.subr.mxu0 0.0
  %633 = vmatpush2.msra.mxu0 0.0
  %634 = vmatprep.subr.mxu0 0.0
  %635 = vmatpush2.msra.mxu0 0.0
  %636 = vmatprep.subr.mxu0 0.0
  %637 = vmatpush2.msra.mxu0 0.0
  %638 = vmatprep.subr.mxu0 0.0
  %639 = vmatpush2.msra.mxu0 0.0
  %640 = vmatprep.subr.mxu0 0.0
  %641 = vmatpush2.msra.mxu0 0.0
  %642 = vmatprep.mubr.f32.mxu0 0.0
  %643 = vmatmul.mubr.f32.gmra.mxu0 %v555
  %v644 = vpop.f32.mrf.mxu0
  %v645 = vadd.f32 0.0, %v644
  %v646 = vpop.f32.mrf.mxu0
  %647 = vmatprep.mubr.f32.mxu0 0.0
  %648 = vmatmul.mubr.f32.gmra.mxu0 %v558
  %v649 = vpop.f32.mrf.mxu0
  %v650 = vadd.f32 0.0, %v649
  %v651 = vpop.f32.mrf.mxu0
  %652 = vmatprep.mubr.f32.mxu0 0.0
  %653 = vmatmul.mubr.f32.gmra.mxu0 %v561
  %v654 = vpop.f32.mrf.mxu0
  %v655 = vadd.f32 0.0, %v654
  %v656 = vpop.f32.mrf.mxu0
  %657 = vmatprep.mubr.f32.mxu0 0.0
  %658 = vmatmul.mubr.f32.gmra.mxu0 %v564
  %v659 = vpop.f32.mrf.mxu0
  %v660 = vadd.f32 0.0, %v659
  %v661 = vpop.f32.mrf.mxu0
  %662 = vmatprep.mubr.f32.mxu0 0.0
  %663 = vmatmul.mubr.f32.gmra.mxu0 %v567
  %v664 = vpop.f32.mrf.mxu0
  %v665 = vadd.f32 0.0, %v664
  %v666 = vpop.f32.mrf.mxu0
  %667 = vmatprep.mubr.f32.mxu0 0.0
  %668 = vmatmul.mubr.f32.gmra.mxu0 %v570
  %v669 = vpop.f32.mrf.mxu0
  %v670 = vadd.f32 0.0, %v669
  %v671 = vpop.f32.mrf.mxu0
  %672 = vmatprep.mubr.f32.mxu0 0.0
  %673 = vmatmul.mubr.f32.gmra.mxu0 %v573
  %v674 = vpop.f32.mrf.mxu0
  %v675 = vadd.f32 0.0, %v674
  %v676 = vpop.f32.mrf.mxu0
  %677 = vmatprep.mubr.f32.mxu0 0.0
  %678 = vmatmul.mubr.f32.gmra.mxu0 %v576
  %v679 = vpop.f32.mrf.mxu0
  %v680 = vadd.f32 0.0, %v679
  %v681 = vpop.f32.mrf.mxu0
  %682 = vdwg.mxu0
  %v684 = vsel %vm553, %v368, 0
  %v687 = vsel %vm553, %v373, 0
  %v690 = vsel %vm553, %v378, 0
  %v693 = vsel %vm553, %v383, 0
  %v696 = vsel %vm553, %v388, 0
  %v699 = vsel %vm553, %v393, 0
  %v702 = vsel %vm553, %v398, 0
  %v705 = vsel %vm553, %v403, 0
  %707 = vmatprep.subr.mxu0 0.0
  %708 = vmatpush1.msra.mxu0 0.0
  %709 = vmatprep.subr.mxu0 0.0
  %710 = vmatpush1.msra.mxu0 0.0
  %711 = vmatprep.subr.mxu0 0.0
  %712 = vmatpush1.msra.mxu0 0.0
  %713 = vmatprep.subr.mxu0 0.0
  %714 = vmatpush1.msra.mxu0 0.0
  %715 = vmatprep.subr.mxu0 0.0
  %716 = vmatpush1.msra.mxu0 0.0
  %717 = vmatprep.subr.mxu0 0.0
  %718 = vmatpush1.msra.mxu0 0.0
  %719 = vmatprep.subr.mxu0 0.0
  %720 = vmatpush1.msra.mxu0 0.0
  %721 = vmatprep.subr.mxu0 0.0
  %722 = vmatpush1.msra.mxu0 0.0
  %723 = vmatprep.subr.mxu0 0.0
  %724 = vmatpush1.msra.mxu0 0.0
  %725 = vmatprep.subr.mxu0 0.0
  %726 = vmatpush1.msra.mxu0 0.0
  %727 = vmatprep.subr.mxu0 0.0
  %728 = vmatpush1.msra.mxu0 0.0
  %729 = vmatprep.subr.mxu0 0.0
  %730 = vmatpush1.msra.mxu0 0.0
  %731 = vmatprep.subr.mxu0 0.0
  %732 = vmatpush1.msra.mxu0 %v409
  %733 = vmatprep.subr.mxu0 0.0
  %734 = vmatpush1.msra.mxu0 %v408
  %735 = vmatprep.subr.mxu0 0.0
  %736 = vmatpush1.msra.mxu0 %v407
  %737 = vmatprep.subr.mxu0 0.0
  %738 = vmatpush1.msra.mxu0 %v406
  %739 = vmatprep.subr.mxu0 0.0
  %740 = vmatpush2.msra.mxu0 0.0
  %741 = vmatprep.subr.mxu0 0.0
  %742 = vmatpush2.msra.mxu0 0.0
  %743 = vmatprep.subr.mxu0 0.0
  %744 = vmatpush2.msra.mxu0 0.0
  %745 = vmatprep.subr.mxu0 0.0
  %746 = vmatpush2.msra.mxu0 0.0
  %747 = vmatprep.subr.mxu0 0.0
  %748 = vmatpush2.msra.mxu0 0.0
  %749 = vmatprep.subr.mxu0 0.0
  %750 = vmatpush2.msra.mxu0 0.0
  %751 = vmatprep.subr.mxu0 0.0
  %752 = vmatpush2.msra.mxu0 0.0
  %753 = vmatprep.subr.mxu0 0.0
  %754 = vmatpush2.msra.mxu0 0.0
  %755 = vmatprep.subr.mxu0 0.0
  %756 = vmatpush2.msra.mxu0 0.0
  %757 = vmatprep.subr.mxu0 0.0
  %758 = vmatpush2.msra.mxu0 0.0
  %759 = vmatprep.subr.mxu0 0.0
  %760 = vmatpush2.msra.mxu0 0.0
  %761 = vmatprep.subr.mxu0 0.0
  %762 = vmatpush2.msra.mxu0 0.0
  %763 = vmatprep.subr.mxu0 0.0
  %764 = vmatpush2.msra.mxu0 0.0
  %765 = vmatprep.subr.mxu0 0.0
  %766 = vmatpush2.msra.mxu0 0.0
  %767 = vmatprep.subr.mxu0 0.0
  %768 = vmatpush2.msra.mxu0 0.0
  %769 = vmatprep.subr.mxu0 0.0
  %770 = vmatpush2.msra.mxu0 0.0
  %771 = vmatprep.mubr.f32.mxu0 0.0
  %772 = vmatmul.mubr.f32.gmra.mxu0 %v684
  %v773 = vpop.f32.mrf.mxu0
  %v774 = vadd.f32 %v645, %v773
  %v775 = vpop.f32.mrf.mxu0
  %776 = vmatprep.mubr.f32.mxu0 0.0
  %777 = vmatmul.mubr.f32.gmra.mxu0 %v687
  %v778 = vpop.f32.mrf.mxu0
  %v779 = vadd.f32 %v650, %v778
  %v780 = vpop.f32.mrf.mxu0
  %781 = vmatprep.mubr.f32.mxu0 0.0
  %782 = vmatmul.mubr.f32.gmra.mxu0 %v690
  %v783 = vpop.f32.mrf.mxu0
  %v784 = vadd.f32 %v655, %v783
  %v785 = vpop.f32.mrf.mxu0
  %786 = vmatprep.mubr.f32.mxu0 0.0
  %787 = vmatmul.mubr.f32.gmra.mxu0 %v693
  %v788 = vpop.f32.mrf.mxu0
  %v789 = vadd.f32 %v660, %v788
  %v790 = vpop.f32.mrf.mxu0
  %791 = vmatprep.mubr.f32.mxu0 0.0
  %792 = vmatmul.mubr.f32.gmra.mxu0 %v696
  %v793 = vpop.f32.mrf.mxu0
  %v794 = vadd.f32 %v665, %v793
  %v795 = vpop.f32.mrf.mxu0
  %796 = vmatprep.mubr.f32.mxu0 0.0
  %797 = vmatmul.mubr.f32.gmra.mxu0 %v699
  %v798 = vpop.f32.mrf.mxu0
  %v799 = vadd.f32 %v670, %v798
  %v800 = vpop.f32.mrf.mxu0
  %801 = vmatprep.mubr.f32.mxu0 0.0
  %802 = vmatmul.mubr.f32.gmra.mxu0 %v702
  %v803 = vpop.f32.mrf.mxu0
  %v804 = vadd.f32 %v675, %v803
  %v805 = vpop.f32.mrf.mxu0
  %806 = vmatprep.mubr.f32.mxu0 0.0
  %807 = vmatmul.mubr.f32.gmra.mxu0 %v705
  %v808 = vpop.f32.mrf.mxu0
  %v809 = vadd.f32 %v680, %v808
  %v810 = vpop.f32.mrf.mxu0
  %811 = vdwg.mxu0
  %s812 = scalar_lea.vmem %s3, 128
  %v813 = vld [vmem:[%s812] sm:$0xff]
  %v814 = vld [vmem:[%s812 + $0x8] sm:$0xff]
  %v815 = vld [vmem:[%s812 + $0x10] sm:$0xff]
  %v816 = vld [vmem:[%s812 + $0x18] sm:$0xff]
  %v817 = vld [vmem:[%s812 + $0x20] sm:$0xff]
  %v818 = vld [vmem:[%s812 + $0x28] sm:$0xff]
  %v819 = vld [vmem:[%s812 + $0x30] sm:$0xff]
  %v820 = vld [vmem:[%s812 + $0x38] sm:$0xff]
  %v822 = vsel %vm276, %v813, 0
  %v825 = vsel %vm276, %v814, 0
  %v828 = vsel %vm276, %v815, 0
  %v831 = vsel %vm276, %v816, 0
  %v834 = vsel %vm276, %v817, 0
  %v837 = vsel %vm276, %v818, 0
  %v840 = vsel %vm276, %v819, 0
  %v843 = vsel %vm276, %v820, 0
  %845 = vmatprep.subr.mxu0 0.0
  %846 = vmatpush1.msra.mxu0 0.0
  %847 = vmatprep.subr.mxu0 0.0
  %848 = vmatpush1.msra.mxu0 0.0
  %849 = vmatprep.subr.mxu0 0.0
  %850 = vmatpush1.msra.mxu0 %v267
  %851 = vmatprep.subr.mxu0 0.0
  %852 = vmatpush1.msra.mxu0 %v266
  %853 = vmatprep.subr.mxu0 0.0
  %854 = vmatpush1.msra.mxu0 %v265
  %855 = vmatprep.subr.mxu0 0.0
  %856 = vmatpush1.msra.mxu0 %v264
  %857 = vmatprep.subr.mxu0 0.0
  %858 = vmatpush1.msra.mxu0 %v263
  %859 = vmatprep.subr.mxu0 0.0
  %860 = vmatpush1.msra.mxu0 %v262
  %861 = vmatprep.subr.mxu0 0.0
  %862 = vmatpush1.msra.mxu0 %v261
  %863 = vmatprep.subr.mxu0 0.0
  %864 = vmatpush1.msra.mxu0 %v260
  %865 = vmatprep.subr.mxu0 0.0
  %866 = vmatpush1.msra.mxu0 %v259
  %867 = vmatprep.subr.mxu0 0.0
  %868 = vmatpush1.msra.mxu0 %v258
  %869 = vmatprep.subr.mxu0 0.0
  %870 = vmatpush1.msra.mxu0 %v257
  %871 = vmatprep.subr.mxu0 0.0
  %872 = vmatpush1.msra.mxu0 %v256
  %873 = vmatprep.subr.mxu0 0.0
  %874 = vmatpush1.msra.mxu0 %v255
  %875 = vmatprep.subr.mxu0 0.0
  %876 = vmatpush1.msra.mxu0 %v254
  %877 = vmatprep.subr.mxu0 0.0
  %878 = vmatpush2.msra.mxu0 0.0
  %879 = vmatprep.subr.mxu0 0.0
  %880 = vmatpush2.msra.mxu0 0.0
  %881 = vmatprep.subr.mxu0 0.0
  %882 = vmatpush2.msra.mxu0 0.0
  %883 = vmatprep.subr.mxu0 0.0
  %884 = vmatpush2.msra.mxu0 0.0
  %885 = vmatprep.subr.mxu0 0.0
  %886 = vmatpush2.msra.mxu0 0.0
  %887 = vmatprep.subr.mxu0 0.0
  %888 = vmatpush2.msra.mxu0 0.0
  %889 = vmatprep.subr.mxu0 0.0
  %890 = vmatpush2.msra.mxu0 0.0
  %891 = vmatprep.subr.mxu0 0.0
  %892 = vmatpush2.msra.mxu0 0.0
  %893 = vmatprep.subr.mxu0 0.0
  %894 = vmatpush2.msra.mxu0 0.0
  %895 = vmatprep.subr.mxu0 0.0
  %896 = vmatpush2.msra.mxu0 0.0
  %897 = vmatprep.subr.mxu0 0.0
  %898 = vmatpush2.msra.mxu0 0.0
  %899 = vmatprep.subr.mxu0 0.0
  %900 = vmatpush2.msra.mxu0 0.0
  %901 = vmatprep.subr.mxu0 0.0
  %902 = vmatpush2.msra.mxu0 0.0
  %903 = vmatprep.subr.mxu0 0.0
  %904 = vmatpush2.msra.mxu0 0.0
  %905 = vmatprep.subr.mxu0 0.0
  %906 = vmatpush2.msra.mxu0 0.0
  %907 = vmatprep.subr.mxu0 0.0
  %908 = vmatpush2.msra.mxu0 0.0
  %909 = vmatprep.mubr.f32.mxu0 0.0
  %910 = vmatmul.mubr.f32.gmra.mxu0 %v822
  %v911 = vpop.f32.mrf.mxu0
  %v912 = vadd.f32 0.0, %v911
  %v913 = vpop.f32.mrf.mxu0
  %914 = vmatprep.mubr.f32.mxu0 0.0
  %915 = vmatmul.mubr.f32.gmra.mxu0 %v825
  %v916 = vpop.f32.mrf.mxu0
  %v917 = vadd.f32 0.0, %v916
  %v918 = vpop.f32.mrf.mxu0
  %919 = vmatprep.mubr.f32.mxu0 0.0
  %920 = vmatmul.mubr.f32.gmra.mxu0 %v828
  %v921 = vpop.f32.mrf.mxu0
  %v922 = vadd.f32 0.0, %v921
  %v923 = vpop.f32.mrf.mxu0
  %924 = vmatprep.mubr.f32.mxu0 0.0
  %925 = vmatmul.mubr.f32.gmra.mxu0 %v831
  %v926 = vpop.f32.mrf.mxu0
  %v927 = vadd.f32 0.0, %v926
  %v928 = vpop.f32.mrf.mxu0
  %929 = vmatprep.mubr.f32.mxu0 0.0
  %930 = vmatmul.mubr.f32.gmra.mxu0 %v834
  %v931 = vpop.f32.mrf.mxu0
  %v932 = vadd.f32 0.0, %v931
  %v933 = vpop.f32.mrf.mxu0
  %934 = vmatprep.mubr.f32.mxu0 0.0
  %935 = vmatmul.mubr.f32.gmra.mxu0 %v837
  %v936 = vpop.f32.mrf.mxu0
  %v937 = vadd.f32 0.0, %v936
  %v938 = vpop.f32.mrf.mxu0
  %939 = vmatprep.mubr.f32.mxu0 0.0
  %940 = vmatmul.mubr.f32.gmra.mxu0 %v840
  %v941 = vpop.f32.mrf.mxu0
  %v942 = vadd.f32 0.0, %v941
  %v943 = vpop.f32.mrf.mxu0
  %944 = vmatprep.mubr.f32.mxu0 0.0
  %945 = vmatmul.mubr.f32.gmra.mxu0 %v843
  %v946 = vpop.f32.mrf.mxu0
  %v947 = vadd.f32 0.0, %v946
  %v948 = vpop.f32.mrf.mxu0
  %949 = vdwg.mxu0
  %s950 = scalar_lea.vmem %s4, 64
  %v951 = vld [vmem:[%s950] sm:$0xff]
  %v952 = vld [vmem:[%s950 + $0x8] sm:$0xff]
  %v953 = vld [vmem:[%s950 + $0x10] sm:$0xff]
  %v954 = vld [vmem:[%s950 + $0x18] sm:$0xff]
  %v956 = vsel %vm553, %v912, 0
  %v959 = vsel %vm553, %v917, 0
  %v962 = vsel %vm553, %v922, 0
  %v965 = vsel %vm553, %v927, 0
  %v968 = vsel %vm553, %v932, 0
  %v971 = vsel %vm553, %v937, 0
  %v974 = vsel %vm553, %v942, 0
  %v977 = vsel %vm553, %v947, 0
  %979 = vmatprep.subr.mxu0 0.0
  %980 = vmatpush1.msra.mxu0 0.0
  %981 = vmatprep.subr.mxu0 0.0
  %982 = vmatpush1.msra.mxu0 0.0
  %983 = vmatprep.subr.mxu0 0.0
  %984 = vmatpush1.msra.mxu0 0.0
  %985 = vmatprep.subr.mxu0 0.0
  %986 = vmatpush1.msra.mxu0 0.0
  %987 = vmatprep.subr.mxu0 0.0
  %988 = vmatpush1.msra.mxu0 0.0
  %989 = vmatprep.subr.mxu0 0.0
  %990 = vmatpush1.msra.mxu0 0.0
  %991 = vmatprep.subr.mxu0 0.0
  %992 = vmatpush1.msra.mxu0 0.0
  %993 = vmatprep.subr.mxu0 0.0
  %994 = vmatpush1.msra.mxu0 0.0
  %995 = vmatprep.subr.mxu0 0.0
  %996 = vmatpush1.msra.mxu0 0.0
  %997 = vmatprep.subr.mxu0 0.0
  %998 = vmatpush1.msra.mxu0 0.0
  %999 = vmatprep.subr.mxu0 0.0
  %1000 = vmatpush1.msra.mxu0 0.0
  %1001 = vmatprep.subr.mxu0 0.0
  %1002 = vmatpush1.msra.mxu0 0.0
  %1003 = vmatprep.subr.mxu0 0.0
  %1004 = vmatpush1.msra.mxu0 %v954
  %1005 = vmatprep.subr.mxu0 0.0
  %1006 = vmatpush1.msra.mxu0 %v953
  %1007 = vmatprep.subr.mxu0 0.0
  %1008 = vmatpush1.msra.mxu0 %v952
  %1009 = vmatprep.subr.mxu0 0.0
  %1010 = vmatpush1.msra.mxu0 %v951
  %1011 = vmatprep.subr.mxu0 0.0
  %1012 = vmatpush2.msra.mxu0 0.0
  %1013 = vmatprep.subr.mxu0 0.0
  %1014 = vmatpush2.msra.mxu0 0.0
  %1015 = vmatprep.subr.mxu0 0.0
  %1016 = vmatpush2.msra.mxu0 0.0
  %1017 = vmatprep.subr.mxu0 0.0
  %1018 = vmatpush2.msra.mxu0 0.0
  %1019 = vmatprep.subr.mxu0 0.0
  %1020 = vmatpush2.msra.mxu0 0.0
  %1021 = vmatprep.subr.mxu0 0.0
  %1022 = vmatpush2.msra.mxu0 0.0
  %1023 = vmatprep.subr.mxu0 0.0
  %1024 = vmatpush2.msra.mxu0 0.0
  %1025 = vmatprep.subr.mxu0 0.0
  %1026 = vmatpush2.msra.mxu0 0.0
  %1027 = vmatprep.subr.mxu0 0.0
  %1028 = vmatpush2.msra.mxu0 0.0
  %1029 = vmatprep.subr.mxu0 0.0
  %1030 = vmatpush2.msra.mxu0 0.0
  %1031 = vmatprep.subr.mxu0 0.0
  %1032 = vmatpush2.msra.mxu0 0.0
  %1033 = vmatprep.subr.mxu0 0.0
  %1034 = vmatpush2.msra.mxu0 0.0
  %1035 = vmatprep.subr.mxu0 0.0
  %1036 = vmatpush2.msra.mxu0 0.0
  %1037 = vmatprep.subr.mxu0 0.0
  %1038 = vmatpush2.msra.mxu0 0.0
  %1039 = vmatprep.subr.mxu0 0.0
  %1040 = vmatpush2.msra.mxu0 0.0
  %1041 = vmatprep.subr.mxu0 0.0
  %1042 = vmatpush2.msra.mxu0 0.0
  %1043 = vmatprep.mubr.f32.mxu0 0.0
  %1044 = vmatmul.mubr.f32.gmra.mxu0 %v956
  %v1045 = vpop.f32.mrf.mxu0
  %v1046 = vadd.f32 0.0, %v1045
  %v1047 = vpop.f32.mrf.mxu0
  %1048 = vmatprep.mubr.f32.mxu0 0.0
  %1049 = vmatmul.mubr.f32.gmra.mxu0 %v959
  %v1050 = vpop.f32.mrf.mxu0
  %v1051 = vadd.f32 0.0, %v1050
  %v1052 = vpop.f32.mrf.mxu0
  %1053 = vmatprep.mubr.f32.mxu0 0.0
  %1054 = vmatmul.mubr.f32.gmra.mxu0 %v962
  %v1055 = vpop.f32.mrf.mxu0
  %v1056 = vadd.f32 0.0, %v1055
  %v1057 = vpop.f32.mrf.mxu0
  %1058 = vmatprep.mubr.f32.mxu0 0.0
  %1059 = vmatmul.mubr.f32.gmra.mxu0 %v965
  %v1060 = vpop.f32.mrf.mxu0
  %v1061 = vadd.f32 0.0, %v1060
  %v1062 = vpop.f32.mrf.mxu0
  %1063 = vmatprep.mubr.f32.mxu0 0.0
  %1064 = vmatmul.mubr.f32.gmra.mxu0 %v968
  %v1065 = vpop.f32.mrf.mxu0
  %v1066 = vadd.f32 0.0, %v1065
  %v1067 = vpop.f32.mrf.mxu0
  %1068 = vmatprep.mubr.f32.mxu0 0.0
  %1069 = vmatmul.mubr.f32.gmra.mxu0 %v971
  %v1070 = vpop.f32.mrf.mxu0
  %v1071 = vadd.f32 0.0, %v1070
  %v1072 = vpop.f32.mrf.mxu0
  %1073 = vmatprep.mubr.f32.mxu0 0.0
  %1074 = vmatmul.mubr.f32.gmra.mxu0 %v974
  %v1075 = vpop.f32.mrf.mxu0
  %v1076 = vadd.f32 0.0, %v1075
  %v1077 = vpop.f32.mrf.mxu0
  %1078 = vmatprep.mubr.f32.mxu0 0.0
  %1079 = vmatmul.mubr.f32.gmra.mxu0 %v977
  %v1080 = vpop.f32.mrf.mxu0
  %v1081 = vadd.f32 0.0, %v1080
  %v1082 = vpop.f32.mrf.mxu0
  %1083 = vdwg.mxu0
  %v1084 = vadd.f32 %v774, %v1046
  %v1085 = vadd.f32 %v779, %v1051
  %v1086 = vadd.f32 %v784, %v1056
  %v1087 = vadd.f32 %v789, %v1061
  %v1088 = vadd.f32 %v794, %v1066
  %v1089 = vadd.f32 %v799, %v1071
  %v1090 = vadd.f32 %v804, %v1076
  %v1091 = vadd.f32 %v809, %v1081
  %s1092 = scalar_lea.vmem %s3, 192
  %v1093 = vld [vmem:[%s1092] sm:$0xff]
  %v1094 = vld [vmem:[%s1092 + $0x8] sm:$0xff]
  %v1095 = vld [vmem:[%s1092 + $0x10] sm:$0xff]
  %v1096 = vld [vmem:[%s1092 + $0x18] sm:$0xff]
  %v1097 = vld [vmem:[%s1092 + $0x20] sm:$0xff]
  %v1098 = vld [vmem:[%s1092 + $0x28] sm:$0xff]
  %v1099 = vld [vmem:[%s1092 + $0x30] sm:$0xff]
  %v1100 = vld [vmem:[%s1092 + $0x38] sm:$0xff]
  %v1102 = vsel %vm276, %v1093, 0
  %v1105 = vsel %vm276, %v1094, 0
  %v1108 = vsel %vm276, %v1095, 0
  %v1111 = vsel %vm276, %v1096, 0
  %v1114 = vsel %vm276, %v1097, 0
  %v1117 = vsel %vm276, %v1098, 0
  %v1120 = vsel %vm276, %v1099, 0
  %v1123 = vsel %vm276, %v1100, 0
  %1125 = vmatprep.subr.mxu0 0.0
  %1126 = vmatpush1.msra.mxu0 0.0
  %1127 = vmatprep.subr.mxu0 0.0
  %1128 = vmatpush1.msra.mxu0 0.0
  %1129 = vmatprep.subr.mxu0 0.0
  %1130 = vmatpush1.msra.mxu0 %v267
  %1131 = vmatprep.subr.mxu0 0.0
  %1132 = vmatpush1.msra.mxu0 %v266
  %1133 = vmatprep.subr.mxu0 0.0
  %1134 = vmatpush1.msra.mxu0 %v265
  %1135 = vmatprep.subr.mxu0 0.0
  %1136 = vmatpush1.msra.mxu0 %v264
  %1137 = vmatprep.subr.mxu0 0.0
  %1138 = vmatpush1.msra.mxu0 %v263
  %1139 = vmatprep.subr.mxu0 0.0
  %1140 = vmatpush1.msra.mxu0 %v262
  %1141 = vmatprep.subr.mxu0 0.0
  %1142 = vmatpush1.msra.mxu0 %v261
  %1143 = vmatprep.subr.mxu0 0.0
  %1144 = vmatpush1.msra.mxu0 %v260
  %1145 = vmatprep.subr.mxu0 0.0
  %1146 = vmatpush1.msra.mxu0 %v259
  %1147 = vmatprep.subr.mxu0 0.0
  %1148 = vmatpush1.msra.mxu0 %v258
  %1149 = vmatprep.subr.mxu0 0.0
  %1150 = vmatpush1.msra.mxu0 %v257
  %1151 = vmatprep.subr.mxu0 0.0
  %1152 = vmatpush1.msra.mxu0 %v256
  %1153 = vmatprep.subr.mxu0 0.0
  %1154 = vmatpush1.msra.mxu0 %v255
  %1155 = vmatprep.subr.mxu0 0.0
  %1156 = vmatpush1.msra.mxu0 %v254
  %1157 = vmatprep.subr.mxu0 0.0
  %1158 = vmatpush2.msra.mxu0 0.0
  %1159 = vmatprep.subr.mxu0 0.0
  %1160 = vmatpush2.msra.mxu0 0.0
  %1161 = vmatprep.subr.mxu0 0.0
  %1162 = vmatpush2.msra.mxu0 0.0
  %1163 = vmatprep.subr.mxu0 0.0
  %1164 = vmatpush2.msra.mxu0 0.0
  %1165 = vmatprep.subr.mxu0 0.0
  %1166 = vmatpush2.msra.mxu0 0.0
  %1167 = vmatprep.subr.mxu0 0.0
  %1168 = vmatpush2.msra.mxu0 0.0
  %1169 = vmatprep.subr.mxu0 0.0
  %1170 = vmatpush2.msra.mxu0 0.0
  %1171 = vmatprep.subr.mxu0 0.0
  %1172 = vmatpush2.msra.mxu0 0.0
  %1173 = vmatprep.subr.mxu0 0.0
  %1174 = vmatpush2.msra.mxu0 0.0
  %1175 = vmatprep.subr.mxu0 0.0
  %1176 = vmatpush2.msra.mxu0 0.0
  %1177 = vmatprep.subr.mxu0 0.0
  %1178 = vmatpush2.msra.mxu0 0.0
  %1179 = vmatprep.subr.mxu0 0.0
  %1180 = vmatpush2.msra.mxu0 0.0
  %1181 = vmatprep.subr.mxu0 0.0
  %1182 = vmatpush2.msra.mxu0 0.0
  %1183 = vmatprep.subr.mxu0 0.0
  %1184 = vmatpush2.msra.mxu0 0.0
  %1185 = vmatprep.subr.mxu0 0.0
  %1186 = vmatpush2.msra.mxu0 0.0
  %1187 = vmatprep.subr.mxu0 0.0
  %1188 = vmatpush2.msra.mxu0 0.0
  %1189 = vmatprep.mubr.f32.mxu0 0.0
  %1190 = vmatmul.mubr.f32.gmra.mxu0 %v1102
  %v1191 = vpop.f32.mrf.mxu0
  %v1192 = vadd.f32 0.0, %v1191
  %v1193 = vpop.f32.mrf.mxu0
  %1194 = vmatprep.mubr.f32.mxu0 0.0
  %1195 = vmatmul.mubr.f32.gmra.mxu0 %v1105
  %v1196 = vpop.f32.mrf.mxu0
  %v1197 = vadd.f32 0.0, %v1196
  %v1198 = vpop.f32.mrf.mxu0
  %1199 = vmatprep.mubr.f32.mxu0 0.0
  %1200 = vmatmul.mubr.f32.gmra.mxu0 %v1108
  %v1201 = vpop.f32.mrf.mxu0
  %v1202 = vadd.f32 0.0, %v1201
  %v1203 = vpop.f32.mrf.mxu0
  %1204 = vmatprep.mubr.f32.mxu0 0.0
  %1205 = vmatmul.mubr.f32.gmra.mxu0 %v1111
  %v1206 = vpop.f32.mrf.mxu0
  %v1207 = vadd.f32 0.0, %v1206
  %v1208 = vpop.f32.mrf.mxu0
  %1209 = vmatprep.mubr.f32.mxu0 0.0
  %1210 = vmatmul.mubr.f32.gmra.mxu0 %v1114
  %v1211 = vpop.f32.mrf.mxu0
  %v1212 = vadd.f32 0.0, %v1211
  %v1213 = vpop.f32.mrf.mxu0
  %1214 = vmatprep.mubr.f32.mxu0 0.0
  %1215 = vmatmul.mubr.f32.gmra.mxu0 %v1117
  %v1216 = vpop.f32.mrf.mxu0
  %v1217 = vadd.f32 0.0, %v1216
  %v1218 = vpop.f32.mrf.mxu0
  %1219 = vmatprep.mubr.f32.mxu0 0.0
  %1220 = vmatmul.mubr.f32.gmra.mxu0 %v1120
  %v1221 = vpop.f32.mrf.mxu0
  %v1222 = vadd.f32 0.0, %v1221
  %v1223 = vpop.f32.mrf.mxu0
  %1224 = vmatprep.mubr.f32.mxu0 0.0
  %1225 = vmatmul.mubr.f32.gmra.mxu0 %v1123
  %v1226 = vpop.f32.mrf.mxu0
  %v1227 = vadd.f32 0.0, %v1226
  %v1228 = vpop.f32.mrf.mxu0
  %1229 = vdwg.mxu0
  %s1230 = scalar_lea.vmem %s4, 96
  %v1231 = vld [vmem:[%s1230] sm:$0xff]
  %v1232 = vld [vmem:[%s1230 + $0x8] sm:$0xff]
  %v1233 = vld [vmem:[%s1230 + $0x10] sm:$0xff]
  %v1234 = vld [vmem:[%s1230 + $0x18] sm:$0xff]
  %v1236 = vsel %vm553, %v1192, 0
  %v1239 = vsel %vm553, %v1197, 0
  %v1242 = vsel %vm553, %v1202, 0
  %v1245 = vsel %vm553, %v1207, 0
  %v1248 = vsel %vm553, %v1212, 0
  %v1251 = vsel %vm553, %v1217, 0
  %v1254 = vsel %vm553, %v1222, 0
  %v1257 = vsel %vm553, %v1227, 0
  %1259 = vmatprep.subr.mxu0 0.0
  %1260 = vmatpush1.msra.mxu0 0.0
  %1261 = vmatprep.subr.mxu0 0.0
  %1262 = vmatpush1.msra.mxu0 0.0
  %1263 = vmatprep.subr.mxu0 0.0
  %1264 = vmatpush1.msra.mxu0 0.0
  %1265 = vmatprep.subr.mxu0 0.0
  %1266 = vmatpush1.msra.mxu0 0.0
  %1267 = vmatprep.subr.mxu0 0.0
  %1268 = vmatpush1.msra.mxu0 0.0
  %1269 = vmatprep.subr.mxu0 0.0
  %1270 = vmatpush1.msra.mxu0 0.0
  %1271 = vmatprep.subr.mxu0 0.0
  %1272 = vmatpush1.msra.mxu0 0.0
  %1273 = vmatprep.subr.mxu0 0.0
  %1274 = vmatpush1.msra.mxu0 0.0
  %1275 = vmatprep.subr.mxu0 0.0
  %1276 = vmatpush1.msra.mxu0 0.0
  %1277 = vmatprep.subr.mxu0 0.0
  %1278 = vmatpush1.msra.mxu0 0.0
  %1279 = vmatprep.subr.mxu0 0.0
  %1280 = vmatpush1.msra.mxu0 0.0
  %1281 = vmatprep.subr.mxu0 0.0
  %1282 = vmatpush1.msra.mxu0 0.0
  %1283 = vmatprep.subr.mxu0 0.0
  %1284 = vmatpush1.msra.mxu0 %v1234
  %1285 = vmatprep.subr.mxu0 0.0
  %1286 = vmatpush1.msra.mxu0 %v1233
  %1287 = vmatprep.subr.mxu0 0.0
  %1288 = vmatpush1.msra.mxu0 %v1232
  %1289 = vmatprep.subr.mxu0 0.0
  %1290 = vmatpush1.msra.mxu0 %v1231
  %1291 = vmatprep.subr.mxu0 0.0
  %1292 = vmatpush2.msra.mxu0 0.0
  %1293 = vmatprep.subr.mxu0 0.0
  %1294 = vmatpush2.msra.mxu0 0.0
  %1295 = vmatprep.subr.mxu0 0.0
  %1296 = vmatpush2.msra.mxu0 0.0
  %1297 = vmatprep.subr.mxu0 0.0
  %1298 = vmatpush2.msra.mxu0 0.0
  %1299 = vmatprep.subr.mxu0 0.0
  %1300 = vmatpush2.msra.mxu0 0.0
  %1301 = vmatprep.subr.mxu0 0.0
  %1302 = vmatpush2.msra.mxu0 0.0
  %1303 = vmatprep.subr.mxu0 0.0
  %1304 = vmatpush2.msra.mxu0 0.0
  %1305 = vmatprep.subr.mxu0 0.0
  %1306 = vmatpush2.msra.mxu0 0.0
  %1307 = vmatprep.subr.mxu0 0.0
  %1308 = vmatpush2.msra.mxu0 0.0
  %1309 = vmatprep.subr.mxu0 0.0
  %1310 = vmatpush2.msra.mxu0 0.0
  %1311 = vmatprep.subr.mxu0 0.0
  %1312 = vmatpush2.msra.mxu0 0.0
  %1313 = vmatprep.subr.mxu0 0.0
  %1314 = vmatpush2.msra.mxu0 0.0
  %1315 = vmatprep.subr.mxu0 0.0
  %1316 = vmatpush2.msra.mxu0 0.0
  %1317 = vmatprep.subr.mxu0 0.0
  %1318 = vmatpush2.msra.mxu0 0.0
  %1319 = vmatprep.subr.mxu0 0.0
  %1320 = vmatpush2.msra.mxu0 0.0
  %1321 = vmatprep.subr.mxu0 0.0
  %1322 = vmatpush2.msra.mxu0 0.0
  %1323 = vmatprep.mubr.f32.mxu0 0.0
  %1324 = vmatmul.mubr.f32.gmra.mxu0 %v1236
  %v1325 = vpop.f32.mrf.mxu0
  %v1326 = vadd.f32 0.0, %v1325
  %v1327 = vpop.f32.mrf.mxu0
  %1328 = vmatprep.mubr.f32.mxu0 0.0
  %1329 = vmatmul.mubr.f32.gmra.mxu0 %v1239
  %v1330 = vpop.f32.mrf.mxu0
  %v1331 = vadd.f32 0.0, %v1330
  %v1332 = vpop.f32.mrf.mxu0
  %1333 = vmatprep.mubr.f32.mxu0 0.0
  %1334 = vmatmul.mubr.f32.gmra.mxu0 %v1242
  %v1335 = vpop.f32.mrf.mxu0
  %v1336 = vadd.f32 0.0, %v1335
  %v1337 = vpop.f32.mrf.mxu0
  %1338 = vmatprep.mubr.f32.mxu0 0.0
  %1339 = vmatmul.mubr.f32.gmra.mxu0 %v1245
  %v1340 = vpop.f32.mrf.mxu0
  %v1341 = vadd.f32 0.0, %v1340
  %v1342 = vpop.f32.mrf.mxu0
  %1343 = vmatprep.mubr.f32.mxu0 0.0
  %1344 = vmatmul.mubr.f32.gmra.mxu0 %v1248
  %v1345 = vpop.f32.mrf.mxu0
  %v1346 = vadd.f32 0.0, %v1345
  %v1347 = vpop.f32.mrf.mxu0
  %1348 = vmatprep.mubr.f32.mxu0 0.0
  %1349 = vmatmul.mubr.f32.gmra.mxu0 %v1251
  %v1350 = vpop.f32.mrf.mxu0
  %v1351 = vadd.f32 0.0, %v1350
  %v1352 = vpop.f32.mrf.mxu0
  %1353 = vmatprep.mubr.f32.mxu0 0.0
  %1354 = vmatmul.mubr.f32.gmra.mxu0 %v1254
  %v1355 = vpop.f32.mrf.mxu0
  %v1356 = vadd.f32 0.0, %v1355
  %v1357 = vpop.f32.mrf.mxu0
  %1358 = vmatprep.mubr.f32.mxu0 0.0
  %1359 = vmatmul.mubr.f32.gmra.mxu0 %v1257
  %v1360 = vpop.f32.mrf.mxu0
  %v1361 = vadd.f32 0.0, %v1360
  %v1362 = vpop.f32.mrf.mxu0
  %1363 = vdwg.mxu0
  %v1364 = vadd.f32 %v1084, %v1326
  %v1365 = vadd.f32 %v1085, %v1331
  %v1366 = vadd.f32 %v1086, %v1336
  %v1367 = vadd.f32 %v1087, %v1341
  %v1368 = vadd.f32 %v1088, %v1346
  %v1369 = vadd.f32 %v1089, %v1351
  %v1370 = vadd.f32 %v1090, %v1356
  %v1371 = vadd.f32 %v1091, %v1361
  %s1372 = scalar_lea.vmem %s3, 256
  %v1373 = vld [vmem:[%s1372] sm:$0xff]
  %v1374 = vld [vmem:[%s1372 + $0x8] sm:$0xff]
  %v1375 = vld [vmem:[%s1372 + $0x10] sm:$0xff]
  %v1376 = vld [vmem:[%s1372 + $0x18] sm:$0xff]
  %v1377 = vld [vmem:[%s1372 + $0x20] sm:$0xff]
  %v1378 = vld [vmem:[%s1372 + $0x28] sm:$0xff]
  %v1379 = vld [vmem:[%s1372 + $0x30] sm:$0xff]
  %v1380 = vld [vmem:[%s1372 + $0x38] sm:$0xff]
  %v1382 = vsel %vm276, %v1373, 0
  %v1385 = vsel %vm276, %v1374, 0
  %v1388 = vsel %vm276, %v1375, 0
  %v1391 = vsel %vm276, %v1376, 0
  %v1394 = vsel %vm276, %v1377, 0
  %v1397 = vsel %vm276, %v1378, 0
  %v1400 = vsel %vm276, %v1379, 0
  %v1403 = vsel %vm276, %v1380, 0
  %1405 = vmatprep.subr.mxu0 0.0
  %1406 = vmatpush1.msra.mxu0 0.0
  %1407 = vmatprep.subr.mxu0 0.0
  %1408 = vmatpush1.msra.mxu0 0.0
  %1409 = vmatprep.subr.mxu0 0.0
  %1410 = vmatpush1.msra.mxu0 %v267
  %1411 = vmatprep.subr.mxu0 0.0
  %1412 = vmatpush1.msra.mxu0 %v266
  %1413 = vmatprep.subr.mxu0 0.0
  %1414 = vmatpush1.msra.mxu0 %v265
  %1415 = vmatprep.subr.mxu0 0.0
  %1416 = vmatpush1.msra.mxu0 %v264
  %1417 = vmatprep.subr.mxu0 0.0
  %1418 = vmatpush1.msra.mxu0 %v263
  %1419 = vmatprep.subr.mxu0 0.0
  %1420 = vmatpush1.msra.mxu0 %v262
  %1421 = vmatprep.subr.mxu0 0.0
  %1422 = vmatpush1.msra.mxu0 %v261
  %1423 = vmatprep.subr.mxu0 0.0
  %1424 = vmatpush1.msra.mxu0 %v260
  %1425 = vmatprep.subr.mxu0 0.0
  %1426 = vmatpush1.msra.mxu0 %v259
  %1427 = vmatprep.subr.mxu0 0.0
  %1428 = vmatpush1.msra.mxu0 %v258
  %1429 = vmatprep.subr.mxu0 0.0
  %1430 = vmatpush1.msra.mxu0 %v257
  %1431 = vmatprep.subr.mxu0 0.0
  %1432 = vmatpush1.msra.mxu0 %v256
  %1433 = vmatprep.subr.mxu0 0.0
  %1434 = vmatpush1.msra.mxu0 %v255
  %1435 = vmatprep.subr.mxu0 0.0
  %1436 = vmatpush1.msra.mxu0 %v254
  %1437 = vmatprep.subr.mxu0 0.0
  %1438 = vmatpush2.msra.mxu0 0.0
  %1439 = vmatprep.subr.mxu0 0.0
  %1440 = vmatpush2.msra.mxu0 0.0
  %1441 = vmatprep.subr.mxu0 0.0
  %1442 = vmatpush2.msra.mxu0 0.0
  %1443 = vmatprep.subr.mxu0 0.0
  %1444 = vmatpush2.msra.mxu0 0.0
  %1445 = vmatprep.subr.mxu0 0.0
  %1446 = vmatpush2.msra.mxu0 0.0
  %1447 = vmatprep.subr.mxu0 0.0
  %1448 = vmatpush2.msra.mxu0 0.0
  %1449 = vmatprep.subr.mxu0 0.0
  %1450 = vmatpush2.msra.mxu0 0.0
  %1451 = vmatprep.subr.mxu0 0.0
  %1452 = vmatpush2.msra.mxu0 0.0
  %1453 = vmatprep.subr.mxu0 0.0
  %1454 = vmatpush2.msra.mxu0 0.0
  %1455 = vmatprep.subr.mxu0 0.0
  %1456 = vmatpush2.msra.mxu0 0.0
  %1457 = vmatprep.subr.mxu0 0.0
  %1458 = vmatpush2.msra.mxu0 0.0
  %1459 = vmatprep.subr.mxu0 0.0
  %1460 = vmatpush2.msra.mxu0 0.0
  %1461 = vmatprep.subr.mxu0 0.0
  %1462 = vmatpush2.msra.mxu0 0.0
  %1463 = vmatprep.subr.mxu0 0.0
  %1464 = vmatpush2.msra.mxu0 0.0
  %1465 = vmatprep.subr.mxu0 0.0
  %1466 = vmatpush2.msra.mxu0 0.0
  %1467 = vmatprep.subr.mxu0 0.0
  %1468 = vmatpush2.msra.mxu0 0.0
  %1469 = vmatprep.mubr.f32.mxu0 0.0
  %1470 = vmatmul.mubr.f32.gmra.mxu0 %v1382
  %v1471 = vpop.f32.mrf.mxu0
  %v1472 = vadd.f32 0.0, %v1471
  %v1473 = vpop.f32.mrf.mxu0
  %1474 = vmatprep.mubr.f32.mxu0 0.0
  %1475 = vmatmul.mubr.f32.gmra.mxu0 %v1385
  %v1476 = vpop.f32.mrf.mxu0
  %v1477 = vadd.f32 0.0, %v1476
  %v1478 = vpop.f32.mrf.mxu0
  %1479 = vmatprep.mubr.f32.mxu0 0.0
  %1480 = vmatmul.mubr.f32.gmra.mxu0 %v1388
  %v1481 = vpop.f32.mrf.mxu0
  %v1482 = vadd.f32 0.0, %v1481
  %v1483 = vpop.f32.mrf.mxu0
  %1484 = vmatprep.mubr.f32.mxu0 0.0
  %1485 = vmatmul.mubr.f32.gmra.mxu0 %v1391
  %v1486 = vpop.f32.mrf.mxu0
  %v1487 = vadd.f32 0.0, %v1486
  %v1488 = vpop.f32.mrf.mxu0
  %1489 = vmatprep.mubr.f32.mxu0 0.0
  %1490 = vmatmul.mubr.f32.gmra.mxu0 %v1394
  %v1491 = vpop.f32.mrf.mxu0
  %v1492 = vadd.f32 0.0, %v1491
  %v1493 = vpop.f32.mrf.mxu0
  %1494 = vmatprep.mubr.f32.mxu0 0.0
  %1495 = vmatmul.mubr.f32.gmra.mxu0 %v1397
  %v1496 = vpop.f32.mrf.mxu0
  %v1497 = vadd.f32 0.0, %v1496
  %v1498 = vpop.f32.mrf.mxu0
  %1499 = vmatprep.mubr.f32.mxu0 0.0
  %1500 = vmatmul.mubr.f32.gmra.mxu0 %v1400
  %v1501 = vpop.f32.mrf.mxu0
  %v1502 = vadd.f32 0.0, %v1501
  %v1503 = vpop.f32.mrf.mxu0
  %1504 = vmatprep.mubr.f32.mxu0 0.0
  %1505 = vmatmul.mubr.f32.gmra.mxu0 %v1403
  %v1506 = vpop.f32.mrf.mxu0
  %v1507 = vadd.f32 0.0, %v1506
  %v1508 = vpop.f32.mrf.mxu0
  %1509 = vdwg.mxu0
  %s1510 = scalar_lea.vmem %s4, 128
  %v1511 = vld [vmem:[%s1510] sm:$0xff]
  %v1512 = vld [vmem:[%s1510 + $0x8] sm:$0xff]
  %v1513 = vld [vmem:[%s1510 + $0x10] sm:$0xff]
  %v1514 = vld [vmem:[%s1510 + $0x18] sm:$0xff]
  %v1516 = vsel %vm553, %v1472, 0
  %v1519 = vsel %vm553, %v1477, 0
  %v1522 = vsel %vm553, %v1482, 0
  %v1525 = vsel %vm553, %v1487, 0
  %v1528 = vsel %vm553, %v1492, 0
  %v1531 = vsel %vm553, %v1497, 0
  %v1534 = vsel %vm553, %v1502, 0
  %v1537 = vsel %vm553, %v1507, 0
  %1539 = vmatprep.subr.mxu0 0.0
  %1540 = vmatpush1.msra.mxu0 0.0
  %1541 = vmatprep.subr.mxu0 0.0
  %1542 = vmatpush1.msra.mxu0 0.0
  %1543 = vmatprep.subr.mxu0 0.0
  %1544 = vmatpush1.msra.mxu0 0.0
  %1545 = vmatprep.subr.mxu0 0.0
  %1546 = vmatpush1.msra.mxu0 0.0
  %1547 = vmatprep.subr.mxu0 0.0
  %1548 = vmatpush1.msra.mxu0 0.0
  %1549 = vmatprep.subr.mxu0 0.0
  %1550 = vmatpush1.msra.mxu0 0.0
  %1551 = vmatprep.subr.mxu0 0.0
  %1552 = vmatpush1.msra.mxu0 0.0
  %1553 = vmatprep.subr.mxu0 0.0
  %1554 = vmatpush1.msra.mxu0 0.0
  %1555 = vmatprep.subr.mxu0 0.0
  %1556 = vmatpush1.msra.mxu0 0.0
  %1557 = vmatprep.subr.mxu0 0.0
  %1558 = vmatpush1.msra.mxu0 0.0
  %1559 = vmatprep.subr.mxu0 0.0
  %1560 = vmatpush1.msra.mxu0 0.0
  %1561 = vmatprep.subr.mxu0 0.0
  %1562 = vmatpush1.msra.mxu0 0.0
  %1563 = vmatprep.subr.mxu0 0.0
  %1564 = vmatpush1.msra.mxu0 %v1514
  %1565 = vmatprep.subr.mxu0 0.0
  %1566 = vmatpush1.msra.mxu0 %v1513
  %1567 = vmatprep.subr.mxu0 0.0
  %1568 = vmatpush1.msra.mxu0 %v1512
  %1569 = vmatprep.subr.mxu0 0.0
  %1570 = vmatpush1.msra.mxu0 %v1511
  %1571 = vmatprep.subr.mxu0 0.0
  %1572 = vmatpush2.msra.mxu0 0.0
  %1573 = vmatprep.subr.mxu0 0.0
  %1574 = vmatpush2.msra.mxu0 0.0
  %1575 = vmatprep.subr.mxu0 0.0
  %1576 = vmatpush2.msra.mxu0 0.0
  %1577 = vmatprep.subr.mxu0 0.0
  %1578 = vmatpush2.msra.mxu0 0.0
  %1579 = vmatprep.subr.mxu0 0.0
  %1580 = vmatpush2.msra.mxu0 0.0
  %1581 = vmatprep.subr.mxu0 0.0
  %1582 = vmatpush2.msra.mxu0 0.0
  %1583 = vmatprep.subr.mxu0 0.0
  %1584 = vmatpush2.msra.mxu0 0.0
  %1585 = vmatprep.subr.mxu0 0.0
  %1586 = vmatpush2.msra.mxu0 0.0
  %1587 = vmatprep.subr.mxu0 0.0
  %1588 = vmatpush2.msra.mxu0 0.0
  %1589 = vmatprep.subr.mxu0 0.0
  %1590 = vmatpush2.msra.mxu0 0.0
  %1591 = vmatprep.subr.mxu0 0.0
  %1592 = vmatpush2.msra.mxu0 0.0
  %1593 = vmatprep.subr.mxu0 0.0
  %1594 = vmatpush2.msra.mxu0 0.0
  %1595 = vmatprep.subr.mxu0 0.0
  %1596 = vmatpush2.msra.mxu0 0.0
  %1597 = vmatprep.subr.mxu0 0.0
  %1598 = vmatpush2.msra.mxu0 0.0
  %1599 = vmatprep.subr.mxu0 0.0
  %1600 = vmatpush2.msra.mxu0 0.0
  %1601 = vmatprep.subr.mxu0 0.0
  %1602 = vmatpush2.msra.mxu0 0.0
  %1603 = vmatprep.mubr.f32.mxu0 0.0
  %1604 = vmatmul.mubr.f32.gmra.mxu0 %v1516
  %v1605 = vpop.f32.mrf.mxu0
  %v1606 = vadd.f32 0.0, %v1605
  %v1607 = vpop.f32.mrf.mxu0
  %1608 = vmatprep.mubr.f32.mxu0 0.0
  %1609 = vmatmul.mubr.f32.gmra.mxu0 %v1519
  %v1610 = vpop.f32.mrf.mxu0
  %v1611 = vadd.f32 0.0, %v1610
  %v1612 = vpop.f32.mrf.mxu0
  %1613 = vmatprep.mubr.f32.mxu0 0.0
  %1614 = vmatmul.mubr.f32.gmra.mxu0 %v1522
  %v1615 = vpop.f32.mrf.mxu0
  %v1616 = vadd.f32 0.0, %v1615
  %v1617 = vpop.f32.mrf.mxu0
  %1618 = vmatprep.mubr.f32.mxu0 0.0
  %1619 = vmatmul.mubr.f32.gmra.mxu0 %v1525
  %v1620 = vpop.f32.mrf.mxu0
  %v1621 = vadd.f32 0.0, %v1620
  %v1622 = vpop.f32.mrf.mxu0
  %1623 = vmatprep.mubr.f32.mxu0 0.0
  %1624 = vmatmul.mubr.f32.gmra.mxu0 %v1528
  %v1625 = vpop.f32.mrf.mxu0
  %v1626 = vadd.f32 0.0, %v1625
  %v1627 = vpop.f32.mrf.mxu0
  %1628 = vmatprep.mubr.f32.mxu0 0.0
  %1629 = vmatmul.mubr.f32.gmra.mxu0 %v1531
  %v1630 = vpop.f32.mrf.mxu0
  %v1631 = vadd.f32 0.0, %v1630
  %v1632 = vpop.f32.mrf.mxu0
  %1633 = vmatprep.mubr.f32.mxu0 0.0
  %1634 = vmatmul.mubr.f32.gmra.mxu0 %v1534
  %v1635 = vpop.f32.mrf.mxu0
  %v1636 = vadd.f32 0.0, %v1635
  %v1637 = vpop.f32.mrf.mxu0
  %1638 = vmatprep.mubr.f32.mxu0 0.0
  %1639 = vmatmul.mubr.f32.gmra.mxu0 %v1537
  %v1640 = vpop.f32.mrf.mxu0
  %v1641 = vadd.f32 0.0, %v1640
  %v1642 = vpop.f32.mrf.mxu0
  %1643 = vdwg.mxu0
  %v1644 = vadd.f32 %v1364, %v1606
  %v1645 = vadd.f32 %v1365, %v1611
  %v1646 = vadd.f32 %v1366, %v1616
  %v1647 = vadd.f32 %v1367, %v1621
  %v1648 = vadd.f32 %v1368, %v1626
  %v1649 = vadd.f32 %v1369, %v1631
  %v1650 = vadd.f32 %v1370, %v1636
  %v1651 = vadd.f32 %v1371, %v1641
  %s1652 = scalar_lea.vmem %s3, 320
  %v1653 = vld [vmem:[%s1652] sm:$0xff]
  %v1654 = vld [vmem:[%s1652 + $0x8] sm:$0xff]
  %v1655 = vld [vmem:[%s1652 + $0x10] sm:$0xff]
  %v1656 = vld [vmem:[%s1652 + $0x18] sm:$0xff]
  %v1657 = vld [vmem:[%s1652 + $0x20] sm:$0xff]
  %v1658 = vld [vmem:[%s1652 + $0x28] sm:$0xff]
  %v1659 = vld [vmem:[%s1652 + $0x30] sm:$0xff]
  %v1660 = vld [vmem:[%s1652 + $0x38] sm:$0xff]
  %v1662 = vsel %vm276, %v1653, 0
  %v1665 = vsel %vm276, %v1654, 0
  %v1668 = vsel %vm276, %v1655, 0
  %v1671 = vsel %vm276, %v1656, 0
  %v1674 = vsel %vm276, %v1657, 0
  %v1677 = vsel %vm276, %v1658, 0
  %v1680 = vsel %vm276, %v1659, 0
  %v1683 = vsel %vm276, %v1660, 0
  %1685 = vmatprep.subr.mxu0 0.0
  %1686 = vmatpush1.msra.mxu0 0.0
  %1687 = vmatprep.subr.mxu0 0.0
  %1688 = vmatpush1.msra.mxu0 0.0
  %1689 = vmatprep.subr.mxu0 0.0
  %1690 = vmatpush1.msra.mxu0 %v267
  %1691 = vmatprep.subr.mxu0 0.0
  %1692 = vmatpush1.msra.mxu0 %v266
  %1693 = vmatprep.subr.mxu0 0.0
  %1694 = vmatpush1.msra.mxu0 %v265
  %1695 = vmatprep.subr.mxu0 0.0
  %1696 = vmatpush1.msra.mxu0 %v264
  %1697 = vmatprep.subr.mxu0 0.0
  %1698 = vmatpush1.msra.mxu0 %v263
  %1699 = vmatprep.subr.mxu0 0.0
  %1700 = vmatpush1.msra.mxu0 %v262
  %1701 = vmatprep.subr.mxu0 0.0
  %1702 = vmatpush1.msra.mxu0 %v261
  %1703 = vmatprep.subr.mxu0 0.0
  %1704 = vmatpush1.msra.mxu0 %v260
  %1705 = vmatprep.subr.mxu0 0.0
  %1706 = vmatpush1.msra.mxu0 %v259
  %1707 = vmatprep.subr.mxu0 0.0
  %1708 = vmatpush1.msra.mxu0 %v258
  %1709 = vmatprep.subr.mxu0 0.0
  %1710 = vmatpush1.msra.mxu0 %v257
  %1711 = vmatprep.subr.mxu0 0.0
  %1712 = vmatpush1.msra.mxu0 %v256
  %1713 = vmatprep.subr.mxu0 0.0
  %1714 = vmatpush1.msra.mxu0 %v255
  %1715 = vmatprep.subr.mxu0 0.0
  %1716 = vmatpush1.msra.mxu0 %v254
  %1717 = vmatprep.subr.mxu0 0.0
  %1718 = vmatpush2.msra.mxu0 0.0
  %1719 = vmatprep.subr.mxu0 0.0
  %1720 = vmatpush2.msra.mxu0 0.0
  %1721 = vmatprep.subr.mxu0 0.0
  %1722 = vmatpush2.msra.mxu0 0.0
  %1723 = vmatprep.subr.mxu0 0.0
  %1724 = vmatpush2.msra.mxu0 0.0
  %1725 = vmatprep.subr.mxu0 0.0
  %1726 = vmatpush2.msra.mxu0 0.0
  %1727 = vmatprep.subr.mxu0 0.0
  %1728 = vmatpush2.msra.mxu0 0.0
  %1729 = vmatprep.subr.mxu0 0.0
  %1730 = vmatpush2.msra.mxu0 0.0
  %1731 = vmatprep.subr.mxu0 0.0
  %1732 = vmatpush2.msra.mxu0 0.0
  %1733 = vmatprep.subr.mxu0 0.0
  %1734 = vmatpush2.msra.mxu0 0.0
  %1735 = vmatprep.subr.mxu0 0.0
  %1736 = vmatpush2.msra.mxu0 0.0
  %1737 = vmatprep.subr.mxu0 0.0
  %1738 = vmatpush2.msra.mxu0 0.0
  %1739 = vmatprep.subr.mxu0 0.0
  %1740 = vmatpush2.msra.mxu0 0.0
  %1741 = vmatprep.subr.mxu0 0.0
  %1742 = vmatpush2.msra.mxu0 0.0
  %1743 = vmatprep.subr.mxu0 0.0
  %1744 = vmatpush2.msra.mxu0 0.0
  %1745 = vmatprep.subr.mxu0 0.0
  %1746 = vmatpush2.msra.mxu0 0.0
  %1747 = vmatprep.subr.mxu0 0.0
  %1748 = vmatpush2.msra.mxu0 0.0
  %1749 = vmatprep.mubr.f32.mxu0 0.0
  %1750 = vmatmul.mubr.f32.gmra.mxu0 %v1662
  %v1751 = vpop.f32.mrf.mxu0
  %v1752 = vadd.f32 0.0, %v1751
  %v1753 = vpop.f32.mrf.mxu0
  %1754 = vmatprep.mubr.f32.mxu0 0.0
  %1755 = vmatmul.mubr.f32.gmra.mxu0 %v1665
  %v1756 = vpop.f32.mrf.mxu0
  %v1757 = vadd.f32 0.0, %v1756
  %v1758 = vpop.f32.mrf.mxu0
  %1759 = vmatprep.mubr.f32.mxu0 0.0
  %1760 = vmatmul.mubr.f32.gmra.mxu0 %v1668
  %v1761 = vpop.f32.mrf.mxu0
  %v1762 = vadd.f32 0.0, %v1761
  %v1763 = vpop.f32.mrf.mxu0
  %1764 = vmatprep.mubr.f32.mxu0 0.0
  %1765 = vmatmul.mubr.f32.gmra.mxu0 %v1671
  %v1766 = vpop.f32.mrf.mxu0
  %v1767 = vadd.f32 0.0, %v1766
  %v1768 = vpop.f32.mrf.mxu0
  %1769 = vmatprep.mubr.f32.mxu0 0.0
  %1770 = vmatmul.mubr.f32.gmra.mxu0 %v1674
  %v1771 = vpop.f32.mrf.mxu0
  %v1772 = vadd.f32 0.0, %v1771
  %v1773 = vpop.f32.mrf.mxu0
  %1774 = vmatprep.mubr.f32.mxu0 0.0
  %1775 = vmatmul.mubr.f32.gmra.mxu0 %v1677
  %v1776 = vpop.f32.mrf.mxu0
  %v1777 = vadd.f32 0.0, %v1776
  %v1778 = vpop.f32.mrf.mxu0
  %1779 = vmatprep.mubr.f32.mxu0 0.0
  %1780 = vmatmul.mubr.f32.gmra.mxu0 %v1680
  %v1781 = vpop.f32.mrf.mxu0
  %v1782 = vadd.f32 0.0, %v1781
  %v1783 = vpop.f32.mrf.mxu0
  %1784 = vmatprep.mubr.f32.mxu0 0.0
  %1785 = vmatmul.mubr.f32.gmra.mxu0 %v1683
  %v1786 = vpop.f32.mrf.mxu0
  %v1787 = vadd.f32 0.0, %v1786
  %v1788 = vpop.f32.mrf.mxu0
  %1789 = vdwg.mxu0
  %s1790 = scalar_lea.vmem %s4, 160
  %v1791 = vld [vmem:[%s1790] sm:$0xff]
  %v1792 = vld [vmem:[%s1790 + $0x8] sm:$0xff]
  %v1793 = vld [vmem:[%s1790 + $0x10] sm:$0xff]
  %v1794 = vld [vmem:[%s1790 + $0x18] sm:$0xff]
  %v1796 = vsel %vm553, %v1752, 0
  %v1799 = vsel %vm553, %v1757, 0
  %v1802 = vsel %vm553, %v1762, 0
  %v1805 = vsel %vm553, %v1767, 0
  %v1808 = vsel %vm553, %v1772, 0
  %v1811 = vsel %vm553, %v1777, 0
  %v1814 = vsel %vm553, %v1782, 0
  %v1817 = vsel %vm553, %v1787, 0
  %1819 = vmatprep.subr.mxu0 0.0
  %1820 = vmatpush1.msra.mxu0 0.0
  %1821 = vmatprep.subr.mxu0 0.0
  %1822 = vmatpush1.msra.mxu0 0.0
  %1823 = vmatprep.subr.mxu0 0.0
  %1824 = vmatpush1.msra.mxu0 0.0
  %1825 = vmatprep.subr.mxu0 0.0
  %1826 = vmatpush1.msra.mxu0 0.0
  %1827 = vmatprep.subr.mxu0 0.0
  %1828 = vmatpush1.msra.mxu0 0.0
  %1829 = vmatprep.subr.mxu0 0.0
  %1830 = vmatpush1.msra.mxu0 0.0
  %1831 = vmatprep.subr.mxu0 0.0
  %1832 = vmatpush1.msra.mxu0 0.0
  %1833 = vmatprep.subr.mxu0 0.0
  %1834 = vmatpush1.msra.mxu0 0.0
  %1835 = vmatprep.subr.mxu0 0.0
  %1836 = vmatpush1.msra.mxu0 0.0
  %1837 = vmatprep.subr.mxu0 0.0
  %1838 = vmatpush1.msra.mxu0 0.0
  %1839 = vmatprep.subr.mxu0 0.0
  %1840 = vmatpush1.msra.mxu0 0.0
  %1841 = vmatprep.subr.mxu0 0.0
  %1842 = vmatpush1.msra.mxu0 0.0
  %1843 = vmatprep.subr.mxu0 0.0
  %1844 = vmatpush1.msra.mxu0 %v1794
  %1845 = vmatprep.subr.mxu0 0.0
  %1846 = vmatpush1.msra.mxu0 %v1793
  %1847 = vmatprep.subr.mxu0 0.0
  %1848 = vmatpush1.msra.mxu0 %v1792
  %1849 = vmatprep.subr.mxu0 0.0
  %1850 = vmatpush1.msra.mxu0 %v1791
  %1851 = vmatprep.subr.mxu0 0.0
  %1852 = vmatpush2.msra.mxu0 0.0
  %1853 = vmatprep.subr.mxu0 0.0
  %1854 = vmatpush2.msra.mxu0 0.0
  %1855 = vmatprep.subr.mxu0 0.0
  %1856 = vmatpush2.msra.mxu0 0.0
  %1857 = vmatprep.subr.mxu0 0.0
  %1858 = vmatpush2.msra.mxu0 0.0
  %1859 = vmatprep.subr.mxu0 0.0
  %1860 = vmatpush2.msra.mxu0 0.0
  %1861 = vmatprep.subr.mxu0 0.0
  %1862 = vmatpush2.msra.mxu0 0.0
  %1863 = vmatprep.subr.mxu0 0.0
  %1864 = vmatpush2.msra.mxu0 0.0
  %1865 = vmatprep.subr.mxu0 0.0
  %1866 = vmatpush2.msra.mxu0 0.0
  %1867 = vmatprep.subr.mxu0 0.0
  %1868 = vmatpush2.msra.mxu0 0.0
  %1869 = vmatprep.subr.mxu0 0.0
  %1870 = vmatpush2.msra.mxu0 0.0
  %1871 = vmatprep.subr.mxu0 0.0
  %1872 = vmatpush2.msra.mxu0 0.0
  %1873 = vmatprep.subr.mxu0 0.0
  %1874 = vmatpush2.msra.mxu0 0.0
  %1875 = vmatprep.subr.mxu0 0.0
  %1876 = vmatpush2.msra.mxu0 0.0
  %1877 = vmatprep.subr.mxu0 0.0
  %1878 = vmatpush2.msra.mxu0 0.0
  %1879 = vmatprep.subr.mxu0 0.0
  %1880 = vmatpush2.msra.mxu0 0.0
  %1881 = vmatprep.subr.mxu0 0.0
  %1882 = vmatpush2.msra.mxu0 0.0
  %1883 = vmatprep.mubr.f32.mxu0 0.0
  %1884 = vmatmul.mubr.f32.gmra.mxu0 %v1796
  %v1885 = vpop.f32.mrf.mxu0
  %v1886 = vadd.f32 0.0, %v1885
  %v1887 = vpop.f32.mrf.mxu0
  %1888 = vmatprep.mubr.f32.mxu0 0.0
  %1889 = vmatmul.mubr.f32.gmra.mxu0 %v1799
  %v1890 = vpop.f32.mrf.mxu0
  %v1891 = vadd.f32 0.0, %v1890
  %v1892 = vpop.f32.mrf.mxu0
  %1893 = vmatprep.mubr.f32.mxu0 0.0
  %1894 = vmatmul.mubr.f32.gmra.mxu0 %v1802
  %v1895 = vpop.f32.mrf.mxu0
  %v1896 = vadd.f32 0.0, %v1895
  %v1897 = vpop.f32.mrf.mxu0
  %1898 = vmatprep.mubr.f32.mxu0 0.0
  %1899 = vmatmul.mubr.f32.gmra.mxu0 %v1805
  %v1900 = vpop.f32.mrf.mxu0
  %v1901 = vadd.f32 0.0, %v1900
  %v1902 = vpop.f32.mrf.mxu0
  %1903 = vmatprep.mubr.f32.mxu0 0.0
  %1904 = vmatmul.mubr.f32.gmra.mxu0 %v1808
  %v1905 = vpop.f32.mrf.mxu0
  %v1906 = vadd.f32 0.0, %v1905
  %v1907 = vpop.f32.mrf.mxu0
  %1908 = vmatprep.mubr.f32.mxu0 0.0
  %1909 = vmatmul.mubr.f32.gmra.mxu0 %v1811
  %v1910 = vpop.f32.mrf.mxu0
  %v1911 = vadd.f32 0.0, %v1910
  %v1912 = vpop.f32.mrf.mxu0
  %1913 = vmatprep.mubr.f32.mxu0 0.0
  %1914 = vmatmul.mubr.f32.gmra.mxu0 %v1814
  %v1915 = vpop.f32.mrf.mxu0
  %v1916 = vadd.f32 0.0, %v1915
  %v1917 = vpop.f32.mrf.mxu0
  %1918 = vmatprep.mubr.f32.mxu0 0.0
  %1919 = vmatmul.mubr.f32.gmra.mxu0 %v1817
  %v1920 = vpop.f32.mrf.mxu0
  %v1921 = vadd.f32 0.0, %v1920
  %v1922 = vpop.f32.mrf.mxu0
  %1923 = vdwg.mxu0
  %v1924 = vadd.f32 %v1644, %v1886
  %v1925 = vadd.f32 %v1645, %v1891
  %v1926 = vadd.f32 %v1646, %v1896
  %v1927 = vadd.f32 %v1647, %v1901
  %v1928 = vadd.f32 %v1648, %v1906
  %v1929 = vadd.f32 %v1649, %v1911
  %v1930 = vadd.f32 %v1650, %v1916
  %v1931 = vadd.f32 %v1651, %v1921
  %s1932 = scalar_lea.vmem %s3, 384
  %v1933 = vld [vmem:[%s1932] sm:$0xff]
  %v1934 = vld [vmem:[%s1932 + $0x8] sm:$0xff]
  %v1935 = vld [vmem:[%s1932 + $0x10] sm:$0xff]
  %v1936 = vld [vmem:[%s1932 + $0x18] sm:$0xff]
  %v1937 = vld [vmem:[%s1932 + $0x20] sm:$0xff]
  %v1938 = vld [vmem:[%s1932 + $0x28] sm:$0xff]
  %v1939 = vld [vmem:[%s1932 + $0x30] sm:$0xff]
  %v1940 = vld [vmem:[%s1932 + $0x38] sm:$0xff]
  %v1942 = vsel %vm276, %v1933, 0
  %v1945 = vsel %vm276, %v1934, 0
  %v1948 = vsel %vm276, %v1935, 0
  %v1951 = vsel %vm276, %v1936, 0
  %v1954 = vsel %vm276, %v1937, 0
  %v1957 = vsel %vm276, %v1938, 0
  %v1960 = vsel %vm276, %v1939, 0
  %v1963 = vsel %vm276, %v1940, 0
  %1965 = vmatprep.subr.mxu0 0.0
  %1966 = vmatpush1.msra.mxu0 0.0
  %1967 = vmatprep.subr.mxu0 0.0
  %1968 = vmatpush1.msra.mxu0 0.0
  %1969 = vmatprep.subr.mxu0 0.0
  %1970 = vmatpush1.msra.mxu0 %v267
  %1971 = vmatprep.subr.mxu0 0.0
  %1972 = vmatpush1.msra.mxu0 %v266
  %1973 = vmatprep.subr.mxu0 0.0
  %1974 = vmatpush1.msra.mxu0 %v265
  %1975 = vmatprep.subr.mxu0 0.0
  %1976 = vmatpush1.msra.mxu0 %v264
  %1977 = vmatprep.subr.mxu0 0.0
  %1978 = vmatpush1.msra.mxu0 %v263
  %1979 = vmatprep.subr.mxu0 0.0
  %1980 = vmatpush1.msra.mxu0 %v262
  %1981 = vmatprep.subr.mxu0 0.0
  %1982 = vmatpush1.msra.mxu0 %v261
  %1983 = vmatprep.subr.mxu0 0.0
  %1984 = vmatpush1.msra.mxu0 %v260
  %1985 = vmatprep.subr.mxu0 0.0
  %1986 = vmatpush1.msra.mxu0 %v259
  %1987 = vmatprep.subr.mxu0 0.0
  %1988 = vmatpush1.msra.mxu0 %v258
  %1989 = vmatprep.subr.mxu0 0.0
  %1990 = vmatpush1.msra.mxu0 %v257
  %1991 = vmatprep.subr.mxu0 0.0
  %1992 = vmatpush1.msra.mxu0 %v256
  %1993 = vmatprep.subr.mxu0 0.0
  %1994 = vmatpush1.msra.mxu0 %v255
  %1995 = vmatprep.subr.mxu0 0.0
  %1996 = vmatpush1.msra.mxu0 %v254
  %1997 = vmatprep.subr.mxu0 0.0
  %1998 = vmatpush2.msra.mxu0 0.0
  %1999 = vmatprep.subr.mxu0 0.0
  %2000 = vmatpush2.msra.mxu0 0.0
  %2001 = vmatprep.subr.mxu0 0.0
  %2002 = vmatpush2.msra.mxu0 0.0
  %2003 = vmatprep.subr.mxu0 0.0
  %2004 = vmatpush2.msra.mxu0 0.0
  %2005 = vmatprep.subr.mxu0 0.0
  %2006 = vmatpush2.msra.mxu0 0.0
  %2007 = vmatprep.subr.mxu0 0.0
  %2008 = vmatpush2.msra.mxu0 0.0
  %2009 = vmatprep.subr.mxu0 0.0
  %2010 = vmatpush2.msra.mxu0 0.0
  %2011 = vmatprep.subr.mxu0 0.0
  %2012 = vmatpush2.msra.mxu0 0.0
  %2013 = vmatprep.subr.mxu0 0.0
  %2014 = vmatpush2.msra.mxu0 0.0
  %2015 = vmatprep.subr.mxu0 0.0
  %2016 = vmatpush2.msra.mxu0 0.0
  %2017 = vmatprep.subr.mxu0 0.0
  %2018 = vmatpush2.msra.mxu0 0.0
  %2019 = vmatprep.subr.mxu0 0.0
  %2020 = vmatpush2.msra.mxu0 0.0
  %2021 = vmatprep.subr.mxu0 0.0
  %2022 = vmatpush2.msra.mxu0 0.0
  %2023 = vmatprep.subr.mxu0 0.0
  %2024 = vmatpush2.msra.mxu0 0.0
  %2025 = vmatprep.subr.mxu0 0.0
  %2026 = vmatpush2.msra.mxu0 0.0
  %2027 = vmatprep.subr.mxu0 0.0
  %2028 = vmatpush2.msra.mxu0 0.0
  %2029 = vmatprep.mubr.f32.mxu0 0.0
  %2030 = vmatmul.mubr.f32.gmra.mxu0 %v1942
  %v2031 = vpop.f32.mrf.mxu0
  %v2032 = vadd.f32 0.0, %v2031
  %v2033 = vpop.f32.mrf.mxu0
  %2034 = vmatprep.mubr.f32.mxu0 0.0
  %2035 = vmatmul.mubr.f32.gmra.mxu0 %v1945
  %v2036 = vpop.f32.mrf.mxu0
  %v2037 = vadd.f32 0.0, %v2036
  %v2038 = vpop.f32.mrf.mxu0
  %2039 = vmatprep.mubr.f32.mxu0 0.0
  %2040 = vmatmul.mubr.f32.gmra.mxu0 %v1948
  %v2041 = vpop.f32.mrf.mxu0
  %v2042 = vadd.f32 0.0, %v2041
  %v2043 = vpop.f32.mrf.mxu0
  %2044 = vmatprep.mubr.f32.mxu0 0.0
  %2045 = vmatmul.mubr.f32.gmra.mxu0 %v1951
  %v2046 = vpop.f32.mrf.mxu0
  %v2047 = vadd.f32 0.0, %v2046
  %v2048 = vpop.f32.mrf.mxu0
  %2049 = vmatprep.mubr.f32.mxu0 0.0
  %2050 = vmatmul.mubr.f32.gmra.mxu0 %v1954
  %v2051 = vpop.f32.mrf.mxu0
  %v2052 = vadd.f32 0.0, %v2051
  %v2053 = vpop.f32.mrf.mxu0
  %2054 = vmatprep.mubr.f32.mxu0 0.0
  %2055 = vmatmul.mubr.f32.gmra.mxu0 %v1957
  %v2056 = vpop.f32.mrf.mxu0
  %v2057 = vadd.f32 0.0, %v2056
  %v2058 = vpop.f32.mrf.mxu0
  %2059 = vmatprep.mubr.f32.mxu0 0.0
  %2060 = vmatmul.mubr.f32.gmra.mxu0 %v1960
  %v2061 = vpop.f32.mrf.mxu0
  %v2062 = vadd.f32 0.0, %v2061
  %v2063 = vpop.f32.mrf.mxu0
  %2064 = vmatprep.mubr.f32.mxu0 0.0
  %2065 = vmatmul.mubr.f32.gmra.mxu0 %v1963
  %v2066 = vpop.f32.mrf.mxu0
  %v2067 = vadd.f32 0.0, %v2066
  %v2068 = vpop.f32.mrf.mxu0
  %2069 = vdwg.mxu0
  %s2070 = scalar_lea.vmem %s4, 192
  %v2071 = vld [vmem:[%s2070] sm:$0xff]
  %v2072 = vld [vmem:[%s2070 + $0x8] sm:$0xff]
  %v2073 = vld [vmem:[%s2070 + $0x10] sm:$0xff]
  %v2074 = vld [vmem:[%s2070 + $0x18] sm:$0xff]
  %v2076 = vsel %vm553, %v2032, 0
  %v2079 = vsel %vm553, %v2037, 0
  %v2082 = vsel %vm553, %v2042, 0
  %v2085 = vsel %vm553, %v2047, 0
  %v2088 = vsel %vm553, %v2052, 0
  %v2091 = vsel %vm553, %v2057, 0
  %v2094 = vsel %vm553, %v2062, 0
  %v2097 = vsel %vm553, %v2067, 0
  %2099 = vmatprep.subr.mxu0 0.0
  %2100 = vmatpush1.msra.mxu0 0.0
  %2101 = vmatprep.subr.mxu0 0.0
  %2102 = vmatpush1.msra.mxu0 0.0
  %2103 = vmatprep.subr.mxu0 0.0
  %2104 = vmatpush1.msra.mxu0 0.0
  %2105 = vmatprep.subr.mxu0 0.0
  %2106 = vmatpush1.msra.mxu0 0.0
  %2107 = vmatprep.subr.mxu0 0.0
  %2108 = vmatpush1.msra.mxu0 0.0
  %2109 = vmatprep.subr.mxu0 0.0
  %2110 = vmatpush1.msra.mxu0 0.0
  %2111 = vmatprep.subr.mxu0 0.0
  %2112 = vmatpush1.msra.mxu0 0.0
  %2113 = vmatprep.subr.mxu0 0.0
  %2114 = vmatpush1.msra.mxu0 0.0
  %2115 = vmatprep.subr.mxu0 0.0
  %2116 = vmatpush1.msra.mxu0 0.0
  %2117 = vmatprep.subr.mxu0 0.0
  %2118 = vmatpush1.msra.mxu0 0.0
  %2119 = vmatprep.subr.mxu0 0.0
  %2120 = vmatpush1.msra.mxu0 0.0
  %2121 = vmatprep.subr.mxu0 0.0
  %2122 = vmatpush1.msra.mxu0 0.0
  %2123 = vmatprep.subr.mxu0 0.0
  %2124 = vmatpush1.msra.mxu0 %v2074
  %2125 = vmatprep.subr.mxu0 0.0
  %2126 = vmatpush1.msra.mxu0 %v2073
  %2127 = vmatprep.subr.mxu0 0.0
  %2128 = vmatpush1.msra.mxu0 %v2072
  %2129 = vmatprep.subr.mxu0 0.0
  %2130 = vmatpush1.msra.mxu0 %v2071
  %2131 = vmatprep.subr.mxu0 0.0
  %2132 = vmatpush2.msra.mxu0 0.0
  %2133 = vmatprep.subr.mxu0 0.0
  %2134 = vmatpush2.msra.mxu0 0.0
  %2135 = vmatprep.subr.mxu0 0.0
  %2136 = vmatpush2.msra.mxu0 0.0
  %2137 = vmatprep.subr.mxu0 0.0
  %2138 = vmatpush2.msra.mxu0 0.0
  %2139 = vmatprep.subr.mxu0 0.0
  %2140 = vmatpush2.msra.mxu0 0.0
  %2141 = vmatprep.subr.mxu0 0.0
  %2142 = vmatpush2.msra.mxu0 0.0
  %2143 = vmatprep.subr.mxu0 0.0
  %2144 = vmatpush2.msra.mxu0 0.0
  %2145 = vmatprep.subr.mxu0 0.0
  %2146 = vmatpush2.msra.mxu0 0.0
  %2147 = vmatprep.subr.mxu0 0.0
  %2148 = vmatpush2.msra.mxu0 0.0
  %2149 = vmatprep.subr.mxu0 0.0
  %2150 = vmatpush2.msra.mxu0 0.0
  %2151 = vmatprep.subr.mxu0 0.0
  %2152 = vmatpush2.msra.mxu0 0.0
  %2153 = vmatprep.subr.mxu0 0.0
  %2154 = vmatpush2.msra.mxu0 0.0
  %2155 = vmatprep.subr.mxu0 0.0
  %2156 = vmatpush2.msra.mxu0 0.0
  %2157 = vmatprep.subr.mxu0 0.0
  %2158 = vmatpush2.msra.mxu0 0.0
  %2159 = vmatprep.subr.mxu0 0.0
  %2160 = vmatpush2.msra.mxu0 0.0
  %2161 = vmatprep.subr.mxu0 0.0
  %2162 = vmatpush2.msra.mxu0 0.0
  %2163 = vmatprep.mubr.f32.mxu0 0.0
  %2164 = vmatmul.mubr.f32.gmra.mxu0 %v2076
  %v2165 = vpop.f32.mrf.mxu0
  %v2166 = vadd.f32 0.0, %v2165
  %v2167 = vpop.f32.mrf.mxu0
  %2168 = vmatprep.mubr.f32.mxu0 0.0
  %2169 = vmatmul.mubr.f32.gmra.mxu0 %v2079
  %v2170 = vpop.f32.mrf.mxu0
  %v2171 = vadd.f32 0.0, %v2170
  %v2172 = vpop.f32.mrf.mxu0
  %2173 = vmatprep.mubr.f32.mxu0 0.0
  %2174 = vmatmul.mubr.f32.gmra.mxu0 %v2082
  %v2175 = vpop.f32.mrf.mxu0
  %v2176 = vadd.f32 0.0, %v2175
  %v2177 = vpop.f32.mrf.mxu0
  %2178 = vmatprep.mubr.f32.mxu0 0.0
  %2179 = vmatmul.mubr.f32.gmra.mxu0 %v2085
  %v2180 = vpop.f32.mrf.mxu0
  %v2181 = vadd.f32 0.0, %v2180
  %v2182 = vpop.f32.mrf.mxu0
  %2183 = vmatprep.mubr.f32.mxu0 0.0
  %2184 = vmatmul.mubr.f32.gmra.mxu0 %v2088
  %v2185 = vpop.f32.mrf.mxu0
  %v2186 = vadd.f32 0.0, %v2185
  %v2187 = vpop.f32.mrf.mxu0
  %2188 = vmatprep.mubr.f32.mxu0 0.0
  %2189 = vmatmul.mubr.f32.gmra.mxu0 %v2091
  %v2190 = vpop.f32.mrf.mxu0
  %v2191 = vadd.f32 0.0, %v2190
  %v2192 = vpop.f32.mrf.mxu0
  %2193 = vmatprep.mubr.f32.mxu0 0.0
  %2194 = vmatmul.mubr.f32.gmra.mxu0 %v2094
  %v2195 = vpop.f32.mrf.mxu0
  %v2196 = vadd.f32 0.0, %v2195
  %v2197 = vpop.f32.mrf.mxu0
  %2198 = vmatprep.mubr.f32.mxu0 0.0
  %2199 = vmatmul.mubr.f32.gmra.mxu0 %v2097
  %v2200 = vpop.f32.mrf.mxu0
  %v2201 = vadd.f32 0.0, %v2200
  %v2202 = vpop.f32.mrf.mxu0
  %2203 = vdwg.mxu0
  %v2204 = vadd.f32 %v1924, %v2166
  %v2205 = vadd.f32 %v1925, %v2171
  %v2206 = vadd.f32 %v1926, %v2176
  %v2207 = vadd.f32 %v1927, %v2181
  %v2208 = vadd.f32 %v1928, %v2186
  %v2209 = vadd.f32 %v1929, %v2191
  %v2210 = vadd.f32 %v1930, %v2196
  %v2211 = vadd.f32 %v1931, %v2201
  %s2212 = scalar_lea.vmem %s3, 448
  %v2213 = vld [vmem:[%s2212] sm:$0xff]
  %v2214 = vld [vmem:[%s2212 + $0x8] sm:$0xff]
  %v2215 = vld [vmem:[%s2212 + $0x10] sm:$0xff]
  %v2216 = vld [vmem:[%s2212 + $0x18] sm:$0xff]
  %v2217 = vld [vmem:[%s2212 + $0x20] sm:$0xff]
  %v2218 = vld [vmem:[%s2212 + $0x28] sm:$0xff]
  %v2219 = vld [vmem:[%s2212 + $0x30] sm:$0xff]
  %v2220 = vld [vmem:[%s2212 + $0x38] sm:$0xff]
  %v2222 = vsel %vm276, %v2213, 0
  %v2225 = vsel %vm276, %v2214, 0
  %v2228 = vsel %vm276, %v2215, 0
  %v2231 = vsel %vm276, %v2216, 0
  %v2234 = vsel %vm276, %v2217, 0
  %v2237 = vsel %vm276, %v2218, 0
  %v2240 = vsel %vm276, %v2219, 0
  %v2243 = vsel %vm276, %v2220, 0
  %2245 = vmatprep.subr.mxu0 0.0
  %2246 = vmatpush1.msra.mxu0 0.0
  %2247 = vmatprep.subr.mxu0 0.0
  %2248 = vmatpush1.msra.mxu0 0.0
  %2249 = vmatprep.subr.mxu0 0.0
  %2250 = vmatpush1.msra.mxu0 %v267
  %2251 = vmatprep.subr.mxu0 0.0
  %2252 = vmatpush1.msra.mxu0 %v266
  %2253 = vmatprep.subr.mxu0 0.0
  %2254 = vmatpush1.msra.mxu0 %v265
  %2255 = vmatprep.subr.mxu0 0.0
  %2256 = vmatpush1.msra.mxu0 %v264
  %2257 = vmatprep.subr.mxu0 0.0
  %2258 = vmatpush1.msra.mxu0 %v263
  %2259 = vmatprep.subr.mxu0 0.0
  %2260 = vmatpush1.msra.mxu0 %v262
  %2261 = vmatprep.subr.mxu0 0.0
  %2262 = vmatpush1.msra.mxu0 %v261
  %2263 = vmatprep.subr.mxu0 0.0
  %2264 = vmatpush1.msra.mxu0 %v260
  %2265 = vmatprep.subr.mxu0 0.0
  %2266 = vmatpush1.msra.mxu0 %v259
  %2267 = vmatprep.subr.mxu0 0.0
  %2268 = vmatpush1.msra.mxu0 %v258
  %2269 = vmatprep.subr.mxu0 0.0
  %2270 = vmatpush1.msra.mxu0 %v257
  %2271 = vmatprep.subr.mxu0 0.0
  %2272 = vmatpush1.msra.mxu0 %v256
  %2273 = vmatprep.subr.mxu0 0.0
  %2274 = vmatpush1.msra.mxu0 %v255
  %2275 = vmatprep.subr.mxu0 0.0
  %2276 = vmatpush1.msra.mxu0 %v254
  %2277 = vmatprep.subr.mxu0 0.0
  %2278 = vmatpush2.msra.mxu0 0.0
  %2279 = vmatprep.subr.mxu0 0.0
  %2280 = vmatpush2.msra.mxu0 0.0
  %2281 = vmatprep.subr.mxu0 0.0
  %2282 = vmatpush2.msra.mxu0 0.0
  %2283 = vmatprep.subr.mxu0 0.0
  %2284 = vmatpush2.msra.mxu0 0.0
  %2285 = vmatprep.subr.mxu0 0.0
  %2286 = vmatpush2.msra.mxu0 0.0
  %2287 = vmatprep.subr.mxu0 0.0
  %2288 = vmatpush2.msra.mxu0 0.0
  %2289 = vmatprep.subr.mxu0 0.0
  %2290 = vmatpush2.msra.mxu0 0.0
  %2291 = vmatprep.subr.mxu0 0.0
  %2292 = vmatpush2.msra.mxu0 0.0
  %2293 = vmatprep.subr.mxu0 0.0
  %2294 = vmatpush2.msra.mxu0 0.0
  %2295 = vmatprep.subr.mxu0 0.0
  %2296 = vmatpush2.msra.mxu0 0.0
  %2297 = vmatprep.subr.mxu0 0.0
  %2298 = vmatpush2.msra.mxu0 0.0
  %2299 = vmatprep.subr.mxu0 0.0
  %2300 = vmatpush2.msra.mxu0 0.0
  %2301 = vmatprep.subr.mxu0 0.0
  %2302 = vmatpush2.msra.mxu0 0.0
  %2303 = vmatprep.subr.mxu0 0.0
  %2304 = vmatpush2.msra.mxu0 0.0
  %2305 = vmatprep.subr.mxu0 0.0
  %2306 = vmatpush2.msra.mxu0 0.0
  %2307 = vmatprep.subr.mxu0 0.0
  %2308 = vmatpush2.msra.mxu0 0.0
  %2309 = vmatprep.mubr.f32.mxu0 0.0
  %2310 = vmatmul.mubr.f32.gmra.mxu0 %v2222
  %v2311 = vpop.f32.mrf.mxu0
  %v2312 = vadd.f32 0.0, %v2311
  %v2313 = vpop.f32.mrf.mxu0
  %2314 = vmatprep.mubr.f32.mxu0 0.0
  %2315 = vmatmul.mubr.f32.gmra.mxu0 %v2225
  %v2316 = vpop.f32.mrf.mxu0
  %v2317 = vadd.f32 0.0, %v2316
  %v2318 = vpop.f32.mrf.mxu0
  %2319 = vmatprep.mubr.f32.mxu0 0.0
  %2320 = vmatmul.mubr.f32.gmra.mxu0 %v2228
  %v2321 = vpop.f32.mrf.mxu0
  %v2322 = vadd.f32 0.0, %v2321
  %v2323 = vpop.f32.mrf.mxu0
  %2324 = vmatprep.mubr.f32.mxu0 0.0
  %2325 = vmatmul.mubr.f32.gmra.mxu0 %v2231
  %v2326 = vpop.f32.mrf.mxu0
  %v2327 = vadd.f32 0.0, %v2326
  %v2328 = vpop.f32.mrf.mxu0
  %2329 = vmatprep.mubr.f32.mxu0 0.0
  %2330 = vmatmul.mubr.f32.gmra.mxu0 %v2234
  %v2331 = vpop.f32.mrf.mxu0
  %v2332 = vadd.f32 0.0, %v2331
  %v2333 = vpop.f32.mrf.mxu0
  %2334 = vmatprep.mubr.f32.mxu0 0.0
  %2335 = vmatmul.mubr.f32.gmra.mxu0 %v2237
  %v2336 = vpop.f32.mrf.mxu0
  %v2337 = vadd.f32 0.0, %v2336
  %v2338 = vpop.f32.mrf.mxu0
  %2339 = vmatprep.mubr.f32.mxu0 0.0
  %2340 = vmatmul.mubr.f32.gmra.mxu0 %v2240
  %v2341 = vpop.f32.mrf.mxu0
  %v2342 = vadd.f32 0.0, %v2341
  %v2343 = vpop.f32.mrf.mxu0
  %2344 = vmatprep.mubr.f32.mxu0 0.0
  %2345 = vmatmul.mubr.f32.gmra.mxu0 %v2243
  %v2346 = vpop.f32.mrf.mxu0
  %v2347 = vadd.f32 0.0, %v2346
  %v2348 = vpop.f32.mrf.mxu0
  %2349 = vdwg.mxu0
  %s2350 = scalar_lea.vmem %s4, 224
  %v2351 = vld [vmem:[%s2350] sm:$0xff]
  %v2352 = vld [vmem:[%s2350 + $0x8] sm:$0xff]
  %v2353 = vld [vmem:[%s2350 + $0x10] sm:$0xff]
  %v2354 = vld [vmem:[%s2350 + $0x18] sm:$0xff]
  %v2356 = vsel %vm553, %v2312, 0
  %v2359 = vsel %vm553, %v2317, 0
  %v2362 = vsel %vm553, %v2322, 0
  %v2365 = vsel %vm553, %v2327, 0
  %v2368 = vsel %vm553, %v2332, 0
  %v2371 = vsel %vm553, %v2337, 0
  %v2374 = vsel %vm553, %v2342, 0
  %v2377 = vsel %vm553, %v2347, 0
  %2379 = vmatprep.subr.mxu0 0.0
  %2380 = vmatpush1.msra.mxu0 0.0
  %2381 = vmatprep.subr.mxu0 0.0
  %2382 = vmatpush1.msra.mxu0 0.0
  %2383 = vmatprep.subr.mxu0 0.0
  %2384 = vmatpush1.msra.mxu0 0.0
  %2385 = vmatprep.subr.mxu0 0.0
  %2386 = vmatpush1.msra.mxu0 0.0
  %2387 = vmatprep.subr.mxu0 0.0
  %2388 = vmatpush1.msra.mxu0 0.0
  %2389 = vmatprep.subr.mxu0 0.0
  %2390 = vmatpush1.msra.mxu0 0.0
  %2391 = vmatprep.subr.mxu0 0.0
  %2392 = vmatpush1.msra.mxu0 0.0
  %2393 = vmatprep.subr.mxu0 0.0
  %2394 = vmatpush1.msra.mxu0 0.0
  %2395 = vmatprep.subr.mxu0 0.0
  %2396 = vmatpush1.msra.mxu0 0.0
  %2397 = vmatprep.subr.mxu0 0.0
  %2398 = vmatpush1.msra.mxu0 0.0
  %2399 = vmatprep.subr.mxu0 0.0
  %2400 = vmatpush1.msra.mxu0 0.0
  %2401 = vmatprep.subr.mxu0 0.0
  %2402 = vmatpush1.msra.mxu0 0.0
  %2403 = vmatprep.subr.mxu0 0.0
  %2404 = vmatpush1.msra.mxu0 %v2354
  %2405 = vmatprep.subr.mxu0 0.0
  %2406 = vmatpush1.msra.mxu0 %v2353
  %2407 = vmatprep.subr.mxu0 0.0
  %2408 = vmatpush1.msra.mxu0 %v2352
  %2409 = vmatprep.subr.mxu0 0.0
  %2410 = vmatpush1.msra.mxu0 %v2351
  %2411 = vmatprep.subr.mxu0 0.0
  %2412 = vmatpush2.msra.mxu0 0.0
  %2413 = vmatprep.subr.mxu0 0.0
  %2414 = vmatpush2.msra.mxu0 0.0
  %2415 = vmatprep.subr.mxu0 0.0
  %2416 = vmatpush2.msra.mxu0 0.0
  %2417 = vmatprep.subr.mxu0 0.0
  %2418 = vmatpush2.msra.mxu0 0.0
  %2419 = vmatprep.subr.mxu0 0.0
  %2420 = vmatpush2.msra.mxu0 0.0
  %2421 = vmatprep.subr.mxu0 0.0
  %2422 = vmatpush2.msra.mxu0 0.0
  %2423 = vmatprep.subr.mxu0 0.0
  %2424 = vmatpush2.msra.mxu0 0.0
  %2425 = vmatprep.subr.mxu0 0.0
  %2426 = vmatpush2.msra.mxu0 0.0
  %2427 = vmatprep.subr.mxu0 0.0
  %2428 = vmatpush2.msra.mxu0 0.0
  %2429 = vmatprep.subr.mxu0 0.0
  %2430 = vmatpush2.msra.mxu0 0.0
  %2431 = vmatprep.subr.mxu0 0.0
  %2432 = vmatpush2.msra.mxu0 0.0
  %2433 = vmatprep.subr.mxu0 0.0
  %2434 = vmatpush2.msra.mxu0 0.0
  %2435 = vmatprep.subr.mxu0 0.0
  %2436 = vmatpush2.msra.mxu0 0.0
  %2437 = vmatprep.subr.mxu0 0.0
  %2438 = vmatpush2.msra.mxu0 0.0
  %2439 = vmatprep.subr.mxu0 0.0
  %2440 = vmatpush2.msra.mxu0 0.0
  %2441 = vmatprep.subr.mxu0 0.0
  %2442 = vmatpush2.msra.mxu0 0.0
  %2443 = vmatprep.mubr.f32.mxu0 0.0
  %2444 = vmatmul.mubr.f32.gmra.mxu0 %v2356
  %v2445 = vpop.f32.mrf.mxu0
  %v2446 = vadd.f32 0.0, %v2445
  %v2447 = vpop.f32.mrf.mxu0
  %2448 = vmatprep.mubr.f32.mxu0 0.0
  %2449 = vmatmul.mubr.f32.gmra.mxu0 %v2359
  %v2450 = vpop.f32.mrf.mxu0
  %v2451 = vadd.f32 0.0, %v2450
  %v2452 = vpop.f32.mrf.mxu0
  %2453 = vmatprep.mubr.f32.mxu0 0.0
  %2454 = vmatmul.mubr.f32.gmra.mxu0 %v2362
  %v2455 = vpop.f32.mrf.mxu0
  %v2456 = vadd.f32 0.0, %v2455
  %v2457 = vpop.f32.mrf.mxu0
  %2458 = vmatprep.mubr.f32.mxu0 0.0
  %2459 = vmatmul.mubr.f32.gmra.mxu0 %v2365
  %v2460 = vpop.f32.mrf.mxu0
  %v2461 = vadd.f32 0.0, %v2460
  %v2462 = vpop.f32.mrf.mxu0
  %2463 = vmatprep.mubr.f32.mxu0 0.0
  %2464 = vmatmul.mubr.f32.gmra.mxu0 %v2368
  %v2465 = vpop.f32.mrf.mxu0
  %v2466 = vadd.f32 0.0, %v2465
  %v2467 = vpop.f32.mrf.mxu0
  %2468 = vmatprep.mubr.f32.mxu0 0.0
  %2469 = vmatmul.mubr.f32.gmra.mxu0 %v2371
  %v2470 = vpop.f32.mrf.mxu0
  %v2471 = vadd.f32 0.0, %v2470
  %v2472 = vpop.f32.mrf.mxu0
  %2473 = vmatprep.mubr.f32.mxu0 0.0
  %2474 = vmatmul.mubr.f32.gmra.mxu0 %v2374
  %v2475 = vpop.f32.mrf.mxu0
  %v2476 = vadd.f32 0.0, %v2475
  %v2477 = vpop.f32.mrf.mxu0
  %2478 = vmatprep.mubr.f32.mxu0 0.0
  %2479 = vmatmul.mubr.f32.gmra.mxu0 %v2377
  %v2480 = vpop.f32.mrf.mxu0
  %v2481 = vadd.f32 0.0, %v2480
  %v2482 = vpop.f32.mrf.mxu0
  %2483 = vdwg.mxu0
  %v2484 = vadd.f32 %v2204, %v2446
  %v2485 = vadd.f32 %v2205, %v2451
  %v2486 = vadd.f32 %v2206, %v2456
  %v2487 = vadd.f32 %v2207, %v2461
  %v2488 = vadd.f32 %v2208, %v2466
  %v2489 = vadd.f32 %v2209, %v2471
  %v2490 = vadd.f32 %v2210, %v2476
  %v2491 = vadd.f32 %v2211, %v2481
  %s2492 = scalar_lea.vmem %s3, 512
  %v2493 = vld [vmem:[%s2492] sm:$0xff]
  %v2494 = vld [vmem:[%s2492 + $0x8] sm:$0xff]
  %v2495 = vld [vmem:[%s2492 + $0x10] sm:$0xff]
  %v2496 = vld [vmem:[%s2492 + $0x18] sm:$0xff]
  %v2497 = vld [vmem:[%s2492 + $0x20] sm:$0xff]
  %v2498 = vld [vmem:[%s2492 + $0x28] sm:$0xff]
  %v2499 = vld [vmem:[%s2492 + $0x30] sm:$0xff]
  %v2500 = vld [vmem:[%s2492 + $0x38] sm:$0xff]
  %v2502 = vsel %vm276, %v2493, 0
  %v2505 = vsel %vm276, %v2494, 0
  %v2508 = vsel %vm276, %v2495, 0
  %v2511 = vsel %vm276, %v2496, 0
  %v2514 = vsel %vm276, %v2497, 0
  %v2517 = vsel %vm276, %v2498, 0
  %v2520 = vsel %vm276, %v2499, 0
  %v2523 = vsel %vm276, %v2500, 0
  %2525 = vmatprep.subr.mxu0 0.0
  %2526 = vmatpush1.msra.mxu0 0.0
  %2527 = vmatprep.subr.mxu0 0.0
  %2528 = vmatpush1.msra.mxu0 0.0
  %2529 = vmatprep.subr.mxu0 0.0
  %2530 = vmatpush1.msra.mxu0 %v267
  %2531 = vmatprep.subr.mxu0 0.0
  %2532 = vmatpush1.msra.mxu0 %v266
  %2533 = vmatprep.subr.mxu0 0.0
  %2534 = vmatpush1.msra.mxu0 %v265
  %2535 = vmatprep.subr.mxu0 0.0
  %2536 = vmatpush1.msra.mxu0 %v264
  %2537 = vmatprep.subr.mxu0 0.0
  %2538 = vmatpush1.msra.mxu0 %v263
  %2539 = vmatprep.subr.mxu0 0.0
  %2540 = vmatpush1.msra.mxu0 %v262
  %2541 = vmatprep.subr.mxu0 0.0
  %2542 = vmatpush1.msra.mxu0 %v261
  %2543 = vmatprep.subr.mxu0 0.0
  %2544 = vmatpush1.msra.mxu0 %v260
  %2545 = vmatprep.subr.mxu0 0.0
  %2546 = vmatpush1.msra.mxu0 %v259
  %2547 = vmatprep.subr.mxu0 0.0
  %2548 = vmatpush1.msra.mxu0 %v258
  %2549 = vmatprep.subr.mxu0 0.0
  %2550 = vmatpush1.msra.mxu0 %v257
  %2551 = vmatprep.subr.mxu0 0.0
  %2552 = vmatpush1.msra.mxu0 %v256
  %2553 = vmatprep.subr.mxu0 0.0
  %2554 = vmatpush1.msra.mxu0 %v255
  %2555 = vmatprep.subr.mxu0 0.0
  %2556 = vmatpush1.msra.mxu0 %v254
  %2557 = vmatprep.subr.mxu0 0.0
  %2558 = vmatpush2.msra.mxu0 0.0
  %2559 = vmatprep.subr.mxu0 0.0
  %2560 = vmatpush2.msra.mxu0 0.0
  %2561 = vmatprep.subr.mxu0 0.0
  %2562 = vmatpush2.msra.mxu0 0.0
  %2563 = vmatprep.subr.mxu0 0.0
  %2564 = vmatpush2.msra.mxu0 0.0
  %2565 = vmatprep.subr.mxu0 0.0
  %2566 = vmatpush2.msra.mxu0 0.0
  %2567 = vmatprep.subr.mxu0 0.0
  %2568 = vmatpush2.msra.mxu0 0.0
  %2569 = vmatprep.subr.mxu0 0.0
  %2570 = vmatpush2.msra.mxu0 0.0
  %2571 = vmatprep.subr.mxu0 0.0
  %2572 = vmatpush2.msra.mxu0 0.0
  %2573 = vmatprep.subr.mxu0 0.0
  %2574 = vmatpush2.msra.mxu0 0.0
  %2575 = vmatprep.subr.mxu0 0.0
  %2576 = vmatpush2.msra.mxu0 0.0
  %2577 = vmatprep.subr.mxu0 0.0
  %2578 = vmatpush2.msra.mxu0 0.0
  %2579 = vmatprep.subr.mxu0 0.0
  %2580 = vmatpush2.msra.mxu0 0.0
  %2581 = vmatprep.subr.mxu0 0.0
  %2582 = vmatpush2.msra.mxu0 0.0
  %2583 = vmatprep.subr.mxu0 0.0
  %2584 = vmatpush2.msra.mxu0 0.0
  %2585 = vmatprep.subr.mxu0 0.0
  %2586 = vmatpush2.msra.mxu0 0.0
  %2587 = vmatprep.subr.mxu0 0.0
  %2588 = vmatpush2.msra.mxu0 0.0
  %2589 = vmatprep.mubr.f32.mxu0 0.0
  %2590 = vmatmul.mubr.f32.gmra.mxu0 %v2502
  %v2591 = vpop.f32.mrf.mxu0
  %v2592 = vadd.f32 0.0, %v2591
  %v2593 = vpop.f32.mrf.mxu0
  %2594 = vmatprep.mubr.f32.mxu0 0.0
  %2595 = vmatmul.mubr.f32.gmra.mxu0 %v2505
  %v2596 = vpop.f32.mrf.mxu0
  %v2597 = vadd.f32 0.0, %v2596
  %v2598 = vpop.f32.mrf.mxu0
  %2599 = vmatprep.mubr.f32.mxu0 0.0
  %2600 = vmatmul.mubr.f32.gmra.mxu0 %v2508
  %v2601 = vpop.f32.mrf.mxu0
  %v2602 = vadd.f32 0.0, %v2601
  %v2603 = vpop.f32.mrf.mxu0
  %2604 = vmatprep.mubr.f32.mxu0 0.0
  %2605 = vmatmul.mubr.f32.gmra.mxu0 %v2511
  %v2606 = vpop.f32.mrf.mxu0
  %v2607 = vadd.f32 0.0, %v2606
  %v2608 = vpop.f32.mrf.mxu0
  %2609 = vmatprep.mubr.f32.mxu0 0.0
  %2610 = vmatmul.mubr.f32.gmra.mxu0 %v2514
  %v2611 = vpop.f32.mrf.mxu0
  %v2612 = vadd.f32 0.0, %v2611
  %v2613 = vpop.f32.mrf.mxu0
  %2614 = vmatprep.mubr.f32.mxu0 0.0
  %2615 = vmatmul.mubr.f32.gmra.mxu0 %v2517
  %v2616 = vpop.f32.mrf.mxu0
  %v2617 = vadd.f32 0.0, %v2616
  %v2618 = vpop.f32.mrf.mxu0
  %2619 = vmatprep.mubr.f32.mxu0 0.0
  %2620 = vmatmul.mubr.f32.gmra.mxu0 %v2520
  %v2621 = vpop.f32.mrf.mxu0
  %v2622 = vadd.f32 0.0, %v2621
  %v2623 = vpop.f32.mrf.mxu0
  %2624 = vmatprep.mubr.f32.mxu0 0.0
  %2625 = vmatmul.mubr.f32.gmra.mxu0 %v2523
  %v2626 = vpop.f32.mrf.mxu0
  %v2627 = vadd.f32 0.0, %v2626
  %v2628 = vpop.f32.mrf.mxu0
  %2629 = vdwg.mxu0
  %s2630 = scalar_lea.vmem %s4, 256
  %v2631 = vld [vmem:[%s2630] sm:$0xff]
  %v2632 = vld [vmem:[%s2630 + $0x8] sm:$0xff]
  %v2633 = vld [vmem:[%s2630 + $0x10] sm:$0xff]
  %v2634 = vld [vmem:[%s2630 + $0x18] sm:$0xff]
  %v2636 = vsel %vm553, %v2592, 0
  %v2639 = vsel %vm553, %v2597, 0
  %v2642 = vsel %vm553, %v2602, 0
  %v2645 = vsel %vm553, %v2607, 0
  %v2648 = vsel %vm553, %v2612, 0
  %v2651 = vsel %vm553, %v2617, 0
  %v2654 = vsel %vm553, %v2622, 0
  %v2657 = vsel %vm553, %v2627, 0
  %2659 = vmatprep.subr.mxu0 0.0
  %2660 = vmatpush1.msra.mxu0 0.0
  %2661 = vmatprep.subr.mxu0 0.0
  %2662 = vmatpush1.msra.mxu0 0.0
  %2663 = vmatprep.subr.mxu0 0.0
  %2664 = vmatpush1.msra.mxu0 0.0
  %2665 = vmatprep.subr.mxu0 0.0
  %2666 = vmatpush1.msra.mxu0 0.0
  %2667 = vmatprep.subr.mxu0 0.0
  %2668 = vmatpush1.msra.mxu0 0.0
  %2669 = vmatprep.subr.mxu0 0.0
  %2670 = vmatpush1.msra.mxu0 0.0
  %2671 = vmatprep.subr.mxu0 0.0
  %2672 = vmatpush1.msra.mxu0 0.0
  %2673 = vmatprep.subr.mxu0 0.0
  %2674 = vmatpush1.msra.mxu0 0.0
  %2675 = vmatprep.subr.mxu0 0.0
  %2676 = vmatpush1.msra.mxu0 0.0
  %2677 = vmatprep.subr.mxu0 0.0
  %2678 = vmatpush1.msra.mxu0 0.0
  %2679 = vmatprep.subr.mxu0 0.0
  %2680 = vmatpush1.msra.mxu0 0.0
  %2681 = vmatprep.subr.mxu0 0.0
  %2682 = vmatpush1.msra.mxu0 0.0
  %2683 = vmatprep.subr.mxu0 0.0
  %2684 = vmatpush1.msra.mxu0 %v2634
  %2685 = vmatprep.subr.mxu0 0.0
  %2686 = vmatpush1.msra.mxu0 %v2633
  %2687 = vmatprep.subr.mxu0 0.0
  %2688 = vmatpush1.msra.mxu0 %v2632
  %2689 = vmatprep.subr.mxu0 0.0
  %2690 = vmatpush1.msra.mxu0 %v2631
  %2691 = vmatprep.subr.mxu0 0.0
  %2692 = vmatpush2.msra.mxu0 0.0
  %2693 = vmatprep.subr.mxu0 0.0
  %2694 = vmatpush2.msra.mxu0 0.0
  %2695 = vmatprep.subr.mxu0 0.0
  %2696 = vmatpush2.msra.mxu0 0.0
  %2697 = vmatprep.subr.mxu0 0.0
  %2698 = vmatpush2.msra.mxu0 0.0
  %2699 = vmatprep.subr.mxu0 0.0
  %2700 = vmatpush2.msra.mxu0 0.0
  %2701 = vmatprep.subr.mxu0 0.0
  %2702 = vmatpush2.msra.mxu0 0.0
  %2703 = vmatprep.subr.mxu0 0.0
  %2704 = vmatpush2.msra.mxu0 0.0
  %2705 = vmatprep.subr.mxu0 0.0
  %2706 = vmatpush2.msra.mxu0 0.0
  %2707 = vmatprep.subr.mxu0 0.0
  %2708 = vmatpush2.msra.mxu0 0.0
  %2709 = vmatprep.subr.mxu0 0.0
  %2710 = vmatpush2.msra.mxu0 0.0
  %2711 = vmatprep.subr.mxu0 0.0
  %2712 = vmatpush2.msra.mxu0 0.0
  %2713 = vmatprep.subr.mxu0 0.0
  %2714 = vmatpush2.msra.mxu0 0.0
  %2715 = vmatprep.subr.mxu0 0.0
  %2716 = vmatpush2.msra.mxu0 0.0
  %2717 = vmatprep.subr.mxu0 0.0
  %2718 = vmatpush2.msra.mxu0 0.0
  %2719 = vmatprep.subr.mxu0 0.0
  %2720 = vmatpush2.msra.mxu0 0.0
  %2721 = vmatprep.subr.mxu0 0.0
  %2722 = vmatpush2.msra.mxu0 0.0
  %2723 = vmatprep.mubr.f32.mxu0 0.0
  %2724 = vmatmul.mubr.f32.gmra.mxu0 %v2636
  %v2725 = vpop.f32.mrf.mxu0
  %v2726 = vadd.f32 0.0, %v2725
  %v2727 = vpop.f32.mrf.mxu0
  %2728 = vmatprep.mubr.f32.mxu0 0.0
  %2729 = vmatmul.mubr.f32.gmra.mxu0 %v2639
  %v2730 = vpop.f32.mrf.mxu0
  %v2731 = vadd.f32 0.0, %v2730
  %v2732 = vpop.f32.mrf.mxu0
  %2733 = vmatprep.mubr.f32.mxu0 0.0
  %2734 = vmatmul.mubr.f32.gmra.mxu0 %v2642
  %v2735 = vpop.f32.mrf.mxu0
  %v2736 = vadd.f32 0.0, %v2735
  %v2737 = vpop.f32.mrf.mxu0
  %2738 = vmatprep.mubr.f32.mxu0 0.0
  %2739 = vmatmul.mubr.f32.gmra.mxu0 %v2645
  %v2740 = vpop.f32.mrf.mxu0
  %v2741 = vadd.f32 0.0, %v2740
  %v2742 = vpop.f32.mrf.mxu0
  %2743 = vmatprep.mubr.f32.mxu0 0.0
  %2744 = vmatmul.mubr.f32.gmra.mxu0 %v2648
  %v2745 = vpop.f32.mrf.mxu0
  %v2746 = vadd.f32 0.0, %v2745
  %v2747 = vpop.f32.mrf.mxu0
  %2748 = vmatprep.mubr.f32.mxu0 0.0
  %2749 = vmatmul.mubr.f32.gmra.mxu0 %v2651
  %v2750 = vpop.f32.mrf.mxu0
  %v2751 = vadd.f32 0.0, %v2750
  %v2752 = vpop.f32.mrf.mxu0
  %2753 = vmatprep.mubr.f32.mxu0 0.0
  %2754 = vmatmul.mubr.f32.gmra.mxu0 %v2654
  %v2755 = vpop.f32.mrf.mxu0
  %v2756 = vadd.f32 0.0, %v2755
  %v2757 = vpop.f32.mrf.mxu0
  %2758 = vmatprep.mubr.f32.mxu0 0.0
  %2759 = vmatmul.mubr.f32.gmra.mxu0 %v2657
  %v2760 = vpop.f32.mrf.mxu0
  %v2761 = vadd.f32 0.0, %v2760
  %v2762 = vpop.f32.mrf.mxu0
  %2763 = vdwg.mxu0
  %v2764 = vadd.f32 %v2484, %v2726
  %v2765 = vadd.f32 %v2485, %v2731
  %v2766 = vadd.f32 %v2486, %v2736
  %v2767 = vadd.f32 %v2487, %v2741
  %v2768 = vadd.f32 %v2488, %v2746
  %v2769 = vadd.f32 %v2489, %v2751
  %v2770 = vadd.f32 %v2490, %v2756
  %v2771 = vadd.f32 %v2491, %v2761
  %v2772 = vld [vmem:[%s5] sm:$0x1]
  %v2774 = vlaneseq
  %v2775 = vshrl.u32 %v2774, 7
  %v2776 = vsub.s32 0, %v2775
  %v2777 = vrot.slane %v2772, %v2776
  %v2779 = vadd.f32 %v2764, %v2777
  %v2780 = vadd.f32 %v2765, %v2777
  %v2781 = vadd.f32 %v2766, %v2777
  %v2782 = vadd.f32 %v2767, %v2777
  %v2783 = vadd.f32 %v2768, %v2777
  %v2784 = vadd.f32 %v2769, %v2777
  %v2785 = vadd.f32 %v2770, %v2777
  %v2786 = vadd.f32 %v2771, %v2777
  %v2787 = vmax.f32 %v2779, 0.0
  %v2788 = vmax.f32 %v2780, 0.0
  %v2789 = vmax.f32 %v2781, 0.0
  %v2790 = vmax.f32 %v2782, 0.0
  %v2791 = vmax.f32 %v2783, 0.0
  %v2792 = vmax.f32 %v2784, 0.0
  %v2793 = vmax.f32 %v2785, 0.0
  %v2794 = vmax.f32 %v2786, 0.0
  %v2795 = vld [vmem:[%s6] sm:$0xff]
  %v2796 = vld [vmem:[%s6 + $0x8] sm:$0xff]
  %v2797 = vld [vmem:[%s6 + $0x10] sm:$0xff]
  %v2798 = vld [vmem:[%s6 + $0x18] sm:$0xff]
  %v2800 = vsel %vm76, %v2795, 0
  %v2803 = vsel %vm76, %v2796, 0
  %v2806 = vsel %vm76, %v2797, 0
  %v2809 = vsel %vm76, %v2798, 0
  %2811 = vmatprep.subr.mxu0 0.0
  %2812 = vmatpush1.msra.mxu0 0.0
  %2813 = vmatprep.subr.mxu0 0.0
  %2814 = vmatpush1.msra.mxu0 0.0
  %2815 = vmatprep.subr.mxu0 0.0
  %2816 = vmatpush1.msra.mxu0 0.0
  %2817 = vmatprep.subr.mxu0 0.0
  %2818 = vmatpush1.msra.mxu0 0.0
  %2819 = vmatprep.subr.mxu0 0.0
  %2820 = vmatpush1.msra.mxu0 0.0
  %2821 = vmatprep.subr.mxu0 0.0
  %2822 = vmatpush1.msra.mxu0 0.0
  %2823 = vmatprep.subr.mxu0 0.0
  %2824 = vmatpush1.msra.mxu0 0.0
  %2825 = vmatprep.subr.mxu0 0.0
  %2826 = vmatpush1.msra.mxu0 0.0
  %2827 = vmatprep.subr.mxu0 0.0
  %2828 = vmatpush1.msra.mxu0 %v2794
  %2829 = vmatprep.subr.mxu0 0.0
  %2830 = vmatpush1.msra.mxu0 %v2793
  %2831 = vmatprep.subr.mxu0 0.0
  %2832 = vmatpush1.msra.mxu0 %v2792
  %2833 = vmatprep.subr.mxu0 0.0
  %2834 = vmatpush1.msra.mxu0 %v2791
  %2835 = vmatprep.subr.mxu0 0.0
  %2836 = vmatpush1.msra.mxu0 %v2790
  %2837 = vmatprep.subr.mxu0 0.0
  %2838 = vmatpush1.msra.mxu0 %v2789
  %2839 = vmatprep.subr.mxu0 0.0
  %2840 = vmatpush1.msra.mxu0 %v2788
  %2841 = vmatprep.subr.mxu0 0.0
  %2842 = vmatpush1.msra.mxu0 %v2787
  %2843 = vmatprep.subr.mxu0 0.0
  %2844 = vmatpush2.msra.mxu0 0.0
  %2845 = vmatprep.subr.mxu0 0.0
  %2846 = vmatpush2.msra.mxu0 0.0
  %2847 = vmatprep.subr.mxu0 0.0
  %2848 = vmatpush2.msra.mxu0 0.0
  %2849 = vmatprep.subr.mxu0 0.0
  %2850 = vmatpush2.msra.mxu0 0.0
  %2851 = vmatprep.subr.mxu0 0.0
  %2852 = vmatpush2.msra.mxu0 0.0
  %2853 = vmatprep.subr.mxu0 0.0
  %2854 = vmatpush2.msra.mxu0 0.0
  %2855 = vmatprep.subr.mxu0 0.0
  %2856 = vmatpush2.msra.mxu0 0.0
  %2857 = vmatprep.subr.mxu0 0.0
  %2858 = vmatpush2.msra.mxu0 0.0
  %2859 = vmatprep.subr.mxu0 0.0
  %2860 = vmatpush2.msra.mxu0 0.0
  %2861 = vmatprep.subr.mxu0 0.0
  %2862 = vmatpush2.msra.mxu0 0.0
  %2863 = vmatprep.subr.mxu0 0.0
  %2864 = vmatpush2.msra.mxu0 0.0
  %2865 = vmatprep.subr.mxu0 0.0
  %2866 = vmatpush2.msra.mxu0 0.0
  %2867 = vmatprep.subr.mxu0 0.0
  %2868 = vmatpush2.msra.mxu0 0.0
  %2869 = vmatprep.subr.mxu0 0.0
  %2870 = vmatpush2.msra.mxu0 0.0
  %2871 = vmatprep.subr.mxu0 0.0
  %2872 = vmatpush2.msra.mxu0 0.0
  %2873 = vmatprep.subr.mxu0 0.0
  %2874 = vmatpush2.msra.mxu0 0.0
  %2875 = vmatprep.mubr.f32.mxu0 0.0
  %2876 = vmatmul.mubr.f32.gmra.mxu0 %v2800
  %v2877 = vpop.f32.mrf.mxu0
  %v2878 = vadd.f32 0.0, %v2877
  %v2879 = vpop.f32.mrf.mxu0
  %2880 = vmatprep.mubr.f32.mxu0 0.0
  %2881 = vmatmul.mubr.f32.gmra.mxu0 %v2803
  %v2882 = vpop.f32.mrf.mxu0
  %v2883 = vadd.f32 0.0, %v2882
  %v2884 = vpop.f32.mrf.mxu0
  %2885 = vmatprep.mubr.f32.mxu0 0.0
  %2886 = vmatmul.mubr.f32.gmra.mxu0 %v2806
  %v2887 = vpop.f32.mrf.mxu0
  %v2888 = vadd.f32 0.0, %v2887
  %v2889 = vpop.f32.mrf.mxu0
  %2890 = vmatprep.mubr.f32.mxu0 0.0
  %2891 = vmatmul.mubr.f32.gmra.mxu0 %v2809
  %v2892 = vpop.f32.mrf.mxu0
  %v2893 = vadd.f32 0.0, %v2892
  %v2894 = vpop.f32.mrf.mxu0
  %2895 = vdwg.mxu0
  %v2896 = vld [vmem:[%s7] sm:$0xff]
  %v2897 = vld [vmem:[%s7 + $0x8] sm:$0xff]
  %v2898 = vld [vmem:[%s7 + $0x10] sm:$0xff]
  %v2899 = vld [vmem:[%s7 + $0x18] sm:$0xff]
  %v2900 = vld [vmem:[%s7 + $0x20] sm:$0xff]
  %v2901 = vld [vmem:[%s7 + $0x28] sm:$0xff]
  %v2902 = vld [vmem:[%s7 + $0x30] sm:$0xff]
  %v2903 = vld [vmem:[%s7 + $0x38] sm:$0xff]
  %s2904 = scalar_lea.vmem %s6, 32
  %v2905 = vld [vmem:[%s2904] sm:$0xff]
  %v2906 = vld [vmem:[%s2904 + $0x8] sm:$0xff]
  %v2907 = vld [vmem:[%s2904 + $0x10] sm:$0xff]
  %v2908 = vld [vmem:[%s2904 + $0x18] sm:$0xff]
  %v2910 = vsel %vm76, %v2905, 0
  %v2913 = vsel %vm76, %v2906, 0
  %v2916 = vsel %vm76, %v2907, 0
  %v2919 = vsel %vm76, %v2908, 0
  %2921 = vmatprep.subr.mxu0 0.0
  %2922 = vmatpush1.msra.mxu0 0.0
  %2923 = vmatprep.subr.mxu0 0.0
  %2924 = vmatpush1.msra.mxu0 0.0
  %2925 = vmatprep.subr.mxu0 0.0
  %2926 = vmatpush1.msra.mxu0 0.0
  %2927 = vmatprep.subr.mxu0 0.0
  %2928 = vmatpush1.msra.mxu0 0.0
  %2929 = vmatprep.subr.mxu0 0.0
  %2930 = vmatpush1.msra.mxu0 0.0
  %2931 = vmatprep.subr.mxu0 0.0
  %2932 = vmatpush1.msra.mxu0 0.0
  %2933 = vmatprep.subr.mxu0 0.0
  %2934 = vmatpush1.msra.mxu0 0.0
  %2935 = vmatprep.subr.mxu0 0.0
  %2936 = vmatpush1.msra.mxu0 0.0
  %2937 = vmatprep.subr.mxu0 0.0
  %2938 = vmatpush1.msra.mxu0 %v2794
  %2939 = vmatprep.subr.mxu0 0.0
  %2940 = vmatpush1.msra.mxu0 %v2793
  %2941 = vmatprep.subr.mxu0 0.0
  %2942 = vmatpush1.msra.mxu0 %v2792
  %2943 = vmatprep.subr.mxu0 0.0
  %2944 = vmatpush1.msra.mxu0 %v2791
  %2945 = vmatprep.subr.mxu0 0.0
  %2946 = vmatpush1.msra.mxu0 %v2790
  %2947 = vmatprep.subr.mxu0 0.0
  %2948 = vmatpush1.msra.mxu0 %v2789
  %2949 = vmatprep.subr.mxu0 0.0
  %2950 = vmatpush1.msra.mxu0 %v2788
  %2951 = vmatprep.subr.mxu0 0.0
  %2952 = vmatpush1.msra.mxu0 %v2787
  %2953 = vmatprep.subr.mxu0 0.0
  %2954 = vmatpush2.msra.mxu0 0.0
  %2955 = vmatprep.subr.mxu0 0.0
  %2956 = vmatpush2.msra.mxu0 0.0
  %2957 = vmatprep.subr.mxu0 0.0
  %2958 = vmatpush2.msra.mxu0 0.0
  %2959 = vmatprep.subr.mxu0 0.0
  %2960 = vmatpush2.msra.mxu0 0.0
  %2961 = vmatprep.subr.mxu0 0.0
  %2962 = vmatpush2.msra.mxu0 0.0
  %2963 = vmatprep.subr.mxu0 0.0
  %2964 = vmatpush2.msra.mxu0 0.0
  %2965 = vmatprep.subr.mxu0 0.0
  %2966 = vmatpush2.msra.mxu0 0.0
  %2967 = vmatprep.subr.mxu0 0.0
  %2968 = vmatpush2.msra.mxu0 0.0
  %2969 = vmatprep.subr.mxu0 0.0
  %2970 = vmatpush2.msra.mxu0 0.0
  %2971 = vmatprep.subr.mxu0 0.0
  %2972 = vmatpush2.msra.mxu0 0.0
  %2973 = vmatprep.subr.mxu0 0.0
  %2974 = vmatpush2.msra.mxu0 0.0
  %2975 = vmatprep.subr.mxu0 0.0
  %2976 = vmatpush2.msra.mxu0 0.0
  %2977 = vmatprep.subr.mxu0 0.0
  %2978 = vmatpush2.msra.mxu0 0.0
  %2979 = vmatprep.subr.mxu0 0.0
  %2980 = vmatpush2.msra.mxu0 0.0
  %2981 = vmatprep.subr.mxu0 0.0
  %2982 = vmatpush2.msra.mxu0 0.0
  %2983 = vmatprep.subr.mxu0 0.0
  %2984 = vmatpush2.msra.mxu0 0.0
  %2985 = vmatprep.mubr.f32.mxu0 0.0
  %2986 = vmatmul.mubr.f32.gmra.mxu0 %v2910
  %v2987 = vpop.f32.mrf.mxu0
  %v2988 = vadd.f32 0.0, %v2987
  %v2989 = vpop.f32.mrf.mxu0
  %2990 = vmatprep.mubr.f32.mxu0 0.0
  %2991 = vmatmul.mubr.f32.gmra.mxu0 %v2913
  %v2992 = vpop.f32.mrf.mxu0
  %v2993 = vadd.f32 0.0, %v2992
  %v2994 = vpop.f32.mrf.mxu0
  %2995 = vmatprep.mubr.f32.mxu0 0.0
  %2996 = vmatmul.mubr.f32.gmra.mxu0 %v2916
  %v2997 = vpop.f32.mrf.mxu0
  %v2998 = vadd.f32 0.0, %v2997
  %v2999 = vpop.f32.mrf.mxu0
  %3000 = vmatprep.mubr.f32.mxu0 0.0
  %3001 = vmatmul.mubr.f32.gmra.mxu0 %v2919
  %v3002 = vpop.f32.mrf.mxu0
  %v3003 = vadd.f32 0.0, %v3002
  %v3004 = vpop.f32.mrf.mxu0
  %3005 = vdwg.mxu0
  %s3006 = scalar_lea.vmem %s7, 64
  %v3007 = vld [vmem:[%s3006] sm:$0xff]
  %v3008 = vld [vmem:[%s3006 + $0x8] sm:$0xff]
  %v3009 = vld [vmem:[%s3006 + $0x10] sm:$0xff]
  %v3010 = vld [vmem:[%s3006 + $0x18] sm:$0xff]
  %v3011 = vld [vmem:[%s3006 + $0x20] sm:$0xff]
  %v3012 = vld [vmem:[%s3006 + $0x28] sm:$0xff]
  %v3013 = vld [vmem:[%s3006 + $0x30] sm:$0xff]
  %v3014 = vld [vmem:[%s3006 + $0x38] sm:$0xff]
  %v3016 = vsel %vm76, %v2988, 0
  %v3019 = vsel %vm76, %v2993, 0
  %v3022 = vsel %vm76, %v2998, 0
  %v3025 = vsel %vm76, %v3003, 0
  %3027 = vmatprep.subr.mxu0 0.0
  %3028 = vmatpush1.msra.mxu0 0.0
  %3029 = vmatprep.subr.mxu0 0.0
  %3030 = vmatpush1.msra.mxu0 0.0
  %3031 = vmatprep.subr.mxu0 0.0
  %3032 = vmatpush1.msra.mxu0 0.0
  %3033 = vmatprep.subr.mxu0 0.0
  %3034 = vmatpush1.msra.mxu0 0.0
  %3035 = vmatprep.subr.mxu0 0.0
  %3036 = vmatpush1.msra.mxu0 0.0
  %3037 = vmatprep.subr.mxu0 0.0
  %3038 = vmatpush1.msra.mxu0 0.0
  %3039 = vmatprep.subr.mxu0 0.0
  %3040 = vmatpush1.msra.mxu0 0.0
  %3041 = vmatprep.subr.mxu0 0.0
  %3042 = vmatpush1.msra.mxu0 0.0
  %3043 = vmatprep.subr.mxu0 0.0
  %3044 = vmatpush1.msra.mxu0 %v3014
  %3045 = vmatprep.subr.mxu0 0.0
  %3046 = vmatpush1.msra.mxu0 %v3013
  %3047 = vmatprep.subr.mxu0 0.0
  %3048 = vmatpush1.msra.mxu0 %v3012
  %3049 = vmatprep.subr.mxu0 0.0
  %3050 = vmatpush1.msra.mxu0 %v3011
  %3051 = vmatprep.subr.mxu0 0.0
  %3052 = vmatpush1.msra.mxu0 %v3010
  %3053 = vmatprep.subr.mxu0 0.0
  %3054 = vmatpush1.msra.mxu0 %v3009
  %3055 = vmatprep.subr.mxu0 0.0
  %3056 = vmatpush1.msra.mxu0 %v3008
  %3057 = vmatprep.subr.mxu0 0.0
  %3058 = vmatpush1.msra.mxu0 %v3007
  %3059 = vmatprep.subr.mxu0 0.0
  %3060 = vmatpush2.msra.mxu0 0.0
  %3061 = vmatprep.subr.mxu0 0.0
  %3062 = vmatpush2.msra.mxu0 0.0
  %3063 = vmatprep.subr.mxu0 0.0
  %3064 = vmatpush2.msra.mxu0 0.0
  %3065 = vmatprep.subr.mxu0 0.0
  %3066 = vmatpush2.msra.mxu0 0.0
  %3067 = vmatprep.subr.mxu0 0.0
  %3068 = vmatpush2.msra.mxu0 0.0
  %3069 = vmatprep.subr.mxu0 0.0
  %3070 = vmatpush2.msra.mxu0 0.0
  %3071 = vmatprep.subr.mxu0 0.0
  %3072 = vmatpush2.msra.mxu0 0.0
  %3073 = vmatprep.subr.mxu0 0.0
  %3074 = vmatpush2.msra.mxu0 0.0
  %3075 = vmatprep.subr.mxu0 0.0
  %3076 = vmatpush2.msra.mxu0 0.0
  %3077 = vmatprep.subr.mxu0 0.0
  %3078 = vmatpush2.msra.mxu0 0.0
  %3079 = vmatprep.subr.mxu0 0.0
  %3080 = vmatpush2.msra.mxu0 0.0
  %3081 = vmatprep.subr.mxu0 0.0
  %3082 = vmatpush2.msra.mxu0 0.0
  %3083 = vmatprep.subr.mxu0 0.0
  %3084 = vmatpush2.msra.mxu0 0.0
  %3085 = vmatprep.subr.mxu0 0.0
  %3086 = vmatpush2.msra.mxu0 0.0
  %3087 = vmatprep.subr.mxu0 0.0
  %3088 = vmatpush2.msra.mxu0 0.0
  %3089 = vmatprep.subr.mxu0 0.0
  %3090 = vmatpush2.msra.mxu0 0.0
  %3091 = vmatprep.mubr.f32.mxu0 0.0
  %3092 = vmatmul.mubr.f32.gmra.mxu0 %v3016
  %v3093 = vpop.f32.mrf.mxu0
  %v3094 = vadd.f32 0.0, %v3093
  %v3095 = vpop.f32.mrf.mxu0
  %3096 = vmatprep.mubr.f32.mxu0 0.0
  %3097 = vmatmul.mubr.f32.gmra.mxu0 %v3019
  %v3098 = vpop.f32.mrf.mxu0
  %v3099 = vadd.f32 0.0, %v3098
  %v3100 = vpop.f32.mrf.mxu0
  %3101 = vmatprep.mubr.f32.mxu0 0.0
  %3102 = vmatmul.mubr.f32.gmra.mxu0 %v3022
  %v3103 = vpop.f32.mrf.mxu0
  %v3104 = vadd.f32 0.0, %v3103
  %v3105 = vpop.f32.mrf.mxu0
  %3106 = vmatprep.mubr.f32.mxu0 0.0
  %3107 = vmatmul.mubr.f32.gmra.mxu0 %v3025
  %v3108 = vpop.f32.mrf.mxu0
  %v3109 = vadd.f32 0.0, %v3108
  %v3110 = vpop.f32.mrf.mxu0
  %3111 = vdwg.mxu0
  %v3113 = vsel %vm76, %v2878, 0
  %v3116 = vsel %vm76, %v2883, 0
  %v3119 = vsel %vm76, %v2888, 0
  %v3122 = vsel %vm76, %v2893, 0
  %3124 = vmatprep.subr.mxu0 0.0
  %3125 = vmatpush1.msra.mxu0 0.0
  %3126 = vmatprep.subr.mxu0 0.0
  %3127 = vmatpush1.msra.mxu0 0.0
  %3128 = vmatprep.subr.mxu0 0.0
  %3129 = vmatpush1.msra.mxu0 0.0
  %3130 = vmatprep.subr.mxu0 0.0
  %3131 = vmatpush1.msra.mxu0 0.0
  %3132 = vmatprep.subr.mxu0 0.0
  %3133 = vmatpush1.msra.mxu0 0.0
  %3134 = vmatprep.subr.mxu0 0.0
  %3135 = vmatpush1.msra.mxu0 0.0
  %3136 = vmatprep.subr.mxu0 0.0
  %3137 = vmatpush1.msra.mxu0 0.0
  %3138 = vmatprep.subr.mxu0 0.0
  %3139 = vmatpush1.msra.mxu0 0.0
  %3140 = vmatprep.subr.mxu0 0.0
  %3141 = vmatpush1.msra.mxu0 %v2903
  %3142 = vmatprep.subr.mxu0 0.0
  %3143 = vmatpush1.msra.mxu0 %v2902
  %3144 = vmatprep.subr.mxu0 0.0
  %3145 = vmatpush1.msra.mxu0 %v2901
  %3146 = vmatprep.subr.mxu0 0.0
  %3147 = vmatpush1.msra.mxu0 %v2900
  %3148 = vmatprep.subr.mxu0 0.0
  %3149 = vmatpush1.msra.mxu0 %v2899
  %3150 = vmatprep.subr.mxu0 0.0
  %3151 = vmatpush1.msra.mxu0 %v2898
  %3152 = vmatprep.subr.mxu0 0.0
  %3153 = vmatpush1.msra.mxu0 %v2897
  %3154 = vmatprep.subr.mxu0 0.0
  %3155 = vmatpush1.msra.mxu0 %v2896
  %3156 = vmatprep.subr.mxu0 0.0
  %3157 = vmatpush2.msra.mxu0 0.0
  %3158 = vmatprep.subr.mxu0 0.0
  %3159 = vmatpush2.msra.mxu0 0.0
  %3160 = vmatprep.subr.mxu0 0.0
  %3161 = vmatpush2.msra.mxu0 0.0
  %3162 = vmatprep.subr.mxu0 0.0
  %3163 = vmatpush2.msra.mxu0 0.0
  %3164 = vmatprep.subr.mxu0 0.0
  %3165 = vmatpush2.msra.mxu0 0.0
  %3166 = vmatprep.subr.mxu0 0.0
  %3167 = vmatpush2.msra.mxu0 0.0
  %3168 = vmatprep.subr.mxu0 0.0
  %3169 = vmatpush2.msra.mxu0 0.0
  %3170 = vmatprep.subr.mxu0 0.0
  %3171 = vmatpush2.msra.mxu0 0.0
  %3172 = vmatprep.subr.mxu0 0.0
  %3173 = vmatpush2.msra.mxu0 0.0
  %3174 = vmatprep.subr.mxu0 0.0
  %3175 = vmatpush2.msra.mxu0 0.0
  %3176 = vmatprep.subr.mxu0 0.0
  %3177 = vmatpush2.msra.mxu0 0.0
  %3178 = vmatprep.subr.mxu0 0.0
  %3179 = vmatpush2.msra.mxu0 0.0
  %3180 = vmatprep.subr.mxu0 0.0
  %3181 = vmatpush2.msra.mxu0 0.0
  %3182 = vmatprep.subr.mxu0 0.0
  %3183 = vmatpush2.msra.mxu0 0.0
  %3184 = vmatprep.subr.mxu0 0.0
  %3185 = vmatpush2.msra.mxu0 0.0
  %3186 = vmatprep.subr.mxu0 0.0
  %3187 = vmatpush2.msra.mxu0 0.0
  %3188 = vmatprep.mubr.f32.mxu0 0.0
  %3189 = vmatmul.mubr.f32.gmra.mxu0 %v3113
  %v3190 = vpop.f32.mrf.mxu0
  %v3191 = vadd.f32 %v3094, %v3190
  %v3192 = vpop.f32.mrf.mxu0
  %3193 = vmatprep.mubr.f32.mxu0 0.0
  %3194 = vmatmul.mubr.f32.gmra.mxu0 %v3116
  %v3195 = vpop.f32.mrf.mxu0
  %v3196 = vadd.f32 %v3099, %v3195
  %v3197 = vpop.f32.mrf.mxu0
  %3198 = vmatprep.mubr.f32.mxu0 0.0
  %3199 = vmatmul.mubr.f32.gmra.mxu0 %v3119
  %v3200 = vpop.f32.mrf.mxu0
  %v3201 = vadd.f32 %v3104, %v3200
  %v3202 = vpop.f32.mrf.mxu0
  %3203 = vmatprep.mubr.f32.mxu0 0.0
  %3204 = vmatmul.mubr.f32.gmra.mxu0 %v3122
  %v3205 = vpop.f32.mrf.mxu0
  %v3206 = vadd.f32 %v3109, %v3205
  %v3207 = vpop.f32.mrf.mxu0
  %3208 = vdwg.mxu0
  %s3209 = scalar_lea.vmem %s6, 64
  %v3210 = vld [vmem:[%s3209] sm:$0xff]
  %v3211 = vld [vmem:[%s3209 + $0x8] sm:$0xff]
  %v3212 = vld [vmem:[%s3209 + $0x10] sm:$0xff]
  %v3213 = vld [vmem:[%s3209 + $0x18] sm:$0xff]
  %v3215 = vsel %vm76, %v3210, 0
  %v3218 = vsel %vm76, %v3211, 0
  %v3221 = vsel %vm76, %v3212, 0
  %v3224 = vsel %vm76, %v3213, 0
  %3226 = vmatprep.subr.mxu0 0.0
  %3227 = vmatpush1.msra.mxu0 0.0
  %3228 = vmatprep.subr.mxu0 0.0
  %3229 = vmatpush1.msra.mxu0 0.0
  %3230 = vmatprep.subr.mxu0 0.0
  %3231 = vmatpush1.msra.mxu0 0.0
  %3232 = vmatprep.subr.mxu0 0.0
  %3233 = vmatpush1.msra.mxu0 0.0
  %3234 = vmatprep.subr.mxu0 0.0
  %3235 = vmatpush1.msra.mxu0 0.0
  %3236 = vmatprep.subr.mxu0 0.0
  %3237 = vmatpush1.msra.mxu0 0.0
  %3238 = vmatprep.subr.mxu0 0.0
  %3239 = vmatpush1.msra.mxu0 0.0
  %3240 = vmatprep.subr.mxu0 0.0
  %3241 = vmatpush1.msra.mxu0 0.0
  %3242 = vmatprep.subr.mxu0 0.0
  %3243 = vmatpush1.msra.mxu0 %v2794
  %3244 = vmatprep.subr.mxu0 0.0
  %3245 = vmatpush1.msra.mxu0 %v2793
  %3246 = vmatprep.subr.mxu0 0.0
  %3247 = vmatpush1.msra.mxu0 %v2792
  %3248 = vmatprep.subr.mxu0 0.0
  %3249 = vmatpush1.msra.mxu0 %v2791
  %3250 = vmatprep.subr.mxu0 0.0
  %3251 = vmatpush1.msra.mxu0 %v2790
  %3252 = vmatprep.subr.mxu0 0.0
  %3253 = vmatpush1.msra.mxu0 %v2789
  %3254 = vmatprep.subr.mxu0 0.0
  %3255 = vmatpush1.msra.mxu0 %v2788
  %3256 = vmatprep.subr.mxu0 0.0
  %3257 = vmatpush1.msra.mxu0 %v2787
  %3258 = vmatprep.subr.mxu0 0.0
  %3259 = vmatpush2.msra.mxu0 0.0
  %3260 = vmatprep.subr.mxu0 0.0
  %3261 = vmatpush2.msra.mxu0 0.0
  %3262 = vmatprep.subr.mxu0 0.0
  %3263 = vmatpush2.msra.mxu0 0.0
  %3264 = vmatprep.subr.mxu0 0.0
  %3265 = vmatpush2.msra.mxu0 0.0
  %3266 = vmatprep.subr.mxu0 0.0
  %3267 = vmatpush2.msra.mxu0 0.0
  %3268 = vmatprep.subr.mxu0 0.0
  %3269 = vmatpush2.msra.mxu0 0.0
  %3270 = vmatprep.subr.mxu0 0.0
  %3271 = vmatpush2.msra.mxu0 0.0
  %3272 = vmatprep.subr.mxu0 0.0
  %3273 = vmatpush2.msra.mxu0 0.0
  %3274 = vmatprep.subr.mxu0 0.0
  %3275 = vmatpush2.msra.mxu0 0.0
  %3276 = vmatprep.subr.mxu0 0.0
  %3277 = vmatpush2.msra.mxu0 0.0
  %3278 = vmatprep.subr.mxu0 0.0
  %3279 = vmatpush2.msra.mxu0 0.0
  %3280 = vmatprep.subr.mxu0 0.0
  %3281 = vmatpush2.msra.mxu0 0.0
  %3282 = vmatprep.subr.mxu0 0.0
  %3283 = vmatpush2.msra.mxu0 0.0
  %3284 = vmatprep.subr.mxu0 0.0
  %3285 = vmatpush2.msra.mxu0 0.0
  %3286 = vmatprep.subr.mxu0 0.0
  %3287 = vmatpush2.msra.mxu0 0.0
  %3288 = vmatprep.subr.mxu0 0.0
  %3289 = vmatpush2.msra.mxu0 0.0
  %3290 = vmatprep.mubr.f32.mxu0 0.0
  %3291 = vmatmul.mubr.f32.gmra.mxu0 %v3215
  %v3292 = vpop.f32.mrf.mxu0
  %v3293 = vadd.f32 0.0, %v3292
  %v3294 = vpop.f32.mrf.mxu0
  %3295 = vmatprep.mubr.f32.mxu0 0.0
  %3296 = vmatmul.mubr.f32.gmra.mxu0 %v3218
  %v3297 = vpop.f32.mrf.mxu0
  %v3298 = vadd.f32 0.0, %v3297
  %v3299 = vpop.f32.mrf.mxu0
  %3300 = vmatprep.mubr.f32.mxu0 0.0
  %3301 = vmatmul.mubr.f32.gmra.mxu0 %v3221
  %v3302 = vpop.f32.mrf.mxu0
  %v3303 = vadd.f32 0.0, %v3302
  %v3304 = vpop.f32.mrf.mxu0
  %3305 = vmatprep.mubr.f32.mxu0 0.0
  %3306 = vmatmul.mubr.f32.gmra.mxu0 %v3224
  %v3307 = vpop.f32.mrf.mxu0
  %v3308 = vadd.f32 0.0, %v3307
  %v3309 = vpop.f32.mrf.mxu0
  %3310 = vdwg.mxu0
  %s3311 = scalar_lea.vmem %s7, 128
  %v3312 = vld [vmem:[%s3311] sm:$0xff]
  %v3313 = vld [vmem:[%s3311 + $0x8] sm:$0xff]
  %v3314 = vld [vmem:[%s3311 + $0x10] sm:$0xff]
  %v3315 = vld [vmem:[%s3311 + $0x18] sm:$0xff]
  %v3316 = vld [vmem:[%s3311 + $0x20] sm:$0xff]
  %v3317 = vld [vmem:[%s3311 + $0x28] sm:$0xff]
  %v3318 = vld [vmem:[%s3311 + $0x30] sm:$0xff]
  %v3319 = vld [vmem:[%s3311 + $0x38] sm:$0xff]
  %v3321 = vsel %vm76, %v3293, 0
  %v3324 = vsel %vm76, %v3298, 0
  %v3327 = vsel %vm76, %v3303, 0
  %v3330 = vsel %vm76, %v3308, 0
  %3332 = vmatprep.subr.mxu0 0.0
  %3333 = vmatpush1.msra.mxu0 0.0
  %3334 = vmatprep.subr.mxu0 0.0
  %3335 = vmatpush1.msra.mxu0 0.0
  %3336 = vmatprep.subr.mxu0 0.0
  %3337 = vmatpush1.msra.mxu0 0.0
  %3338 = vmatprep.subr.mxu0 0.0
  %3339 = vmatpush1.msra.mxu0 0.0
  %3340 = vmatprep.subr.mxu0 0.0
  %3341 = vmatpush1.msra.mxu0 0.0
  %3342 = vmatprep.subr.mxu0 0.0
  %3343 = vmatpush1.msra.mxu0 0.0
  %3344 = vmatprep.subr.mxu0 0.0
  %3345 = vmatpush1.msra.mxu0 0.0
  %3346 = vmatprep.subr.mxu0 0.0
  %3347 = vmatpush1.msra.mxu0 0.0
  %3348 = vmatprep.subr.mxu0 0.0
  %3349 = vmatpush1.msra.mxu0 %v3319
  %3350 = vmatprep.subr.mxu0 0.0
  %3351 = vmatpush1.msra.mxu0 %v3318
  %3352 = vmatprep.subr.mxu0 0.0
  %3353 = vmatpush1.msra.mxu0 %v3317
  %3354 = vmatprep.subr.mxu0 0.0
  %3355 = vmatpush1.msra.mxu0 %v3316
  %3356 = vmatprep.subr.mxu0 0.0
  %3357 = vmatpush1.msra.mxu0 %v3315
  %3358 = vmatprep.subr.mxu0 0.0
  %3359 = vmatpush1.msra.mxu0 %v3314
  %3360 = vmatprep.subr.mxu0 0.0
  %3361 = vmatpush1.msra.mxu0 %v3313
  %3362 = vmatprep.subr.mxu0 0.0
  %3363 = vmatpush1.msra.mxu0 %v3312
  %3364 = vmatprep.subr.mxu0 0.0
  %3365 = vmatpush2.msra.mxu0 0.0
  %3366 = vmatprep.subr.mxu0 0.0
  %3367 = vmatpush2.msra.mxu0 0.0
  %3368 = vmatprep.subr.mxu0 0.0
  %3369 = vmatpush2.msra.mxu0 0.0
  %3370 = vmatprep.subr.mxu0 0.0
  %3371 = vmatpush2.msra.mxu0 0.0
  %3372 = vmatprep.subr.mxu0 0.0
  %3373 = vmatpush2.msra.mxu0 0.0
  %3374 = vmatprep.subr.mxu0 0.0
  %3375 = vmatpush2.msra.mxu0 0.0
  %3376 = vmatprep.subr.mxu0 0.0
  %3377 = vmatpush2.msra.mxu0 0.0
  %3378 = vmatprep.subr.mxu0 0.0
  %3379 = vmatpush2.msra.mxu0 0.0
  %3380 = vmatprep.subr.mxu0 0.0
  %3381 = vmatpush2.msra.mxu0 0.0
  %3382 = vmatprep.subr.mxu0 0.0
  %3383 = vmatpush2.msra.mxu0 0.0
  %3384 = vmatprep.subr.mxu0 0.0
  %3385 = vmatpush2.msra.mxu0 0.0
  %3386 = vmatprep.subr.mxu0 0.0
  %3387 = vmatpush2.msra.mxu0 0.0
  %3388 = vmatprep.subr.mxu0 0.0
  %3389 = vmatpush2.msra.mxu0 0.0
  %3390 = vmatprep.subr.mxu0 0.0
  %3391 = vmatpush2.msra.mxu0 0.0
  %3392 = vmatprep.subr.mxu0 0.0
  %3393 = vmatpush2.msra.mxu0 0.0
  %3394 = vmatprep.subr.mxu0 0.0
  %3395 = vmatpush2.msra.mxu0 0.0
  %3396 = vmatprep.mubr.f32.mxu0 0.0
  %3397 = vmatmul.mubr.f32.gmra.mxu0 %v3321
  %v3398 = vpop.f32.mrf.mxu0
  %v3399 = vadd.f32 0.0, %v3398
  %v3400 = vpop.f32.mrf.mxu0
  %3401 = vmatprep.mubr.f32.mxu0 0.0
  %3402 = vmatmul.mubr.f32.gmra.mxu0 %v3324
  %v3403 = vpop.f32.mrf.mxu0
  %v3404 = vadd.f32 0.0, %v3403
  %v3405 = vpop.f32.mrf.mxu0
  %3406 = vmatprep.mubr.f32.mxu0 0.0
  %3407 = vmatmul.mubr.f32.gmra.mxu0 %v3327
  %v3408 = vpop.f32.mrf.mxu0
  %v3409 = vadd.f32 0.0, %v3408
  %v3410 = vpop.f32.mrf.mxu0
  %3411 = vmatprep.mubr.f32.mxu0 0.0
  %3412 = vmatmul.mubr.f32.gmra.mxu0 %v3330
  %v3413 = vpop.f32.mrf.mxu0
  %v3414 = vadd.f32 0.0, %v3413
  %v3415 = vpop.f32.mrf.mxu0
  %3416 = vdwg.mxu0
  %v3417 = vadd.f32 %v3191, %v3399
  %v3418 = vadd.f32 %v3196, %v3404
  %v3419 = vadd.f32 %v3201, %v3409
  %v3420 = vadd.f32 %v3206, %v3414
  %s3421 = scalar_lea.vmem %s6, 96
  %v3422 = vld [vmem:[%s3421] sm:$0xff]
  %v3423 = vld [vmem:[%s3421 + $0x8] sm:$0xff]
  %v3424 = vld [vmem:[%s3421 + $0x10] sm:$0xff]
  %v3425 = vld [vmem:[%s3421 + $0x18] sm:$0xff]
  %v3427 = vsel %vm76, %v3422, 0
  %v3430 = vsel %vm76, %v3423, 0
  %v3433 = vsel %vm76, %v3424, 0
  %v3436 = vsel %vm76, %v3425, 0
  %3438 = vmatprep.subr.mxu0 0.0
  %3439 = vmatpush1.msra.mxu0 0.0
  %3440 = vmatprep.subr.mxu0 0.0
  %3441 = vmatpush1.msra.mxu0 0.0
  %3442 = vmatprep.subr.mxu0 0.0
  %3443 = vmatpush1.msra.mxu0 0.0
  %3444 = vmatprep.subr.mxu0 0.0
  %3445 = vmatpush1.msra.mxu0 0.0
  %3446 = vmatprep.subr.mxu0 0.0
  %3447 = vmatpush1.msra.mxu0 0.0
  %3448 = vmatprep.subr.mxu0 0.0
  %3449 = vmatpush1.msra.mxu0 0.0
  %3450 = vmatprep.subr.mxu0 0.0
  %3451 = vmatpush1.msra.mxu0 0.0
  %3452 = vmatprep.subr.mxu0 0.0
  %3453 = vmatpush1.msra.mxu0 0.0
  %3454 = vmatprep.subr.mxu0 0.0
  %3455 = vmatpush1.msra.mxu0 %v2794
  %3456 = vmatprep.subr.mxu0 0.0
  %3457 = vmatpush1.msra.mxu0 %v2793
  %3458 = vmatprep.subr.mxu0 0.0
  %3459 = vmatpush1.msra.mxu0 %v2792
  %3460 = vmatprep.subr.mxu0 0.0
  %3461 = vmatpush1.msra.mxu0 %v2791
  %3462 = vmatprep.subr.mxu0 0.0
  %3463 = vmatpush1.msra.mxu0 %v2790
  %3464 = vmatprep.subr.mxu0 0.0
  %3465 = vmatpush1.msra.mxu0 %v2789
  %3466 = vmatprep.subr.mxu0 0.0
  %3467 = vmatpush1.msra.mxu0 %v2788
  %3468 = vmatprep.subr.mxu0 0.0
  %3469 = vmatpush1.msra.mxu0 %v2787
  %3470 = vmatprep.subr.mxu0 0.0
  %3471 = vmatpush2.msra.mxu0 0.0
  %3472 = vmatprep.subr.mxu0 0.0
  %3473 = vmatpush2.msra.mxu0 0.0
  %3474 = vmatprep.subr.mxu0 0.0
  %3475 = vmatpush2.msra.mxu0 0.0
  %3476 = vmatprep.subr.mxu0 0.0
  %3477 = vmatpush2.msra.mxu0 0.0
  %3478 = vmatprep.subr.mxu0 0.0
  %3479 = vmatpush2.msra.mxu0 0.0
  %3480 = vmatprep.subr.mxu0 0.0
  %3481 = vmatpush2.msra.mxu0 0.0
  %3482 = vmatprep.subr.mxu0 0.0
  %3483 = vmatpush2.msra.mxu0 0.0
  %3484 = vmatprep.subr.mxu0 0.0
  %3485 = vmatpush2.msra.mxu0 0.0
  %3486 = vmatprep.subr.mxu0 0.0
  %3487 = vmatpush2.msra.mxu0 0.0
  %3488 = vmatprep.subr.mxu0 0.0
  %3489 = vmatpush2.msra.mxu0 0.0
  %3490 = vmatprep.subr.mxu0 0.0
  %3491 = vmatpush2.msra.mxu0 0.0
  %3492 = vmatprep.subr.mxu0 0.0
  %3493 = vmatpush2.msra.mxu0 0.0
  %3494 = vmatprep.subr.mxu0 0.0
  %3495 = vmatpush2.msra.mxu0 0.0
  %3496 = vmatprep.subr.mxu0 0.0
  %3497 = vmatpush2.msra.mxu0 0.0
  %3498 = vmatprep.subr.mxu0 0.0
  %3499 = vmatpush2.msra.mxu0 0.0
  %3500 = vmatprep.subr.mxu0 0.0
  %3501 = vmatpush2.msra.mxu0 0.0
  %3502 = vmatprep.mubr.f32.mxu0 0.0
  %3503 = vmatmul.mubr.f32.gmra.mxu0 %v3427
  %v3504 = vpop.f32.mrf.mxu0
  %v3505 = vadd.f32 0.0, %v3504
  %v3506 = vpop.f32.mrf.mxu0
  %3507 = vmatprep.mubr.f32.mxu0 0.0
  %3508 = vmatmul.mubr.f32.gmra.mxu0 %v3430
  %v3509 = vpop.f32.mrf.mxu0
  %v3510 = vadd.f32 0.0, %v3509
  %v3511 = vpop.f32.mrf.mxu0
  %3512 = vmatprep.mubr.f32.mxu0 0.0
  %3513 = vmatmul.mubr.f32.gmra.mxu0 %v3433
  %v3514 = vpop.f32.mrf.mxu0
  %v3515 = vadd.f32 0.0, %v3514
  %v3516 = vpop.f32.mrf.mxu0
  %3517 = vmatprep.mubr.f32.mxu0 0.0
  %3518 = vmatmul.mubr.f32.gmra.mxu0 %v3436
  %v3519 = vpop.f32.mrf.mxu0
  %v3520 = vadd.f32 0.0, %v3519
  %v3521 = vpop.f32.mrf.mxu0
  %3522 = vdwg.mxu0
  %s3523 = scalar_lea.vmem %s7, 192
  %v3524 = vld [vmem:[%s3523] sm:$0xff]
  %v3525 = vld [vmem:[%s3523 + $0x8] sm:$0xff]
  %v3526 = vld [vmem:[%s3523 + $0x10] sm:$0xff]
  %v3527 = vld [vmem:[%s3523 + $0x18] sm:$0xff]
  %v3528 = vld [vmem:[%s3523 + $0x20] sm:$0xff]
  %v3529 = vld [vmem:[%s3523 + $0x28] sm:$0xff]
  %v3530 = vld [vmem:[%s3523 + $0x30] sm:$0xff]
  %v3531 = vld [vmem:[%s3523 + $0x38] sm:$0xff]
  %v3533 = vsel %vm76, %v3505, 0
  %v3536 = vsel %vm76, %v3510, 0
  %v3539 = vsel %vm76, %v3515, 0
  %v3542 = vsel %vm76, %v3520, 0
  %3544 = vmatprep.subr.mxu0 0.0
  %3545 = vmatpush1.msra.mxu0 0.0
  %3546 = vmatprep.subr.mxu0 0.0
  %3547 = vmatpush1.msra.mxu0 0.0
  %3548 = vmatprep.subr.mxu0 0.0
  %3549 = vmatpush1.msra.mxu0 0.0
  %3550 = vmatprep.subr.mxu0 0.0
  %3551 = vmatpush1.msra.mxu0 0.0
  %3552 = vmatprep.subr.mxu0 0.0
  %3553 = vmatpush1.msra.mxu0 0.0
  %3554 = vmatprep.subr.mxu0 0.0
  %3555 = vmatpush1.msra.mxu0 0.0
  %3556 = vmatprep.subr.mxu0 0.0
  %3557 = vmatpush1.msra.mxu0 0.0
  %3558 = vmatprep.subr.mxu0 0.0
  %3559 = vmatpush1.msra.mxu0 0.0
  %3560 = vmatprep.subr.mxu0 0.0
  %3561 = vmatpush1.msra.mxu0 %v3531
  %3562 = vmatprep.subr.mxu0 0.0
  %3563 = vmatpush1.msra.mxu0 %v3530
  %3564 = vmatprep.subr.mxu0 0.0
  %3565 = vmatpush1.msra.mxu0 %v3529
  %3566 = vmatprep.subr.mxu0 0.0
  %3567 = vmatpush1.msra.mxu0 %v3528
  %3568 = vmatprep.subr.mxu0 0.0
  %3569 = vmatpush1.msra.mxu0 %v3527
  %3570 = vmatprep.subr.mxu0 0.0
  %3571 = vmatpush1.msra.mxu0 %v3526
  %3572 = vmatprep.subr.mxu0 0.0
  %3573 = vmatpush1.msra.mxu0 %v3525
  %3574 = vmatprep.subr.mxu0 0.0
  %3575 = vmatpush1.msra.mxu0 %v3524
  %3576 = vmatprep.subr.mxu0 0.0
  %3577 = vmatpush2.msra.mxu0 0.0
  %3578 = vmatprep.subr.mxu0 0.0
  %3579 = vmatpush2.msra.mxu0 0.0
  %3580 = vmatprep.subr.mxu0 0.0
  %3581 = vmatpush2.msra.mxu0 0.0
  %3582 = vmatprep.subr.mxu0 0.0
  %3583 = vmatpush2.msra.mxu0 0.0
  %3584 = vmatprep.subr.mxu0 0.0
  %3585 = vmatpush2.msra.mxu0 0.0
  %3586 = vmatprep.subr.mxu0 0.0
  %3587 = vmatpush2.msra.mxu0 0.0
  %3588 = vmatprep.subr.mxu0 0.0
  %3589 = vmatpush2.msra.mxu0 0.0
  %3590 = vmatprep.subr.mxu0 0.0
  %3591 = vmatpush2.msra.mxu0 0.0
  %3592 = vmatprep.subr.mxu0 0.0
  %3593 = vmatpush2.msra.mxu0 0.0
  %3594 = vmatprep.subr.mxu0 0.0
  %3595 = vmatpush2.msra.mxu0 0.0
  %3596 = vmatprep.subr.mxu0 0.0
  %3597 = vmatpush2.msra.mxu0 0.0
  %3598 = vmatprep.subr.mxu0 0.0
  %3599 = vmatpush2.msra.mxu0 0.0
  %3600 = vmatprep.subr.mxu0 0.0
  %3601 = vmatpush2.msra.mxu0 0.0
  %3602 = vmatprep.subr.mxu0 0.0
  %3603 = vmatpush2.msra.mxu0 0.0
  %3604 = vmatprep.subr.mxu0 0.0
  %3605 = vmatpush2.msra.mxu0 0.0
  %3606 = vmatprep.subr.mxu0 0.0
  %3607 = vmatpush2.msra.mxu0 0.0
  %3608 = vmatprep.mubr.f32.mxu0 0.0
  %3609 = vmatmul.mubr.f32.gmra.mxu0 %v3533
  %v3610 = vpop.f32.mrf.mxu0
  %v3611 = vadd.f32 0.0, %v3610
  %v3612 = vpop.f32.mrf.mxu0
  %3613 = vmatprep.mubr.f32.mxu0 0.0
  %3614 = vmatmul.mubr.f32.gmra.mxu0 %v3536
  %v3615 = vpop.f32.mrf.mxu0
  %v3616 = vadd.f32 0.0, %v3615
  %v3617 = vpop.f32.mrf.mxu0
  %3618 = vmatprep.mubr.f32.mxu0 0.0
  %3619 = vmatmul.mubr.f32.gmra.mxu0 %v3539
  %v3620 = vpop.f32.mrf.mxu0
  %v3621 = vadd.f32 0.0, %v3620
  %v3622 = vpop.f32.mrf.mxu0
  %3623 = vmatprep.mubr.f32.mxu0 0.0
  %3624 = vmatmul.mubr.f32.gmra.mxu0 %v3542
  %v3625 = vpop.f32.mrf.mxu0
  %v3626 = vadd.f32 0.0, %v3625
  %v3627 = vpop.f32.mrf.mxu0
  %3628 = vdwg.mxu0
  %v3629 = vadd.f32 %v3417, %v3611
  %v3630 = vadd.f32 %v3418, %v3616
  %v3631 = vadd.f32 %v3419, %v3621
  %v3632 = vadd.f32 %v3420, %v3626
  %s3633 = scalar_lea.vmem %s6, 128
  %v3634 = vld [vmem:[%s3633] sm:$0xff]
  %v3635 = vld [vmem:[%s3633 + $0x8] sm:$0xff]
  %v3636 = vld [vmem:[%s3633 + $0x10] sm:$0xff]
  %v3637 = vld [vmem:[%s3633 + $0x18] sm:$0xff]
  %v3639 = vsel %vm76, %v3634, 0
  %v3642 = vsel %vm76, %v3635, 0
  %v3645 = vsel %vm76, %v3636, 0
  %v3648 = vsel %vm76, %v3637, 0
  %3650 = vmatprep.subr.mxu0 0.0
  %3651 = vmatpush1.msra.mxu0 0.0
  %3652 = vmatprep.subr.mxu0 0.0
  %3653 = vmatpush1.msra.mxu0 0.0
  %3654 = vmatprep.subr.mxu0 0.0
  %3655 = vmatpush1.msra.mxu0 0.0
  %3656 = vmatprep.subr.mxu0 0.0
  %3657 = vmatpush1.msra.mxu0 0.0
  %3658 = vmatprep.subr.mxu0 0.0
  %3659 = vmatpush1.msra.mxu0 0.0
  %3660 = vmatprep.subr.mxu0 0.0
  %3661 = vmatpush1.msra.mxu0 0.0
  %3662 = vmatprep.subr.mxu0 0.0
  %3663 = vmatpush1.msra.mxu0 0.0
  %3664 = vmatprep.subr.mxu0 0.0
  %3665 = vmatpush1.msra.mxu0 0.0
  %3666 = vmatprep.subr.mxu0 0.0
  %3667 = vmatpush1.msra.mxu0 %v2794
  %3668 = vmatprep.subr.mxu0 0.0
  %3669 = vmatpush1.msra.mxu0 %v2793
  %3670 = vmatprep.subr.mxu0 0.0
  %3671 = vmatpush1.msra.mxu0 %v2792
  %3672 = vmatprep.subr.mxu0 0.0
  %3673 = vmatpush1.msra.mxu0 %v2791
  %3674 = vmatprep.subr.mxu0 0.0
  %3675 = vmatpush1.msra.mxu0 %v2790
  %3676 = vmatprep.subr.mxu0 0.0
  %3677 = vmatpush1.msra.mxu0 %v2789
  %3678 = vmatprep.subr.mxu0 0.0
  %3679 = vmatpush1.msra.mxu0 %v2788
  %3680 = vmatprep.subr.mxu0 0.0
  %3681 = vmatpush1.msra.mxu0 %v2787
  %3682 = vmatprep.subr.mxu0 0.0
  %3683 = vmatpush2.msra.mxu0 0.0
  %3684 = vmatprep.subr.mxu0 0.0
  %3685 = vmatpush2.msra.mxu0 0.0
  %3686 = vmatprep.subr.mxu0 0.0
  %3687 = vmatpush2.msra.mxu0 0.0
  %3688 = vmatprep.subr.mxu0 0.0
  %3689 = vmatpush2.msra.mxu0 0.0
  %3690 = vmatprep.subr.mxu0 0.0
  %3691 = vmatpush2.msra.mxu0 0.0
  %3692 = vmatprep.subr.mxu0 0.0
  %3693 = vmatpush2.msra.mxu0 0.0
  %3694 = vmatprep.subr.mxu0 0.0
  %3695 = vmatpush2.msra.mxu0 0.0
  %3696 = vmatprep.subr.mxu0 0.0
  %3697 = vmatpush2.msra.mxu0 0.0
  %3698 = vmatprep.subr.mxu0 0.0
  %3699 = vmatpush2.msra.mxu0 0.0
  %3700 = vmatprep.subr.mxu0 0.0
  %3701 = vmatpush2.msra.mxu0 0.0
  %3702 = vmatprep.subr.mxu0 0.0
  %3703 = vmatpush2.msra.mxu0 0.0
  %3704 = vmatprep.subr.mxu0 0.0
  %3705 = vmatpush2.msra.mxu0 0.0
  %3706 = vmatprep.subr.mxu0 0.0
  %3707 = vmatpush2.msra.mxu0 0.0
  %3708 = vmatprep.subr.mxu0 0.0
  %3709 = vmatpush2.msra.mxu0 0.0
  %3710 = vmatprep.subr.mxu0 0.0
  %3711 = vmatpush2.msra.mxu0 0.0
  %3712 = vmatprep.subr.mxu0 0.0
  %3713 = vmatpush2.msra.mxu0 0.0
  %3714 = vmatprep.mubr.f32.mxu0 0.0
  %3715 = vmatmul.mubr.f32.gmra.mxu0 %v3639
  %v3716 = vpop.f32.mrf.mxu0
  %v3717 = vadd.f32 0.0, %v3716
  %v3718 = vpop.f32.mrf.mxu0
  %3719 = vmatprep.mubr.f32.mxu0 0.0
  %3720 = vmatmul.mubr.f32.gmra.mxu0 %v3642
  %v3721 = vpop.f32.mrf.mxu0
  %v3722 = vadd.f32 0.0, %v3721
  %v3723 = vpop.f32.mrf.mxu0
  %3724 = vmatprep.mubr.f32.mxu0 0.0
  %3725 = vmatmul.mubr.f32.gmra.mxu0 %v3645
  %v3726 = vpop.f32.mrf.mxu0
  %v3727 = vadd.f32 0.0, %v3726
  %v3728 = vpop.f32.mrf.mxu0
  %3729 = vmatprep.mubr.f32.mxu0 0.0
  %3730 = vmatmul.mubr.f32.gmra.mxu0 %v3648
  %v3731 = vpop.f32.mrf.mxu0
  %v3732 = vadd.f32 0.0, %v3731
  %v3733 = vpop.f32.mrf.mxu0
  %3734 = vdwg.mxu0
  %s3735 = scalar_lea.vmem %s7, 256
  %v3736 = vld [vmem:[%s3735] sm:$0xff]
  %v3737 = vld [vmem:[%s3735 + $0x8] sm:$0xff]
  %v3738 = vld [vmem:[%s3735 + $0x10] sm:$0xff]
  %v3739 = vld [vmem:[%s3735 + $0x18] sm:$0xff]
  %v3740 = vld [vmem:[%s3735 + $0x20] sm:$0xff]
  %v3741 = vld [vmem:[%s3735 + $0x28] sm:$0xff]
  %v3742 = vld [vmem:[%s3735 + $0x30] sm:$0xff]
  %v3743 = vld [vmem:[%s3735 + $0x38] sm:$0xff]
  %v3745 = vsel %vm76, %v3717, 0
  %v3748 = vsel %vm76, %v3722, 0
  %v3751 = vsel %vm76, %v3727, 0
  %v3754 = vsel %vm76, %v3732, 0
  %3756 = vmatprep.subr.mxu0 0.0
  %3757 = vmatpush1.msra.mxu0 0.0
  %3758 = vmatprep.subr.mxu0 0.0
  %3759 = vmatpush1.msra.mxu0 0.0
  %3760 = vmatprep.subr.mxu0 0.0
  %3761 = vmatpush1.msra.mxu0 0.0
  %3762 = vmatprep.subr.mxu0 0.0
  %3763 = vmatpush1.msra.mxu0 0.0
  %3764 = vmatprep.subr.mxu0 0.0
  %3765 = vmatpush1.msra.mxu0 0.0
  %3766 = vmatprep.subr.mxu0 0.0
  %3767 = vmatpush1.msra.mxu0 0.0
  %3768 = vmatprep.subr.mxu0 0.0
  %3769 = vmatpush1.msra.mxu0 0.0
  %3770 = vmatprep.subr.mxu0 0.0
  %3771 = vmatpush1.msra.mxu0 0.0
  %3772 = vmatprep.subr.mxu0 0.0
  %3773 = vmatpush1.msra.mxu0 %v3743
  %3774 = vmatprep.subr.mxu0 0.0
  %3775 = vmatpush1.msra.mxu0 %v3742
  %3776 = vmatprep.subr.mxu0 0.0
  %3777 = vmatpush1.msra.mxu0 %v3741
  %3778 = vmatprep.subr.mxu0 0.0
  %3779 = vmatpush1.msra.mxu0 %v3740
  %3780 = vmatprep.subr.mxu0 0.0
  %3781 = vmatpush1.msra.mxu0 %v3739
  %3782 = vmatprep.subr.mxu0 0.0
  %3783 = vmatpush1.msra.mxu0 %v3738
  %3784 = vmatprep.subr.mxu0 0.0
  %3785 = vmatpush1.msra.mxu0 %v3737
  %3786 = vmatprep.subr.mxu0 0.0
  %3787 = vmatpush1.msra.mxu0 %v3736
  %3788 = vmatprep.subr.mxu0 0.0
  %3789 = vmatpush2.msra.mxu0 0.0
  %3790 = vmatprep.subr.mxu0 0.0
  %3791 = vmatpush2.msra.mxu0 0.0
  %3792 = vmatprep.subr.mxu0 0.0
  %3793 = vmatpush2.msra.mxu0 0.0
  %3794 = vmatprep.subr.mxu0 0.0
  %3795 = vmatpush2.msra.mxu0 0.0
  %3796 = vmatprep.subr.mxu0 0.0
  %3797 = vmatpush2.msra.mxu0 0.0
  %3798 = vmatprep.subr.mxu0 0.0
  %3799 = vmatpush2.msra.mxu0 0.0
  %3800 = vmatprep.subr.mxu0 0.0
  %3801 = vmatpush2.msra.mxu0 0.0
  %3802 = vmatprep.subr.mxu0 0.0
  %3803 = vmatpush2.msra.mxu0 0.0
  %3804 = vmatprep.subr.mxu0 0.0
  %3805 = vmatpush2.msra.mxu0 0.0
  %3806 = vmatprep.subr.mxu0 0.0
  %3807 = vmatpush2.msra.mxu0 0.0
  %3808 = vmatprep.subr.mxu0 0.0
  %3809 = vmatpush2.msra.mxu0 0.0
  %3810 = vmatprep.subr.mxu0 0.0
  %3811 = vmatpush2.msra.mxu0 0.0
  %3812 = vmatprep.subr.mxu0 0.0
  %3813 = vmatpush2.msra.mxu0 0.0
  %3814 = vmatprep.subr.mxu0 0.0
  %3815 = vmatpush2.msra.mxu0 0.0
  %3816 = vmatprep.subr.mxu0 0.0
  %3817 = vmatpush2.msra.mxu0 0.0
  %3818 = vmatprep.subr.mxu0 0.0
  %3819 = vmatpush2.msra.mxu0 0.0
  %3820 = vmatprep.mubr.f32.mxu0 0.0
  %3821 = vmatmul.mubr.f32.gmra.mxu0 %v3745
  %v3822 = vpop.f32.mrf.mxu0
  %v3823 = vadd.f32 0.0, %v3822
  %v3824 = vpop.f32.mrf.mxu0
  %3825 = vmatprep.mubr.f32.mxu0 0.0
  %3826 = vmatmul.mubr.f32.gmra.mxu0 %v3748
  %v3827 = vpop.f32.mrf.mxu0
  %v3828 = vadd.f32 0.0, %v3827
  %v3829 = vpop.f32.mrf.mxu0
  %3830 = vmatprep.mubr.f32.mxu0 0.0
  %3831 = vmatmul.mubr.f32.gmra.mxu0 %v3751
  %v3832 = vpop.f32.mrf.mxu0
  %v3833 = vadd.f32 0.0, %v3832
  %v3834 = vpop.f32.mrf.mxu0
  %3835 = vmatprep.mubr.f32.mxu0 0.0
  %3836 = vmatmul.mubr.f32.gmra.mxu0 %v3754
  %v3837 = vpop.f32.mrf.mxu0
  %v3838 = vadd.f32 0.0, %v3837
  %v3839 = vpop.f32.mrf.mxu0
  %3840 = vdwg.mxu0
  %v3841 = vadd.f32 %v3629, %v3823
  %v3842 = vadd.f32 %v3630, %v3828
  %v3843 = vadd.f32 %v3631, %v3833
  %v3844 = vadd.f32 %v3632, %v3838
  %s3845 = scalar_lea.vmem %s6, 160
  %v3846 = vld [vmem:[%s3845] sm:$0xff]
  %v3847 = vld [vmem:[%s3845 + $0x8] sm:$0xff]
  %v3848 = vld [vmem:[%s3845 + $0x10] sm:$0xff]
  %v3849 = vld [vmem:[%s3845 + $0x18] sm:$0xff]
  %v3851 = vsel %vm76, %v3846, 0
  %v3854 = vsel %vm76, %v3847, 0
  %v3857 = vsel %vm76, %v3848, 0
  %v3860 = vsel %vm76, %v3849, 0
  %3862 = vmatprep.subr.mxu0 0.0
  %3863 = vmatpush1.msra.mxu0 0.0
  %3864 = vmatprep.subr.mxu0 0.0
  %3865 = vmatpush1.msra.mxu0 0.0
  %3866 = vmatprep.subr.mxu0 0.0
  %3867 = vmatpush1.msra.mxu0 0.0
  %3868 = vmatprep.subr.mxu0 0.0
  %3869 = vmatpush1.msra.mxu0 0.0
  %3870 = vmatprep.subr.mxu0 0.0
  %3871 = vmatpush1.msra.mxu0 0.0
  %3872 = vmatprep.subr.mxu0 0.0
  %3873 = vmatpush1.msra.mxu0 0.0
  %3874 = vmatprep.subr.mxu0 0.0
  %3875 = vmatpush1.msra.mxu0 0.0
  %3876 = vmatprep.subr.mxu0 0.0
  %3877 = vmatpush1.msra.mxu0 0.0
  %3878 = vmatprep.subr.mxu0 0.0
  %3879 = vmatpush1.msra.mxu0 %v2794
  %3880 = vmatprep.subr.mxu0 0.0
  %3881 = vmatpush1.msra.mxu0 %v2793
  %3882 = vmatprep.subr.mxu0 0.0
  %3883 = vmatpush1.msra.mxu0 %v2792
  %3884 = vmatprep.subr.mxu0 0.0
  %3885 = vmatpush1.msra.mxu0 %v2791
  %3886 = vmatprep.subr.mxu0 0.0
  %3887 = vmatpush1.msra.mxu0 %v2790
  %3888 = vmatprep.subr.mxu0 0.0
  %3889 = vmatpush1.msra.mxu0 %v2789
  %3890 = vmatprep.subr.mxu0 0.0
  %3891 = vmatpush1.msra.mxu0 %v2788
  %3892 = vmatprep.subr.mxu0 0.0
  %3893 = vmatpush1.msra.mxu0 %v2787
  %3894 = vmatprep.subr.mxu0 0.0
  %3895 = vmatpush2.msra.mxu0 0.0
  %3896 = vmatprep.subr.mxu0 0.0
  %3897 = vmatpush2.msra.mxu0 0.0
  %3898 = vmatprep.subr.mxu0 0.0
  %3899 = vmatpush2.msra.mxu0 0.0
  %3900 = vmatprep.subr.mxu0 0.0
  %3901 = vmatpush2.msra.mxu0 0.0
  %3902 = vmatprep.subr.mxu0 0.0
  %3903 = vmatpush2.msra.mxu0 0.0
  %3904 = vmatprep.subr.mxu0 0.0
  %3905 = vmatpush2.msra.mxu0 0.0
  %3906 = vmatprep.subr.mxu0 0.0
  %3907 = vmatpush2.msra.mxu0 0.0
  %3908 = vmatprep.subr.mxu0 0.0
  %3909 = vmatpush2.msra.mxu0 0.0
  %3910 = vmatprep.subr.mxu0 0.0
  %3911 = vmatpush2.msra.mxu0 0.0
  %3912 = vmatprep.subr.mxu0 0.0
  %3913 = vmatpush2.msra.mxu0 0.0
  %3914 = vmatprep.subr.mxu0 0.0
  %3915 = vmatpush2.msra.mxu0 0.0
  %3916 = vmatprep.subr.mxu0 0.0
  %3917 = vmatpush2.msra.mxu0 0.0
  %3918 = vmatprep.subr.mxu0 0.0
  %3919 = vmatpush2.msra.mxu0 0.0
  %3920 = vmatprep.subr.mxu0 0.0
  %3921 = vmatpush2.msra.mxu0 0.0
  %3922 = vmatprep.subr.mxu0 0.0
  %3923 = vmatpush2.msra.mxu0 0.0
  %3924 = vmatprep.subr.mxu0 0.0
  %3925 = vmatpush2.msra.mxu0 0.0
  %3926 = vmatprep.mubr.f32.mxu0 0.0
  %3927 = vmatmul.mubr.f32.gmra.mxu0 %v3851
  %v3928 = vpop.f32.mrf.mxu0
  %v3929 = vadd.f32 0.0, %v3928
  %v3930 = vpop.f32.mrf.mxu0
  %3931 = vmatprep.mubr.f32.mxu0 0.0
  %3932 = vmatmul.mubr.f32.gmra.mxu0 %v3854
  %v3933 = vpop.f32.mrf.mxu0
  %v3934 = vadd.f32 0.0, %v3933
  %v3935 = vpop.f32.mrf.mxu0
  %3936 = vmatprep.mubr.f32.mxu0 0.0
  %3937 = vmatmul.mubr.f32.gmra.mxu0 %v3857
  %v3938 = vpop.f32.mrf.mxu0
  %v3939 = vadd.f32 0.0, %v3938
  %v3940 = vpop.f32.mrf.mxu0
  %3941 = vmatprep.mubr.f32.mxu0 0.0
  %3942 = vmatmul.mubr.f32.gmra.mxu0 %v3860
  %v3943 = vpop.f32.mrf.mxu0
  %v3944 = vadd.f32 0.0, %v3943
  %v3945 = vpop.f32.mrf.mxu0
  %3946 = vdwg.mxu0
  %s3947 = scalar_lea.vmem %s7, 320
  %v3948 = vld [vmem:[%s3947] sm:$0xff]
  %v3949 = vld [vmem:[%s3947 + $0x8] sm:$0xff]
  %v3950 = vld [vmem:[%s3947 + $0x10] sm:$0xff]
  %v3951 = vld [vmem:[%s3947 + $0x18] sm:$0xff]
  %v3952 = vld [vmem:[%s3947 + $0x20] sm:$0xff]
  %v3953 = vld [vmem:[%s3947 + $0x28] sm:$0xff]
  %v3954 = vld [vmem:[%s3947 + $0x30] sm:$0xff]
  %v3955 = vld [vmem:[%s3947 + $0x38] sm:$0xff]
  %v3957 = vsel %vm76, %v3929, 0
  %v3960 = vsel %vm76, %v3934, 0
  %v3963 = vsel %vm76, %v3939, 0
  %v3966 = vsel %vm76, %v3944, 0
  %3968 = vmatprep.subr.mxu0 0.0
  %3969 = vmatpush1.msra.mxu0 0.0
  %3970 = vmatprep.subr.mxu0 0.0
  %3971 = vmatpush1.msra.mxu0 0.0
  %3972 = vmatprep.subr.mxu0 0.0
  %3973 = vmatpush1.msra.mxu0 0.0
  %3974 = vmatprep.subr.mxu0 0.0
  %3975 = vmatpush1.msra.mxu0 0.0
  %3976 = vmatprep.subr.mxu0 0.0
  %3977 = vmatpush1.msra.mxu0 0.0
  %3978 = vmatprep.subr.mxu0 0.0
  %3979 = vmatpush1.msra.mxu0 0.0
  %3980 = vmatprep.subr.mxu0 0.0
  %3981 = vmatpush1.msra.mxu0 0.0
  %3982 = vmatprep.subr.mxu0 0.0
  %3983 = vmatpush1.msra.mxu0 0.0
  %3984 = vmatprep.subr.mxu0 0.0
  %3985 = vmatpush1.msra.mxu0 %v3955
  %3986 = vmatprep.subr.mxu0 0.0
  %3987 = vmatpush1.msra.mxu0 %v3954
  %3988 = vmatprep.subr.mxu0 0.0
  %3989 = vmatpush1.msra.mxu0 %v3953
  %3990 = vmatprep.subr.mxu0 0.0
  %3991 = vmatpush1.msra.mxu0 %v3952
  %3992 = vmatprep.subr.mxu0 0.0
  %3993 = vmatpush1.msra.mxu0 %v3951
  %3994 = vmatprep.subr.mxu0 0.0
  %3995 = vmatpush1.msra.mxu0 %v3950
  %3996 = vmatprep.subr.mxu0 0.0
  %3997 = vmatpush1.msra.mxu0 %v3949
  %3998 = vmatprep.subr.mxu0 0.0
  %3999 = vmatpush1.msra.mxu0 %v3948
  %4000 = vmatprep.subr.mxu0 0.0
  %4001 = vmatpush2.msra.mxu0 0.0
  %4002 = vmatprep.subr.mxu0 0.0
  %4003 = vmatpush2.msra.mxu0 0.0
  %4004 = vmatprep.subr.mxu0 0.0
  %4005 = vmatpush2.msra.mxu0 0.0
  %4006 = vmatprep.subr.mxu0 0.0
  %4007 = vmatpush2.msra.mxu0 0.0
  %4008 = vmatprep.subr.mxu0 0.0
  %4009 = vmatpush2.msra.mxu0 0.0
  %4010 = vmatprep.subr.mxu0 0.0
  %4011 = vmatpush2.msra.mxu0 0.0
  %4012 = vmatprep.subr.mxu0 0.0
  %4013 = vmatpush2.msra.mxu0 0.0
  %4014 = vmatprep.subr.mxu0 0.0
  %4015 = vmatpush2.msra.mxu0 0.0
  %4016 = vmatprep.subr.mxu0 0.0
  %4017 = vmatpush2.msra.mxu0 0.0
  %4018 = vmatprep.subr.mxu0 0.0
  %4019 = vmatpush2.msra.mxu0 0.0
  %4020 = vmatprep.subr.mxu0 0.0
  %4021 = vmatpush2.msra.mxu0 0.0
  %4022 = vmatprep.subr.mxu0 0.0
  %4023 = vmatpush2.msra.mxu0 0.0
  %4024 = vmatprep.subr.mxu0 0.0
  %4025 = vmatpush2.msra.mxu0 0.0
  %4026 = vmatprep.subr.mxu0 0.0
  %4027 = vmatpush2.msra.mxu0 0.0
  %4028 = vmatprep.subr.mxu0 0.0
  %4029 = vmatpush2.msra.mxu0 0.0
  %4030 = vmatprep.subr.mxu0 0.0
  %4031 = vmatpush2.msra.mxu0 0.0
  %4032 = vmatprep.mubr.f32.mxu0 0.0
  %4033 = vmatmul.mubr.f32.gmra.mxu0 %v3957
  %v4034 = vpop.f32.mrf.mxu0
  %v4035 = vadd.f32 0.0, %v4034
  %v4036 = vpop.f32.mrf.mxu0
  %4037 = vmatprep.mubr.f32.mxu0 0.0
  %4038 = vmatmul.mubr.f32.gmra.mxu0 %v3960
  %v4039 = vpop.f32.mrf.mxu0
  %v4040 = vadd.f32 0.0, %v4039
  %v4041 = vpop.f32.mrf.mxu0
  %4042 = vmatprep.mubr.f32.mxu0 0.0
  %4043 = vmatmul.mubr.f32.gmra.mxu0 %v3963
  %v4044 = vpop.f32.mrf.mxu0
  %v4045 = vadd.f32 0.0, %v4044
  %v4046 = vpop.f32.mrf.mxu0
  %4047 = vmatprep.mubr.f32.mxu0 0.0
  %4048 = vmatmul.mubr.f32.gmra.mxu0 %v3966
  %v4049 = vpop.f32.mrf.mxu0
  %v4050 = vadd.f32 0.0, %v4049
  %v4051 = vpop.f32.mrf.mxu0
  %4052 = vdwg.mxu0
  %v4053 = vadd.f32 %v3841, %v4035
  %v4054 = vadd.f32 %v3842, %v4040
  %v4055 = vadd.f32 %v3843, %v4045
  %v4056 = vadd.f32 %v3844, %v4050
  %s4057 = scalar_lea.vmem %s6, 192
  %v4058 = vld [vmem:[%s4057] sm:$0xff]
  %v4059 = vld [vmem:[%s4057 + $0x8] sm:$0xff]
  %v4060 = vld [vmem:[%s4057 + $0x10] sm:$0xff]
  %v4061 = vld [vmem:[%s4057 + $0x18] sm:$0xff]
  %v4063 = vsel %vm76, %v4058, 0
  %v4066 = vsel %vm76, %v4059, 0
  %v4069 = vsel %vm76, %v4060, 0
  %v4072 = vsel %vm76, %v4061, 0
  %4074 = vmatprep.subr.mxu0 0.0
  %4075 = vmatpush1.msra.mxu0 0.0
  %4076 = vmatprep.subr.mxu0 0.0
  %4077 = vmatpush1.msra.mxu0 0.0
  %4078 = vmatprep.subr.mxu0 0.0
  %4079 = vmatpush1.msra.mxu0 0.0
  %4080 = vmatprep.subr.mxu0 0.0
  %4081 = vmatpush1.msra.mxu0 0.0
  %4082 = vmatprep.subr.mxu0 0.0
  %4083 = vmatpush1.msra.mxu0 0.0
  %4084 = vmatprep.subr.mxu0 0.0
  %4085 = vmatpush1.msra.mxu0 0.0
  %4086 = vmatprep.subr.mxu0 0.0
  %4087 = vmatpush1.msra.mxu0 0.0
  %4088 = vmatprep.subr.mxu0 0.0
  %4089 = vmatpush1.msra.mxu0 0.0
  %4090 = vmatprep.subr.mxu0 0.0
  %4091 = vmatpush1.msra.mxu0 %v2794
  %4092 = vmatprep.subr.mxu0 0.0
  %4093 = vmatpush1.msra.mxu0 %v2793
  %4094 = vmatprep.subr.mxu0 0.0
  %4095 = vmatpush1.msra.mxu0 %v2792
  %4096 = vmatprep.subr.mxu0 0.0
  %4097 = vmatpush1.msra.mxu0 %v2791
  %4098 = vmatprep.subr.mxu0 0.0
  %4099 = vmatpush1.msra.mxu0 %v2790
  %4100 = vmatprep.subr.mxu0 0.0
  %4101 = vmatpush1.msra.mxu0 %v2789
  %4102 = vmatprep.subr.mxu0 0.0
  %4103 = vmatpush1.msra.mxu0 %v2788
  %4104 = vmatprep.subr.mxu0 0.0
  %4105 = vmatpush1.msra.mxu0 %v2787
  %4106 = vmatprep.subr.mxu0 0.0
  %4107 = vmatpush2.msra.mxu0 0.0
  %4108 = vmatprep.subr.mxu0 0.0
  %4109 = vmatpush2.msra.mxu0 0.0
  %4110 = vmatprep.subr.mxu0 0.0
  %4111 = vmatpush2.msra.mxu0 0.0
  %4112 = vmatprep.subr.mxu0 0.0
  %4113 = vmatpush2.msra.mxu0 0.0
  %4114 = vmatprep.subr.mxu0 0.0
  %4115 = vmatpush2.msra.mxu0 0.0
  %4116 = vmatprep.subr.mxu0 0.0
  %4117 = vmatpush2.msra.mxu0 0.0
  %4118 = vmatprep.subr.mxu0 0.0
  %4119 = vmatpush2.msra.mxu0 0.0
  %4120 = vmatprep.subr.mxu0 0.0
  %4121 = vmatpush2.msra.mxu0 0.0
  %4122 = vmatprep.subr.mxu0 0.0
  %4123 = vmatpush2.msra.mxu0 0.0
  %4124 = vmatprep.subr.mxu0 0.0
  %4125 = vmatpush2.msra.mxu0 0.0
  %4126 = vmatprep.subr.mxu0 0.0
  %4127 = vmatpush2.msra.mxu0 0.0
  %4128 = vmatprep.subr.mxu0 0.0
  %4129 = vmatpush2.msra.mxu0 0.0
  %4130 = vmatprep.subr.mxu0 0.0
  %4131 = vmatpush2.msra.mxu0 0.0
  %4132 = vmatprep.subr.mxu0 0.0
  %4133 = vmatpush2.msra.mxu0 0.0
  %4134 = vmatprep.subr.mxu0 0.0
  %4135 = vmatpush2.msra.mxu0 0.0
  %4136 = vmatprep.subr.mxu0 0.0
  %4137 = vmatpush2.msra.mxu0 0.0
  %4138 = vmatprep.mubr.f32.mxu0 0.0
  %4139 = vmatmul.mubr.f32.gmra.mxu0 %v4063
  %v4140 = vpop.f32.mrf.mxu0
  %v4141 = vadd.f32 0.0, %v4140
  %v4142 = vpop.f32.mrf.mxu0
  %4143 = vmatprep.mubr.f32.mxu0 0.0
  %4144 = vmatmul.mubr.f32.gmra.mxu0 %v4066
  %v4145 = vpop.f32.mrf.mxu0
  %v4146 = vadd.f32 0.0, %v4145
  %v4147 = vpop.f32.mrf.mxu0
  %4148 = vmatprep.mubr.f32.mxu0 0.0
  %4149 = vmatmul.mubr.f32.gmra.mxu0 %v4069
  %v4150 = vpop.f32.mrf.mxu0
  %v4151 = vadd.f32 0.0, %v4150
  %v4152 = vpop.f32.mrf.mxu0
  %4153 = vmatprep.mubr.f32.mxu0 0.0
  %4154 = vmatmul.mubr.f32.gmra.mxu0 %v4072
  %v4155 = vpop.f32.mrf.mxu0
  %v4156 = vadd.f32 0.0, %v4155
  %v4157 = vpop.f32.mrf.mxu0
  %4158 = vdwg.mxu0
  %s4159 = scalar_lea.vmem %s7, 384
  %v4160 = vld [vmem:[%s4159] sm:$0xff]
  %v4161 = vld [vmem:[%s4159 + $0x8] sm:$0xff]
  %v4162 = vld [vmem:[%s4159 + $0x10] sm:$0xff]
  %v4163 = vld [vmem:[%s4159 + $0x18] sm:$0xff]
  %v4164 = vld [vmem:[%s4159 + $0x20] sm:$0xff]
  %v4165 = vld [vmem:[%s4159 + $0x28] sm:$0xff]
  %v4166 = vld [vmem:[%s4159 + $0x30] sm:$0xff]
  %v4167 = vld [vmem:[%s4159 + $0x38] sm:$0xff]
  %v4169 = vsel %vm76, %v4141, 0
  %v4172 = vsel %vm76, %v4146, 0
  %v4175 = vsel %vm76, %v4151, 0
  %v4178 = vsel %vm76, %v4156, 0
  %4180 = vmatprep.subr.mxu0 0.0
  %4181 = vmatpush1.msra.mxu0 0.0
  %4182 = vmatprep.subr.mxu0 0.0
  %4183 = vmatpush1.msra.mxu0 0.0
  %4184 = vmatprep.subr.mxu0 0.0
  %4185 = vmatpush1.msra.mxu0 0.0
  %4186 = vmatprep.subr.mxu0 0.0
  %4187 = vmatpush1.msra.mxu0 0.0
  %4188 = vmatprep.subr.mxu0 0.0
  %4189 = vmatpush1.msra.mxu0 0.0
  %4190 = vmatprep.subr.mxu0 0.0
  %4191 = vmatpush1.msra.mxu0 0.0
  %4192 = vmatprep.subr.mxu0 0.0
  %4193 = vmatpush1.msra.mxu0 0.0
  %4194 = vmatprep.subr.mxu0 0.0
  %4195 = vmatpush1.msra.mxu0 0.0
  %4196 = vmatprep.subr.mxu0 0.0
  %4197 = vmatpush1.msra.mxu0 %v4167
  %4198 = vmatprep.subr.mxu0 0.0
  %4199 = vmatpush1.msra.mxu0 %v4166
  %4200 = vmatprep.subr.mxu0 0.0
  %4201 = vmatpush1.msra.mxu0 %v4165
  %4202 = vmatprep.subr.mxu0 0.0
  %4203 = vmatpush1.msra.mxu0 %v4164
  %4204 = vmatprep.subr.mxu0 0.0
  %4205 = vmatpush1.msra.mxu0 %v4163
  %4206 = vmatprep.subr.mxu0 0.0
  %4207 = vmatpush1.msra.mxu0 %v4162
  %4208 = vmatprep.subr.mxu0 0.0
  %4209 = vmatpush1.msra.mxu0 %v4161
  %4210 = vmatprep.subr.mxu0 0.0
  %4211 = vmatpush1.msra.mxu0 %v4160
  %4212 = vmatprep.subr.mxu0 0.0
  %4213 = vmatpush2.msra.mxu0 0.0
  %4214 = vmatprep.subr.mxu0 0.0
  %4215 = vmatpush2.msra.mxu0 0.0
  %4216 = vmatprep.subr.mxu0 0.0
  %4217 = vmatpush2.msra.mxu0 0.0
  %4218 = vmatprep.subr.mxu0 0.0
  %4219 = vmatpush2.msra.mxu0 0.0
  %4220 = vmatprep.subr.mxu0 0.0
  %4221 = vmatpush2.msra.mxu0 0.0
  %4222 = vmatprep.subr.mxu0 0.0
  %4223 = vmatpush2.msra.mxu0 0.0
  %4224 = vmatprep.subr.mxu0 0.0
  %4225 = vmatpush2.msra.mxu0 0.0
  %4226 = vmatprep.subr.mxu0 0.0
  %4227 = vmatpush2.msra.mxu0 0.0
  %4228 = vmatprep.subr.mxu0 0.0
  %4229 = vmatpush2.msra.mxu0 0.0
  %4230 = vmatprep.subr.mxu0 0.0
  %4231 = vmatpush2.msra.mxu0 0.0
  %4232 = vmatprep.subr.mxu0 0.0
  %4233 = vmatpush2.msra.mxu0 0.0
  %4234 = vmatprep.subr.mxu0 0.0
  %4235 = vmatpush2.msra.mxu0 0.0
  %4236 = vmatprep.subr.mxu0 0.0
  %4237 = vmatpush2.msra.mxu0 0.0
  %4238 = vmatprep.subr.mxu0 0.0
  %4239 = vmatpush2.msra.mxu0 0.0
  %4240 = vmatprep.subr.mxu0 0.0
  %4241 = vmatpush2.msra.mxu0 0.0
  %4242 = vmatprep.subr.mxu0 0.0
  %4243 = vmatpush2.msra.mxu0 0.0
  %4244 = vmatprep.mubr.f32.mxu0 0.0
  %4245 = vmatmul.mubr.f32.gmra.mxu0 %v4169
  %v4246 = vpop.f32.mrf.mxu0
  %v4247 = vadd.f32 0.0, %v4246
  %v4248 = vpop.f32.mrf.mxu0
  %4249 = vmatprep.mubr.f32.mxu0 0.0
  %4250 = vmatmul.mubr.f32.gmra.mxu0 %v4172
  %v4251 = vpop.f32.mrf.mxu0
  %v4252 = vadd.f32 0.0, %v4251
  %v4253 = vpop.f32.mrf.mxu0
  %4254 = vmatprep.mubr.f32.mxu0 0.0
  %4255 = vmatmul.mubr.f32.gmra.mxu0 %v4175
  %v4256 = vpop.f32.mrf.mxu0
  %v4257 = vadd.f32 0.0, %v4256
  %v4258 = vpop.f32.mrf.mxu0
  %4259 = vmatprep.mubr.f32.mxu0 0.0
  %4260 = vmatmul.mubr.f32.gmra.mxu0 %v4178
  %v4261 = vpop.f32.mrf.mxu0
  %v4262 = vadd.f32 0.0, %v4261
  %v4263 = vpop.f32.mrf.mxu0
  %4264 = vdwg.mxu0
  %v4265 = vadd.f32 %v4053, %v4247
  %v4266 = vadd.f32 %v4054, %v4252
  %v4267 = vadd.f32 %v4055, %v4257
  %v4268 = vadd.f32 %v4056, %v4262
  %s4269 = scalar_lea.vmem %s6, 224
  %v4270 = vld [vmem:[%s4269] sm:$0xff]
  %v4271 = vld [vmem:[%s4269 + $0x8] sm:$0xff]
  %v4272 = vld [vmem:[%s4269 + $0x10] sm:$0xff]
  %v4273 = vld [vmem:[%s4269 + $0x18] sm:$0xff]
  %v4275 = vsel %vm76, %v4270, 0
  %v4278 = vsel %vm76, %v4271, 0
  %v4281 = vsel %vm76, %v4272, 0
  %v4284 = vsel %vm76, %v4273, 0
  %4286 = vmatprep.subr.mxu0 0.0
  %4287 = vmatpush1.msra.mxu0 0.0
  %4288 = vmatprep.subr.mxu0 0.0
  %4289 = vmatpush1.msra.mxu0 0.0
  %4290 = vmatprep.subr.mxu0 0.0
  %4291 = vmatpush1.msra.mxu0 0.0
  %4292 = vmatprep.subr.mxu0 0.0
  %4293 = vmatpush1.msra.mxu0 0.0
  %4294 = vmatprep.subr.mxu0 0.0
  %4295 = vmatpush1.msra.mxu0 0.0
  %4296 = vmatprep.subr.mxu0 0.0
  %4297 = vmatpush1.msra.mxu0 0.0
  %4298 = vmatprep.subr.mxu0 0.0
  %4299 = vmatpush1.msra.mxu0 0.0
  %4300 = vmatprep.subr.mxu0 0.0
  %4301 = vmatpush1.msra.mxu0 0.0
  %4302 = vmatprep.subr.mxu0 0.0
  %4303 = vmatpush1.msra.mxu0 %v2794
  %4304 = vmatprep.subr.mxu0 0.0
  %4305 = vmatpush1.msra.mxu0 %v2793
  %4306 = vmatprep.subr.mxu0 0.0
  %4307 = vmatpush1.msra.mxu0 %v2792
  %4308 = vmatprep.subr.mxu0 0.0
  %4309 = vmatpush1.msra.mxu0 %v2791
  %4310 = vmatprep.subr.mxu0 0.0
  %4311 = vmatpush1.msra.mxu0 %v2790
  %4312 = vmatprep.subr.mxu0 0.0
  %4313 = vmatpush1.msra.mxu0 %v2789
  %4314 = vmatprep.subr.mxu0 0.0
  %4315 = vmatpush1.msra.mxu0 %v2788
  %4316 = vmatprep.subr.mxu0 0.0
  %4317 = vmatpush1.msra.mxu0 %v2787
  %4318 = vmatprep.subr.mxu0 0.0
  %4319 = vmatpush2.msra.mxu0 0.0
  %4320 = vmatprep.subr.mxu0 0.0
  %4321 = vmatpush2.msra.mxu0 0.0
  %4322 = vmatprep.subr.mxu0 0.0
  %4323 = vmatpush2.msra.mxu0 0.0
  %4324 = vmatprep.subr.mxu0 0.0
  %4325 = vmatpush2.msra.mxu0 0.0
  %4326 = vmatprep.subr.mxu0 0.0
  %4327 = vmatpush2.msra.mxu0 0.0
  %4328 = vmatprep.subr.mxu0 0.0
  %4329 = vmatpush2.msra.mxu0 0.0
  %4330 = vmatprep.subr.mxu0 0.0
  %4331 = vmatpush2.msra.mxu0 0.0
  %4332 = vmatprep.subr.mxu0 0.0
  %4333 = vmatpush2.msra.mxu0 0.0
  %4334 = vmatprep.subr.mxu0 0.0
  %4335 = vmatpush2.msra.mxu0 0.0
  %4336 = vmatprep.subr.mxu0 0.0
  %4337 = vmatpush2.msra.mxu0 0.0
  %4338 = vmatprep.subr.mxu0 0.0
  %4339 = vmatpush2.msra.mxu0 0.0
  %4340 = vmatprep.subr.mxu0 0.0
  %4341 = vmatpush2.msra.mxu0 0.0
  %4342 = vmatprep.subr.mxu0 0.0
  %4343 = vmatpush2.msra.mxu0 0.0
  %4344 = vmatprep.subr.mxu0 0.0
  %4345 = vmatpush2.msra.mxu0 0.0
  %4346 = vmatprep.subr.mxu0 0.0
  %4347 = vmatpush2.msra.mxu0 0.0
  %4348 = vmatprep.subr.mxu0 0.0
  %4349 = vmatpush2.msra.mxu0 0.0
  %4350 = vmatprep.mubr.f32.mxu0 0.0
  %4351 = vmatmul.mubr.f32.gmra.mxu0 %v4275
  %v4352 = vpop.f32.mrf.mxu0
  %v4353 = vadd.f32 0.0, %v4352
  %v4354 = vpop.f32.mrf.mxu0
  %4355 = vmatprep.mubr.f32.mxu0 0.0
  %4356 = vmatmul.mubr.f32.gmra.mxu0 %v4278
  %v4357 = vpop.f32.mrf.mxu0
  %v4358 = vadd.f32 0.0, %v4357
  %v4359 = vpop.f32.mrf.mxu0
  %4360 = vmatprep.mubr.f32.mxu0 0.0
  %4361 = vmatmul.mubr.f32.gmra.mxu0 %v4281
  %v4362 = vpop.f32.mrf.mxu0
  %v4363 = vadd.f32 0.0, %v4362
  %v4364 = vpop.f32.mrf.mxu0
  %4365 = vmatprep.mubr.f32.mxu0 0.0
  %4366 = vmatmul.mubr.f32.gmra.mxu0 %v4284
  %v4367 = vpop.f32.mrf.mxu0
  %v4368 = vadd.f32 0.0, %v4367
  %v4369 = vpop.f32.mrf.mxu0
  %4370 = vdwg.mxu0
  %s4371 = scalar_lea.vmem %s7, 448
  %v4372 = vld [vmem:[%s4371] sm:$0xff]
  %v4373 = vld [vmem:[%s4371 + $0x8] sm:$0xff]
  %v4374 = vld [vmem:[%s4371 + $0x10] sm:$0xff]
  %v4375 = vld [vmem:[%s4371 + $0x18] sm:$0xff]
  %v4376 = vld [vmem:[%s4371 + $0x20] sm:$0xff]
  %v4377 = vld [vmem:[%s4371 + $0x28] sm:$0xff]
  %v4378 = vld [vmem:[%s4371 + $0x30] sm:$0xff]
  %v4379 = vld [vmem:[%s4371 + $0x38] sm:$0xff]
  %v4381 = vsel %vm76, %v4353, 0
  %v4384 = vsel %vm76, %v4358, 0
  %v4387 = vsel %vm76, %v4363, 0
  %v4390 = vsel %vm76, %v4368, 0
  %4392 = vmatprep.subr.mxu0 0.0
  %4393 = vmatpush1.msra.mxu0 0.0
  %4394 = vmatprep.subr.mxu0 0.0
  %4395 = vmatpush1.msra.mxu0 0.0
  %4396 = vmatprep.subr.mxu0 0.0
  %4397 = vmatpush1.msra.mxu0 0.0
  %4398 = vmatprep.subr.mxu0 0.0
  %4399 = vmatpush1.msra.mxu0 0.0
  %4400 = vmatprep.subr.mxu0 0.0
  %4401 = vmatpush1.msra.mxu0 0.0
  %4402 = vmatprep.subr.mxu0 0.0
  %4403 = vmatpush1.msra.mxu0 0.0
  %4404 = vmatprep.subr.mxu0 0.0
  %4405 = vmatpush1.msra.mxu0 0.0
  %4406 = vmatprep.subr.mxu0 0.0
  %4407 = vmatpush1.msra.mxu0 0.0
  %4408 = vmatprep.subr.mxu0 0.0
  %4409 = vmatpush1.msra.mxu0 %v4379
  %4410 = vmatprep.subr.mxu0 0.0
  %4411 = vmatpush1.msra.mxu0 %v4378
  %4412 = vmatprep.subr.mxu0 0.0
  %4413 = vmatpush1.msra.mxu0 %v4377
  %4414 = vmatprep.subr.mxu0 0.0
  %4415 = vmatpush1.msra.mxu0 %v4376
  %4416 = vmatprep.subr.mxu0 0.0
  %4417 = vmatpush1.msra.mxu0 %v4375
  %4418 = vmatprep.subr.mxu0 0.0
  %4419 = vmatpush1.msra.mxu0 %v4374
  %4420 = vmatprep.subr.mxu0 0.0
  %4421 = vmatpush1.msra.mxu0 %v4373
  %4422 = vmatprep.subr.mxu0 0.0
  %4423 = vmatpush1.msra.mxu0 %v4372
  %4424 = vmatprep.subr.mxu0 0.0
  %4425 = vmatpush2.msra.mxu0 0.0
  %4426 = vmatprep.subr.mxu0 0.0
  %4427 = vmatpush2.msra.mxu0 0.0
  %4428 = vmatprep.subr.mxu0 0.0
  %4429 = vmatpush2.msra.mxu0 0.0
  %4430 = vmatprep.subr.mxu0 0.0
  %4431 = vmatpush2.msra.mxu0 0.0
  %4432 = vmatprep.subr.mxu0 0.0
  %4433 = vmatpush2.msra.mxu0 0.0
  %4434 = vmatprep.subr.mxu0 0.0
  %4435 = vmatpush2.msra.mxu0 0.0
  %4436 = vmatprep.subr.mxu0 0.0
  %4437 = vmatpush2.msra.mxu0 0.0
  %4438 = vmatprep.subr.mxu0 0.0
  %4439 = vmatpush2.msra.mxu0 0.0
  %4440 = vmatprep.subr.mxu0 0.0
  %4441 = vmatpush2.msra.mxu0 0.0
  %4442 = vmatprep.subr.mxu0 0.0
  %4443 = vmatpush2.msra.mxu0 0.0
  %4444 = vmatprep.subr.mxu0 0.0
  %4445 = vmatpush2.msra.mxu0 0.0
  %4446 = vmatprep.subr.mxu0 0.0
  %4447 = vmatpush2.msra.mxu0 0.0
  %4448 = vmatprep.subr.mxu0 0.0
  %4449 = vmatpush2.msra.mxu0 0.0
  %4450 = vmatprep.subr.mxu0 0.0
  %4451 = vmatpush2.msra.mxu0 0.0
  %4452 = vmatprep.subr.mxu0 0.0
  %4453 = vmatpush2.msra.mxu0 0.0
  %4454 = vmatprep.subr.mxu0 0.0
  %4455 = vmatpush2.msra.mxu0 0.0
  %4456 = vmatprep.mubr.f32.mxu0 0.0
  %4457 = vmatmul.mubr.f32.gmra.mxu0 %v4381
  %v4458 = vpop.f32.mrf.mxu0
  %v4459 = vadd.f32 0.0, %v4458
  %v4460 = vpop.f32.mrf.mxu0
  %4461 = vmatprep.mubr.f32.mxu0 0.0
  %4462 = vmatmul.mubr.f32.gmra.mxu0 %v4384
  %v4463 = vpop.f32.mrf.mxu0
  %v4464 = vadd.f32 0.0, %v4463
  %v4465 = vpop.f32.mrf.mxu0
  %4466 = vmatprep.mubr.f32.mxu0 0.0
  %4467 = vmatmul.mubr.f32.gmra.mxu0 %v4387
  %v4468 = vpop.f32.mrf.mxu0
  %v4469 = vadd.f32 0.0, %v4468
  %v4470 = vpop.f32.mrf.mxu0
  %4471 = vmatprep.mubr.f32.mxu0 0.0
  %4472 = vmatmul.mubr.f32.gmra.mxu0 %v4390
  %v4473 = vpop.f32.mrf.mxu0
  %v4474 = vadd.f32 0.0, %v4473
  %v4475 = vpop.f32.mrf.mxu0
  %4476 = vdwg.mxu0
  %v4477 = vadd.f32 %v4265, %v4459
  %v4478 = vadd.f32 %v4266, %v4464
  %v4479 = vadd.f32 %v4267, %v4469
  %v4480 = vadd.f32 %v4268, %v4474
  %s4481 = scalar_lea.vmem %s6, 256
  %v4482 = vld [vmem:[%s4481] sm:$0xff]
  %v4483 = vld [vmem:[%s4481 + $0x8] sm:$0xff]
  %v4484 = vld [vmem:[%s4481 + $0x10] sm:$0xff]
  %v4485 = vld [vmem:[%s4481 + $0x18] sm:$0xff]
  %v4487 = vsel %vm76, %v4482, 0
  %v4490 = vsel %vm76, %v4483, 0
  %v4493 = vsel %vm76, %v4484, 0
  %v4496 = vsel %vm76, %v4485, 0
  %4498 = vmatprep.subr.mxu0 0.0
  %4499 = vmatpush1.msra.mxu0 0.0
  %4500 = vmatprep.subr.mxu0 0.0
  %4501 = vmatpush1.msra.mxu0 0.0
  %4502 = vmatprep.subr.mxu0 0.0
  %4503 = vmatpush1.msra.mxu0 0.0
  %4504 = vmatprep.subr.mxu0 0.0
  %4505 = vmatpush1.msra.mxu0 0.0
  %4506 = vmatprep.subr.mxu0 0.0
  %4507 = vmatpush1.msra.mxu0 0.0
  %4508 = vmatprep.subr.mxu0 0.0
  %4509 = vmatpush1.msra.mxu0 0.0
  %4510 = vmatprep.subr.mxu0 0.0
  %4511 = vmatpush1.msra.mxu0 0.0
  %4512 = vmatprep.subr.mxu0 0.0
  %4513 = vmatpush1.msra.mxu0 0.0
  %4514 = vmatprep.subr.mxu0 0.0
  %4515 = vmatpush1.msra.mxu0 %v2794
  %4516 = vmatprep.subr.mxu0 0.0
  %4517 = vmatpush1.msra.mxu0 %v2793
  %4518 = vmatprep.subr.mxu0 0.0
  %4519 = vmatpush1.msra.mxu0 %v2792
  %4520 = vmatprep.subr.mxu0 0.0
  %4521 = vmatpush1.msra.mxu0 %v2791
  %4522 = vmatprep.subr.mxu0 0.0
  %4523 = vmatpush1.msra.mxu0 %v2790
  %4524 = vmatprep.subr.mxu0 0.0
  %4525 = vmatpush1.msra.mxu0 %v2789
  %4526 = vmatprep.subr.mxu0 0.0
  %4527 = vmatpush1.msra.mxu0 %v2788
  %4528 = vmatprep.subr.mxu0 0.0
  %4529 = vmatpush1.msra.mxu0 %v2787
  %4530 = vmatprep.subr.mxu0 0.0
  %4531 = vmatpush2.msra.mxu0 0.0
  %4532 = vmatprep.subr.mxu0 0.0
  %4533 = vmatpush2.msra.mxu0 0.0
  %4534 = vmatprep.subr.mxu0 0.0
  %4535 = vmatpush2.msra.mxu0 0.0
  %4536 = vmatprep.subr.mxu0 0.0
  %4537 = vmatpush2.msra.mxu0 0.0
  %4538 = vmatprep.subr.mxu0 0.0
  %4539 = vmatpush2.msra.mxu0 0.0
  %4540 = vmatprep.subr.mxu0 0.0
  %4541 = vmatpush2.msra.mxu0 0.0
  %4542 = vmatprep.subr.mxu0 0.0
  %4543 = vmatpush2.msra.mxu0 0.0
  %4544 = vmatprep.subr.mxu0 0.0
  %4545 = vmatpush2.msra.mxu0 0.0
  %4546 = vmatprep.subr.mxu0 0.0
  %4547 = vmatpush2.msra.mxu0 0.0
  %4548 = vmatprep.subr.mxu0 0.0
  %4549 = vmatpush2.msra.mxu0 0.0
  %4550 = vmatprep.subr.mxu0 0.0
  %4551 = vmatpush2.msra.mxu0 0.0
  %4552 = vmatprep.subr.mxu0 0.0
  %4553 = vmatpush2.msra.mxu0 0.0
  %4554 = vmatprep.subr.mxu0 0.0
  %4555 = vmatpush2.msra.mxu0 0.0
  %4556 = vmatprep.subr.mxu0 0.0
  %4557 = vmatpush2.msra.mxu0 0.0
  %4558 = vmatprep.subr.mxu0 0.0
  %4559 = vmatpush2.msra.mxu0 0.0
  %4560 = vmatprep.subr.mxu0 0.0
  %4561 = vmatpush2.msra.mxu0 0.0
  %4562 = vmatprep.mubr.f32.mxu0 0.0
  %4563 = vmatmul.mubr.f32.gmra.mxu0 %v4487
  %v4564 = vpop.f32.mrf.mxu0
  %v4565 = vadd.f32 0.0, %v4564
  %v4566 = vpop.f32.mrf.mxu0
  %4567 = vmatprep.mubr.f32.mxu0 0.0
  %4568 = vmatmul.mubr.f32.gmra.mxu0 %v4490
  %v4569 = vpop.f32.mrf.mxu0
  %v4570 = vadd.f32 0.0, %v4569
  %v4571 = vpop.f32.mrf.mxu0
  %4572 = vmatprep.mubr.f32.mxu0 0.0
  %4573 = vmatmul.mubr.f32.gmra.mxu0 %v4493
  %v4574 = vpop.f32.mrf.mxu0
  %v4575 = vadd.f32 0.0, %v4574
  %v4576 = vpop.f32.mrf.mxu0
  %4577 = vmatprep.mubr.f32.mxu0 0.0
  %4578 = vmatmul.mubr.f32.gmra.mxu0 %v4496
  %v4579 = vpop.f32.mrf.mxu0
  %v4580 = vadd.f32 0.0, %v4579
  %v4581 = vpop.f32.mrf.mxu0
  %4582 = vdwg.mxu0
  %s4583 = scalar_lea.vmem %s7, 512
  %v4584 = vld [vmem:[%s4583] sm:$0xff]
  %v4585 = vld [vmem:[%s4583 + $0x8] sm:$0xff]
  %v4586 = vld [vmem:[%s4583 + $0x10] sm:$0xff]
  %v4587 = vld [vmem:[%s4583 + $0x18] sm:$0xff]
  %v4588 = vld [vmem:[%s4583 + $0x20] sm:$0xff]
  %v4589 = vld [vmem:[%s4583 + $0x28] sm:$0xff]
  %v4590 = vld [vmem:[%s4583 + $0x30] sm:$0xff]
  %v4591 = vld [vmem:[%s4583 + $0x38] sm:$0xff]
  %v4593 = vsel %vm76, %v4565, 0
  %v4596 = vsel %vm76, %v4570, 0
  %v4599 = vsel %vm76, %v4575, 0
  %v4602 = vsel %vm76, %v4580, 0
  %4604 = vmatprep.subr.mxu0 0.0
  %4605 = vmatpush1.msra.mxu0 0.0
  %4606 = vmatprep.subr.mxu0 0.0
  %4607 = vmatpush1.msra.mxu0 0.0
  %4608 = vmatprep.subr.mxu0 0.0
  %4609 = vmatpush1.msra.mxu0 0.0
  %4610 = vmatprep.subr.mxu0 0.0
  %4611 = vmatpush1.msra.mxu0 0.0
  %4612 = vmatprep.subr.mxu0 0.0
  %4613 = vmatpush1.msra.mxu0 0.0
  %4614 = vmatprep.subr.mxu0 0.0
  %4615 = vmatpush1.msra.mxu0 0.0
  %4616 = vmatprep.subr.mxu0 0.0
  %4617 = vmatpush1.msra.mxu0 0.0
  %4618 = vmatprep.subr.mxu0 0.0
  %4619 = vmatpush1.msra.mxu0 0.0
  %4620 = vmatprep.subr.mxu0 0.0
  %4621 = vmatpush1.msra.mxu0 %v4591
  %4622 = vmatprep.subr.mxu0 0.0
  %4623 = vmatpush1.msra.mxu0 %v4590
  %4624 = vmatprep.subr.mxu0 0.0
  %4625 = vmatpush1.msra.mxu0 %v4589
  %4626 = vmatprep.subr.mxu0 0.0
  %4627 = vmatpush1.msra.mxu0 %v4588
  %4628 = vmatprep.subr.mxu0 0.0
  %4629 = vmatpush1.msra.mxu0 %v4587
  %4630 = vmatprep.subr.mxu0 0.0
  %4631 = vmatpush1.msra.mxu0 %v4586
  %4632 = vmatprep.subr.mxu0 0.0
  %4633 = vmatpush1.msra.mxu0 %v4585
  %4634 = vmatprep.subr.mxu0 0.0
  %4635 = vmatpush1.msra.mxu0 %v4584
  %4636 = vmatprep.subr.mxu0 0.0
  %4637 = vmatpush2.msra.mxu0 0.0
  %4638 = vmatprep.subr.mxu0 0.0
  %4639 = vmatpush2.msra.mxu0 0.0
  %4640 = vmatprep.subr.mxu0 0.0
  %4641 = vmatpush2.msra.mxu0 0.0
  %4642 = vmatprep.subr.mxu0 0.0
  %4643 = vmatpush2.msra.mxu0 0.0
  %4644 = vmatprep.subr.mxu0 0.0
  %4645 = vmatpush2.msra.mxu0 0.0
  %4646 = vmatprep.subr.mxu0 0.0
  %4647 = vmatpush2.msra.mxu0 0.0
  %4648 = vmatprep.subr.mxu0 0.0
  %4649 = vmatpush2.msra.mxu0 0.0
  %4650 = vmatprep.subr.mxu0 0.0
  %4651 = vmatpush2.msra.mxu0 0.0
  %4652 = vmatprep.subr.mxu0 0.0
  %4653 = vmatpush2.msra.mxu0 0.0
  %4654 = vmatprep.subr.mxu0 0.0
  %4655 = vmatpush2.msra.mxu0 0.0
  %4656 = vmatprep.subr.mxu0 0.0
  %4657 = vmatpush2.msra.mxu0 0.0
  %4658 = vmatprep.subr.mxu0 0.0
  %4659 = vmatpush2.msra.mxu0 0.0
  %4660 = vmatprep.subr.mxu0 0.0
  %4661 = vmatpush2.msra.mxu0 0.0
  %4662 = vmatprep.subr.mxu0 0.0
  %4663 = vmatpush2.msra.mxu0 0.0
  %4664 = vmatprep.subr.mxu0 0.0
  %4665 = vmatpush2.msra.mxu0 0.0
  %4666 = vmatprep.subr.mxu0 0.0
  %4667 = vmatpush2.msra.mxu0 0.0
  %4668 = vmatprep.mubr.f32.mxu0 0.0
  %4669 = vmatmul.mubr.f32.gmra.mxu0 %v4593
  %v4670 = vpop.f32.mrf.mxu0
  %v4671 = vadd.f32 0.0, %v4670
  %v4672 = vpop.f32.mrf.mxu0
  %4673 = vmatprep.mubr.f32.mxu0 0.0
  %4674 = vmatmul.mubr.f32.gmra.mxu0 %v4596
  %v4675 = vpop.f32.mrf.mxu0
  %v4676 = vadd.f32 0.0, %v4675
  %v4677 = vpop.f32.mrf.mxu0
  %4678 = vmatprep.mubr.f32.mxu0 0.0
  %4679 = vmatmul.mubr.f32.gmra.mxu0 %v4599
  %v4680 = vpop.f32.mrf.mxu0
  %v4681 = vadd.f32 0.0, %v4680
  %v4682 = vpop.f32.mrf.mxu0
  %4683 = vmatprep.mubr.f32.mxu0 0.0
  %4684 = vmatmul.mubr.f32.gmra.mxu0 %v4602
  %v4685 = vpop.f32.mrf.mxu0
  %v4686 = vadd.f32 0.0, %v4685
  %v4687 = vpop.f32.mrf.mxu0
  %4688 = vdwg.mxu0
  %v4689 = vadd.f32 %v4477, %v4671
  %v4690 = vadd.f32 %v4478, %v4676
  %v4691 = vadd.f32 %v4479, %v4681
  %v4692 = vadd.f32 %v4480, %v4686
  %v4693 = vld [vmem:[%s8] sm:$0x1]
  %v4695 = vlaneseq
  %v4696 = vshrl.u32 %v4695, 7
  %v4697 = vsub.s32 0, %v4696
  %v4698 = vrot.slane %v4693, %v4697
  %v4700 = vadd.f32 %v4689, %v4698
  %v4701 = vadd.f32 %v4690, %v4698
  %v4702 = vadd.f32 %v4691, %v4698
  %v4703 = vadd.f32 %v4692, %v4698
  %v4704 = vmax.f32 %v4700, 0.0
  %v4705 = vmax.f32 %v4701, 0.0
  %v4706 = vmax.f32 %v4702, 0.0
  %v4707 = vmax.f32 %v4703, 0.0
  %v4708 = vld [vmem:[%s9] sm:$0xff]
  %v4710 = vsel %vm553, %v4708, 0
  %4712 = vmatprep.subr.mxu0 0.0
  %4713 = vmatpush1.msra.mxu0 0.0
  %4714 = vmatprep.subr.mxu0 0.0
  %4715 = vmatpush1.msra.mxu0 0.0
  %4716 = vmatprep.subr.mxu0 0.0
  %4717 = vmatpush1.msra.mxu0 0.0
  %4718 = vmatprep.subr.mxu0 0.0
  %4719 = vmatpush1.msra.mxu0 0.0
  %4720 = vmatprep.subr.mxu0 0.0
  %4721 = vmatpush1.msra.mxu0 0.0
  %4722 = vmatprep.subr.mxu0 0.0
  %4723 = vmatpush1.msra.mxu0 0.0
  %4724 = vmatprep.subr.mxu0 0.0
  %4725 = vmatpush1.msra.mxu0 0.0
  %4726 = vmatprep.subr.mxu0 0.0
  %4727 = vmatpush1.msra.mxu0 0.0
  %4728 = vmatprep.subr.mxu0 0.0
  %4729 = vmatpush1.msra.mxu0 0.0
  %4730 = vmatprep.subr.mxu0 0.0
  %4731 = vmatpush1.msra.mxu0 0.0
  %4732 = vmatprep.subr.mxu0 0.0
  %4733 = vmatpush1.msra.mxu0 0.0
  %4734 = vmatprep.subr.mxu0 0.0
  %4735 = vmatpush1.msra.mxu0 0.0
  %4736 = vmatprep.subr.mxu0 0.0
  %4737 = vmatpush1.msra.mxu0 %v4707
  %4738 = vmatprep.subr.mxu0 0.0
  %4739 = vmatpush1.msra.mxu0 %v4706
  %4740 = vmatprep.subr.mxu0 0.0
  %4741 = vmatpush1.msra.mxu0 %v4705
  %4742 = vmatprep.subr.mxu0 0.0
  %4743 = vmatpush1.msra.mxu0 %v4704
  %4744 = vmatprep.subr.mxu0 0.0
  %4745 = vmatpush2.msra.mxu0 0.0
  %4746 = vmatprep.subr.mxu0 0.0
  %4747 = vmatpush2.msra.mxu0 0.0
  %4748 = vmatprep.subr.mxu0 0.0
  %4749 = vmatpush2.msra.mxu0 0.0
  %4750 = vmatprep.subr.mxu0 0.0
  %4751 = vmatpush2.msra.mxu0 0.0
  %4752 = vmatprep.subr.mxu0 0.0
  %4753 = vmatpush2.msra.mxu0 0.0
  %4754 = vmatprep.subr.mxu0 0.0
  %4755 = vmatpush2.msra.mxu0 0.0
  %4756 = vmatprep.subr.mxu0 0.0
  %4757 = vmatpush2.msra.mxu0 0.0
  %4758 = vmatprep.subr.mxu0 0.0
  %4759 = vmatpush2.msra.mxu0 0.0
  %4760 = vmatprep.subr.mxu0 0.0
  %4761 = vmatpush2.msra.mxu0 0.0
  %4762 = vmatprep.subr.mxu0 0.0
  %4763 = vmatpush2.msra.mxu0 0.0
  %4764 = vmatprep.subr.mxu0 0.0
  %4765 = vmatpush2.msra.mxu0 0.0
  %4766 = vmatprep.subr.mxu0 0.0
  %4767 = vmatpush2.msra.mxu0 0.0
  %4768 = vmatprep.subr.mxu0 0.0
  %4769 = vmatpush2.msra.mxu0 0.0
  %4770 = vmatprep.subr.mxu0 0.0
  %4771 = vmatpush2.msra.mxu0 0.0
  %4772 = vmatprep.subr.mxu0 0.0
  %4773 = vmatpush2.msra.mxu0 0.0
  %4774 = vmatprep.subr.mxu0 0.0
  %4775 = vmatpush2.msra.mxu0 0.0
  %4776 = vmatprep.mubr.f32.mxu0 0.0
  %4777 = vmatmul.mubr.f32.gmra.mxu0 %v4710
  %v4778 = vpop.f32.mrf.mxu0
  %v4779 = vadd.f32 0.0, %v4778
  %v4780 = vpop.f32.mrf.mxu0
  %4781 = vdwg.mxu0
  %v4782 = vld [vmem:[%s10] sm:$0xff]
  %v4783 = vld [vmem:[%s10 + $0x8] sm:$0xff]
  %v4784 = vld [vmem:[%s10 + $0x10] sm:$0xff]
  %v4785 = vld [vmem:[%s10 + $0x18] sm:$0xff]
  %v4786 = vld [vmem:[%s10 + $0x20] sm:$0xff]
  %v4787 = vld [vmem:[%s10 + $0x28] sm:$0xff]
  %v4788 = vld [vmem:[%s10 + $0x30] sm:$0xff]
  %v4789 = vld [vmem:[%s10 + $0x38] sm:$0xff]
  %v4790 = vld [vmem:[%s10 + $0x40] sm:$0xff]
  %v4791 = vld [vmem:[%s10 + $0x48] sm:$0xff]
  %v4792 = vld [vmem:[%s10 + $0x50] sm:$0xff]
  %v4793 = vld [vmem:[%s10 + $0x58] sm:$0xff]
  %v4794 = vld [vmem:[%s10 + $0x60] sm:$0xff]
  %v4795 = vld [vmem:[%s10 + $0x68] sm:$0xff]
  %v4796 = vld [vmem:[%s10 + $0x70] sm:$0xff]
  %v4797 = vld [vmem:[%s10 + $0x78] sm:$0xff]
  %v4798 = vld [vmem:[%s10 + $0x80] sm:$0xff]
  %v4799 = vld [vmem:[%s10 + $0x88] sm:$0xff]
  %v4800 = vld [vmem:[%s10 + $0x90] sm:$0xff]
  %v4801 = vld [vmem:[%s10 + $0x98] sm:$0xff]
  %v4802 = vld [vmem:[%s10 + $0xa0] sm:$0xff]
  %v4803 = vld [vmem:[%s10 + $0xa8] sm:$0xff]
  %v4804 = vld [vmem:[%s10 + $0xb0] sm:$0xff]
  %v4805 = vld [vmem:[%s10 + $0xb8] sm:$0xff]
  %v4806 = vld [vmem:[%s10 + $0xc0] sm:$0xff]
  %v4807 = vld [vmem:[%s10 + $0xc8] sm:$0xff]
  %v4808 = vld [vmem:[%s10 + $0xd0] sm:$0xff]
  %v4809 = vld [vmem:[%s10 + $0xd8] sm:$0xff]
  %v4810 = vld [vmem:[%s10 + $0xe0] sm:$0xff]
  %v4811 = vld [vmem:[%s10 + $0xe8] sm:$0xff]
  %v4812 = vld [vmem:[%s10 + $0xf0] sm:$0xff]
  %v4813 = vld [vmem:[%s10 + $0xf8] sm:$0xff]
  %s4814 = scalar_lea.vmem %s9, 8
  %v4815 = vld [vmem:[%s4814] sm:$0xff]
  %v4817 = vsel %vm553, %v4815, 0
  %4819 = vmatprep.subr.mxu0 0.0
  %4820 = vmatpush1.msra.mxu0 0.0
  %4821 = vmatprep.subr.mxu0 0.0
  %4822 = vmatpush1.msra.mxu0 0.0
  %4823 = vmatprep.subr.mxu0 0.0
  %4824 = vmatpush1.msra.mxu0 0.0
  %4825 = vmatprep.subr.mxu0 0.0
  %4826 = vmatpush1.msra.mxu0 0.0
  %4827 = vmatprep.subr.mxu0 0.0
  %4828 = vmatpush1.msra.mxu0 0.0
  %4829 = vmatprep.subr.mxu0 0.0
  %4830 = vmatpush1.msra.mxu0 0.0
  %4831 = vmatprep.subr.mxu0 0.0
  %4832 = vmatpush1.msra.mxu0 0.0
  %4833 = vmatprep.subr.mxu0 0.0
  %4834 = vmatpush1.msra.mxu0 0.0
  %4835 = vmatprep.subr.mxu0 0.0
  %4836 = vmatpush1.msra.mxu0 0.0
  %4837 = vmatprep.subr.mxu0 0.0
  %4838 = vmatpush1.msra.mxu0 0.0
  %4839 = vmatprep.subr.mxu0 0.0
  %4840 = vmatpush1.msra.mxu0 0.0
  %4841 = vmatprep.subr.mxu0 0.0
  %4842 = vmatpush1.msra.mxu0 0.0
  %4843 = vmatprep.subr.mxu0 0.0
  %4844 = vmatpush1.msra.mxu0 %v4707
  %4845 = vmatprep.subr.mxu0 0.0
  %4846 = vmatpush1.msra.mxu0 %v4706
  %4847 = vmatprep.subr.mxu0 0.0
  %4848 = vmatpush1.msra.mxu0 %v4705
  %4849 = vmatprep.subr.mxu0 0.0
  %4850 = vmatpush1.msra.mxu0 %v4704
  %4851 = vmatprep.subr.mxu0 0.0
  %4852 = vmatpush2.msra.mxu0 0.0
  %4853 = vmatprep.subr.mxu0 0.0
  %4854 = vmatpush2.msra.mxu0 0.0
  %4855 = vmatprep.subr.mxu0 0.0
  %4856 = vmatpush2.msra.mxu0 0.0
  %4857 = vmatprep.subr.mxu0 0.0
  %4858 = vmatpush2.msra.mxu0 0.0
  %4859 = vmatprep.subr.mxu0 0.0
  %4860 = vmatpush2.msra.mxu0 0.0
  %4861 = vmatprep.subr.mxu0 0.0
  %4862 = vmatpush2.msra.mxu0 0.0
  %4863 = vmatprep.subr.mxu0 0.0
  %4864 = vmatpush2.msra.mxu0 0.0
  %4865 = vmatprep.subr.mxu0 0.0
  %4866 = vmatpush2.msra.mxu0 0.0
  %4867 = vmatprep.subr.mxu0 0.0
  %4868 = vmatpush2.msra.mxu0 0.0
  %4869 = vmatprep.subr.mxu0 0.0
  %4870 = vmatpush2.msra.mxu0 0.0
  %4871 = vmatprep.subr.mxu0 0.0
  %4872 = vmatpush2.msra.mxu0 0.0
  %4873 = vmatprep.subr.mxu0 0.0
  %4874 = vmatpush2.msra.mxu0 0.0
  %4875 = vmatprep.subr.mxu0 0.0
  %4876 = vmatpush2.msra.mxu0 0.0
  %4877 = vmatprep.subr.mxu0 0.0
  %4878 = vmatpush2.msra.mxu0 0.0
  %4879 = vmatprep.subr.mxu0 0.0
  %4880 = vmatpush2.msra.mxu0 0.0
  %4881 = vmatprep.subr.mxu0 0.0
  %4882 = vmatpush2.msra.mxu0 0.0
  %4883 = vmatprep.mubr.f32.mxu0 0.0
  %4884 = vmatmul.mubr.f32.gmra.mxu0 %v4817
  %v4885 = vpop.f32.mrf.mxu0
  %v4886 = vadd.f32 0.0, %v4885
  %v4887 = vpop.f32.mrf.mxu0
  %4888 = vdwg.mxu0
  %s4889 = scalar_lea.vmem %s10, 256
  %v4890 = vld [vmem:[%s4889] sm:$0xff]
  %v4891 = vld [vmem:[%s4889 + $0x8] sm:$0xff]
  %v4892 = vld [vmem:[%s4889 + $0x10] sm:$0xff]
  %v4893 = vld [vmem:[%s4889 + $0x18] sm:$0xff]
  %v4894 = vld [vmem:[%s4889 + $0x20] sm:$0xff]
  %v4895 = vld [vmem:[%s4889 + $0x28] sm:$0xff]
  %v4896 = vld [vmem:[%s4889 + $0x30] sm:$0xff]
  %v4897 = vld [vmem:[%s4889 + $0x38] sm:$0xff]
  %v4898 = vld [vmem:[%s4889 + $0x40] sm:$0xff]
  %v4899 = vld [vmem:[%s4889 + $0x48] sm:$0xff]
  %v4900 = vld [vmem:[%s4889 + $0x50] sm:$0xff]
  %v4901 = vld [vmem:[%s4889 + $0x58] sm:$0xff]
  %v4902 = vld [vmem:[%s4889 + $0x60] sm:$0xff]
  %v4903 = vld [vmem:[%s4889 + $0x68] sm:$0xff]
  %v4904 = vld [vmem:[%s4889 + $0x70] sm:$0xff]
  %v4905 = vld [vmem:[%s4889 + $0x78] sm:$0xff]
  %v4906 = vld [vmem:[%s4889 + $0x80] sm:$0xff]
  %v4907 = vld [vmem:[%s4889 + $0x88] sm:$0xff]
  %v4908 = vld [vmem:[%s4889 + $0x90] sm:$0xff]
  %v4909 = vld [vmem:[%s4889 + $0x98] sm:$0xff]
  %v4910 = vld [vmem:[%s4889 + $0xa0] sm:$0xff]
  %v4911 = vld [vmem:[%s4889 + $0xa8] sm:$0xff]
  %v4912 = vld [vmem:[%s4889 + $0xb0] sm:$0xff]
  %v4913 = vld [vmem:[%s4889 + $0xb8] sm:$0xff]
  %v4914 = vld [vmem:[%s4889 + $0xc0] sm:$0xff]
  %v4915 = vld [vmem:[%s4889 + $0xc8] sm:$0xff]
  %v4916 = vld [vmem:[%s4889 + $0xd0] sm:$0xff]
  %v4917 = vld [vmem:[%s4889 + $0xd8] sm:$0xff]
  %v4918 = vld [vmem:[%s4889 + $0xe0] sm:$0xff]
  %v4919 = vld [vmem:[%s4889 + $0xe8] sm:$0xff]
  %v4920 = vld [vmem:[%s4889 + $0xf0] sm:$0xff]
  %v4921 = vld [vmem:[%s4889 + $0xf8] sm:$0xff]
  %v4923 = vsel %vm76, %v4886, 0
  %4925 = vmatprep.subr.mxu0 0.0
  %4926 = vmatpush1.msra.mxu0 0.0
  %4927 = vmatprep.subr.mxu0 0.0
  %4928 = vmatpush1.msra.mxu0 0.0
  %4929 = vmatprep.subr.mxu0 0.0
  %4930 = vmatpush1.msra.mxu0 0.0
  %4931 = vmatprep.subr.mxu0 0.0
  %4932 = vmatpush1.msra.mxu0 0.0
  %4933 = vmatprep.subr.mxu0 0.0
  %4934 = vmatpush1.msra.mxu0 0.0
  %4935 = vmatprep.subr.mxu0 0.0
  %4936 = vmatpush1.msra.mxu0 0.0
  %4937 = vmatprep.subr.mxu0 0.0
  %4938 = vmatpush1.msra.mxu0 0.0
  %4939 = vmatprep.subr.mxu0 0.0
  %4940 = vmatpush1.msra.mxu0 0.0
  %4941 = vmatprep.subr.mxu0 %v4919
  %4942 = vmatpush1.msra.mxu0 %v4918
  %4943 = vmatprep.subr.mxu0 %v4915
  %4944 = vmatpush1.msra.mxu0 %v4914
  %4945 = vmatprep.subr.mxu0 %v4911
  %4946 = vmatpush1.msra.mxu0 %v4910
  %4947 = vmatprep.subr.mxu0 %v4907
  %4948 = vmatpush1.msra.mxu0 %v4906
  %4949 = vmatprep.subr.mxu0 %v4903
  %4950 = vmatpush1.msra.mxu0 %v4902
  %4951 = vmatprep.subr.mxu0 %v4899
  %4952 = vmatpush1.msra.mxu0 %v4898
  %4953 = vmatprep.subr.mxu0 %v4895
  %4954 = vmatpush1.msra.mxu0 %v4894
  %4955 = vmatprep.subr.mxu0 %v4891
  %4956 = vmatpush1.msra.mxu0 %v4890
  %4957 = vmatprep.subr.mxu0 0.0
  %4958 = vmatpush2.msra.mxu0 0.0
  %4959 = vmatprep.subr.mxu0 0.0
  %4960 = vmatpush2.msra.mxu0 0.0
  %4961 = vmatprep.subr.mxu0 0.0
  %4962 = vmatpush2.msra.mxu0 0.0
  %4963 = vmatprep.subr.mxu0 0.0
  %4964 = vmatpush2.msra.mxu0 0.0
  %4965 = vmatprep.subr.mxu0 0.0
  %4966 = vmatpush2.msra.mxu0 0.0
  %4967 = vmatprep.subr.mxu0 0.0
  %4968 = vmatpush2.msra.mxu0 0.0
  %4969 = vmatprep.subr.mxu0 0.0
  %4970 = vmatpush2.msra.mxu0 0.0
  %4971 = vmatprep.subr.mxu0 0.0
  %4972 = vmatpush2.msra.mxu0 0.0
  %4973 = vmatprep.subr.mxu0 0.0
  %4974 = vmatpush2.msra.mxu0 0.0
  %4975 = vmatprep.subr.mxu0 0.0
  %4976 = vmatpush2.msra.mxu0 0.0
  %4977 = vmatprep.subr.mxu0 0.0
  %4978 = vmatpush2.msra.mxu0 0.0
  %4979 = vmatprep.subr.mxu0 0.0
  %4980 = vmatpush2.msra.mxu0 0.0
  %4981 = vmatprep.subr.mxu0 0.0
  %4982 = vmatpush2.msra.mxu0 0.0
  %4983 = vmatprep.subr.mxu0 0.0
  %4984 = vmatpush2.msra.mxu0 0.0
  %4985 = vmatprep.subr.mxu0 0.0
  %4986 = vmatpush2.msra.mxu0 0.0
  %4987 = vmatprep.subr.mxu0 0.0
  %4988 = vmatpush2.msra.mxu0 0.0
  %4989 = vmatprep.mubr.f32.mxu0 0.0
  %4990 = vmatmul.mubr.f32.gmra.mxu0 %v4923
  %v4991 = vpop.f32.mrf.mxu0
  %v4992 = vadd.f32 0.0, %v4991
  %v4993 = vpop.f32.mrf.mxu0
  %v4994 = vadd.f32 0.0, %v4993
  %4995 = vdwg.mxu0
  %4996 = vmatprep.subr.mxu0 0.0
  %4997 = vmatpush1.msra.mxu0 0.0
  %4998 = vmatprep.subr.mxu0 0.0
  %4999 = vmatpush1.msra.mxu0 0.0
  %5000 = vmatprep.subr.mxu0 0.0
  %5001 = vmatpush1.msra.mxu0 0.0
  %5002 = vmatprep.subr.mxu0 0.0
  %5003 = vmatpush1.msra.mxu0 0.0
  %5004 = vmatprep.subr.mxu0 0.0
  %5005 = vmatpush1.msra.mxu0 0.0
  %5006 = vmatprep.subr.mxu0 0.0
  %5007 = vmatpush1.msra.mxu0 0.0
  %5008 = vmatprep.subr.mxu0 0.0
  %5009 = vmatpush1.msra.mxu0 0.0
  %5010 = vmatprep.subr.mxu0 0.0
  %5011 = vmatpush1.msra.mxu0 0.0
  %5012 = vmatprep.subr.mxu0 %v4921
  %5013 = vmatpush1.msra.mxu0 %v4920
  %5014 = vmatprep.subr.mxu0 %v4917
  %5015 = vmatpush1.msra.mxu0 %v4916
  %5016 = vmatprep.subr.mxu0 %v4913
  %5017 = vmatpush1.msra.mxu0 %v4912
  %5018 = vmatprep.subr.mxu0 %v4909
  %5019 = vmatpush1.msra.mxu0 %v4908
  %5020 = vmatprep.subr.mxu0 %v4905
  %5021 = vmatpush1.msra.mxu0 %v4904
  %5022 = vmatprep.subr.mxu0 %v4901
  %5023 = vmatpush1.msra.mxu0 %v4900
  %5024 = vmatprep.subr.mxu0 %v4897
  %5025 = vmatpush1.msra.mxu0 %v4896
  %5026 = vmatprep.subr.mxu0 %v4893
  %5027 = vmatpush1.msra.mxu0 %v4892
  %5028 = vmatprep.subr.mxu0 0.0
  %5029 = vmatpush2.msra.mxu0 0.0
  %5030 = vmatprep.subr.mxu0 0.0
  %5031 = vmatpush2.msra.mxu0 0.0
  %5032 = vmatprep.subr.mxu0 0.0
  %5033 = vmatpush2.msra.mxu0 0.0
  %5034 = vmatprep.subr.mxu0 0.0
  %5035 = vmatpush2.msra.mxu0 0.0
  %5036 = vmatprep.subr.mxu0 0.0
  %5037 = vmatpush2.msra.mxu0 0.0
  %5038 = vmatprep.subr.mxu0 0.0
  %5039 = vmatpush2.msra.mxu0 0.0
  %5040 = vmatprep.subr.mxu0 0.0
  %5041 = vmatpush2.msra.mxu0 0.0
  %5042 = vmatprep.subr.mxu0 0.0
  %5043 = vmatpush2.msra.mxu0 0.0
  %5044 = vmatprep.subr.mxu0 0.0
  %5045 = vmatpush2.msra.mxu0 0.0
  %5046 = vmatprep.subr.mxu0 0.0
  %5047 = vmatpush2.msra.mxu0 0.0
  %5048 = vmatprep.subr.mxu0 0.0
  %5049 = vmatpush2.msra.mxu0 0.0
  %5050 = vmatprep.subr.mxu0 0.0
  %5051 = vmatpush2.msra.mxu0 0.0
  %5052 = vmatprep.subr.mxu0 0.0
  %5053 = vmatpush2.msra.mxu0 0.0
  %5054 = vmatprep.subr.mxu0 0.0
  %5055 = vmatpush2.msra.mxu0 0.0
  %5056 = vmatprep.subr.mxu0 0.0
  %5057 = vmatpush2.msra.mxu0 0.0
  %5058 = vmatprep.subr.mxu0 0.0
  %5059 = vmatpush2.msra.mxu0 0.0
  %5060 = vmatprep.mubr.f32.mxu0 0.0
  %5061 = vmatmul.mubr.f32.gmra.mxu0 %v4923
  %v5062 = vpop.f32.mrf.mxu0
  %v5063 = vadd.f32 0.0, %v5062
  %v5064 = vpop.f32.mrf.mxu0
  %v5065 = vadd.f32 0.0, %v5064
  %5066 = vdwg.mxu0
  %v5068 = vsel %vm76, %v4779, 0
  %5070 = vmatprep.subr.mxu0 0.0
  %5071 = vmatpush1.msra.mxu0 0.0
  %5072 = vmatprep.subr.mxu0 0.0
  %5073 = vmatpush1.msra.mxu0 0.0
  %5074 = vmatprep.subr.mxu0 0.0
  %5075 = vmatpush1.msra.mxu0 0.0
  %5076 = vmatprep.subr.mxu0 0.0
  %5077 = vmatpush1.msra.mxu0 0.0
  %5078 = vmatprep.subr.mxu0 0.0
  %5079 = vmatpush1.msra.mxu0 0.0
  %5080 = vmatprep.subr.mxu0 0.0
  %5081 = vmatpush1.msra.mxu0 0.0
  %5082 = vmatprep.subr.mxu0 0.0
  %5083 = vmatpush1.msra.mxu0 0.0
  %5084 = vmatprep.subr.mxu0 0.0
  %5085 = vmatpush1.msra.mxu0 0.0
  %5086 = vmatprep.subr.mxu0 %v4811
  %5087 = vmatpush1.msra.mxu0 %v4810
  %5088 = vmatprep.subr.mxu0 %v4807
  %5089 = vmatpush1.msra.mxu0 %v4806
  %5090 = vmatprep.subr.mxu0 %v4803
  %5091 = vmatpush1.msra.mxu0 %v4802
  %5092 = vmatprep.subr.mxu0 %v4799
  %5093 = vmatpush1.msra.mxu0 %v4798
  %5094 = vmatprep.subr.mxu0 %v4795
  %5095 = vmatpush1.msra.mxu0 %v4794
  %5096 = vmatprep.subr.mxu0 %v4791
  %5097 = vmatpush1.msra.mxu0 %v4790
  %5098 = vmatprep.subr.mxu0 %v4787
  %5099 = vmatpush1.msra.mxu0 %v4786
  %5100 = vmatprep.subr.mxu0 %v4783
  %5101 = vmatpush1.msra.mxu0 %v4782
  %5102 = vmatprep.subr.mxu0 0.0
  %5103 = vmatpush2.msra.mxu0 0.0
  %5104 = vmatprep.subr.mxu0 0.0
  %5105 = vmatpush2.msra.mxu0 0.0
  %5106 = vmatprep.subr.mxu0 0.0
  %5107 = vmatpush2.msra.mxu0 0.0
  %5108 = vmatprep.subr.mxu0 0.0
  %5109 = vmatpush2.msra.mxu0 0.0
  %5110 = vmatprep.subr.mxu0 0.0
  %5111 = vmatpush2.msra.mxu0 0.0
  %5112 = vmatprep.subr.mxu0 0.0
  %5113 = vmatpush2.msra.mxu0 0.0
  %5114 = vmatprep.subr.mxu0 0.0
  %5115 = vmatpush2.msra.mxu0 0.0
  %5116 = vmatprep.subr.mxu0 0.0
  %5117 = vmatpush2.msra.mxu0 0.0
  %5118 = vmatprep.subr.mxu0 0.0
  %5119 = vmatpush2.msra.mxu0 0.0
  %5120 = vmatprep.subr.mxu0 0.0
  %5121 = vmatpush2.msra.mxu0 0.0
  %5122 = vmatprep.subr.mxu0 0.0
  %5123 = vmatpush2.msra.mxu0 0.0
  %5124 = vmatprep.subr.mxu0 0.0
  %5125 = vmatpush2.msra.mxu0 0.0
  %5126 = vmatprep.subr.mxu0 0.0
  %5127 = vmatpush2.msra.mxu0 0.0
  %5128 = vmatprep.subr.mxu0 0.0
  %5129 = vmatpush2.msra.mxu0 0.0
  %5130 = vmatprep.subr.mxu0 0.0
  %5131 = vmatpush2.msra.mxu0 0.0
  %5132 = vmatprep.subr.mxu0 0.0
  %5133 = vmatpush2.msra.mxu0 0.0
  %5134 = vmatprep.mubr.f32.mxu0 0.0
  %5135 = vmatmul.mubr.f32.gmra.mxu0 %v5068
  %v5136 = vpop.f32.mrf.mxu0
  %v5137 = vadd.f32 %v4992, %v5136
  %v5138 = vpop.f32.mrf.mxu0
  %v5139 = vadd.f32 %v4994, %v5138
  %5140 = vdwg.mxu0
  %5141 = vmatprep.subr.mxu0 0.0
  %5142 = vmatpush1.msra.mxu0 0.0
  %5143 = vmatprep.subr.mxu0 0.0
  %5144 = vmatpush1.msra.mxu0 0.0
  %5145 = vmatprep.subr.mxu0 0.0
  %5146 = vmatpush1.msra.mxu0 0.0
  %5147 = vmatprep.subr.mxu0 0.0
  %5148 = vmatpush1.msra.mxu0 0.0
  %5149 = vmatprep.subr.mxu0 0.0
  %5150 = vmatpush1.msra.mxu0 0.0
  %5151 = vmatprep.subr.mxu0 0.0
  %5152 = vmatpush1.msra.mxu0 0.0
  %5153 = vmatprep.subr.mxu0 0.0
  %5154 = vmatpush1.msra.mxu0 0.0
  %5155 = vmatprep.subr.mxu0 0.0
  %5156 = vmatpush1.msra.mxu0 0.0
  %5157 = vmatprep.subr.mxu0 %v4813
  %5158 = vmatpush1.msra.mxu0 %v4812
  %5159 = vmatprep.subr.mxu0 %v4809
  %5160 = vmatpush1.msra.mxu0 %v4808
  %5161 = vmatprep.subr.mxu0 %v4805
  %5162 = vmatpush1.msra.mxu0 %v4804
  %5163 = vmatprep.subr.mxu0 %v4801
  %5164 = vmatpush1.msra.mxu0 %v4800
  %5165 = vmatprep.subr.mxu0 %v4797
  %5166 = vmatpush1.msra.mxu0 %v4796
  %5167 = vmatprep.subr.mxu0 %v4793
  %5168 = vmatpush1.msra.mxu0 %v4792
  %5169 = vmatprep.subr.mxu0 %v4789
  %5170 = vmatpush1.msra.mxu0 %v4788
  %5171 = vmatprep.subr.mxu0 %v4785
  %5172 = vmatpush1.msra.mxu0 %v4784
  %5173 = vmatprep.subr.mxu0 0.0
  %5174 = vmatpush2.msra.mxu0 0.0
  %5175 = vmatprep.subr.mxu0 0.0
  %5176 = vmatpush2.msra.mxu0 0.0
  %5177 = vmatprep.subr.mxu0 0.0
  %5178 = vmatpush2.msra.mxu0 0.0
  %5179 = vmatprep.subr.mxu0 0.0
  %5180 = vmatpush2.msra.mxu0 0.0
  %5181 = vmatprep.subr.mxu0 0.0
  %5182 = vmatpush2.msra.mxu0 0.0
  %5183 = vmatprep.subr.mxu0 0.0
  %5184 = vmatpush2.msra.mxu0 0.0
  %5185 = vmatprep.subr.mxu0 0.0
  %5186 = vmatpush2.msra.mxu0 0.0
  %5187 = vmatprep.subr.mxu0 0.0
  %5188 = vmatpush2.msra.mxu0 0.0
  %5189 = vmatprep.subr.mxu0 0.0
  %5190 = vmatpush2.msra.mxu0 0.0
  %5191 = vmatprep.subr.mxu0 0.0
  %5192 = vmatpush2.msra.mxu0 0.0
  %5193 = vmatprep.subr.mxu0 0.0
  %5194 = vmatpush2.msra.mxu0 0.0
  %5195 = vmatprep.subr.mxu0 0.0
  %5196 = vmatpush2.msra.mxu0 0.0
  %5197 = vmatprep.subr.mxu0 0.0
  %5198 = vmatpush2.msra.mxu0 0.0
  %5199 = vmatprep.subr.mxu0 0.0
  %5200 = vmatpush2.msra.mxu0 0.0
  %5201 = vmatprep.subr.mxu0 0.0
  %5202 = vmatpush2.msra.mxu0 0.0
  %5203 = vmatprep.subr.mxu0 0.0
  %5204 = vmatpush2.msra.mxu0 0.0
  %5205 = vmatprep.mubr.f32.mxu0 0.0
  %5206 = vmatmul.mubr.f32.gmra.mxu0 %v5068
  %v5207 = vpop.f32.mrf.mxu0
  %v5208 = vadd.f32 %v5063, %v5207
  %v5209 = vpop.f32.mrf.mxu0
  %v5210 = vadd.f32 %v5065, %v5209
  %5211 = vdwg.mxu0
  %s5212 = scalar_lea.vmem %s9, 16
  %v5213 = vld [vmem:[%s5212] sm:$0xff]
  %v5215 = vsel %vm553, %v5213, 0
  %5217 = vmatprep.subr.mxu0 0.0
  %5218 = vmatpush1.msra.mxu0 0.0
  %5219 = vmatprep.subr.mxu0 0.0
  %5220 = vmatpush1.msra.mxu0 0.0
  %5221 = vmatprep.subr.mxu0 0.0
  %5222 = vmatpush1.msra.mxu0 0.0
  %5223 = vmatprep.subr.mxu0 0.0
  %5224 = vmatpush1.msra.mxu0 0.0
  %5225 = vmatprep.subr.mxu0 0.0
  %5226 = vmatpush1.msra.mxu0 0.0
  %5227 = vmatprep.subr.mxu0 0.0
  %5228 = vmatpush1.msra.mxu0 0.0
  %5229 = vmatprep.subr.mxu0 0.0
  %5230 = vmatpush1.msra.mxu0 0.0
  %5231 = vmatprep.subr.mxu0 0.0
  %5232 = vmatpush1.msra.mxu0 0.0
  %5233 = vmatprep.subr.mxu0 0.0
  %5234 = vmatpush1.msra.mxu0 0.0
  %5235 = vmatprep.subr.mxu0 0.0
  %5236 = vmatpush1.msra.mxu0 0.0
  %5237 = vmatprep.subr.mxu0 0.0
  %5238 = vmatpush1.msra.mxu0 0.0
  %5239 = vmatprep.subr.mxu0 0.0
  %5240 = vmatpush1.msra.mxu0 0.0
  %5241 = vmatprep.subr.mxu0 0.0
  %5242 = vmatpush1.msra.mxu0 %v4707
  %5243 = vmatprep.subr.mxu0 0.0
  %5244 = vmatpush1.msra.mxu0 %v4706
  %5245 = vmatprep.subr.mxu0 0.0
  %5246 = vmatpush1.msra.mxu0 %v4705
  %5247 = vmatprep.subr.mxu0 0.0
  %5248 = vmatpush1.msra.mxu0 %v4704
  %5249 = vmatprep.subr.mxu0 0.0
  %5250 = vmatpush2.msra.mxu0 0.0
  %5251 = vmatprep.subr.mxu0 0.0
  %5252 = vmatpush2.msra.mxu0 0.0
  %5253 = vmatprep.subr.mxu0 0.0
  %5254 = vmatpush2.msra.mxu0 0.0
  %5255 = vmatprep.subr.mxu0 0.0
  %5256 = vmatpush2.msra.mxu0 0.0
  %5257 = vmatprep.subr.mxu0 0.0
  %5258 = vmatpush2.msra.mxu0 0.0
  %5259 = vmatprep.subr.mxu0 0.0
  %5260 = vmatpush2.msra.mxu0 0.0
  %5261 = vmatprep.subr.mxu0 0.0
  %5262 = vmatpush2.msra.mxu0 0.0
  %5263 = vmatprep.subr.mxu0 0.0
  %5264 = vmatpush2.msra.mxu0 0.0
  %5265 = vmatprep.subr.mxu0 0.0
  %5266 = vmatpush2.msra.mxu0 0.0
  %5267 = vmatprep.subr.mxu0 0.0
  %5268 = vmatpush2.msra.mxu0 0.0
  %5269 = vmatprep.subr.mxu0 0.0
  %5270 = vmatpush2.msra.mxu0 0.0
  %5271 = vmatprep.subr.mxu0 0.0
  %5272 = vmatpush2.msra.mxu0 0.0
  %5273 = vmatprep.subr.mxu0 0.0
  %5274 = vmatpush2.msra.mxu0 0.0
  %5275 = vmatprep.subr.mxu0 0.0
  %5276 = vmatpush2.msra.mxu0 0.0
  %5277 = vmatprep.subr.mxu0 0.0
  %5278 = vmatpush2.msra.mxu0 0.0
  %5279 = vmatprep.subr.mxu0 0.0
  %5280 = vmatpush2.msra.mxu0 0.0
  %5281 = vmatprep.mubr.f32.mxu0 0.0
  %5282 = vmatmul.mubr.f32.gmra.mxu0 %v5215
  %v5283 = vpop.f32.mrf.mxu0
  %v5284 = vadd.f32 0.0, %v5283
  %v5285 = vpop.f32.mrf.mxu0
  %5286 = vdwg.mxu0
  %s5287 = scalar_lea.vmem %s10, 512
  %v5288 = vld [vmem:[%s5287] sm:$0xff]
  %v5289 = vld [vmem:[%s5287 + $0x8] sm:$0xff]
  %v5290 = vld [vmem:[%s5287 + $0x10] sm:$0xff]
  %v5291 = vld [vmem:[%s5287 + $0x18] sm:$0xff]
  %v5292 = vld [vmem:[%s5287 + $0x20] sm:$0xff]
  %v5293 = vld [vmem:[%s5287 + $0x28] sm:$0xff]
  %v5294 = vld [vmem:[%s5287 + $0x30] sm:$0xff]
  %v5295 = vld [vmem:[%s5287 + $0x38] sm:$0xff]
  %v5296 = vld [vmem:[%s5287 + $0x40] sm:$0xff]
  %v5297 = vld [vmem:[%s5287 + $0x48] sm:$0xff]
  %v5298 = vld [vmem:[%s5287 + $0x50] sm:$0xff]
  %v5299 = vld [vmem:[%s5287 + $0x58] sm:$0xff]
  %v5300 = vld [vmem:[%s5287 + $0x60] sm:$0xff]
  %v5301 = vld [vmem:[%s5287 + $0x68] sm:$0xff]
  %v5302 = vld [vmem:[%s5287 + $0x70] sm:$0xff]
  %v5303 = vld [vmem:[%s5287 + $0x78] sm:$0xff]
  %v5304 = vld [vmem:[%s5287 + $0x80] sm:$0xff]
  %v5305 = vld [vmem:[%s5287 + $0x88] sm:$0xff]
  %v5306 = vld [vmem:[%s5287 + $0x90] sm:$0xff]
  %v5307 = vld [vmem:[%s5287 + $0x98] sm:$0xff]
  %v5308 = vld [vmem:[%s5287 + $0xa0] sm:$0xff]
  %v5309 = vld [vmem:[%s5287 + $0xa8] sm:$0xff]
  %v5310 = vld [vmem:[%s5287 + $0xb0] sm:$0xff]
  %v5311 = vld [vmem:[%s5287 + $0xb8] sm:$0xff]
  %v5312 = vld [vmem:[%s5287 + $0xc0] sm:$0xff]
  %v5313 = vld [vmem:[%s5287 + $0xc8] sm:$0xff]
  %v5314 = vld [vmem:[%s5287 + $0xd0] sm:$0xff]
  %v5315 = vld [vmem:[%s5287 + $0xd8] sm:$0xff]
  %v5316 = vld [vmem:[%s5287 + $0xe0] sm:$0xff]
  %v5317 = vld [vmem:[%s5287 + $0xe8] sm:$0xff]
  %v5318 = vld [vmem:[%s5287 + $0xf0] sm:$0xff]
  %v5319 = vld [vmem:[%s5287 + $0xf8] sm:$0xff]
  %v5321 = vsel %vm76, %v5284, 0
  %5323 = vmatprep.subr.mxu0 0.0
  %5324 = vmatpush1.msra.mxu0 0.0
  %5325 = vmatprep.subr.mxu0 0.0
  %5326 = vmatpush1.msra.mxu0 0.0
  %5327 = vmatprep.subr.mxu0 0.0
  %5328 = vmatpush1.msra.mxu0 0.0
  %5329 = vmatprep.subr.mxu0 0.0
  %5330 = vmatpush1.msra.mxu0 0.0
  %5331 = vmatprep.subr.mxu0 0.0
  %5332 = vmatpush1.msra.mxu0 0.0
  %5333 = vmatprep.subr.mxu0 0.0
  %5334 = vmatpush1.msra.mxu0 0.0
  %5335 = vmatprep.subr.mxu0 0.0
  %5336 = vmatpush1.msra.mxu0 0.0
  %5337 = vmatprep.subr.mxu0 0.0
  %5338 = vmatpush1.msra.mxu0 0.0
  %5339 = vmatprep.subr.mxu0 %v5317
  %5340 = vmatpush1.msra.mxu0 %v5316
  %5341 = vmatprep.subr.mxu0 %v5313
  %5342 = vmatpush1.msra.mxu0 %v5312
  %5343 = vmatprep.subr.mxu0 %v5309
  %5344 = vmatpush1.msra.mxu0 %v5308
  %5345 = vmatprep.subr.mxu0 %v5305
  %5346 = vmatpush1.msra.mxu0 %v5304
  %5347 = vmatprep.subr.mxu0 %v5301
  %5348 = vmatpush1.msra.mxu0 %v5300
  %5349 = vmatprep.subr.mxu0 %v5297
  %5350 = vmatpush1.msra.mxu0 %v5296
  %5351 = vmatprep.subr.mxu0 %v5293
  %5352 = vmatpush1.msra.mxu0 %v5292
  %5353 = vmatprep.subr.mxu0 %v5289
  %5354 = vmatpush1.msra.mxu0 %v5288
  %5355 = vmatprep.subr.mxu0 0.0
  %5356 = vmatpush2.msra.mxu0 0.0
  %5357 = vmatprep.subr.mxu0 0.0
  %5358 = vmatpush2.msra.mxu0 0.0
  %5359 = vmatprep.subr.mxu0 0.0
  %5360 = vmatpush2.msra.mxu0 0.0
  %5361 = vmatprep.subr.mxu0 0.0
  %5362 = vmatpush2.msra.mxu0 0.0
  %5363 = vmatprep.subr.mxu0 0.0
  %5364 = vmatpush2.msra.mxu0 0.0
  %5365 = vmatprep.subr.mxu0 0.0
  %5366 = vmatpush2.msra.mxu0 0.0
  %5367 = vmatprep.subr.mxu0 0.0
  %5368 = vmatpush2.msra.mxu0 0.0
  %5369 = vmatprep.subr.mxu0 0.0
  %5370 = vmatpush2.msra.mxu0 0.0
  %5371 = vmatprep.subr.mxu0 0.0
  %5372 = vmatpush2.msra.mxu0 0.0
  %5373 = vmatprep.subr.mxu0 0.0
  %5374 = vmatpush2.msra.mxu0 0.0
  %5375 = vmatprep.subr.mxu0 0.0
  %5376 = vmatpush2.msra.mxu0 0.0
  %5377 = vmatprep.subr.mxu0 0.0
  %5378 = vmatpush2.msra.mxu0 0.0
  %5379 = vmatprep.subr.mxu0 0.0
  %5380 = vmatpush2.msra.mxu0 0.0
  %5381 = vmatprep.subr.mxu0 0.0
  %5382 = vmatpush2.msra.mxu0 0.0
  %5383 = vmatprep.subr.mxu0 0.0
  %5384 = vmatpush2.msra.mxu0 0.0
  %5385 = vmatprep.subr.mxu0 0.0
  %5386 = vmatpush2.msra.mxu0 0.0
  %5387 = vmatprep.mubr.f32.mxu0 0.0
  %5388 = vmatmul.mubr.f32.gmra.mxu0 %v5321
  %v5389 = vpop.f32.mrf.mxu0
  %v5390 = vadd.f32 0.0, %v5389
  %v5391 = vpop.f32.mrf.mxu0
  %v5392 = vadd.f32 0.0, %v5391
  %5393 = vdwg.mxu0
  %5394 = vmatprep.subr.mxu0 0.0
  %5395 = vmatpush1.msra.mxu0 0.0
  %5396 = vmatprep.subr.mxu0 0.0
  %5397 = vmatpush1.msra.mxu0 0.0
  %5398 = vmatprep.subr.mxu0 0.0
  %5399 = vmatpush1.msra.mxu0 0.0
  %5400 = vmatprep.subr.mxu0 0.0
  %5401 = vmatpush1.msra.mxu0 0.0
  %5402 = vmatprep.subr.mxu0 0.0
  %5403 = vmatpush1.msra.mxu0 0.0
  %5404 = vmatprep.subr.mxu0 0.0
  %5405 = vmatpush1.msra.mxu0 0.0
  %5406 = vmatprep.subr.mxu0 0.0
  %5407 = vmatpush1.msra.mxu0 0.0
  %5408 = vmatprep.subr.mxu0 0.0
  %5409 = vmatpush1.msra.mxu0 0.0
  %5410 = vmatprep.subr.mxu0 %v5319
  %5411 = vmatpush1.msra.mxu0 %v5318
  %5412 = vmatprep.subr.mxu0 %v5315
  %5413 = vmatpush1.msra.mxu0 %v5314
  %5414 = vmatprep.subr.mxu0 %v5311
  %5415 = vmatpush1.msra.mxu0 %v5310
  %5416 = vmatprep.subr.mxu0 %v5307
  %5417 = vmatpush1.msra.mxu0 %v5306
  %5418 = vmatprep.subr.mxu0 %v5303
  %5419 = vmatpush1.msra.mxu0 %v5302
  %5420 = vmatprep.subr.mxu0 %v5299
  %5421 = vmatpush1.msra.mxu0 %v5298
  %5422 = vmatprep.subr.mxu0 %v5295
  %5423 = vmatpush1.msra.mxu0 %v5294
  %5424 = vmatprep.subr.mxu0 %v5291
  %5425 = vmatpush1.msra.mxu0 %v5290
  %5426 = vmatprep.subr.mxu0 0.0
  %5427 = vmatpush2.msra.mxu0 0.0
  %5428 = vmatprep.subr.mxu0 0.0
  %5429 = vmatpush2.msra.mxu0 0.0
  %5430 = vmatprep.subr.mxu0 0.0
  %5431 = vmatpush2.msra.mxu0 0.0
  %5432 = vmatprep.subr.mxu0 0.0
  %5433 = vmatpush2.msra.mxu0 0.0
  %5434 = vmatprep.subr.mxu0 0.0
  %5435 = vmatpush2.msra.mxu0 0.0
  %5436 = vmatprep.subr.mxu0 0.0
  %5437 = vmatpush2.msra.mxu0 0.0
  %5438 = vmatprep.subr.mxu0 0.0
  %5439 = vmatpush2.msra.mxu0 0.0
  %5440 = vmatprep.subr.mxu0 0.0
  %5441 = vmatpush2.msra.mxu0 0.0
  %5442 = vmatprep.subr.mxu0 0.0
  %5443 = vmatpush2.msra.mxu0 0.0
  %5444 = vmatprep.subr.mxu0 0.0
  %5445 = vmatpush2.msra.mxu0 0.0
  %5446 = vmatprep.subr.mxu0 0.0
  %5447 = vmatpush2.msra.mxu0 0.0
  %5448 = vmatprep.subr.mxu0 0.0
  %5449 = vmatpush2.msra.mxu0 0.0
  %5450 = vmatprep.subr.mxu0 0.0
  %5451 = vmatpush2.msra.mxu0 0.0
  %5452 = vmatprep.subr.mxu0 0.0
  %5453 = vmatpush2.msra.mxu0 0.0
  %5454 = vmatprep.subr.mxu0 0.0
  %5455 = vmatpush2.msra.mxu0 0.0
  %5456 = vmatprep.subr.mxu0 0.0
  %5457 = vmatpush2.msra.mxu0 0.0
  %5458 = vmatprep.mubr.f32.mxu0 0.0
  %5459 = vmatmul.mubr.f32.gmra.mxu0 %v5321
  %v5460 = vpop.f32.mrf.mxu0
  %v5461 = vadd.f32 0.0, %v5460
  %v5462 = vpop.f32.mrf.mxu0
  %v5463 = vadd.f32 0.0, %v5462
  %5464 = vdwg.mxu0
  %v5465 = vadd.f32 %v5137, %v5390
  %v5466 = vadd.f32 %v5139, %v5392
  %v5467 = vadd.f32 %v5208, %v5461
  %v5468 = vadd.f32 %v5210, %v5463
  %s5469 = scalar_lea.vmem %s9, 24
  %v5470 = vld [vmem:[%s5469] sm:$0xff]
  %v5472 = vsel %vm553, %v5470, 0
  %5474 = vmatprep.subr.mxu0 0.0
  %5475 = vmatpush1.msra.mxu0 0.0
  %5476 = vmatprep.subr.mxu0 0.0
  %5477 = vmatpush1.msra.mxu0 0.0
  %5478 = vmatprep.subr.mxu0 0.0
  %5479 = vmatpush1.msra.mxu0 0.0
  %5480 = vmatprep.subr.mxu0 0.0
  %5481 = vmatpush1.msra.mxu0 0.0
  %5482 = vmatprep.subr.mxu0 0.0
  %5483 = vmatpush1.msra.mxu0 0.0
  %5484 = vmatprep.subr.mxu0 0.0
  %5485 = vmatpush1.msra.mxu0 0.0
  %5486 = vmatprep.subr.mxu0 0.0
  %5487 = vmatpush1.msra.mxu0 0.0
  %5488 = vmatprep.subr.mxu0 0.0
  %5489 = vmatpush1.msra.mxu0 0.0
  %5490 = vmatprep.subr.mxu0 0.0
  %5491 = vmatpush1.msra.mxu0 0.0
  %5492 = vmatprep.subr.mxu0 0.0
  %5493 = vmatpush1.msra.mxu0 0.0
  %5494 = vmatprep.subr.mxu0 0.0
  %5495 = vmatpush1.msra.mxu0 0.0
  %5496 = vmatprep.subr.mxu0 0.0
  %5497 = vmatpush1.msra.mxu0 0.0
  %5498 = vmatprep.subr.mxu0 0.0
  %5499 = vmatpush1.msra.mxu0 %v4707
  %5500 = vmatprep.subr.mxu0 0.0
  %5501 = vmatpush1.msra.mxu0 %v4706
  %5502 = vmatprep.subr.mxu0 0.0
  %5503 = vmatpush1.msra.mxu0 %v4705
  %5504 = vmatprep.subr.mxu0 0.0
  %5505 = vmatpush1.msra.mxu0 %v4704
  %5506 = vmatprep.subr.mxu0 0.0
  %5507 = vmatpush2.msra.mxu0 0.0
  %5508 = vmatprep.subr.mxu0 0.0
  %5509 = vmatpush2.msra.mxu0 0.0
  %5510 = vmatprep.subr.mxu0 0.0
  %5511 = vmatpush2.msra.mxu0 0.0
  %5512 = vmatprep.subr.mxu0 0.0
  %5513 = vmatpush2.msra.mxu0 0.0
  %5514 = vmatprep.subr.mxu0 0.0
  %5515 = vmatpush2.msra.mxu0 0.0
  %5516 = vmatprep.subr.mxu0 0.0
  %5517 = vmatpush2.msra.mxu0 0.0
  %5518 = vmatprep.subr.mxu0 0.0
  %5519 = vmatpush2.msra.mxu0 0.0
  %5520 = vmatprep.subr.mxu0 0.0
  %5521 = vmatpush2.msra.mxu0 0.0
  %5522 = vmatprep.subr.mxu0 0.0
  %5523 = vmatpush2.msra.mxu0 0.0
  %5524 = vmatprep.subr.mxu0 0.0
  %5525 = vmatpush2.msra.mxu0 0.0
  %5526 = vmatprep.subr.mxu0 0.0
  %5527 = vmatpush2.msra.mxu0 0.0
  %5528 = vmatprep.subr.mxu0 0.0
  %5529 = vmatpush2.msra.mxu0 0.0
  %5530 = vmatprep.subr.mxu0 0.0
  %5531 = vmatpush2.msra.mxu0 0.0
  %5532 = vmatprep.subr.mxu0 0.0
  %5533 = vmatpush2.msra.mxu0 0.0
  %5534 = vmatprep.subr.mxu0 0.0
  %5535 = vmatpush2.msra.mxu0 0.0
  %5536 = vmatprep.subr.mxu0 0.0
  %5537 = vmatpush2.msra.mxu0 0.0
  %5538 = vmatprep.mubr.f32.mxu0 0.0
  %5539 = vmatmul.mubr.f32.gmra.mxu0 %v5472
  %v5540 = vpop.f32.mrf.mxu0
  %v5541 = vadd.f32 0.0, %v5540
  %v5542 = vpop.f32.mrf.mxu0
  %5543 = vdwg.mxu0
  %s5544 = scalar_lea.vmem %s10, 768
  %v5545 = vld [vmem:[%s5544] sm:$0xff]
  %v5546 = vld [vmem:[%s5544 + $0x8] sm:$0xff]
  %v5547 = vld [vmem:[%s5544 + $0x10] sm:$0xff]
  %v5548 = vld [vmem:[%s5544 + $0x18] sm:$0xff]
  %v5549 = vld [vmem:[%s5544 + $0x20] sm:$0xff]
  %v5550 = vld [vmem:[%s5544 + $0x28] sm:$0xff]
  %v5551 = vld [vmem:[%s5544 + $0x30] sm:$0xff]
  %v5552 = vld [vmem:[%s5544 + $0x38] sm:$0xff]
  %v5553 = vld [vmem:[%s5544 + $0x40] sm:$0xff]
  %v5554 = vld [vmem:[%s5544 + $0x48] sm:$0xff]
  %v5555 = vld [vmem:[%s5544 + $0x50] sm:$0xff]
  %v5556 = vld [vmem:[%s5544 + $0x58] sm:$0xff]
  %v5557 = vld [vmem:[%s5544 + $0x60] sm:$0xff]
  %v5558 = vld [vmem:[%s5544 + $0x68] sm:$0xff]
  %v5559 = vld [vmem:[%s5544 + $0x70] sm:$0xff]
  %v5560 = vld [vmem:[%s5544 + $0x78] sm:$0xff]
  %v5561 = vld [vmem:[%s5544 + $0x80] sm:$0xff]
  %v5562 = vld [vmem:[%s5544 + $0x88] sm:$0xff]
  %v5563 = vld [vmem:[%s5544 + $0x90] sm:$0xff]
  %v5564 = vld [vmem:[%s5544 + $0x98] sm:$0xff]
  %v5565 = vld [vmem:[%s5544 + $0xa0] sm:$0xff]
  %v5566 = vld [vmem:[%s5544 + $0xa8] sm:$0xff]
  %v5567 = vld [vmem:[%s5544 + $0xb0] sm:$0xff]
  %v5568 = vld [vmem:[%s5544 + $0xb8] sm:$0xff]
  %v5569 = vld [vmem:[%s5544 + $0xc0] sm:$0xff]
  %v5570 = vld [vmem:[%s5544 + $0xc8] sm:$0xff]
  %v5571 = vld [vmem:[%s5544 + $0xd0] sm:$0xff]
  %v5572 = vld [vmem:[%s5544 + $0xd8] sm:$0xff]
  %v5573 = vld [vmem:[%s5544 + $0xe0] sm:$0xff]
  %v5574 = vld [vmem:[%s5544 + $0xe8] sm:$0xff]
  %v5575 = vld [vmem:[%s5544 + $0xf0] sm:$0xff]
  %v5576 = vld [vmem:[%s5544 + $0xf8] sm:$0xff]
  %v5578 = vsel %vm76, %v5541, 0
  %5580 = vmatprep.subr.mxu0 0.0
  %5581 = vmatpush1.msra.mxu0 0.0
  %5582 = vmatprep.subr.mxu0 0.0
  %5583 = vmatpush1.msra.mxu0 0.0
  %5584 = vmatprep.subr.mxu0 0.0
  %5585 = vmatpush1.msra.mxu0 0.0
  %5586 = vmatprep.subr.mxu0 0.0
  %5587 = vmatpush1.msra.mxu0 0.0
  %5588 = vmatprep.subr.mxu0 0.0
  %5589 = vmatpush1.msra.mxu0 0.0
  %5590 = vmatprep.subr.mxu0 0.0
  %5591 = vmatpush1.msra.mxu0 0.0
  %5592 = vmatprep.subr.mxu0 0.0
  %5593 = vmatpush1.msra.mxu0 0.0
  %5594 = vmatprep.subr.mxu0 0.0
  %5595 = vmatpush1.msra.mxu0 0.0
  %5596 = vmatprep.subr.mxu0 %v5574
  %5597 = vmatpush1.msra.mxu0 %v5573
  %5598 = vmatprep.subr.mxu0 %v5570
  %5599 = vmatpush1.msra.mxu0 %v5569
  %5600 = vmatprep.subr.mxu0 %v5566
  %5601 = vmatpush1.msra.mxu0 %v5565
  %5602 = vmatprep.subr.mxu0 %v5562
  %5603 = vmatpush1.msra.mxu0 %v5561
  %5604 = vmatprep.subr.mxu0 %v5558
  %5605 = vmatpush1.msra.mxu0 %v5557
  %5606 = vmatprep.subr.mxu0 %v5554
  %5607 = vmatpush1.msra.mxu0 %v5553
  %5608 = vmatprep.subr.mxu0 %v5550
  %5609 = vmatpush1.msra.mxu0 %v5549
  %5610 = vmatprep.subr.mxu0 %v5546
  %5611 = vmatpush1.msra.mxu0 %v5545
  %5612 = vmatprep.subr.mxu0 0.0
  %5613 = vmatpush2.msra.mxu0 0.0
  %5614 = vmatprep.subr.mxu0 0.0
  %5615 = vmatpush2.msra.mxu0 0.0
  %5616 = vmatprep.subr.mxu0 0.0
  %5617 = vmatpush2.msra.mxu0 0.0
  %5618 = vmatprep.subr.mxu0 0.0
  %5619 = vmatpush2.msra.mxu0 0.0
  %5620 = vmatprep.subr.mxu0 0.0
  %5621 = vmatpush2.msra.mxu0 0.0
  %5622 = vmatprep.subr.mxu0 0.0
  %5623 = vmatpush2.msra.mxu0 0.0
  %5624 = vmatprep.subr.mxu0 0.0
  %5625 = vmatpush2.msra.mxu0 0.0
  %5626 = vmatprep.subr.mxu0 0.0
  %5627 = vmatpush2.msra.mxu0 0.0
  %5628 = vmatprep.subr.mxu0 0.0
  %5629 = vmatpush2.msra.mxu0 0.0
  %5630 = vmatprep.subr.mxu0 0.0
  %5631 = vmatpush2.msra.mxu0 0.0
  %5632 = vmatprep.subr.mxu0 0.0
  %5633 = vmatpush2.msra.mxu0 0.0
  %5634 = vmatprep.subr.mxu0 0.0
  %5635 = vmatpush2.msra.mxu0 0.0
  %5636 = vmatprep.subr.mxu0 0.0
  %5637 = vmatpush2.msra.mxu0 0.0
  %5638 = vmatprep.subr.mxu0 0.0
  %5639 = vmatpush2.msra.mxu0 0.0
  %5640 = vmatprep.subr.mxu0 0.0
  %5641 = vmatpush2.msra.mxu0 0.0
  %5642 = vmatprep.subr.mxu0 0.0
  %5643 = vmatpush2.msra.mxu0 0.0
  %5644 = vmatprep.mubr.f32.mxu0 0.0
  %5645 = vmatmul.mubr.f32.gmra.mxu0 %v5578
  %v5646 = vpop.f32.mrf.mxu0
  %v5647 = vadd.f32 0.0, %v5646
  %v5648 = vpop.f32.mrf.mxu0
  %v5649 = vadd.f32 0.0, %v5648
  %5650 = vdwg.mxu0
  %5651 = vmatprep.subr.mxu0 0.0
  %5652 = vmatpush1.msra.mxu0 0.0
  %5653 = vmatprep.subr.mxu0 0.0
  %5654 = vmatpush1.msra.mxu0 0.0
  %5655 = vmatprep.subr.mxu0 0.0
  %5656 = vmatpush1.msra.mxu0 0.0
  %5657 = vmatprep.subr.mxu0 0.0
  %5658 = vmatpush1.msra.mxu0 0.0
  %5659 = vmatprep.subr.mxu0 0.0
  %5660 = vmatpush1.msra.mxu0 0.0
  %5661 = vmatprep.subr.mxu0 0.0
  %5662 = vmatpush1.msra.mxu0 0.0
  %5663 = vmatprep.subr.mxu0 0.0
  %5664 = vmatpush1.msra.mxu0 0.0
  %5665 = vmatprep.subr.mxu0 0.0
  %5666 = vmatpush1.msra.mxu0 0.0
  %5667 = vmatprep.subr.mxu0 %v5576
  %5668 = vmatpush1.msra.mxu0 %v5575
  %5669 = vmatprep.subr.mxu0 %v5572
  %5670 = vmatpush1.msra.mxu0 %v5571
  %5671 = vmatprep.subr.mxu0 %v5568
  %5672 = vmatpush1.msra.mxu0 %v5567
  %5673 = vmatprep.subr.mxu0 %v5564
  %5674 = vmatpush1.msra.mxu0 %v5563
  %5675 = vmatprep.subr.mxu0 %v5560
  %5676 = vmatpush1.msra.mxu0 %v5559
  %5677 = vmatprep.subr.mxu0 %v5556
  %5678 = vmatpush1.msra.mxu0 %v5555
  %5679 = vmatprep.subr.mxu0 %v5552
  %5680 = vmatpush1.msra.mxu0 %v5551
  %5681 = vmatprep.subr.mxu0 %v5548
  %5682 = vmatpush1.msra.mxu0 %v5547
  %5683 = vmatprep.subr.mxu0 0.0
  %5684 = vmatpush2.msra.mxu0 0.0
  %5685 = vmatprep.subr.mxu0 0.0
  %5686 = vmatpush2.msra.mxu0 0.0
  %5687 = vmatprep.subr.mxu0 0.0
  %5688 = vmatpush2.msra.mxu0 0.0
  %5689 = vmatprep.subr.mxu0 0.0
  %5690 = vmatpush2.msra.mxu0 0.0
  %5691 = vmatprep.subr.mxu0 0.0
  %5692 = vmatpush2.msra.mxu0 0.0
  %5693 = vmatprep.subr.mxu0 0.0
  %5694 = vmatpush2.msra.mxu0 0.0
  %5695 = vmatprep.subr.mxu0 0.0
  %5696 = vmatpush2.msra.mxu0 0.0
  %5697 = vmatprep.subr.mxu0 0.0
  %5698 = vmatpush2.msra.mxu0 0.0
  %5699 = vmatprep.subr.mxu0 0.0
  %5700 = vmatpush2.msra.mxu0 0.0
  %5701 = vmatprep.subr.mxu0 0.0
  %5702 = vmatpush2.msra.mxu0 0.0
  %5703 = vmatprep.subr.mxu0 0.0
  %5704 = vmatpush2.msra.mxu0 0.0
  %5705 = vmatprep.subr.mxu0 0.0
  %5706 = vmatpush2.msra.mxu0 0.0
  %5707 = vmatprep.subr.mxu0 0.0
  %5708 = vmatpush2.msra.mxu0 0.0
  %5709 = vmatprep.subr.mxu0 0.0
  %5710 = vmatpush2.msra.mxu0 0.0
  %5711 = vmatprep.subr.mxu0 0.0
  %5712 = vmatpush2.msra.mxu0 0.0
  %5713 = vmatprep.subr.mxu0 0.0
  %5714 = vmatpush2.msra.mxu0 0.0
  %5715 = vmatprep.mubr.f32.mxu0 0.0
  %5716 = vmatmul.mubr.f32.gmra.mxu0 %v5578
  %v5717 = vpop.f32.mrf.mxu0
  %v5718 = vadd.f32 0.0, %v5717
  %v5719 = vpop.f32.mrf.mxu0
  %v5720 = vadd.f32 0.0, %v5719
  %5721 = vdwg.mxu0
  %v5722 = vadd.f32 %v5465, %v5647
  %v5723 = vadd.f32 %v5466, %v5649
  %v5724 = vadd.f32 %v5467, %v5718
  %v5725 = vadd.f32 %v5468, %v5720
  %s5726 = scalar_lea.vmem %s9, 32
  %v5727 = vld [vmem:[%s5726] sm:$0xff]
  %v5729 = vsel %vm553, %v5727, 0
  %5731 = vmatprep.subr.mxu0 0.0
  %5732 = vmatpush1.msra.mxu0 0.0
  %5733 = vmatprep.subr.mxu0 0.0
  %5734 = vmatpush1.msra.mxu0 0.0
  %5735 = vmatprep.subr.mxu0 0.0
  %5736 = vmatpush1.msra.mxu0 0.0
  %5737 = vmatprep.subr.mxu0 0.0
  %5738 = vmatpush1.msra.mxu0 0.0
  %5739 = vmatprep.subr.mxu0 0.0
  %5740 = vmatpush1.msra.mxu0 0.0
  %5741 = vmatprep.subr.mxu0 0.0
  %5742 = vmatpush1.msra.mxu0 0.0
  %5743 = vmatprep.subr.mxu0 0.0
  %5744 = vmatpush1.msra.mxu0 0.0
  %5745 = vmatprep.subr.mxu0 0.0
  %5746 = vmatpush1.msra.mxu0 0.0
  %5747 = vmatprep.subr.mxu0 0.0
  %5748 = vmatpush1.msra.mxu0 0.0
  %5749 = vmatprep.subr.mxu0 0.0
  %5750 = vmatpush1.msra.mxu0 0.0
  %5751 = vmatprep.subr.mxu0 0.0
  %5752 = vmatpush1.msra.mxu0 0.0
  %5753 = vmatprep.subr.mxu0 0.0
  %5754 = vmatpush1.msra.mxu0 0.0
  %5755 = vmatprep.subr.mxu0 0.0
  %5756 = vmatpush1.msra.mxu0 %v4707
  %5757 = vmatprep.subr.mxu0 0.0
  %5758 = vmatpush1.msra.mxu0 %v4706
  %5759 = vmatprep.subr.mxu0 0.0
  %5760 = vmatpush1.msra.mxu0 %v4705
  %5761 = vmatprep.subr.mxu0 0.0
  %5762 = vmatpush1.msra.mxu0 %v4704
  %5763 = vmatprep.subr.mxu0 0.0
  %5764 = vmatpush2.msra.mxu0 0.0
  %5765 = vmatprep.subr.mxu0 0.0
  %5766 = vmatpush2.msra.mxu0 0.0
  %5767 = vmatprep.subr.mxu0 0.0
  %5768 = vmatpush2.msra.mxu0 0.0
  %5769 = vmatprep.subr.mxu0 0.0
  %5770 = vmatpush2.msra.mxu0 0.0
  %5771 = vmatprep.subr.mxu0 0.0
  %5772 = vmatpush2.msra.mxu0 0.0
  %5773 = vmatprep.subr.mxu0 0.0
  %5774 = vmatpush2.msra.mxu0 0.0
  %5775 = vmatprep.subr.mxu0 0.0
  %5776 = vmatpush2.msra.mxu0 0.0
  %5777 = vmatprep.subr.mxu0 0.0
  %5778 = vmatpush2.msra.mxu0 0.0
  %5779 = vmatprep.subr.mxu0 0.0
  %5780 = vmatpush2.msra.mxu0 0.0
  %5781 = vmatprep.subr.mxu0 0.0
  %5782 = vmatpush2.msra.mxu0 0.0
  %5783 = vmatprep.subr.mxu0 0.0
  %5784 = vmatpush2.msra.mxu0 0.0
  %5785 = vmatprep.subr.mxu0 0.0
  %5786 = vmatpush2.msra.mxu0 0.0
  %5787 = vmatprep.subr.mxu0 0.0
  %5788 = vmatpush2.msra.mxu0 0.0
  %5789 = vmatprep.subr.mxu0 0.0
  %5790 = vmatpush2.msra.mxu0 0.0
  %5791 = vmatprep.subr.mxu0 0.0
  %5792 = vmatpush2.msra.mxu0 0.0
  %5793 = vmatprep.subr.mxu0 0.0
  %5794 = vmatpush2.msra.mxu0 0.0
  %5795 = vmatprep.mubr.f32.mxu0 0.0
  %5796 = vmatmul.mubr.f32.gmra.mxu0 %v5729
  %v5797 = vpop.f32.mrf.mxu0
  %v5798 = vadd.f32 0.0, %v5797
  %v5799 = vpop.f32.mrf.mxu0
  %5800 = vdwg.mxu0
  %s5801 = scalar_lea.vmem %s10, 1024
  %v5802 = vld [vmem:[%s5801] sm:$0xff]
  %v5803 = vld [vmem:[%s5801 + $0x8] sm:$0xff]
  %v5804 = vld [vmem:[%s5801 + $0x10] sm:$0xff]
  %v5805 = vld [vmem:[%s5801 + $0x18] sm:$0xff]
  %v5806 = vld [vmem:[%s5801 + $0x20] sm:$0xff]
  %v5807 = vld [vmem:[%s5801 + $0x28] sm:$0xff]
  %v5808 = vld [vmem:[%s5801 + $0x30] sm:$0xff]
  %v5809 = vld [vmem:[%s5801 + $0x38] sm:$0xff]
  %v5810 = vld [vmem:[%s5801 + $0x40] sm:$0xff]
  %v5811 = vld [vmem:[%s5801 + $0x48] sm:$0xff]
  %v5812 = vld [vmem:[%s5801 + $0x50] sm:$0xff]
  %v5813 = vld [vmem:[%s5801 + $0x58] sm:$0xff]
  %v5814 = vld [vmem:[%s5801 + $0x60] sm:$0xff]
  %v5815 = vld [vmem:[%s5801 + $0x68] sm:$0xff]
  %v5816 = vld [vmem:[%s5801 + $0x70] sm:$0xff]
  %v5817 = vld [vmem:[%s5801 + $0x78] sm:$0xff]
  %v5818 = vld [vmem:[%s5801 + $0x80] sm:$0xff]
  %v5819 = vld [vmem:[%s5801 + $0x88] sm:$0xff]
  %v5820 = vld [vmem:[%s5801 + $0x90] sm:$0xff]
  %v5821 = vld [vmem:[%s5801 + $0x98] sm:$0xff]
  %v5822 = vld [vmem:[%s5801 + $0xa0] sm:$0xff]
  %v5823 = vld [vmem:[%s5801 + $0xa8] sm:$0xff]
  %v5824 = vld [vmem:[%s5801 + $0xb0] sm:$0xff]
  %v5825 = vld [vmem:[%s5801 + $0xb8] sm:$0xff]
  %v5826 = vld [vmem:[%s5801 + $0xc0] sm:$0xff]
  %v5827 = vld [vmem:[%s5801 + $0xc8] sm:$0xff]
  %v5828 = vld [vmem:[%s5801 + $0xd0] sm:$0xff]
  %v5829 = vld [vmem:[%s5801 + $0xd8] sm:$0xff]
  %v5830 = vld [vmem:[%s5801 + $0xe0] sm:$0xff]
  %v5831 = vld [vmem:[%s5801 + $0xe8] sm:$0xff]
  %v5832 = vld [vmem:[%s5801 + $0xf0] sm:$0xff]
  %v5833 = vld [vmem:[%s5801 + $0xf8] sm:$0xff]
  %v5835 = vsel %vm76, %v5798, 0
  %5837 = vmatprep.subr.mxu0 0.0
  %5838 = vmatpush1.msra.mxu0 0.0
  %5839 = vmatprep.subr.mxu0 0.0
  %5840 = vmatpush1.msra.mxu0 0.0
  %5841 = vmatprep.subr.mxu0 0.0
  %5842 = vmatpush1.msra.mxu0 0.0
  %5843 = vmatprep.subr.mxu0 0.0
  %5844 = vmatpush1.msra.mxu0 0.0
  %5845 = vmatprep.subr.mxu0 0.0
  %5846 = vmatpush1.msra.mxu0 0.0
  %5847 = vmatprep.subr.mxu0 0.0
  %5848 = vmatpush1.msra.mxu0 0.0
  %5849 = vmatprep.subr.mxu0 0.0
  %5850 = vmatpush1.msra.mxu0 0.0
  %5851 = vmatprep.subr.mxu0 0.0
  %5852 = vmatpush1.msra.mxu0 0.0
  %5853 = vmatprep.subr.mxu0 %v5831
  %5854 = vmatpush1.msra.mxu0 %v5830
  %5855 = vmatprep.subr.mxu0 %v5827
  %5856 = vmatpush1.msra.mxu0 %v5826
  %5857 = vmatprep.subr.mxu0 %v5823
  %5858 = vmatpush1.msra.mxu0 %v5822
  %5859 = vmatprep.subr.mxu0 %v5819
  %5860 = vmatpush1.msra.mxu0 %v5818
  %5861 = vmatprep.subr.mxu0 %v5815
  %5862 = vmatpush1.msra.mxu0 %v5814
  %5863 = vmatprep.subr.mxu0 %v5811
  %5864 = vmatpush1.msra.mxu0 %v5810
  %5865 = vmatprep.subr.mxu0 %v5807
  %5866 = vmatpush1.msra.mxu0 %v5806
  %5867 = vmatprep.subr.mxu0 %v5803
  %5868 = vmatpush1.msra.mxu0 %v5802
  %5869 = vmatprep.subr.mxu0 0.0
  %5870 = vmatpush2.msra.mxu0 0.0
  %5871 = vmatprep.subr.mxu0 0.0
  %5872 = vmatpush2.msra.mxu0 0.0
  %5873 = vmatprep.subr.mxu0 0.0
  %5874 = vmatpush2.msra.mxu0 0.0
  %5875 = vmatprep.subr.mxu0 0.0
  %5876 = vmatpush2.msra.mxu0 0.0
  %5877 = vmatprep.subr.mxu0 0.0
  %5878 = vmatpush2.msra.mxu0 0.0
  %5879 = vmatprep.subr.mxu0 0.0
  %5880 = vmatpush2.msra.mxu0 0.0
  %5881 = vmatprep.subr.mxu0 0.0
  %5882 = vmatpush2.msra.mxu0 0.0
  %5883 = vmatprep.subr.mxu0 0.0
  %5884 = vmatpush2.msra.mxu0 0.0
  %5885 = vmatprep.subr.mxu0 0.0
  %5886 = vmatpush2.msra.mxu0 0.0
  %5887 = vmatprep.subr.mxu0 0.0
  %5888 = vmatpush2.msra.mxu0 0.0
  %5889 = vmatprep.subr.mxu0 0.0
  %5890 = vmatpush2.msra.mxu0 0.0
  %5891 = vmatprep.subr.mxu0 0.0
  %5892 = vmatpush2.msra.mxu0 0.0
  %5893 = vmatprep.subr.mxu0 0.0
  %5894 = vmatpush2.msra.mxu0 0.0
  %5895 = vmatprep.subr.mxu0 0.0
  %5896 = vmatpush2.msra.mxu0 0.0
  %5897 = vmatprep.subr.mxu0 0.0
  %5898 = vmatpush2.msra.mxu0 0.0
  %5899 = vmatprep.subr.mxu0 0.0
  %5900 = vmatpush2.msra.mxu0 0.0
  %5901 = vmatprep.mubr.f32.mxu0 0.0
  %5902 = vmatmul.mubr.f32.gmra.mxu0 %v5835
  %v5903 = vpop.f32.mrf.mxu0
  %v5904 = vadd.f32 0.0, %v5903
  %v5905 = vpop.f32.mrf.mxu0
  %v5906 = vadd.f32 0.0, %v5905
  %5907 = vdwg.mxu0
  %5908 = vmatprep.subr.mxu0 0.0
  %5909 = vmatpush1.msra.mxu0 0.0
  %5910 = vmatprep.subr.mxu0 0.0
  %5911 = vmatpush1.msra.mxu0 0.0
  %5912 = vmatprep.subr.mxu0 0.0
  %5913 = vmatpush1.msra.mxu0 0.0
  %5914 = vmatprep.subr.mxu0 0.0
  %5915 = vmatpush1.msra.mxu0 0.0
  %5916 = vmatprep.subr.mxu0 0.0
  %5917 = vmatpush1.msra.mxu0 0.0
  %5918 = vmatprep.subr.mxu0 0.0
  %5919 = vmatpush1.msra.mxu0 0.0
  %5920 = vmatprep.subr.mxu0 0.0
  %5921 = vmatpush1.msra.mxu0 0.0
  %5922 = vmatprep.subr.mxu0 0.0
  %5923 = vmatpush1.msra.mxu0 0.0
  %5924 = vmatprep.subr.mxu0 %v5833
  %5925 = vmatpush1.msra.mxu0 %v5832
  %5926 = vmatprep.subr.mxu0 %v5829
  %5927 = vmatpush1.msra.mxu0 %v5828
  %5928 = vmatprep.subr.mxu0 %v5825
  %5929 = vmatpush1.msra.mxu0 %v5824
  %5930 = vmatprep.subr.mxu0 %v5821
  %5931 = vmatpush1.msra.mxu0 %v5820
  %5932 = vmatprep.subr.mxu0 %v5817
  %5933 = vmatpush1.msra.mxu0 %v5816
  %5934 = vmatprep.subr.mxu0 %v5813
  %5935 = vmatpush1.msra.mxu0 %v5812
  %5936 = vmatprep.subr.mxu0 %v5809
  %5937 = vmatpush1.msra.mxu0 %v5808
  %5938 = vmatprep.subr.mxu0 %v5805
  %5939 = vmatpush1.msra.mxu0 %v5804
  %5940 = vmatprep.subr.mxu0 0.0
  %5941 = vmatpush2.msra.mxu0 0.0
  %5942 = vmatprep.subr.mxu0 0.0
  %5943 = vmatpush2.msra.mxu0 0.0
  %5944 = vmatprep.subr.mxu0 0.0
  %5945 = vmatpush2.msra.mxu0 0.0
  %5946 = vmatprep.subr.mxu0 0.0
  %5947 = vmatpush2.msra.mxu0 0.0
  %5948 = vmatprep.subr.mxu0 0.0
  %5949 = vmatpush2.msra.mxu0 0.0
  %5950 = vmatprep.subr.mxu0 0.0
  %5951 = vmatpush2.msra.mxu0 0.0
  %5952 = vmatprep.subr.mxu0 0.0
  %5953 = vmatpush2.msra.mxu0 0.0
  %5954 = vmatprep.subr.mxu0 0.0
  %5955 = vmatpush2.msra.mxu0 0.0
  %5956 = vmatprep.subr.mxu0 0.0
  %5957 = vmatpush2.msra.mxu0 0.0
  %5958 = vmatprep.subr.mxu0 0.0
  %5959 = vmatpush2.msra.mxu0 0.0
  %5960 = vmatprep.subr.mxu0 0.0
  %5961 = vmatpush2.msra.mxu0 0.0
  %5962 = vmatprep.subr.mxu0 0.0
  %5963 = vmatpush2.msra.mxu0 0.0
  %5964 = vmatprep.subr.mxu0 0.0
  %5965 = vmatpush2.msra.mxu0 0.0
  %5966 = vmatprep.subr.mxu0 0.0
  %5967 = vmatpush2.msra.mxu0 0.0
  %5968 = vmatprep.subr.mxu0 0.0
  %5969 = vmatpush2.msra.mxu0 0.0
  %5970 = vmatprep.subr.mxu0 0.0
  %5971 = vmatpush2.msra.mxu0 0.0
  %5972 = vmatprep.mubr.f32.mxu0 0.0
  %5973 = vmatmul.mubr.f32.gmra.mxu0 %v5835
  %v5974 = vpop.f32.mrf.mxu0
  %v5975 = vadd.f32 0.0, %v5974
  %v5976 = vpop.f32.mrf.mxu0
  %v5977 = vadd.f32 0.0, %v5976
  %5978 = vdwg.mxu0
  %v5979 = vadd.f32 %v5722, %v5904
  %v5980 = vadd.f32 %v5723, %v5906
  %v5981 = vadd.f32 %v5724, %v5975
  %v5982 = vadd.f32 %v5725, %v5977
  %s5983 = scalar_lea.vmem %s9, 40
  %v5984 = vld [vmem:[%s5983] sm:$0xff]
  %v5986 = vsel %vm553, %v5984, 0
  %5988 = vmatprep.subr.mxu0 0.0
  %5989 = vmatpush1.msra.mxu0 0.0
  %5990 = vmatprep.subr.mxu0 0.0
  %5991 = vmatpush1.msra.mxu0 0.0
  %5992 = vmatprep.subr.mxu0 0.0
  %5993 = vmatpush1.msra.mxu0 0.0
  %5994 = vmatprep.subr.mxu0 0.0
  %5995 = vmatpush1.msra.mxu0 0.0
  %5996 = vmatprep.subr.mxu0 0.0
  %5997 = vmatpush1.msra.mxu0 0.0
  %5998 = vmatprep.subr.mxu0 0.0
  %5999 = vmatpush1.msra.mxu0 0.0
  %6000 = vmatprep.subr.mxu0 0.0
  %6001 = vmatpush1.msra.mxu0 0.0
  %6002 = vmatprep.subr.mxu0 0.0
  %6003 = vmatpush1.msra.mxu0 0.0
  %6004 = vmatprep.subr.mxu0 0.0
  %6005 = vmatpush1.msra.mxu0 0.0
  %6006 = vmatprep.subr.mxu0 0.0
  %6007 = vmatpush1.msra.mxu0 0.0
  %6008 = vmatprep.subr.mxu0 0.0
  %6009 = vmatpush1.msra.mxu0 0.0
  %6010 = vmatprep.subr.mxu0 0.0
  %6011 = vmatpush1.msra.mxu0 0.0
  %6012 = vmatprep.subr.mxu0 0.0
  %6013 = vmatpush1.msra.mxu0 %v4707
  %6014 = vmatprep.subr.mxu0 0.0
  %6015 = vmatpush1.msra.mxu0 %v4706
  %6016 = vmatprep.subr.mxu0 0.0
  %6017 = vmatpush1.msra.mxu0 %v4705
  %6018 = vmatprep.subr.mxu0 0.0
  %6019 = vmatpush1.msra.mxu0 %v4704
  %6020 = vmatprep.subr.mxu0 0.0
  %6021 = vmatpush2.msra.mxu0 0.0
  %6022 = vmatprep.subr.mxu0 0.0
  %6023 = vmatpush2.msra.mxu0 0.0
  %6024 = vmatprep.subr.mxu0 0.0
  %6025 = vmatpush2.msra.mxu0 0.0
  %6026 = vmatprep.subr.mxu0 0.0
  %6027 = vmatpush2.msra.mxu0 0.0
  %6028 = vmatprep.subr.mxu0 0.0
  %6029 = vmatpush2.msra.mxu0 0.0
  %6030 = vmatprep.subr.mxu0 0.0
  %6031 = vmatpush2.msra.mxu0 0.0
  %6032 = vmatprep.subr.mxu0 0.0
  %6033 = vmatpush2.msra.mxu0 0.0
  %6034 = vmatprep.subr.mxu0 0.0
  %6035 = vmatpush2.msra.mxu0 0.0
  %6036 = vmatprep.subr.mxu0 0.0
  %6037 = vmatpush2.msra.mxu0 0.0
  %6038 = vmatprep.subr.mxu0 0.0
  %6039 = vmatpush2.msra.mxu0 0.0
  %6040 = vmatprep.subr.mxu0 0.0
  %6041 = vmatpush2.msra.mxu0 0.0
  %6042 = vmatprep.subr.mxu0 0.0
  %6043 = vmatpush2.msra.mxu0 0.0
  %6044 = vmatprep.subr.mxu0 0.0
  %6045 = vmatpush2.msra.mxu0 0.0
  %6046 = vmatprep.subr.mxu0 0.0
  %6047 = vmatpush2.msra.mxu0 0.0
  %6048 = vmatprep.subr.mxu0 0.0
  %6049 = vmatpush2.msra.mxu0 0.0
  %6050 = vmatprep.subr.mxu0 0.0
  %6051 = vmatpush2.msra.mxu0 0.0
  %6052 = vmatprep.mubr.f32.mxu0 0.0
  %6053 = vmatmul.mubr.f32.gmra.mxu0 %v5986
  %v6054 = vpop.f32.mrf.mxu0
  %v6055 = vadd.f32 0.0, %v6054
  %v6056 = vpop.f32.mrf.mxu0
  %6057 = vdwg.mxu0
  %s6058 = scalar_lea.vmem %s10, 1280
  %v6059 = vld [vmem:[%s6058] sm:$0xff]
  %v6060 = vld [vmem:[%s6058 + $0x8] sm:$0xff]
  %v6061 = vld [vmem:[%s6058 + $0x10] sm:$0xff]
  %v6062 = vld [vmem:[%s6058 + $0x18] sm:$0xff]
  %v6063 = vld [vmem:[%s6058 + $0x20] sm:$0xff]
  %v6064 = vld [vmem:[%s6058 + $0x28] sm:$0xff]
  %v6065 = vld [vmem:[%s6058 + $0x30] sm:$0xff]
  %v6066 = vld [vmem:[%s6058 + $0x38] sm:$0xff]
  %v6067 = vld [vmem:[%s6058 + $0x40] sm:$0xff]
  %v6068 = vld [vmem:[%s6058 + $0x48] sm:$0xff]
  %v6069 = vld [vmem:[%s6058 + $0x50] sm:$0xff]
  %v6070 = vld [vmem:[%s6058 + $0x58] sm:$0xff]
  %v6071 = vld [vmem:[%s6058 + $0x60] sm:$0xff]
  %v6072 = vld [vmem:[%s6058 + $0x68] sm:$0xff]
  %v6073 = vld [vmem:[%s6058 + $0x70] sm:$0xff]
  %v6074 = vld [vmem:[%s6058 + $0x78] sm:$0xff]
  %v6075 = vld [vmem:[%s6058 + $0x80] sm:$0xff]
  %v6076 = vld [vmem:[%s6058 + $0x88] sm:$0xff]
  %v6077 = vld [vmem:[%s6058 + $0x90] sm:$0xff]
  %v6078 = vld [vmem:[%s6058 + $0x98] sm:$0xff]
  %v6079 = vld [vmem:[%s6058 + $0xa0] sm:$0xff]
  %v6080 = vld [vmem:[%s6058 + $0xa8] sm:$0xff]
  %v6081 = vld [vmem:[%s6058 + $0xb0] sm:$0xff]
  %v6082 = vld [vmem:[%s6058 + $0xb8] sm:$0xff]
  %v6083 = vld [vmem:[%s6058 + $0xc0] sm:$0xff]
  %v6084 = vld [vmem:[%s6058 + $0xc8] sm:$0xff]
  %v6085 = vld [vmem:[%s6058 + $0xd0] sm:$0xff]
  %v6086 = vld [vmem:[%s6058 + $0xd8] sm:$0xff]
  %v6087 = vld [vmem:[%s6058 + $0xe0] sm:$0xff]
  %v6088 = vld [vmem:[%s6058 + $0xe8] sm:$0xff]
  %v6089 = vld [vmem:[%s6058 + $0xf0] sm:$0xff]
  %v6090 = vld [vmem:[%s6058 + $0xf8] sm:$0xff]
  %v6092 = vsel %vm76, %v6055, 0
  %6094 = vmatprep.subr.mxu0 0.0
  %6095 = vmatpush1.msra.mxu0 0.0
  %6096 = vmatprep.subr.mxu0 0.0
  %6097 = vmatpush1.msra.mxu0 0.0
  %6098 = vmatprep.subr.mxu0 0.0
  %6099 = vmatpush1.msra.mxu0 0.0
  %6100 = vmatprep.subr.mxu0 0.0
  %6101 = vmatpush1.msra.mxu0 0.0
  %6102 = vmatprep.subr.mxu0 0.0
  %6103 = vmatpush1.msra.mxu0 0.0
  %6104 = vmatprep.subr.mxu0 0.0
  %6105 = vmatpush1.msra.mxu0 0.0
  %6106 = vmatprep.subr.mxu0 0.0
  %6107 = vmatpush1.msra.mxu0 0.0
  %6108 = vmatprep.subr.mxu0 0.0
  %6109 = vmatpush1.msra.mxu0 0.0
  %6110 = vmatprep.subr.mxu0 %v6088
  %6111 = vmatpush1.msra.mxu0 %v6087
  %6112 = vmatprep.subr.mxu0 %v6084
  %6113 = vmatpush1.msra.mxu0 %v6083
  %6114 = vmatprep.subr.mxu0 %v6080
  %6115 = vmatpush1.msra.mxu0 %v6079
  %6116 = vmatprep.subr.mxu0 %v6076
  %6117 = vmatpush1.msra.mxu0 %v6075
  %6118 = vmatprep.subr.mxu0 %v6072
  %6119 = vmatpush1.msra.mxu0 %v6071
  %6120 = vmatprep.subr.mxu0 %v6068
  %6121 = vmatpush1.msra.mxu0 %v6067
  %6122 = vmatprep.subr.mxu0 %v6064
  %6123 = vmatpush1.msra.mxu0 %v6063
  %6124 = vmatprep.subr.mxu0 %v6060
  %6125 = vmatpush1.msra.mxu0 %v6059
  %6126 = vmatprep.subr.mxu0 0.0
  %6127 = vmatpush2.msra.mxu0 0.0
  %6128 = vmatprep.subr.mxu0 0.0
  %6129 = vmatpush2.msra.mxu0 0.0
  %6130 = vmatprep.subr.mxu0 0.0
  %6131 = vmatpush2.msra.mxu0 0.0
  %6132 = vmatprep.subr.mxu0 0.0
  %6133 = vmatpush2.msra.mxu0 0.0
  %6134 = vmatprep.subr.mxu0 0.0
  %6135 = vmatpush2.msra.mxu0 0.0
  %6136 = vmatprep.subr.mxu0 0.0
  %6137 = vmatpush2.msra.mxu0 0.0
  %6138 = vmatprep.subr.mxu0 0.0
  %6139 = vmatpush2.msra.mxu0 0.0
  %6140 = vmatprep.subr.mxu0 0.0
  %6141 = vmatpush2.msra.mxu0 0.0
  %6142 = vmatprep.subr.mxu0 0.0
  %6143 = vmatpush2.msra.mxu0 0.0
  %6144 = vmatprep.subr.mxu0 0.0
  %6145 = vmatpush2.msra.mxu0 0.0
  %6146 = vmatprep.subr.mxu0 0.0
  %6147 = vmatpush2.msra.mxu0 0.0
  %6148 = vmatprep.subr.mxu0 0.0
  %6149 = vmatpush2.msra.mxu0 0.0
  %6150 = vmatprep.subr.mxu0 0.0
  %6151 = vmatpush2.msra.mxu0 0.0
  %6152 = vmatprep.subr.mxu0 0.0
  %6153 = vmatpush2.msra.mxu0 0.0
  %6154 = vmatprep.subr.mxu0 0.0
  %6155 = vmatpush2.msra.mxu0 0.0
  %6156 = vmatprep.subr.mxu0 0.0
  %6157 = vmatpush2.msra.mxu0 0.0
  %6158 = vmatprep.mubr.f32.mxu0 0.0
  %6159 = vmatmul.mubr.f32.gmra.mxu0 %v6092
  %v6160 = vpop.f32.mrf.mxu0
  %v6161 = vadd.f32 0.0, %v6160
  %v6162 = vpop.f32.mrf.mxu0
  %v6163 = vadd.f32 0.0, %v6162
  %6164 = vdwg.mxu0
  %6165 = vmatprep.subr.mxu0 0.0
  %6166 = vmatpush1.msra.mxu0 0.0
  %6167 = vmatprep.subr.mxu0 0.0
  %6168 = vmatpush1.msra.mxu0 0.0
  %6169 = vmatprep.subr.mxu0 0.0
  %6170 = vmatpush1.msra.mxu0 0.0
  %6171 = vmatprep.subr.mxu0 0.0
  %6172 = vmatpush1.msra.mxu0 0.0
  %6173 = vmatprep.subr.mxu0 0.0
  %6174 = vmatpush1.msra.mxu0 0.0
  %6175 = vmatprep.subr.mxu0 0.0
  %6176 = vmatpush1.msra.mxu0 0.0
  %6177 = vmatprep.subr.mxu0 0.0
  %6178 = vmatpush1.msra.mxu0 0.0
  %6179 = vmatprep.subr.mxu0 0.0
  %6180 = vmatpush1.msra.mxu0 0.0
  %6181 = vmatprep.subr.mxu0 %v6090
  %6182 = vmatpush1.msra.mxu0 %v6089
  %6183 = vmatprep.subr.mxu0 %v6086
  %6184 = vmatpush1.msra.mxu0 %v6085
  %6185 = vmatprep.subr.mxu0 %v6082
  %6186 = vmatpush1.msra.mxu0 %v6081
  %6187 = vmatprep.subr.mxu0 %v6078
  %6188 = vmatpush1.msra.mxu0 %v6077
  %6189 = vmatprep.subr.mxu0 %v6074
  %6190 = vmatpush1.msra.mxu0 %v6073
  %6191 = vmatprep.subr.mxu0 %v6070
  %6192 = vmatpush1.msra.mxu0 %v6069
  %6193 = vmatprep.subr.mxu0 %v6066
  %6194 = vmatpush1.msra.mxu0 %v6065
  %6195 = vmatprep.subr.mxu0 %v6062
  %6196 = vmatpush1.msra.mxu0 %v6061
  %6197 = vmatprep.subr.mxu0 0.0
  %6198 = vmatpush2.msra.mxu0 0.0
  %6199 = vmatprep.subr.mxu0 0.0
  %6200 = vmatpush2.msra.mxu0 0.0
  %6201 = vmatprep.subr.mxu0 0.0
  %6202 = vmatpush2.msra.mxu0 0.0
  %6203 = vmatprep.subr.mxu0 0.0
  %6204 = vmatpush2.msra.mxu0 0.0
  %6205 = vmatprep.subr.mxu0 0.0
  %6206 = vmatpush2.msra.mxu0 0.0
  %6207 = vmatprep.subr.mxu0 0.0
  %6208 = vmatpush2.msra.mxu0 0.0
  %6209 = vmatprep.subr.mxu0 0.0
  %6210 = vmatpush2.msra.mxu0 0.0
  %6211 = vmatprep.subr.mxu0 0.0
  %6212 = vmatpush2.msra.mxu0 0.0
  %6213 = vmatprep.subr.mxu0 0.0
  %6214 = vmatpush2.msra.mxu0 0.0
  %6215 = vmatprep.subr.mxu0 0.0
  %6216 = vmatpush2.msra.mxu0 0.0
  %6217 = vmatprep.subr.mxu0 0.0
  %6218 = vmatpush2.msra.mxu0 0.0
  %6219 = vmatprep.subr.mxu0 0.0
  %6220 = vmatpush2.msra.mxu0 0.0
  %6221 = vmatprep.subr.mxu0 0.0
  %6222 = vmatpush2.msra.mxu0 0.0
  %6223 = vmatprep.subr.mxu0 0.0
  %6224 = vmatpush2.msra.mxu0 0.0
  %6225 = vmatprep.subr.mxu0 0.0
  %6226 = vmatpush2.msra.mxu0 0.0
  %6227 = vmatprep.subr.mxu0 0.0
  %6228 = vmatpush2.msra.mxu0 0.0
  %6229 = vmatprep.mubr.f32.mxu0 0.0
  %6230 = vmatmul.mubr.f32.gmra.mxu0 %v6092
  %v6231 = vpop.f32.mrf.mxu0
  %v6232 = vadd.f32 0.0, %v6231
  %v6233 = vpop.f32.mrf.mxu0
  %v6234 = vadd.f32 0.0, %v6233
  %6235 = vdwg.mxu0
  %v6236 = vadd.f32 %v5979, %v6161
  %v6237 = vadd.f32 %v5980, %v6163
  %v6238 = vadd.f32 %v5981, %v6232
  %v6239 = vadd.f32 %v5982, %v6234
  %s6240 = scalar_lea.vmem %s9, 48
  %v6241 = vld [vmem:[%s6240] sm:$0xff]
  %v6243 = vsel %vm553, %v6241, 0
  %6245 = vmatprep.subr.mxu0 0.0
  %6246 = vmatpush1.msra.mxu0 0.0
  %6247 = vmatprep.subr.mxu0 0.0
  %6248 = vmatpush1.msra.mxu0 0.0
  %6249 = vmatprep.subr.mxu0 0.0
  %6250 = vmatpush1.msra.mxu0 0.0
  %6251 = vmatprep.subr.mxu0 0.0
  %6252 = vmatpush1.msra.mxu0 0.0
  %6253 = vmatprep.subr.mxu0 0.0
  %6254 = vmatpush1.msra.mxu0 0.0
  %6255 = vmatprep.subr.mxu0 0.0
  %6256 = vmatpush1.msra.mxu0 0.0
  %6257 = vmatprep.subr.mxu0 0.0
  %6258 = vmatpush1.msra.mxu0 0.0
  %6259 = vmatprep.subr.mxu0 0.0
  %6260 = vmatpush1.msra.mxu0 0.0
  %6261 = vmatprep.subr.mxu0 0.0
  %6262 = vmatpush1.msra.mxu0 0.0
  %6263 = vmatprep.subr.mxu0 0.0
  %6264 = vmatpush1.msra.mxu0 0.0
  %6265 = vmatprep.subr.mxu0 0.0
  %6266 = vmatpush1.msra.mxu0 0.0
  %6267 = vmatprep.subr.mxu0 0.0
  %6268 = vmatpush1.msra.mxu0 0.0
  %6269 = vmatprep.subr.mxu0 0.0
  %6270 = vmatpush1.msra.mxu0 %v4707
  %6271 = vmatprep.subr.mxu0 0.0
  %6272 = vmatpush1.msra.mxu0 %v4706
  %6273 = vmatprep.subr.mxu0 0.0
  %6274 = vmatpush1.msra.mxu0 %v4705
  %6275 = vmatprep.subr.mxu0 0.0
  %6276 = vmatpush1.msra.mxu0 %v4704
  %6277 = vmatprep.subr.mxu0 0.0
  %6278 = vmatpush2.msra.mxu0 0.0
  %6279 = vmatprep.subr.mxu0 0.0
  %6280 = vmatpush2.msra.mxu0 0.0
  %6281 = vmatprep.subr.mxu0 0.0
  %6282 = vmatpush2.msra.mxu0 0.0
  %6283 = vmatprep.subr.mxu0 0.0
  %6284 = vmatpush2.msra.mxu0 0.0
  %6285 = vmatprep.subr.mxu0 0.0
  %6286 = vmatpush2.msra.mxu0 0.0
  %6287 = vmatprep.subr.mxu0 0.0
  %6288 = vmatpush2.msra.mxu0 0.0
  %6289 = vmatprep.subr.mxu0 0.0
  %6290 = vmatpush2.msra.mxu0 0.0
  %6291 = vmatprep.subr.mxu0 0.0
  %6292 = vmatpush2.msra.mxu0 0.0
  %6293 = vmatprep.subr.mxu0 0.0
  %6294 = vmatpush2.msra.mxu0 0.0
  %6295 = vmatprep.subr.mxu0 0.0
  %6296 = vmatpush2.msra.mxu0 0.0
  %6297 = vmatprep.subr.mxu0 0.0
  %6298 = vmatpush2.msra.mxu0 0.0
  %6299 = vmatprep.subr.mxu0 0.0
  %6300 = vmatpush2.msra.mxu0 0.0
  %6301 = vmatprep.subr.mxu0 0.0
  %6302 = vmatpush2.msra.mxu0 0.0
  %6303 = vmatprep.subr.mxu0 0.0
  %6304 = vmatpush2.msra.mxu0 0.0
  %6305 = vmatprep.subr.mxu0 0.0
  %6306 = vmatpush2.msra.mxu0 0.0
  %6307 = vmatprep.subr.mxu0 0.0
  %6308 = vmatpush2.msra.mxu0 0.0
  %6309 = vmatprep.mubr.f32.mxu0 0.0
  %6310 = vmatmul.mubr.f32.gmra.mxu0 %v6243
  %v6311 = vpop.f32.mrf.mxu0
  %v6312 = vadd.f32 0.0, %v6311
  %v6313 = vpop.f32.mrf.mxu0
  %6314 = vdwg.mxu0
  %s6315 = scalar_lea.vmem %s10, 1536
  %v6316 = vld [vmem:[%s6315] sm:$0xff]
  %v6317 = vld [vmem:[%s6315 + $0x8] sm:$0xff]
  %v6318 = vld [vmem:[%s6315 + $0x10] sm:$0xff]
  %v6319 = vld [vmem:[%s6315 + $0x18] sm:$0xff]
  %v6320 = vld [vmem:[%s6315 + $0x20] sm:$0xff]
  %v6321 = vld [vmem:[%s6315 + $0x28] sm:$0xff]
  %v6322 = vld [vmem:[%s6315 + $0x30] sm:$0xff]
  %v6323 = vld [vmem:[%s6315 + $0x38] sm:$0xff]
  %v6324 = vld [vmem:[%s6315 + $0x40] sm:$0xff]
  %v6325 = vld [vmem:[%s6315 + $0x48] sm:$0xff]
  %v6326 = vld [vmem:[%s6315 + $0x50] sm:$0xff]
  %v6327 = vld [vmem:[%s6315 + $0x58] sm:$0xff]
  %v6328 = vld [vmem:[%s6315 + $0x60] sm:$0xff]
  %v6329 = vld [vmem:[%s6315 + $0x68] sm:$0xff]
  %v6330 = vld [vmem:[%s6315 + $0x70] sm:$0xff]
  %v6331 = vld [vmem:[%s6315 + $0x78] sm:$0xff]
  %v6332 = vld [vmem:[%s6315 + $0x80] sm:$0xff]
  %v6333 = vld [vmem:[%s6315 + $0x88] sm:$0xff]
  %v6334 = vld [vmem:[%s6315 + $0x90] sm:$0xff]
  %v6335 = vld [vmem:[%s6315 + $0x98] sm:$0xff]
  %v6336 = vld [vmem:[%s6315 + $0xa0] sm:$0xff]
  %v6337 = vld [vmem:[%s6315 + $0xa8] sm:$0xff]
  %v6338 = vld [vmem:[%s6315 + $0xb0] sm:$0xff]
  %v6339 = vld [vmem:[%s6315 + $0xb8] sm:$0xff]
  %v6340 = vld [vmem:[%s6315 + $0xc0] sm:$0xff]
  %v6341 = vld [vmem:[%s6315 + $0xc8] sm:$0xff]
  %v6342 = vld [vmem:[%s6315 + $0xd0] sm:$0xff]
  %v6343 = vld [vmem:[%s6315 + $0xd8] sm:$0xff]
  %v6344 = vld [vmem:[%s6315 + $0xe0] sm:$0xff]
  %v6345 = vld [vmem:[%s6315 + $0xe8] sm:$0xff]
  %v6346 = vld [vmem:[%s6315 + $0xf0] sm:$0xff]
  %v6347 = vld [vmem:[%s6315 + $0xf8] sm:$0xff]
  %v6349 = vsel %vm76, %v6312, 0
  %6351 = vmatprep.subr.mxu0 0.0
  %6352 = vmatpush1.msra.mxu0 0.0
  %6353 = vmatprep.subr.mxu0 0.0
  %6354 = vmatpush1.msra.mxu0 0.0
  %6355 = vmatprep.subr.mxu0 0.0
  %6356 = vmatpush1.msra.mxu0 0.0
  %6357 = vmatprep.subr.mxu0 0.0
  %6358 = vmatpush1.msra.mxu0 0.0
  %6359 = vmatprep.subr.mxu0 0.0
  %6360 = vmatpush1.msra.mxu0 0.0
  %6361 = vmatprep.subr.mxu0 0.0
  %6362 = vmatpush1.msra.mxu0 0.0
  %6363 = vmatprep.subr.mxu0 0.0
  %6364 = vmatpush1.msra.mxu0 0.0
  %6365 = vmatprep.subr.mxu0 0.0
  %6366 = vmatpush1.msra.mxu0 0.0
  %6367 = vmatprep.subr.mxu0 %v6345
  %6368 = vmatpush1.msra.mxu0 %v6344
  %6369 = vmatprep.subr.mxu0 %v6341
  %6370 = vmatpush1.msra.mxu0 %v6340
  %6371 = vmatprep.subr.mxu0 %v6337
  %6372 = vmatpush1.msra.mxu0 %v6336
  %6373 = vmatprep.subr.mxu0 %v6333
  %6374 = vmatpush1.msra.mxu0 %v6332
  %6375 = vmatprep.subr.mxu0 %v6329
  %6376 = vmatpush1.msra.mxu0 %v6328
  %6377 = vmatprep.subr.mxu0 %v6325
  %6378 = vmatpush1.msra.mxu0 %v6324
  %6379 = vmatprep.subr.mxu0 %v6321
  %6380 = vmatpush1.msra.mxu0 %v6320
  %6381 = vmatprep.subr.mxu0 %v6317
  %6382 = vmatpush1.msra.mxu0 %v6316
  %6383 = vmatprep.subr.mxu0 0.0
  %6384 = vmatpush2.msra.mxu0 0.0
  %6385 = vmatprep.subr.mxu0 0.0
  %6386 = vmatpush2.msra.mxu0 0.0
  %6387 = vmatprep.subr.mxu0 0.0
  %6388 = vmatpush2.msra.mxu0 0.0
  %6389 = vmatprep.subr.mxu0 0.0
  %6390 = vmatpush2.msra.mxu0 0.0
  %6391 = vmatprep.subr.mxu0 0.0
  %6392 = vmatpush2.msra.mxu0 0.0
  %6393 = vmatprep.subr.mxu0 0.0
  %6394 = vmatpush2.msra.mxu0 0.0
  %6395 = vmatprep.subr.mxu0 0.0
  %6396 = vmatpush2.msra.mxu0 0.0
  %6397 = vmatprep.subr.mxu0 0.0
  %6398 = vmatpush2.msra.mxu0 0.0
  %6399 = vmatprep.subr.mxu0 0.0
  %6400 = vmatpush2.msra.mxu0 0.0
  %6401 = vmatprep.subr.mxu0 0.0
  %6402 = vmatpush2.msra.mxu0 0.0
  %6403 = vmatprep.subr.mxu0 0.0
  %6404 = vmatpush2.msra.mxu0 0.0
  %6405 = vmatprep.subr.mxu0 0.0
  %6406 = vmatpush2.msra.mxu0 0.0
  %6407 = vmatprep.subr.mxu0 0.0
  %6408 = vmatpush2.msra.mxu0 0.0
  %6409 = vmatprep.subr.mxu0 0.0
  %6410 = vmatpush2.msra.mxu0 0.0
  %6411 = vmatprep.subr.mxu0 0.0
  %6412 = vmatpush2.msra.mxu0 0.0
  %6413 = vmatprep.subr.mxu0 0.0
  %6414 = vmatpush2.msra.mxu0 0.0
  %6415 = vmatprep.mubr.f32.mxu0 0.0
  %6416 = vmatmul.mubr.f32.gmra.mxu0 %v6349
  %v6417 = vpop.f32.mrf.mxu0
  %v6418 = vadd.f32 0.0, %v6417
  %v6419 = vpop.f32.mrf.mxu0
  %v6420 = vadd.f32 0.0, %v6419
  %6421 = vdwg.mxu0
  %6422 = vmatprep.subr.mxu0 0.0
  %6423 = vmatpush1.msra.mxu0 0.0
  %6424 = vmatprep.subr.mxu0 0.0
  %6425 = vmatpush1.msra.mxu0 0.0
  %6426 = vmatprep.subr.mxu0 0.0
  %6427 = vmatpush1.msra.mxu0 0.0
  %6428 = vmatprep.subr.mxu0 0.0
  %6429 = vmatpush1.msra.mxu0 0.0
  %6430 = vmatprep.subr.mxu0 0.0
  %6431 = vmatpush1.msra.mxu0 0.0
  %6432 = vmatprep.subr.mxu0 0.0
  %6433 = vmatpush1.msra.mxu0 0.0
  %6434 = vmatprep.subr.mxu0 0.0
  %6435 = vmatpush1.msra.mxu0 0.0
  %6436 = vmatprep.subr.mxu0 0.0
  %6437 = vmatpush1.msra.mxu0 0.0
  %6438 = vmatprep.subr.mxu0 %v6347
  %6439 = vmatpush1.msra.mxu0 %v6346
  %6440 = vmatprep.subr.mxu0 %v6343
  %6441 = vmatpush1.msra.mxu0 %v6342
  %6442 = vmatprep.subr.mxu0 %v6339
  %6443 = vmatpush1.msra.mxu0 %v6338
  %6444 = vmatprep.subr.mxu0 %v6335
  %6445 = vmatpush1.msra.mxu0 %v6334
  %6446 = vmatprep.subr.mxu0 %v6331
  %6447 = vmatpush1.msra.mxu0 %v6330
  %6448 = vmatprep.subr.mxu0 %v6327
  %6449 = vmatpush1.msra.mxu0 %v6326
  %6450 = vmatprep.subr.mxu0 %v6323
  %6451 = vmatpush1.msra.mxu0 %v6322
  %6452 = vmatprep.subr.mxu0 %v6319
  %6453 = vmatpush1.msra.mxu0 %v6318
  %6454 = vmatprep.subr.mxu0 0.0
  %6455 = vmatpush2.msra.mxu0 0.0
  %6456 = vmatprep.subr.mxu0 0.0
  %6457 = vmatpush2.msra.mxu0 0.0
  %6458 = vmatprep.subr.mxu0 0.0
  %6459 = vmatpush2.msra.mxu0 0.0
  %6460 = vmatprep.subr.mxu0 0.0
  %6461 = vmatpush2.msra.mxu0 0.0
  %6462 = vmatprep.subr.mxu0 0.0
  %6463 = vmatpush2.msra.mxu0 0.0
  %6464 = vmatprep.subr.mxu0 0.0
  %6465 = vmatpush2.msra.mxu0 0.0
  %6466 = vmatprep.subr.mxu0 0.0
  %6467 = vmatpush2.msra.mxu0 0.0
  %6468 = vmatprep.subr.mxu0 0.0
  %6469 = vmatpush2.msra.mxu0 0.0
  %6470 = vmatprep.subr.mxu0 0.0
  %6471 = vmatpush2.msra.mxu0 0.0
  %6472 = vmatprep.subr.mxu0 0.0
  %6473 = vmatpush2.msra.mxu0 0.0
  %6474 = vmatprep.subr.mxu0 0.0
  %6475 = vmatpush2.msra.mxu0 0.0
  %6476 = vmatprep.subr.mxu0 0.0
  %6477 = vmatpush2.msra.mxu0 0.0
  %6478 = vmatprep.subr.mxu0 0.0
  %6479 = vmatpush2.msra.mxu0 0.0
  %6480 = vmatprep.subr.mxu0 0.0
  %6481 = vmatpush2.msra.mxu0 0.0
  %6482 = vmatprep.subr.mxu0 0.0
  %6483 = vmatpush2.msra.mxu0 0.0
  %6484 = vmatprep.subr.mxu0 0.0
  %6485 = vmatpush2.msra.mxu0 0.0
  %6486 = vmatprep.mubr.f32.mxu0 0.0
  %6487 = vmatmul.mubr.f32.gmra.mxu0 %v6349
  %v6488 = vpop.f32.mrf.mxu0
  %v6489 = vadd.f32 0.0, %v6488
  %v6490 = vpop.f32.mrf.mxu0
  %v6491 = vadd.f32 0.0, %v6490
  %6492 = vdwg.mxu0
  %v6493 = vadd.f32 %v6236, %v6418
  %v6494 = vadd.f32 %v6237, %v6420
  %v6495 = vadd.f32 %v6238, %v6489
  %v6496 = vadd.f32 %v6239, %v6491
  %s6497 = scalar_lea.vmem %s9, 56
  %v6498 = vld [vmem:[%s6497] sm:$0xff]
  %v6500 = vsel %vm553, %v6498, 0
  %6502 = vmatprep.subr.mxu0 0.0
  %6503 = vmatpush1.msra.mxu0 0.0
  %6504 = vmatprep.subr.mxu0 0.0
  %6505 = vmatpush1.msra.mxu0 0.0
  %6506 = vmatprep.subr.mxu0 0.0
  %6507 = vmatpush1.msra.mxu0 0.0
  %6508 = vmatprep.subr.mxu0 0.0
  %6509 = vmatpush1.msra.mxu0 0.0
  %6510 = vmatprep.subr.mxu0 0.0
  %6511 = vmatpush1.msra.mxu0 0.0
  %6512 = vmatprep.subr.mxu0 0.0
  %6513 = vmatpush1.msra.mxu0 0.0
  %6514 = vmatprep.subr.mxu0 0.0
  %6515 = vmatpush1.msra.mxu0 0.0
  %6516 = vmatprep.subr.mxu0 0.0
  %6517 = vmatpush1.msra.mxu0 0.0
  %6518 = vmatprep.subr.mxu0 0.0
  %6519 = vmatpush1.msra.mxu0 0.0
  %6520 = vmatprep.subr.mxu0 0.0
  %6521 = vmatpush1.msra.mxu0 0.0
  %6522 = vmatprep.subr.mxu0 0.0
  %6523 = vmatpush1.msra.mxu0 0.0
  %6524 = vmatprep.subr.mxu0 0.0
  %6525 = vmatpush1.msra.mxu0 0.0
  %6526 = vmatprep.subr.mxu0 0.0
  %6527 = vmatpush1.msra.mxu0 %v4707
  %6528 = vmatprep.subr.mxu0 0.0
  %6529 = vmatpush1.msra.mxu0 %v4706
  %6530 = vmatprep.subr.mxu0 0.0
  %6531 = vmatpush1.msra.mxu0 %v4705
  %6532 = vmatprep.subr.mxu0 0.0
  %6533 = vmatpush1.msra.mxu0 %v4704
  %6534 = vmatprep.subr.mxu0 0.0
  %6535 = vmatpush2.msra.mxu0 0.0
  %6536 = vmatprep.subr.mxu0 0.0
  %6537 = vmatpush2.msra.mxu0 0.0
  %6538 = vmatprep.subr.mxu0 0.0
  %6539 = vmatpush2.msra.mxu0 0.0
  %6540 = vmatprep.subr.mxu0 0.0
  %6541 = vmatpush2.msra.mxu0 0.0
  %6542 = vmatprep.subr.mxu0 0.0
  %6543 = vmatpush2.msra.mxu0 0.0
  %6544 = vmatprep.subr.mxu0 0.0
  %6545 = vmatpush2.msra.mxu0 0.0
  %6546 = vmatprep.subr.mxu0 0.0
  %6547 = vmatpush2.msra.mxu0 0.0
  %6548 = vmatprep.subr.mxu0 0.0
  %6549 = vmatpush2.msra.mxu0 0.0
  %6550 = vmatprep.subr.mxu0 0.0
  %6551 = vmatpush2.msra.mxu0 0.0
  %6552 = vmatprep.subr.mxu0 0.0
  %6553 = vmatpush2.msra.mxu0 0.0
  %6554 = vmatprep.subr.mxu0 0.0
  %6555 = vmatpush2.msra.mxu0 0.0
  %6556 = vmatprep.subr.mxu0 0.0
  %6557 = vmatpush2.msra.mxu0 0.0
  %6558 = vmatprep.subr.mxu0 0.0
  %6559 = vmatpush2.msra.mxu0 0.0
  %6560 = vmatprep.subr.mxu0 0.0
  %6561 = vmatpush2.msra.mxu0 0.0
  %6562 = vmatprep.subr.mxu0 0.0
  %6563 = vmatpush2.msra.mxu0 0.0
  %6564 = vmatprep.subr.mxu0 0.0
  %6565 = vmatpush2.msra.mxu0 0.0
  %6566 = vmatprep.mubr.f32.mxu0 0.0
  %6567 = vmatmul.mubr.f32.gmra.mxu0 %v6500
  %v6568 = vpop.f32.mrf.mxu0
  %v6569 = vadd.f32 0.0, %v6568
  %v6570 = vpop.f32.mrf.mxu0
  %6571 = vdwg.mxu0
  %s6572 = scalar_lea.vmem %s10, 1792
  %v6573 = vld [vmem:[%s6572] sm:$0xff]
  %v6574 = vld [vmem:[%s6572 + $0x8] sm:$0xff]
  %v6575 = vld [vmem:[%s6572 + $0x10] sm:$0xff]
  %v6576 = vld [vmem:[%s6572 + $0x18] sm:$0xff]
  %v6577 = vld [vmem:[%s6572 + $0x20] sm:$0xff]
  %v6578 = vld [vmem:[%s6572 + $0x28] sm:$0xff]
  %v6579 = vld [vmem:[%s6572 + $0x30] sm:$0xff]
  %v6580 = vld [vmem:[%s6572 + $0x38] sm:$0xff]
  %v6581 = vld [vmem:[%s6572 + $0x40] sm:$0xff]
  %v6582 = vld [vmem:[%s6572 + $0x48] sm:$0xff]
  %v6583 = vld [vmem:[%s6572 + $0x50] sm:$0xff]
  %v6584 = vld [vmem:[%s6572 + $0x58] sm:$0xff]
  %v6585 = vld [vmem:[%s6572 + $0x60] sm:$0xff]
  %v6586 = vld [vmem:[%s6572 + $0x68] sm:$0xff]
  %v6587 = vld [vmem:[%s6572 + $0x70] sm:$0xff]
  %v6588 = vld [vmem:[%s6572 + $0x78] sm:$0xff]
  %v6589 = vld [vmem:[%s6572 + $0x80] sm:$0xff]
  %v6590 = vld [vmem:[%s6572 + $0x88] sm:$0xff]
  %v6591 = vld [vmem:[%s6572 + $0x90] sm:$0xff]
  %v6592 = vld [vmem:[%s6572 + $0x98] sm:$0xff]
  %v6593 = vld [vmem:[%s6572 + $0xa0] sm:$0xff]
  %v6594 = vld [vmem:[%s6572 + $0xa8] sm:$0xff]
  %v6595 = vld [vmem:[%s6572 + $0xb0] sm:$0xff]
  %v6596 = vld [vmem:[%s6572 + $0xb8] sm:$0xff]
  %v6597 = vld [vmem:[%s6572 + $0xc0] sm:$0xff]
  %v6598 = vld [vmem:[%s6572 + $0xc8] sm:$0xff]
  %v6599 = vld [vmem:[%s6572 + $0xd0] sm:$0xff]
  %v6600 = vld [vmem:[%s6572 + $0xd8] sm:$0xff]
  %v6601 = vld [vmem:[%s6572 + $0xe0] sm:$0xff]
  %v6602 = vld [vmem:[%s6572 + $0xe8] sm:$0xff]
  %v6603 = vld [vmem:[%s6572 + $0xf0] sm:$0xff]
  %v6604 = vld [vmem:[%s6572 + $0xf8] sm:$0xff]
  %v6606 = vsel %vm76, %v6569, 0
  %6608 = vmatprep.subr.mxu0 0.0
  %6609 = vmatpush1.msra.mxu0 0.0
  %6610 = vmatprep.subr.mxu0 0.0
  %6611 = vmatpush1.msra.mxu0 0.0
  %6612 = vmatprep.subr.mxu0 0.0
  %6613 = vmatpush1.msra.mxu0 0.0
  %6614 = vmatprep.subr.mxu0 0.0
  %6615 = vmatpush1.msra.mxu0 0.0
  %6616 = vmatprep.subr.mxu0 0.0
  %6617 = vmatpush1.msra.mxu0 0.0
  %6618 = vmatprep.subr.mxu0 0.0
  %6619 = vmatpush1.msra.mxu0 0.0
  %6620 = vmatprep.subr.mxu0 0.0
  %6621 = vmatpush1.msra.mxu0 0.0
  %6622 = vmatprep.subr.mxu0 0.0
  %6623 = vmatpush1.msra.mxu0 0.0
  %6624 = vmatprep.subr.mxu0 %v6602
  %6625 = vmatpush1.msra.mxu0 %v6601
  %6626 = vmatprep.subr.mxu0 %v6598
  %6627 = vmatpush1.msra.mxu0 %v6597
  %6628 = vmatprep.subr.mxu0 %v6594
  %6629 = vmatpush1.msra.mxu0 %v6593
  %6630 = vmatprep.subr.mxu0 %v6590
  %6631 = vmatpush1.msra.mxu0 %v6589
  %6632 = vmatprep.subr.mxu0 %v6586
  %6633 = vmatpush1.msra.mxu0 %v6585
  %6634 = vmatprep.subr.mxu0 %v6582
  %6635 = vmatpush1.msra.mxu0 %v6581
  %6636 = vmatprep.subr.mxu0 %v6578
  %6637 = vmatpush1.msra.mxu0 %v6577
  %6638 = vmatprep.subr.mxu0 %v6574
  %6639 = vmatpush1.msra.mxu0 %v6573
  %6640 = vmatprep.subr.mxu0 0.0
  %6641 = vmatpush2.msra.mxu0 0.0
  %6642 = vmatprep.subr.mxu0 0.0
  %6643 = vmatpush2.msra.mxu0 0.0
  %6644 = vmatprep.subr.mxu0 0.0
  %6645 = vmatpush2.msra.mxu0 0.0
  %6646 = vmatprep.subr.mxu0 0.0
  %6647 = vmatpush2.msra.mxu0 0.0
  %6648 = vmatprep.subr.mxu0 0.0
  %6649 = vmatpush2.msra.mxu0 0.0
  %6650 = vmatprep.subr.mxu0 0.0
  %6651 = vmatpush2.msra.mxu0 0.0
  %6652 = vmatprep.subr.mxu0 0.0
  %6653 = vmatpush2.msra.mxu0 0.0
  %6654 = vmatprep.subr.mxu0 0.0
  %6655 = vmatpush2.msra.mxu0 0.0
  %6656 = vmatprep.subr.mxu0 0.0
  %6657 = vmatpush2.msra.mxu0 0.0
  %6658 = vmatprep.subr.mxu0 0.0
  %6659 = vmatpush2.msra.mxu0 0.0
  %6660 = vmatprep.subr.mxu0 0.0
  %6661 = vmatpush2.msra.mxu0 0.0
  %6662 = vmatprep.subr.mxu0 0.0
  %6663 = vmatpush2.msra.mxu0 0.0
  %6664 = vmatprep.subr.mxu0 0.0
  %6665 = vmatpush2.msra.mxu0 0.0
  %6666 = vmatprep.subr.mxu0 0.0
  %6667 = vmatpush2.msra.mxu0 0.0
  %6668 = vmatprep.subr.mxu0 0.0
  %6669 = vmatpush2.msra.mxu0 0.0
  %6670 = vmatprep.subr.mxu0 0.0
  %6671 = vmatpush2.msra.mxu0 0.0
  %6672 = vmatprep.mubr.f32.mxu0 0.0
  %6673 = vmatmul.mubr.f32.gmra.mxu0 %v6606
  %v6674 = vpop.f32.mrf.mxu0
  %v6675 = vadd.f32 0.0, %v6674
  %v6676 = vpop.f32.mrf.mxu0
  %v6677 = vadd.f32 0.0, %v6676
  %6678 = vdwg.mxu0
  %6679 = vmatprep.subr.mxu0 0.0
  %6680 = vmatpush1.msra.mxu0 0.0
  %6681 = vmatprep.subr.mxu0 0.0
  %6682 = vmatpush1.msra.mxu0 0.0
  %6683 = vmatprep.subr.mxu0 0.0
  %6684 = vmatpush1.msra.mxu0 0.0
  %6685 = vmatprep.subr.mxu0 0.0
  %6686 = vmatpush1.msra.mxu0 0.0
  %6687 = vmatprep.subr.mxu0 0.0
  %6688 = vmatpush1.msra.mxu0 0.0
  %6689 = vmatprep.subr.mxu0 0.0
  %6690 = vmatpush1.msra.mxu0 0.0
  %6691 = vmatprep.subr.mxu0 0.0
  %6692 = vmatpush1.msra.mxu0 0.0
  %6693 = vmatprep.subr.mxu0 0.0
  %6694 = vmatpush1.msra.mxu0 0.0
  %6695 = vmatprep.subr.mxu0 %v6604
  %6696 = vmatpush1.msra.mxu0 %v6603
  %6697 = vmatprep.subr.mxu0 %v6600
  %6698 = vmatpush1.msra.mxu0 %v6599
  %6699 = vmatprep.subr.mxu0 %v6596
  %6700 = vmatpush1.msra.mxu0 %v6595
  %6701 = vmatprep.subr.mxu0 %v6592
  %6702 = vmatpush1.msra.mxu0 %v6591
  %6703 = vmatprep.subr.mxu0 %v6588
  %6704 = vmatpush1.msra.mxu0 %v6587
  %6705 = vmatprep.subr.mxu0 %v6584
  %6706 = vmatpush1.msra.mxu0 %v6583
  %6707 = vmatprep.subr.mxu0 %v6580
  %6708 = vmatpush1.msra.mxu0 %v6579
  %6709 = vmatprep.subr.mxu0 %v6576
  %6710 = vmatpush1.msra.mxu0 %v6575
  %6711 = vmatprep.subr.mxu0 0.0
  %6712 = vmatpush2.msra.mxu0 0.0
  %6713 = vmatprep.subr.mxu0 0.0
  %6714 = vmatpush2.msra.mxu0 0.0
  %6715 = vmatprep.subr.mxu0 0.0
  %6716 = vmatpush2.msra.mxu0 0.0
  %6717 = vmatprep.subr.mxu0 0.0
  %6718 = vmatpush2.msra.mxu0 0.0
  %6719 = vmatprep.subr.mxu0 0.0
  %6720 = vmatpush2.msra.mxu0 0.0
  %6721 = vmatprep.subr.mxu0 0.0
  %6722 = vmatpush2.msra.mxu0 0.0
  %6723 = vmatprep.subr.mxu0 0.0
  %6724 = vmatpush2.msra.mxu0 0.0
  %6725 = vmatprep.subr.mxu0 0.0
  %6726 = vmatpush2.msra.mxu0 0.0
  %6727 = vmatprep.subr.mxu0 0.0
  %6728 = vmatpush2.msra.mxu0 0.0
  %6729 = vmatprep.subr.mxu0 0.0
  %6730 = vmatpush2.msra.mxu0 0.0
  %6731 = vmatprep.subr.mxu0 0.0
  %6732 = vmatpush2.msra.mxu0 0.0
  %6733 = vmatprep.subr.mxu0 0.0
  %6734 = vmatpush2.msra.mxu0 0.0
  %6735 = vmatprep.subr.mxu0 0.0
  %6736 = vmatpush2.msra.mxu0 0.0
  %6737 = vmatprep.subr.mxu0 0.0
  %6738 = vmatpush2.msra.mxu0 0.0
  %6739 = vmatprep.subr.mxu0 0.0
  %6740 = vmatpush2.msra.mxu0 0.0
  %6741 = vmatprep.subr.mxu0 0.0
  %6742 = vmatpush2.msra.mxu0 0.0
  %6743 = vmatprep.mubr.f32.mxu0 0.0
  %6744 = vmatmul.mubr.f32.gmra.mxu0 %v6606
  %v6745 = vpop.f32.mrf.mxu0
  %v6746 = vadd.f32 0.0, %v6745
  %v6747 = vpop.f32.mrf.mxu0
  %v6748 = vadd.f32 0.0, %v6747
  %6749 = vdwg.mxu0
  %v6750 = vadd.f32 %v6493, %v6675
  %v6751 = vadd.f32 %v6494, %v6677
  %v6752 = vadd.f32 %v6495, %v6746
  %v6753 = vadd.f32 %v6496, %v6748
  %s6754 = scalar_lea.vmem %s9, 64
  %v6755 = vld [vmem:[%s6754] sm:$0xff]
  %v6757 = vsel %vm553, %v6755, 0
  %6759 = vmatprep.subr.mxu0 0.0
  %6760 = vmatpush1.msra.mxu0 0.0
  %6761 = vmatprep.subr.mxu0 0.0
  %6762 = vmatpush1.msra.mxu0 0.0
  %6763 = vmatprep.subr.mxu0 0.0
  %6764 = vmatpush1.msra.mxu0 0.0
  %6765 = vmatprep.subr.mxu0 0.0
  %6766 = vmatpush1.msra.mxu0 0.0
  %6767 = vmatprep.subr.mxu0 0.0
  %6768 = vmatpush1.msra.mxu0 0.0
  %6769 = vmatprep.subr.mxu0 0.0
  %6770 = vmatpush1.msra.mxu0 0.0
  %6771 = vmatprep.subr.mxu0 0.0
  %6772 = vmatpush1.msra.mxu0 0.0
  %6773 = vmatprep.subr.mxu0 0.0
  %6774 = vmatpush1.msra.mxu0 0.0
  %6775 = vmatprep.subr.mxu0 0.0
  %6776 = vmatpush1.msra.mxu0 0.0
  %6777 = vmatprep.subr.mxu0 0.0
  %6778 = vmatpush1.msra.mxu0 0.0
  %6779 = vmatprep.subr.mxu0 0.0
  %6780 = vmatpush1.msra.mxu0 0.0
  %6781 = vmatprep.subr.mxu0 0.0
  %6782 = vmatpush1.msra.mxu0 0.0
  %6783 = vmatprep.subr.mxu0 0.0
  %6784 = vmatpush1.msra.mxu0 %v4707
  %6785 = vmatprep.subr.mxu0 0.0
  %6786 = vmatpush1.msra.mxu0 %v4706
  %6787 = vmatprep.subr.mxu0 0.0
  %6788 = vmatpush1.msra.mxu0 %v4705
  %6789 = vmatprep.subr.mxu0 0.0
  %6790 = vmatpush1.msra.mxu0 %v4704
  %6791 = vmatprep.subr.mxu0 0.0
  %6792 = vmatpush2.msra.mxu0 0.0
  %6793 = vmatprep.subr.mxu0 0.0
  %6794 = vmatpush2.msra.mxu0 0.0
  %6795 = vmatprep.subr.mxu0 0.0
  %6796 = vmatpush2.msra.mxu0 0.0
  %6797 = vmatprep.subr.mxu0 0.0
  %6798 = vmatpush2.msra.mxu0 0.0
  %6799 = vmatprep.subr.mxu0 0.0
  %6800 = vmatpush2.msra.mxu0 0.0
  %6801 = vmatprep.subr.mxu0 0.0
  %6802 = vmatpush2.msra.mxu0 0.0
  %6803 = vmatprep.subr.mxu0 0.0
  %6804 = vmatpush2.msra.mxu0 0.0
  %6805 = vmatprep.subr.mxu0 0.0
  %6806 = vmatpush2.msra.mxu0 0.0
  %6807 = vmatprep.subr.mxu0 0.0
  %6808 = vmatpush2.msra.mxu0 0.0
  %6809 = vmatprep.subr.mxu0 0.0
  %6810 = vmatpush2.msra.mxu0 0.0
  %6811 = vmatprep.subr.mxu0 0.0
  %6812 = vmatpush2.msra.mxu0 0.0
  %6813 = vmatprep.subr.mxu0 0.0
  %6814 = vmatpush2.msra.mxu0 0.0
  %6815 = vmatprep.subr.mxu0 0.0
  %6816 = vmatpush2.msra.mxu0 0.0
  %6817 = vmatprep.subr.mxu0 0.0
  %6818 = vmatpush2.msra.mxu0 0.0
  %6819 = vmatprep.subr.mxu0 0.0
  %6820 = vmatpush2.msra.mxu0 0.0
  %6821 = vmatprep.subr.mxu0 0.0
  %6822 = vmatpush2.msra.mxu0 0.0
  %6823 = vmatprep.mubr.f32.mxu0 0.0
  %6824 = vmatmul.mubr.f32.gmra.mxu0 %v6757
  %v6825 = vpop.f32.mrf.mxu0
  %v6826 = vadd.f32 0.0, %v6825
  %v6827 = vpop.f32.mrf.mxu0
  %6828 = vdwg.mxu0
  %s6829 = scalar_lea.vmem %s10, 2048
  %v6830 = vld [vmem:[%s6829] sm:$0xff]
  %v6831 = vld [vmem:[%s6829 + $0x8] sm:$0xff]
  %v6832 = vld [vmem:[%s6829 + $0x10] sm:$0xff]
  %v6833 = vld [vmem:[%s6829 + $0x18] sm:$0xff]
  %v6834 = vld [vmem:[%s6829 + $0x20] sm:$0xff]
  %v6835 = vld [vmem:[%s6829 + $0x28] sm:$0xff]
  %v6836 = vld [vmem:[%s6829 + $0x30] sm:$0xff]
  %v6837 = vld [vmem:[%s6829 + $0x38] sm:$0xff]
  %v6838 = vld [vmem:[%s6829 + $0x40] sm:$0xff]
  %v6839 = vld [vmem:[%s6829 + $0x48] sm:$0xff]
  %v6840 = vld [vmem:[%s6829 + $0x50] sm:$0xff]
  %v6841 = vld [vmem:[%s6829 + $0x58] sm:$0xff]
  %v6842 = vld [vmem:[%s6829 + $0x60] sm:$0xff]
  %v6843 = vld [vmem:[%s6829 + $0x68] sm:$0xff]
  %v6844 = vld [vmem:[%s6829 + $0x70] sm:$0xff]
  %v6845 = vld [vmem:[%s6829 + $0x78] sm:$0xff]
  %v6846 = vld [vmem:[%s6829 + $0x80] sm:$0xff]
  %v6847 = vld [vmem:[%s6829 + $0x88] sm:$0xff]
  %v6848 = vld [vmem:[%s6829 + $0x90] sm:$0xff]
  %v6849 = vld [vmem:[%s6829 + $0x98] sm:$0xff]
  %v6850 = vld [vmem:[%s6829 + $0xa0] sm:$0xff]
  %v6851 = vld [vmem:[%s6829 + $0xa8] sm:$0xff]
  %v6852 = vld [vmem:[%s6829 + $0xb0] sm:$0xff]
  %v6853 = vld [vmem:[%s6829 + $0xb8] sm:$0xff]
  %v6854 = vld [vmem:[%s6829 + $0xc0] sm:$0xff]
  %v6855 = vld [vmem:[%s6829 + $0xc8] sm:$0xff]
  %v6856 = vld [vmem:[%s6829 + $0xd0] sm:$0xff]
  %v6857 = vld [vmem:[%s6829 + $0xd8] sm:$0xff]
  %v6858 = vld [vmem:[%s6829 + $0xe0] sm:$0xff]
  %v6859 = vld [vmem:[%s6829 + $0xe8] sm:$0xff]
  %v6860 = vld [vmem:[%s6829 + $0xf0] sm:$0xff]
  %v6861 = vld [vmem:[%s6829 + $0xf8] sm:$0xff]
  %v6863 = vsel %vm76, %v6826, 0
  %6865 = vmatprep.subr.mxu0 0.0
  %6866 = vmatpush1.msra.mxu0 0.0
  %6867 = vmatprep.subr.mxu0 0.0
  %6868 = vmatpush1.msra.mxu0 0.0
  %6869 = vmatprep.subr.mxu0 0.0
  %6870 = vmatpush1.msra.mxu0 0.0
  %6871 = vmatprep.subr.mxu0 0.0
  %6872 = vmatpush1.msra.mxu0 0.0
  %6873 = vmatprep.subr.mxu0 0.0
  %6874 = vmatpush1.msra.mxu0 0.0
  %6875 = vmatprep.subr.mxu0 0.0
  %6876 = vmatpush1.msra.mxu0 0.0
  %6877 = vmatprep.subr.mxu0 0.0
  %6878 = vmatpush1.msra.mxu0 0.0
  %6879 = vmatprep.subr.mxu0 0.0
  %6880 = vmatpush1.msra.mxu0 0.0
  %6881 = vmatprep.subr.mxu0 %v6859
  %6882 = vmatpush1.msra.mxu0 %v6858
  %6883 = vmatprep.subr.mxu0 %v6855
  %6884 = vmatpush1.msra.mxu0 %v6854
  %6885 = vmatprep.subr.mxu0 %v6851
  %6886 = vmatpush1.msra.mxu0 %v6850
  %6887 = vmatprep.subr.mxu0 %v6847
  %6888 = vmatpush1.msra.mxu0 %v6846
  %6889 = vmatprep.subr.mxu0 %v6843
  %6890 = vmatpush1.msra.mxu0 %v6842
  %6891 = vmatprep.subr.mxu0 %v6839
  %6892 = vmatpush1.msra.mxu0 %v6838
  %6893 = vmatprep.subr.mxu0 %v6835
  %6894 = vmatpush1.msra.mxu0 %v6834
  %6895 = vmatprep.subr.mxu0 %v6831
  %6896 = vmatpush1.msra.mxu0 %v6830
  %6897 = vmatprep.subr.mxu0 0.0
  %6898 = vmatpush2.msra.mxu0 0.0
  %6899 = vmatprep.subr.mxu0 0.0
  %6900 = vmatpush2.msra.mxu0 0.0
  %6901 = vmatprep.subr.mxu0 0.0
  %6902 = vmatpush2.msra.mxu0 0.0
  %6903 = vmatprep.subr.mxu0 0.0
  %6904 = vmatpush2.msra.mxu0 0.0
  %6905 = vmatprep.subr.mxu0 0.0
  %6906 = vmatpush2.msra.mxu0 0.0
  %6907 = vmatprep.subr.mxu0 0.0
  %6908 = vmatpush2.msra.mxu0 0.0
  %6909 = vmatprep.subr.mxu0 0.0
  %6910 = vmatpush2.msra.mxu0 0.0
  %6911 = vmatprep.subr.mxu0 0.0
  %6912 = vmatpush2.msra.mxu0 0.0
  %6913 = vmatprep.subr.mxu0 0.0
  %6914 = vmatpush2.msra.mxu0 0.0
  %6915 = vmatprep.subr.mxu0 0.0
  %6916 = vmatpush2.msra.mxu0 0.0
  %6917 = vmatprep.subr.mxu0 0.0
  %6918 = vmatpush2.msra.mxu0 0.0
  %6919 = vmatprep.subr.mxu0 0.0
  %6920 = vmatpush2.msra.mxu0 0.0
  %6921 = vmatprep.subr.mxu0 0.0
  %6922 = vmatpush2.msra.mxu0 0.0
  %6923 = vmatprep.subr.mxu0 0.0
  %6924 = vmatpush2.msra.mxu0 0.0
  %6925 = vmatprep.subr.mxu0 0.0
  %6926 = vmatpush2.msra.mxu0 0.0
  %6927 = vmatprep.subr.mxu0 0.0
  %6928 = vmatpush2.msra.mxu0 0.0
  %6929 = vmatprep.mubr.f32.mxu0 0.0
  %6930 = vmatmul.mubr.f32.gmra.mxu0 %v6863
  %v6931 = vpop.f32.mrf.mxu0
  %v6932 = vadd.f32 0.0, %v6931
  %v6933 = vpop.f32.mrf.mxu0
  %v6934 = vadd.f32 0.0, %v6933
  %6935 = vdwg.mxu0
  %6936 = vmatprep.subr.mxu0 0.0
  %6937 = vmatpush1.msra.mxu0 0.0
  %6938 = vmatprep.subr.mxu0 0.0
  %6939 = vmatpush1.msra.mxu0 0.0
  %6940 = vmatprep.subr.mxu0 0.0
  %6941 = vmatpush1.msra.mxu0 0.0
  %6942 = vmatprep.subr.mxu0 0.0
  %6943 = vmatpush1.msra.mxu0 0.0
  %6944 = vmatprep.subr.mxu0 0.0
  %6945 = vmatpush1.msra.mxu0 0.0
  %6946 = vmatprep.subr.mxu0 0.0
  %6947 = vmatpush1.msra.mxu0 0.0
  %6948 = vmatprep.subr.mxu0 0.0
  %6949 = vmatpush1.msra.mxu0 0.0
  %6950 = vmatprep.subr.mxu0 0.0
  %6951 = vmatpush1.msra.mxu0 0.0
  %6952 = vmatprep.subr.mxu0 %v6861
  %6953 = vmatpush1.msra.mxu0 %v6860
  %6954 = vmatprep.subr.mxu0 %v6857
  %6955 = vmatpush1.msra.mxu0 %v6856
  %6956 = vmatprep.subr.mxu0 %v6853
  %6957 = vmatpush1.msra.mxu0 %v6852
  %6958 = vmatprep.subr.mxu0 %v6849
  %6959 = vmatpush1.msra.mxu0 %v6848
  %6960 = vmatprep.subr.mxu0 %v6845
  %6961 = vmatpush1.msra.mxu0 %v6844
  %6962 = vmatprep.subr.mxu0 %v6841
  %6963 = vmatpush1.msra.mxu0 %v6840
  %6964 = vmatprep.subr.mxu0 %v6837
  %6965 = vmatpush1.msra.mxu0 %v6836
  %6966 = vmatprep.subr.mxu0 %v6833
  %6967 = vmatpush1.msra.mxu0 %v6832
  %6968 = vmatprep.subr.mxu0 0.0
  %6969 = vmatpush2.msra.mxu0 0.0
  %6970 = vmatprep.subr.mxu0 0.0
  %6971 = vmatpush2.msra.mxu0 0.0
  %6972 = vmatprep.subr.mxu0 0.0
  %6973 = vmatpush2.msra.mxu0 0.0
  %6974 = vmatprep.subr.mxu0 0.0
  %6975 = vmatpush2.msra.mxu0 0.0
  %6976 = vmatprep.subr.mxu0 0.0
  %6977 = vmatpush2.msra.mxu0 0.0
  %6978 = vmatprep.subr.mxu0 0.0
  %6979 = vmatpush2.msra.mxu0 0.0
  %6980 = vmatprep.subr.mxu0 0.0
  %6981 = vmatpush2.msra.mxu0 0.0
  %6982 = vmatprep.subr.mxu0 0.0
  %6983 = vmatpush2.msra.mxu0 0.0
  %6984 = vmatprep.subr.mxu0 0.0
  %6985 = vmatpush2.msra.mxu0 0.0
  %6986 = vmatprep.subr.mxu0 0.0
  %6987 = vmatpush2.msra.mxu0 0.0
  %6988 = vmatprep.subr.mxu0 0.0
  %6989 = vmatpush2.msra.mxu0 0.0
  %6990 = vmatprep.subr.mxu0 0.0
  %6991 = vmatpush2.msra.mxu0 0.0
  %6992 = vmatprep.subr.mxu0 0.0
  %6993 = vmatpush2.msra.mxu0 0.0
  %6994 = vmatprep.subr.mxu0 0.0
  %6995 = vmatpush2.msra.mxu0 0.0
  %6996 = vmatprep.subr.mxu0 0.0
  %6997 = vmatpush2.msra.mxu0 0.0
  %6998 = vmatprep.subr.mxu0 0.0
  %6999 = vmatpush2.msra.mxu0 0.0
  %7000 = vmatprep.mubr.f32.mxu0 0.0
  %7001 = vmatmul.mubr.f32.gmra.mxu0 %v6863
  %v7002 = vpop.f32.mrf.mxu0
  %v7003 = vadd.f32 0.0, %v7002
  %v7004 = vpop.f32.mrf.mxu0
  %v7005 = vadd.f32 0.0, %v7004
  %7006 = vdwg.mxu0
  %v7007 = vadd.f32 %v6750, %v6932
  %v7008 = vadd.f32 %v6751, %v6934
  %v7009 = vadd.f32 %v6752, %v7003
  %v7010 = vadd.f32 %v6753, %v7005
  %v7011 = vld [vmem:[%s11] sm:$0xf]
  %v7013 = vlaneseq
  %v7014 = vshrl.u32 %v7013, 7
  %v7015 = vsub.s32 0, %v7014
  %v7016 = vrot.slane %v7011, %v7015
  %v7017 = vlaneseq
  %v7018 = vshrl.u32 %v7017, 7
  %v7019 = vsub.s32 1, %v7018
  %v7020 = vrot.slane %v7011, %v7019
  %v7021 = vlaneseq
  %v7022 = vshrl.u32 %v7021, 7
  %v7023 = vsub.s32 2, %v7022
  %v7024 = vrot.slane %v7011, %v7023
  %v7025 = vlaneseq
  %v7026 = vshrl.u32 %v7025, 7
  %v7027 = vsub.s32 3, %v7026
  %v7028 = vrot.slane %v7011, %v7027
  %v7033 = vadd.f32 %v7007, %v7016
  %v7034 = vadd.f32 %v7008, %v7020
  %v7035 = vadd.f32 %v7009, %v7024
  %v7036 = vadd.f32 %v7010, %v7028
  %v7037 = vmax.f32 %v7033, 0.0
  %v7038 = vmax.f32 %v7034, 0.0
  %v7039 = vmax.f32 %v7035, 0.0
  %v7040 = vmax.f32 %v7036, 0.0
  %v7041 = vld [vmem:[%s12] sm:$0xff]
  %v7042 = vld [vmem:[%s12 + $0x8] sm:$0xff]
  %v7043 = vld [vmem:[%s12 + $0x10] sm:$0xff]
  %v7044 = vld [vmem:[%s12 + $0x18] sm:$0xff]
  %v7045 = vld [vmem:[%s12 + $0x20] sm:$0xff]
  %v7046 = vld [vmem:[%s12 + $0x28] sm:$0xff]
  %v7047 = vld [vmem:[%s12 + $0x30] sm:$0xff]
  %v7048 = vld [vmem:[%s12 + $0x38] sm:$0xff]
  %v7049 = vld [vmem:[%s12 + $0x40] sm:$0xff]
  %v7050 = vld [vmem:[%s12 + $0x48] sm:$0xff]
  %v7051 = vld [vmem:[%s12 + $0x50] sm:$0xff]
  %v7052 = vld [vmem:[%s12 + $0x58] sm:$0xff]
  %v7053 = vld [vmem:[%s12 + $0x60] sm:$0xff]
  %v7054 = vld [vmem:[%s12 + $0x68] sm:$0xff]
  %v7055 = vld [vmem:[%s12 + $0x70] sm:$0xff]
  %v7056 = vld [vmem:[%s12 + $0x78] sm:$0xff]
  %v7057 = vld [vmem:[%s12 + $0x80] sm:$0xff]
  %v7058 = vld [vmem:[%s12 + $0x88] sm:$0xff]
  %v7059 = vld [vmem:[%s12 + $0x90] sm:$0xff]
  %v7060 = vld [vmem:[%s12 + $0x98] sm:$0xff]
  %v7061 = vld [vmem:[%s12 + $0xa0] sm:$0xff]
  %v7062 = vld [vmem:[%s12 + $0xa8] sm:$0xff]
  %v7063 = vld [vmem:[%s12 + $0xb0] sm:$0xff]
  %v7064 = vld [vmem:[%s12 + $0xb8] sm:$0xff]
  %v7065 = vld [vmem:[%s12 + $0xc0] sm:$0xff]
  %v7066 = vld [vmem:[%s12 + $0xc8] sm:$0xff]
  %v7067 = vld [vmem:[%s12 + $0xd0] sm:$0xff]
  %v7068 = vld [vmem:[%s12 + $0xd8] sm:$0xff]
  %v7069 = vld [vmem:[%s12 + $0xe0] sm:$0xff]
  %v7070 = vld [vmem:[%s12 + $0xe8] sm:$0xff]
  %v7071 = vld [vmem:[%s12 + $0xf0] sm:$0xff]
  %v7072 = vld [vmem:[%s12 + $0xf8] sm:$0xff]
  %v7073 = vld [vmem:[%s12 + $0x100] sm:$0xff]
  %v7074 = vld [vmem:[%s12 + $0x108] sm:$0xff]
  %v7075 = vld [vmem:[%s12 + $0x110] sm:$0xff]
  %v7076 = vld [vmem:[%s12 + $0x118] sm:$0xff]
  %v7077 = vld [vmem:[%s12 + $0x120] sm:$0xff]
  %v7078 = vld [vmem:[%s12 + $0x128] sm:$0xff]
  %v7079 = vld [vmem:[%s12 + $0x130] sm:$0xff]
  %v7080 = vld [vmem:[%s12 + $0x138] sm:$0xff]
  %v7081 = vld [vmem:[%s12 + $0x140] sm:$0xff]
  %v7082 = vld [vmem:[%s12 + $0x148] sm:$0xff]
  %v7083 = vld [vmem:[%s12 + $0x150] sm:$0xff]
  %v7084 = vld [vmem:[%s12 + $0x158] sm:$0xff]
  %v7085 = vld [vmem:[%s12 + $0x160] sm:$0xff]
  %v7086 = vld [vmem:[%s12 + $0x168] sm:$0xff]
  %v7087 = vld [vmem:[%s12 + $0x170] sm:$0xff]
  %v7088 = vld [vmem:[%s12 + $0x178] sm:$0xff]
  %v7089 = vld [vmem:[%s12 + $0x180] sm:$0xff]
  %v7090 = vld [vmem:[%s12 + $0x188] sm:$0xff]
  %v7091 = vld [vmem:[%s12 + $0x190] sm:$0xff]
  %v7092 = vld [vmem:[%s12 + $0x198] sm:$0xff]
  %v7093 = vld [vmem:[%s12 + $0x1a0] sm:$0xff]
  %v7094 = vld [vmem:[%s12 + $0x1a8] sm:$0xff]
  %v7095 = vld [vmem:[%s12 + $0x1b0] sm:$0xff]
  %v7096 = vld [vmem:[%s12 + $0x1b8] sm:$0xff]
  %v7097 = vld [vmem:[%s12 + $0x1c0] sm:$0xff]
  %v7098 = vld [vmem:[%s12 + $0x1c8] sm:$0xff]
  %v7099 = vld [vmem:[%s12 + $0x1d0] sm:$0xff]
  %v7100 = vld [vmem:[%s12 + $0x1d8] sm:$0xff]
  %v7101 = vld [vmem:[%s12 + $0x1e0] sm:$0xff]
  %v7102 = vld [vmem:[%s12 + $0x1e8] sm:$0xff]
  %v7103 = vld [vmem:[%s12 + $0x1f0] sm:$0xff]
  %v7104 = vld [vmem:[%s12 + $0x1f8] sm:$0xff]
  %v7105 = vld [vmem:[%s13] sm:$0x1]
  %v7107 = vlaneseq
  %v7108 = vshrl.u32 %v7107, 7
  %v7109 = vsub.s32 0, %v7108
  %v7110 = vrot.slane %v7105, %v7109
  %7112 = vmatprep.subr.mxu0 0.0
  %7113 = vmatpush1.msra.mxu0 %v7056
  %7114 = vmatprep.subr.mxu0 0.0
  %7115 = vmatpush1.msra.mxu0 %v7055
  %7116 = vmatprep.subr.mxu0 0.0
  %7117 = vmatpush1.msra.mxu0 %v7054
  %7118 = vmatprep.subr.mxu0 0.0
  %7119 = vmatpush1.msra.mxu0 %v7053
  %7120 = vmatprep.subr.mxu0 0.0
  %7121 = vmatpush1.msra.mxu0 %v7052
  %7122 = vmatprep.subr.mxu0 0.0
  %7123 = vmatpush1.msra.mxu0 %v7051
  %7124 = vmatprep.subr.mxu0 0.0
  %7125 = vmatpush1.msra.mxu0 %v7050
  %7126 = vmatprep.subr.mxu0 0.0
  %7127 = vmatpush1.msra.mxu0 %v7049
  %7128 = vmatprep.subr.mxu0 0.0
  %7129 = vmatpush1.msra.mxu0 %v7048
  %7130 = vmatprep.subr.mxu0 0.0
  %7131 = vmatpush1.msra.mxu0 %v7047
  %7132 = vmatprep.subr.mxu0 0.0
  %7133 = vmatpush1.msra.mxu0 %v7046
  %7134 = vmatprep.subr.mxu0 0.0
  %7135 = vmatpush1.msra.mxu0 %v7045
  %7136 = vmatprep.subr.mxu0 0.0
  %7137 = vmatpush1.msra.mxu0 %v7044
  %7138 = vmatprep.subr.mxu0 0.0
  %7139 = vmatpush1.msra.mxu0 %v7043
  %7140 = vmatprep.subr.mxu0 0.0
  %7141 = vmatpush1.msra.mxu0 %v7042
  %7142 = vmatprep.subr.mxu0 0.0
  %7143 = vmatpush1.msra.mxu0 %v7041
  %7144 = vmatprep.subr.mxu0 0.0
  %7145 = vmatpush2.msra.mxu0 %v7072
  %7146 = vmatprep.subr.mxu0 0.0
  %7147 = vmatpush2.msra.mxu0 %v7071
  %7148 = vmatprep.subr.mxu0 0.0
  %7149 = vmatpush2.msra.mxu0 %v7070
  %7150 = vmatprep.subr.mxu0 0.0
  %7151 = vmatpush2.msra.mxu0 %v7069
  %7152 = vmatprep.subr.mxu0 0.0
  %7153 = vmatpush2.msra.mxu0 %v7068
  %7154 = vmatprep.subr.mxu0 0.0
  %7155 = vmatpush2.msra.mxu0 %v7067
  %7156 = vmatprep.subr.mxu0 0.0
  %7157 = vmatpush2.msra.mxu0 %v7066
  %7158 = vmatprep.subr.mxu0 0.0
  %7159 = vmatpush2.msra.mxu0 %v7065
  %7160 = vmatprep.subr.mxu0 0.0
  %7161 = vmatpush2.msra.mxu0 %v7064
  %7162 = vmatprep.subr.mxu0 0.0
  %7163 = vmatpush2.msra.mxu0 %v7063
  %7164 = vmatprep.subr.mxu0 0.0
  %7165 = vmatpush2.msra.mxu0 %v7062
  %7166 = vmatprep.subr.mxu0 0.0
  %7167 = vmatpush2.msra.mxu0 %v7061
  %7168 = vmatprep.subr.mxu0 0.0
  %7169 = vmatpush2.msra.mxu0 %v7060
  %7170 = vmatprep.subr.mxu0 0.0
  %7171 = vmatpush2.msra.mxu0 %v7059
  %7172 = vmatprep.subr.mxu0 0.0
  %7173 = vmatpush2.msra.mxu0 %v7058
  %7174 = vmatprep.subr.mxu0 0.0
  %7175 = vmatpush2.msra.mxu0 %v7057
  %7176 = vmatprep.mubr.f32.mxu0 %v7038
  %7177 = vmatmul.mubr.f32.gmra.mxu0 %v7037
  %v7178 = vpop.f32.mrf.mxu0
  %v7179 = vadd.f32 %v7110, %v7178
  %v7180 = vpop.f32.mrf.mxu0
  %7181 = vdwg.mxu0
  %7182 = vmatprep.subr.mxu0 0.0
  %7183 = vmatpush1.msra.mxu0 %v7088
  %7184 = vmatprep.subr.mxu0 0.0
  %7185 = vmatpush1.msra.mxu0 %v7087
  %7186 = vmatprep.subr.mxu0 0.0
  %7187 = vmatpush1.msra.mxu0 %v7086
  %7188 = vmatprep.subr.mxu0 0.0
  %7189 = vmatpush1.msra.mxu0 %v7085
  %7190 = vmatprep.subr.mxu0 0.0
  %7191 = vmatpush1.msra.mxu0 %v7084
  %7192 = vmatprep.subr.mxu0 0.0
  %7193 = vmatpush1.msra.mxu0 %v7083
  %7194 = vmatprep.subr.mxu0 0.0
  %7195 = vmatpush1.msra.mxu0 %v7082
  %7196 = vmatprep.subr.mxu0 0.0
  %7197 = vmatpush1.msra.mxu0 %v7081
  %7198 = vmatprep.subr.mxu0 0.0
  %7199 = vmatpush1.msra.mxu0 %v7080
  %7200 = vmatprep.subr.mxu0 0.0
  %7201 = vmatpush1.msra.mxu0 %v7079
  %7202 = vmatprep.subr.mxu0 0.0
  %7203 = vmatpush1.msra.mxu0 %v7078
  %7204 = vmatprep.subr.mxu0 0.0
  %7205 = vmatpush1.msra.mxu0 %v7077
  %7206 = vmatprep.subr.mxu0 0.0
  %7207 = vmatpush1.msra.mxu0 %v7076
  %7208 = vmatprep.subr.mxu0 0.0
  %7209 = vmatpush1.msra.mxu0 %v7075
  %7210 = vmatprep.subr.mxu0 0.0
  %7211 = vmatpush1.msra.mxu0 %v7074
  %7212 = vmatprep.subr.mxu0 0.0
  %7213 = vmatpush1.msra.mxu0 %v7073
  %7214 = vmatprep.subr.mxu0 0.0
  %7215 = vmatpush2.msra.mxu0 %v7104
  %7216 = vmatprep.subr.mxu0 0.0
  %7217 = vmatpush2.msra.mxu0 %v7103
  %7218 = vmatprep.subr.mxu0 0.0
  %7219 = vmatpush2.msra.mxu0 %v7102
  %7220 = vmatprep.subr.mxu0 0.0
  %7221 = vmatpush2.msra.mxu0 %v7101
  %7222 = vmatprep.subr.mxu0 0.0
  %7223 = vmatpush2.msra.mxu0 %v7100
  %7224 = vmatprep.subr.mxu0 0.0
  %7225 = vmatpush2.msra.mxu0 %v7099
  %7226 = vmatprep.subr.mxu0 0.0
  %7227 = vmatpush2.msra.mxu0 %v7098
  %7228 = vmatprep.subr.mxu0 0.0
  %7229 = vmatpush2.msra.mxu0 %v7097
  %7230 = vmatprep.subr.mxu0 0.0
  %7231 = vmatpush2.msra.mxu0 %v7096
  %7232 = vmatprep.subr.mxu0 0.0
  %7233 = vmatpush2.msra.mxu0 %v7095
  %7234 = vmatprep.subr.mxu0 0.0
  %7235 = vmatpush2.msra.mxu0 %v7094
  %7236 = vmatprep.subr.mxu0 0.0
  %7237 = vmatpush2.msra.mxu0 %v7093
  %7238 = vmatprep.subr.mxu0 0.0
  %7239 = vmatpush2.msra.mxu0 %v7092
  %7240 = vmatprep.subr.mxu0 0.0
  %7241 = vmatpush2.msra.mxu0 %v7091
  %7242 = vmatprep.subr.mxu0 0.0
  %7243 = vmatpush2.msra.mxu0 %v7090
  %7244 = vmatprep.subr.mxu0 0.0
  %7245 = vmatpush2.msra.mxu0 %v7089
  %7246 = vmatprep.mubr.f32.mxu0 %v7040
  %7247 = vmatmul.mubr.f32.gmra.mxu0 %v7039
  %v7248 = vpop.f32.mrf.mxu0
  %v7249 = vadd.f32 %v7179, %v7248
  %v7250 = vpop.f32.mrf.mxu0
  %7251 = vdwg.mxu0
  %7252 = vst [vmem:[%s14] sm:$0xff] %v7249
  // Predicated region
  $region58: #{_behavior_cloning_forward.1} parent=0 // pred_check
    _
  $region59: #{_behavior_cloning_forward.1} parent=0 // pred_check_branch
    %7254 = sbr.rel (0) target = $region61
  $region60: #{_behavior_cloning_forward.1} parent=0 // pred_region
    _
  $region61: #{_behavior_cloning_forward.1} parent=0 // pred_fallthru
    _
  // Predicated region
  $region62: #{_behavior_cloning_forward.1} parent=0 // pred_check
    _
  $region63: #{_behavior_cloning_forward.1} parent=0 // pred_check_branch
    %7256 = sbr.rel (0) target = $region65
  $region64: #{_behavior_cloning_forward.1} parent=0 // pred_region
    _
  $region65: #{_behavior_cloning_forward.1} parent=0 // pred_fallthru
    _

</llo_original>
